<compile_context>
chip_gen: v7x
topology: tpu7x:2x2x1
jax: 0.10.0
libtpu: 0.0.40
codegen_flags: <defaults>
</compile_context>

<pallas_src>
import jax
import jax.numpy as jnp
from jax import lax
from jax.experimental import pallas as pl
from jax.experimental.pallas import tpu as pltpu


# ------------------------------ fused kernel --------------------------------

def _lenet_kernel(x_ref, m1_ref, b1_ref, e1_ref, o1_ref,
                  m2_ref, b2_ref, e2_ref, o2_ref,
                  fc1_ref, fb1_ref, fc2_ref, fb2_ref, o_ref):
    """Whole forward pass for a block of Bt images; batch rides the MXU M dim."""
    f32 = jnp.float32
    bf16 = jnp.bfloat16
    Bt = o_ref.shape[0]

    def mm(a, b):
        return jnp.dot(a, b, preferred_element_type=f32)

    # ---------------- conv1 (3x3, 1->6) fused with 2x2 max-pool --------------
    # x_ref: (26, Bt, 26)  [y, b, x]   ->  activation row: (Bt, 144) = (Bt, x*6+co)
    def conv1_row(y):
        acc = jnp.broadcast_to(b1_ref[...], (Bt, 144))          # f32 accumulator
        for i in range(3):                                       # 3 row taps
            acc = acc + mm(x_ref[y + i], m1_ref[i])              # banded RHS (26,144)
        return acc

    p1 = []                                                      # 12 rows of (Bt, 72)
    for m in range(12):
        rmax = jnp.maximum(conv1_row(2 * m), conv1_row(2 * m + 1)).astype(bf16)
        # column pair-max + subsample via two exact 0/1 selection matmuls
        p1.append(jnp.maximum(mm(rmax, e1_ref[...]),
                              mm(rmax, o1_ref[...])).astype(bf16))

    # ---------------- conv2 (3x3, 6->16) fused with 2x2 max-pool -------------
    # p1 row: (Bt, u*6+ci)  ->  activation row: (Bt, 160) = (Bt, x*16+co)
    def conv2_row(y):
        acc = jnp.broadcast_to(b2_ref[...], (Bt, 160))
        for i in range(3):
            acc = acc + mm(p1[y + i], m2_ref[i])                 # banded RHS (72,160)
        return acc

    p2 = []                                                      # 5 rows of (Bt, 80)
    for m in range(5):
        rmax = jnp.maximum(conv2_row(2 * m), conv2_row(2 * m + 1)).astype(bf16)
        p2.append(jnp.maximum(mm(rmax, e2_ref[...]),
                              mm(rmax, o2_ref[...])).astype(bf16))

    # ---------------- fc1 + ReLU (flatten order == torch (c, h, w)) ----------
    h = jnp.broadcast_to(fb1_ref[...], (Bt, 120))
    for r in range(5):
        h = h + mm(p2[r], fc1_ref[r])                            # (Bt,80)@(80,120)
    h = jnp.maximum(h, 0.0).astype(bf16)

    # ---------------- fc2 (output padded to lane-dense width) ----------------
    out = mm(h, fc2_ref[...]) + fb2_ref[...]                     # (Bt, Opad)
    o_ref[...] = out.astype(o_ref.dtype)


# --------------------------- wrapper / layout prep ---------------------------

def convolution_forward(params, x):
    """x: (B, 1, 26, 26) float32 -> (B, outputsize). Single fused pallas_call."""
    f32, bf16 = jnp.float32, jnp.bfloat16
    B = x.shape[0]
    outputsize = params['fc2_b'].shape[0]
    Opad = int(pl.cdiv(outputsize, 128) * 128)                   # lane-dense output

    # ---- batching: Bt images per grid step, folded into the matmul M dim ----
    Bt = int(min(128, max(8, pl.next_power_of_2(pl.cdiv(B, 2)))))
    grid_n = int(pl.cdiv(B, Bt))
    if grid_n < 2:            # v7x has 2 TensorCores; keep >= 2 parallel steps
        grid_n = 2
    Bp = grid_n * Bt

    # input laid out [y, b, x] so conv row-taps are free leading-dim slices
    X = x[:, 0, :, :].astype(bf16)                               # (B, 26, 26)
    X = jnp.pad(X, ((0, Bp - B), (0, 0), (0, 0)))                # (Bp, 26, 26)
    X = jnp.transpose(X, (1, 0, 2))                              # (26, Bp, 26)

    # ---- conv1 banded row-tap matrices: M1row[i][xin, x*6+co] = w1[co,0,i,xin-x]
    w1 = params['w1'].astype(f32)[:, 0]                          # (6,3,3) [co,i,j]
    W1 = jnp.transpose(w1, (1, 2, 0))                            # (3,3,6) [i,j,co]
    i_id = jnp.arange(3)[:, None, None, None]
    xin = jnp.arange(26)[None, :, None, None]
    x1 = jnp.arange(24)[None, None, :, None]
    co6 = jnp.arange(6)[None, None, None, :]
    j1 = xin - x1
    vals1 = W1[i_id, jnp.clip(j1, 0, 2), co6]                    # (3,26,24,6)
    M1row = jnp.where((j1 >= 0) & (j1 < 3), vals1, 0.0) \
               .reshape(3, 26, 144).astype(bf16)
    b1w = jnp.tile(params['b1'].astype(f32), 24)[None, :]        # (1,144)

    # ---- conv2 banded row-tap matrices: M2row[i][u*6+ci, x*16+co] = w2[co,ci,i,u-x]
    w2 = params['w2'].astype(f32)                                # (16,6,3,3)
    W2r = jnp.transpose(w2, (2, 3, 1, 0))                        # (3,3,6,16) [i,j,ci,co]
    i_id = jnp.arange(3)[:, None, None, None, None]
    u_id = jnp.arange(12)[None, :, None, None, None]
    ci_id = jnp.arange(6)[None, None, :, None, None]
    x2_id = jnp.arange(10)[None, None, None, :, None]
    co_id = jnp.arange(16)[None, None, None, None, :]
    j2 = u_id - x2_id
    vals2 = W2r[i_id, jnp.clip(j2, 0, 2), ci_id, co_id]          # (3,12,6,10,16)
    M2row = jnp.where((j2 >= 0) & (j2 < 3), vals2, 0.0) \
               .reshape(3, 72, 160).astype(bf16)
    b2w = jnp.tile(params['b2'].astype(f32), 10)[None, :]        # (1,160)

    # ---- pooling column pair-max / subsample selection matrices (exact 0/1) --
    c72 = jnp.arange(72)
    u, c = c72 // 6, c72 % 6
    r144 = jnp.arange(144)[:, None]
    E1 = (r144 == (12 * u + c)[None, :]).astype(bf16)            # (144,72)
    O1 = (r144 == (12 * u + 6 + c)[None, :]).astype(bf16)        # (144,72)

    c80 = jnp.arange(80)
    v, co = c80 // 16, c80 % 16
    r160 = jnp.arange(160)[:, None]
    E2 = (r160 == (32 * v + co)[None, :]).astype(bf16)           # (160,80)
    O2 = (r160 == (32 * v + 16 + co)[None, :]).astype(bf16)      # (160,80)

    # ---- FC weights re-laid-out to match p2[b, w*16+co] and torch flatten ----
    FC1 = params['fc1_w'].astype(f32).reshape(120, 16, 5, 5) \
                         .transpose(2, 3, 1, 0).reshape(5, 80, 120).astype(bf16)
    fb1 = params['fc1_b'].astype(f32)[None, :]                   # (1,120)
    W2p = jnp.pad(params['fc2_w'].astype(f32).T,
                  ((0, 0), (0, Opad - outputsize))).astype(bf16)  # (120,Opad)
    fb2 = jnp.pad(params['fc2_b'].astype(f32),
                  (0, Opad - outputsize))[None, :]               # (1,Opad)

    const2 = lambda g: (0, 0)
    const3 = lambda g: (0, 0, 0)

    out = pl.pallas_call(
        _lenet_kernel,
        out_shape=jax.ShapeDtypeStruct((Bp, Opad), f32),
        grid=(grid_n,),
        in_specs=[
            pl.BlockSpec((26, Bt, 26), lambda g: (0, g, 0)),     # images [y, b, x]
            pl.BlockSpec((3, 26, 144), const3),                  # conv1 banded taps
            pl.BlockSpec((1, 144), const2),                      # conv1 bias (tiled)
            pl.BlockSpec((144, 72), const2),                     # pool1 even select
            pl.BlockSpec((144, 72), const2),                     # pool1 odd  select
            pl.BlockSpec((3, 72, 160), const3),                  # conv2 banded taps
            pl.BlockSpec((1, 160), const2),                      # conv2 bias (tiled)
            pl.BlockSpec((160, 80), const2),                     # pool2 even select
            pl.BlockSpec((160, 80), const2),                     # pool2 odd  select
            pl.BlockSpec((5, 80, 120), const3),                  # fc1 weight (re-laid-out)
            pl.BlockSpec((1, 120), const2),                      # fc1 bias
            pl.BlockSpec((120, Opad), const2),                   # fc2 weight (padded)
            pl.BlockSpec((1, Opad), const2),                     # fc2 bias (padded)
        ],
        out_specs=pl.BlockSpec((Bt, Opad), lambda g: (g, 0)),
        compiler_params=pltpu.CompilerParams(
            dimension_semantics=("parallel",)),                  # v7x: 2 TCs
    )(X, M1row, b1w, E1, O1, M2row, b2w, E2, O2, FC1, fb1, W2p, fb2)

    return out[:B, :outputsize]


# ------------------------------ pure-JAX reference ---------------------------

def reference_forward(params, x):
    dn = ('NCHW', 'OIHW', 'NCHW')
    a = lax.conv_general_dilated(x, params['w1'], (1, 1), 'VALID',
                                 dimension_numbers=dn)
    a = a + params['b1'][None, :, None, None]
    a = lax.reduce_window(a, -jnp.inf, lax.max, (1, 1, 2, 2), (1, 1, 2, 2),
                          'VALID')
    a = lax.conv_general_dilated(a, params['w2'], (1, 1), 'VALID',
                                 dimension_numbers=dn)
    a = a + params['b2'][None, :, None, None]
    a = lax.reduce_window(a, -jnp.inf, lax.max, (1, 1, 2, 2), (1, 1, 2, 2),
                          'VALID')
    a = a.reshape(a.shape[0], 16 * 5 * 5)
    a = jnp.maximum(a @ params['fc1_w'].T + params['fc1_b'], 0.0)
    return a @ params['fc2_w'].T + params['fc2_b']


def init_params(key, outputsize):
    def uinit(k, shape, fan_in):
        bound = 1.0 / jnp.sqrt(fan_in)
        return jax.random.uniform(k, shape, jnp.float32, -bound, bound)

    ks = jax.random.split(key, 8)
    return {
        'w1': uinit(ks[0], (6, 1, 3, 3), 1 * 3 * 3),
        'b1': uinit(ks[1], (6,), 1 * 3 * 3),
        'w2': uinit(ks[2], (16, 6, 3, 3), 6 * 3 * 3),
        'b2': uinit(ks[3], (16,), 6 * 3 * 3),
        'fc1_w': uinit(ks[4], (120, 400), 400),
        'fc1_b': uinit(ks[5], (120,), 400),
        'fc2_w': uinit(ks[6], (outputsize, 120), 120),
        'fc2_b': uinit(ks[7], (120,) if False else (outputsize,), 120),
    }


if __name__ == "__main__":
    key = jax.random.PRNGKey(0)
    k_param, k_x = jax.random.split(key)

    outputsize = 10
    params = init_params(k_param, outputsize)
    # 26x26 single-channel input so the flattened conv features match 400.
    x = jax.random.normal(k_x, (2, 1, 26, 26), dtype=jnp.float32)

    out = jax.jit(convolution_forward)(params, x)
    out = jax.block_until_ready(out)

    ref = reference_forward(params, x)
    assert out.shape == (2, outputsize)
    # bf16 matmul operands (f32 accumulation) vs. a pure-f32 reference:
    # observed error is O(1e-3); 1e-2 tolerance leaves a wide margin.
    assert jnp.allclose(out, ref, atol=1e-2, rtol=1e-2)

    print("KERNEL_OK")
</pallas_src>

<mosaic_0001>
module attributes {stable_mosaic.version = 11 : i64} {
  func.func @_lenet_kernel(%arg0: i32, %arg1: memref<26x8x26xbf16, #tpu.memory_space<vmem>>, %arg2: memref<3x26x144xbf16, #tpu.memory_space<vmem>>, %arg3: memref<1x144xf32, #tpu.memory_space<vmem>>, %arg4: memref<144x72xbf16, #tpu.memory_space<vmem>>, %arg5: memref<144x72xbf16, #tpu.memory_space<vmem>>, %arg6: memref<3x72x160xbf16, #tpu.memory_space<vmem>>, %arg7: memref<1x160xf32, #tpu.memory_space<vmem>>, %arg8: memref<160x80xbf16, #tpu.memory_space<vmem>>, %arg9: memref<160x80xbf16, #tpu.memory_space<vmem>>, %arg10: memref<5x80x120xbf16, #tpu.memory_space<vmem>>, %arg11: memref<1x120xf32, #tpu.memory_space<vmem>>, %arg12: memref<120x128xbf16, #tpu.memory_space<vmem>>, %arg13: memref<1x128xf32, #tpu.memory_space<vmem>>, %arg14: memref<8x128xf32, #tpu.memory_space<vmem>>) attributes {dimension_semantics = [#tpu.dimension_semantics<parallel>], iteration_bounds = array<i64: 2>, scalar_prefetch = 0 : i64, scratch_operands = 0 : i64, tpu.core_type = #tpu.core_type<tc>, window_params = [{transform_indices = @transform_0, window_bounds = array<i64: 26, 8, 26>}, {pipeline_mode = #tpu.pipeline_mode<synchronous>, transform_indices = @transform_1, window_bounds = array<i64: 3, 26, 144>}, {pipeline_mode = #tpu.pipeline_mode<synchronous>, transform_indices = @transform_2, window_bounds = array<i64: 1, 144>}, {pipeline_mode = #tpu.pipeline_mode<synchronous>, transform_indices = @transform_3, window_bounds = array<i64: 144, 72>}, {pipeline_mode = #tpu.pipeline_mode<synchronous>, transform_indices = @transform_4, window_bounds = array<i64: 144, 72>}, {pipeline_mode = #tpu.pipeline_mode<synchronous>, transform_indices = @transform_5, window_bounds = array<i64: 3, 72, 160>}, {pipeline_mode = #tpu.pipeline_mode<synchronous>, transform_indices = @transform_6, window_bounds = array<i64: 1, 160>}, {pipeline_mode = #tpu.pipeline_mode<synchronous>, transform_indices = @transform_7, window_bounds = array<i64: 160, 80>}, {pipeline_mode = #tpu.pipeline_mode<synchronous>, transform_indices = @transform_8, window_bounds = array<i64: 160, 80>}, {pipeline_mode = #tpu.pipeline_mode<synchronous>, transform_indices = @transform_9, window_bounds = array<i64: 5, 80, 120>}, {pipeline_mode = #tpu.pipeline_mode<synchronous>, transform_indices = @transform_10, window_bounds = array<i64: 1, 120>}, {pipeline_mode = #tpu.pipeline_mode<synchronous>, transform_indices = @transform_11, window_bounds = array<i64: 120, 128>}, {pipeline_mode = #tpu.pipeline_mode<synchronous>, transform_indices = @transform_12, window_bounds = array<i64: 1, 128>}, {transform_indices = @transform_13, window_bounds = array<i64: 8, 128>}]} {
    %c0 = arith.constant 0 : index
    %c0_0 = arith.constant 0 : index
    %0 = vector.load %arg3[%c0, %c0_0] : memref<1x144xf32, #tpu.memory_space<vmem>>, vector<1x144xf32>
    %1 = vector.shape_cast %0 : vector<1x144xf32> to vector<1x144xf32>
    %2 = vector.broadcast %1 : vector<1x144xf32> to vector<8x144xf32>
    %c0_1 = arith.constant 0 : index
    %c0_2 = arith.constant 0 : index
    %c0_3 = arith.constant 0 : index
    %3 = vector.load %arg1[%c0_1, %c0_2, %c0_3] : memref<26x8x26xbf16, #tpu.memory_space<vmem>>, vector<1x8x26xbf16>
    %4 = vector.shape_cast %3 : vector<1x8x26xbf16> to vector<8x26xbf16>
    %c0_4 = arith.constant 0 : index
    %c0_5 = arith.constant 0 : index
    %c0_6 = arith.constant 0 : index
    %5 = vector.load %arg2[%c0_4, %c0_5, %c0_6] : memref<3x26x144xbf16, #tpu.memory_space<vmem>>, vector<1x26x144xbf16>
    %6 = vector.shape_cast %5 : vector<1x26x144xbf16> to vector<26x144xbf16>
    %cst = arith.constant dense<0.000000e+00> : vector<8x144xf32>
    %7 = tpu.matmul %4, %6, %cst {dimension_numbers = #tpu.dot_dimension_numbers<[1], [0], [0], [1], [0, 0, 1, 1], [], []>} : vector<8x26xbf16>, vector<26x144xbf16>, vector<8x144xf32> -> vector<8x144xf32>
    %8 = arith.addf %2, %7 : vector<8x144xf32>
    %c1 = arith.constant 1 : index
    %c0_7 = arith.constant 0 : index
    %c0_8 = arith.constant 0 : index
    %9 = vector.load %arg1[%c1, %c0_7, %c0_8] : memref<26x8x26xbf16, #tpu.memory_space<vmem>>, vector<1x8x26xbf16>
    %10 = vector.shape_cast %9 : vector<1x8x26xbf16> to vector<8x26xbf16>
    %c1_9 = arith.constant 1 : index
    %c0_10 = arith.constant 0 : index
    %c0_11 = arith.constant 0 : index
    %11 = vector.load %arg2[%c1_9, %c0_10, %c0_11] : memref<3x26x144xbf16, #tpu.memory_space<vmem>>, vector<1x26x144xbf16>
    %12 = vector.shape_cast %11 : vector<1x26x144xbf16> to vector<26x144xbf16>
    %cst_12 = arith.constant dense<0.000000e+00> : vector<8x144xf32>
    %13 = tpu.matmul %10, %12, %cst_12 {dimension_numbers = #tpu.dot_dimension_numbers<[1], [0], [0], [1], [0, 0, 1, 1], [], []>} : vector<8x26xbf16>, vector<26x144xbf16>, vector<8x144xf32> -> vector<8x144xf32>
    %14 = arith.addf %8, %13 : vector<8x144xf32>
    %c2 = arith.constant 2 : index
    %c0_13 = arith.constant 0 : index
    %c0_14 = arith.constant 0 : index
    %15 = vector.load %arg1[%c2, %c0_13, %c0_14] : memref<26x8x26xbf16, #tpu.memory_space<vmem>>, vector<1x8x26xbf16>
    %16 = vector.shape_cast %15 : vector<1x8x26xbf16> to vector<8x26xbf16>
    %c2_15 = arith.constant 2 : index
    %c0_16 = arith.constant 0 : index
    %c0_17 = arith.constant 0 : index
    %17 = vector.load %arg2[%c2_15, %c0_16, %c0_17] : memref<3x26x144xbf16, #tpu.memory_space<vmem>>, vector<1x26x144xbf16>
    %18 = vector.shape_cast %17 : vector<1x26x144xbf16> to vector<26x144xbf16>
    %cst_18 = arith.constant dense<0.000000e+00> : vector<8x144xf32>
    %19 = tpu.matmul %16, %18, %cst_18 {dimension_numbers = #tpu.dot_dimension_numbers<[1], [0], [0], [1], [0, 0, 1, 1], [], []>} : vector<8x26xbf16>, vector<26x144xbf16>, vector<8x144xf32> -> vector<8x144xf32>
    %20 = arith.addf %14, %19 : vector<8x144xf32>
    %c0_19 = arith.constant 0 : index
    %c0_20 = arith.constant 0 : index
    %21 = vector.load %arg3[%c0_19, %c0_20] : memref<1x144xf32, #tpu.memory_space<vmem>>, vector<1x144xf32>
    %22 = vector.shape_cast %21 : vector<1x144xf32> to vector<1x144xf32>
    %23 = vector.broadcast %22 : vector<1x144xf32> to vector<8x144xf32>
    %c1_21 = arith.constant 1 : index
    %c0_22 = arith.constant 0 : index
    %c0_23 = arith.constant 0 : index
    %24 = vector.load %arg1[%c1_21, %c0_22, %c0_23] : memref<26x8x26xbf16, #tpu.memory_space<vmem>>, vector<1x8x26xbf16>
    %25 = vector.shape_cast %24 : vector<1x8x26xbf16> to vector<8x26xbf16>
    %c0_24 = arith.constant 0 : index
    %c0_25 = arith.constant 0 : index
    %c0_26 = arith.constant 0 : index
    %26 = vector.load %arg2[%c0_24, %c0_25, %c0_26] : memref<3x26x144xbf16, #tpu.memory_space<vmem>>, vector<1x26x144xbf16>
    %27 = vector.shape_cast %26 : vector<1x26x144xbf16> to vector<26x144xbf16>
    %cst_27 = arith.constant dense<0.000000e+00> : vector<8x144xf32>
    %28 = tpu.matmul %25, %27, %cst_27 {dimension_numbers = #tpu.dot_dimension_numbers<[1], [0], [0], [1], [0, 0, 1, 1], [], []>} : vector<8x26xbf16>, vector<26x144xbf16>, vector<8x144xf32> -> vector<8x144xf32>
    %29 = arith.addf %23, %28 : vector<8x144xf32>
    %c2_28 = arith.constant 2 : index
    %c0_29 = arith.constant 0 : index
    %c0_30 = arith.constant 0 : index
    %30 = vector.load %arg1[%c2_28, %c0_29, %c0_30] : memref<26x8x26xbf16, #tpu.memory_space<vmem>>, vector<1x8x26xbf16>
    %31 = vector.shape_cast %30 : vector<1x8x26xbf16> to vector<8x26xbf16>
    %c1_31 = arith.constant 1 : index
    %c0_32 = arith.constant 0 : index
    %c0_33 = arith.constant 0 : index
    %32 = vector.load %arg2[%c1_31, %c0_32, %c0_33] : memref<3x26x144xbf16, #tpu.memory_space<vmem>>, vector<1x26x144xbf16>
    %33 = vector.shape_cast %32 : vector<1x26x144xbf16> to vector<26x144xbf16>
    %cst_34 = arith.constant dense<0.000000e+00> : vector<8x144xf32>
    %34 = tpu.matmul %31, %33, %cst_34 {dimension_numbers = #tpu.dot_dimension_numbers<[1], [0], [0], [1], [0, 0, 1, 1], [], []>} : vector<8x26xbf16>, vector<26x144xbf16>, vector<8x144xf32> -> vector<8x144xf32>
    %35 = arith.addf %29, %34 : vector<8x144xf32>
    %c3 = arith.constant 3 : index
    %c0_35 = arith.constant 0 : index
    %c0_36 = arith.constant 0 : index
    %36 = vector.load %arg1[%c3, %c0_35, %c0_36] : memref<26x8x26xbf16, #tpu.memory_space<vmem>>, vector<1x8x26xbf16>
    %37 = vector.shape_cast %36 : vector<1x8x26xbf16> to vector<8x26xbf16>
    %c2_37 = arith.constant 2 : index
    %c0_38 = arith.constant 0 : index
    %c0_39 = arith.constant 0 : index
    %38 = vector.load %arg2[%c2_37, %c0_38, %c0_39] : memref<3x26x144xbf16, #tpu.memory_space<vmem>>, vector<1x26x144xbf16>
    %39 = vector.shape_cast %38 : vector<1x26x144xbf16> to vector<26x144xbf16>
    %cst_40 = arith.constant dense<0.000000e+00> : vector<8x144xf32>
    %40 = tpu.matmul %37, %39, %cst_40 {dimension_numbers = #tpu.dot_dimension_numbers<[1], [0], [0], [1], [0, 0, 1, 1], [], []>} : vector<8x26xbf16>, vector<26x144xbf16>, vector<8x144xf32> -> vector<8x144xf32>
    %41 = arith.addf %35, %40 : vector<8x144xf32>
    %42 = arith.maximumf %20, %41 : vector<8x144xf32>
    %43 = arith.truncf %42 : vector<8x144xf32> to vector<8x144xbf16>
    %c0_41 = arith.constant 0 : index
    %c0_42 = arith.constant 0 : index
    %44 = vector.load %arg4[%c0_41, %c0_42] : memref<144x72xbf16, #tpu.memory_space<vmem>>, vector<144x72xbf16>
    %cst_43 = arith.constant dense<0.000000e+00> : vector<8x72xf32>
    %45 = tpu.matmul %43, %44, %cst_43 {dimension_numbers = #tpu.dot_dimension_numbers<[1], [0], [0], [1], [0, 0, 1, 1], [], []>} : vector<8x144xbf16>, vector<144x72xbf16>, vector<8x72xf32> -> vector<8x72xf32>
    %c0_44 = arith.constant 0 : index
    %c0_45 = arith.constant 0 : index
    %46 = vector.load %arg5[%c0_44, %c0_45] : memref<144x72xbf16, #tpu.memory_space<vmem>>, vector<144x72xbf16>
    %cst_46 = arith.constant dense<0.000000e+00> : vector<8x72xf32>
    %47 = tpu.matmul %43, %46, %cst_46 {dimension_numbers = #tpu.dot_dimension_numbers<[1], [0], [0], [1], [0, 0, 1, 1], [], []>} : vector<8x144xbf16>, vector<144x72xbf16>, vector<8x72xf32> -> vector<8x72xf32>
    %48 = arith.maximumf %45, %47 : vector<8x72xf32>
    %49 = arith.truncf %48 : vector<8x72xf32> to vector<8x72xbf16>
    %c0_47 = arith.constant 0 : index
    %c0_48 = arith.constant 0 : index
    %50 = vector.load %arg3[%c0_47, %c0_48] : memref<1x144xf32, #tpu.memory_space<vmem>>, vector<1x144xf32>
    %51 = vector.shape_cast %50 : vector<1x144xf32> to vector<1x144xf32>
    %52 = vector.broadcast %51 : vector<1x144xf32> to vector<8x144xf32>
    %c2_49 = arith.constant 2 : index
    %c0_50 = arith.constant 0 : index
    %c0_51 = arith.constant 0 : index
    %53 = vector.load %arg1[%c2_49, %c0_50, %c0_51] : memref<26x8x26xbf16, #tpu.memory_space<vmem>>, vector<1x8x26xbf16>
    %54 = vector.shape_cast %53 : vector<1x8x26xbf16> to vector<8x26xbf16>
    %c0_52 = arith.constant 0 : index
    %c0_53 = arith.constant 0 : index
    %c0_54 = arith.constant 0 : index
    %55 = vector.load %arg2[%c0_52, %c0_53, %c0_54] : memref<3x26x144xbf16, #tpu.memory_space<vmem>>, vector<1x26x144xbf16>
    %56 = vector.shape_cast %55 : vector<1x26x144xbf16> to vector<26x144xbf16>
    %cst_55 = arith.constant dense<0.000000e+00> : vector<8x144xf32>
    %57 = tpu.matmul %54, %56, %cst_55 {dimension_numbers = #tpu.dot_dimension_numbers<[1], [0], [0], [1], [0, 0, 1, 1], [], []>} : vector<8x26xbf16>, vector<26x144xbf16>, vector<8x144xf32> -> vector<8x144xf32>
    %58 = arith.addf %52, %57 : vector<8x144xf32>
    %c3_56 = arith.constant 3 : index
    %c0_57 = arith.constant 0 : index
    %c0_58 = arith.constant 0 : index
    %59 = vector.load %arg1[%c3_56, %c0_57, %c0_58] : memref<26x8x26xbf16, #tpu.memory_space<vmem>>, vector<1x8x26xbf16>
    %60 = vector.shape_cast %59 : vector<1x8x26xbf16> to vector<8x26xbf16>
    %c1_59 = arith.constant 1 : index
    %c0_60 = arith.constant 0 : index
    %c0_61 = arith.constant 0 : index
    %61 = vector.load %arg2[%c1_59, %c0_60, %c0_61] : memref<3x26x144xbf16, #tpu.memory_space<vmem>>, vector<1x26x144xbf16>
    %62 = vector.shape_cast %61 : vector<1x26x144xbf16> to vector<26x144xbf16>
    %cst_62 = arith.constant dense<0.000000e+00> : vector<8x144xf32>
    %63 = tpu.matmul %60, %62, %cst_62 {dimension_numbers = #tpu.dot_dimension_numbers<[1], [0], [0], [1], [0, 0, 1, 1], [], []>} : vector<8x26xbf16>, vector<26x144xbf16>, vector<8x144xf32> -> vector<8x144xf32>
    %64 = arith.addf %58, %63 : vector<8x144xf32>
    %c4 = arith.constant 4 : index
    %c0_63 = arith.constant 0 : index
    %c0_64 = arith.constant 0 : index
    %65 = vector.load %arg1[%c4, %c0_63, %c0_64] : memref<26x8x26xbf16, #tpu.memory_space<vmem>>, vector<1x8x26xbf16>
    %66 = vector.shape_cast %65 : vector<1x8x26xbf16> to vector<8x26xbf16>
    %c2_65 = arith.constant 2 : index
    %c0_66 = arith.constant 0 : index
    %c0_67 = arith.constant 0 : index
    %67 = vector.load %arg2[%c2_65, %c0_66, %c0_67] : memref<3x26x144xbf16, #tpu.memory_space<vmem>>, vector<1x26x144xbf16>
    %68 = vector.shape_cast %67 : vector<1x26x144xbf16> to vector<26x144xbf16>
    %cst_68 = arith.constant dense<0.000000e+00> : vector<8x144xf32>
    %69 = tpu.matmul %66, %68, %cst_68 {dimension_numbers = #tpu.dot_dimension_numbers<[1], [0], [0], [1], [0, 0, 1, 1], [], []>} : vector<8x26xbf16>, vector<26x144xbf16>, vector<8x144xf32> -> vector<8x144xf32>
    %70 = arith.addf %64, %69 : vector<8x144xf32>
    %c0_69 = arith.constant 0 : index
    %c0_70 = arith.constant 0 : index
    %71 = vector.load %arg3[%c0_69, %c0_70] : memref<1x144xf32, #tpu.memory_space<vmem>>, vector<1x144xf32>
    %72 = vector.shape_cast %71 : vector<1x144xf32> to vector<1x144xf32>
    %73 = vector.broadcast %72 : vector<1x144xf32> to vector<8x144xf32>
    %c3_71 = arith.constant 3 : index
    %c0_72 = arith.constant 0 : index
    %c0_73 = arith.constant 0 : index
    %74 = vector.load %arg1[%c3_71, %c0_72, %c0_73] : memref<26x8x26xbf16, #tpu.memory_space<vmem>>, vector<1x8x26xbf16>
    %75 = vector.shape_cast %74 : vector<1x8x26xbf16> to vector<8x26xbf16>
    %c0_74 = arith.constant 0 : index
    %c0_75 = arith.constant 0 : index
    %c0_76 = arith.constant 0 : index
    %76 = vector.load %arg2[%c0_74, %c0_75, %c0_76] : memref<3x26x144xbf16, #tpu.memory_space<vmem>>, vector<1x26x144xbf16>
    %77 = vector.shape_cast %76 : vector<1x26x144xbf16> to vector<26x144xbf16>
    %cst_77 = arith.constant dense<0.000000e+00> : vector<8x144xf32>
    %78 = tpu.matmul %75, %77, %cst_77 {dimension_numbers = #tpu.dot_dimension_numbers<[1], [0], [0], [1], [0, 0, 1, 1], [], []>} : vector<8x26xbf16>, vector<26x144xbf16>, vector<8x144xf32> -> vector<8x144xf32>
    %79 = arith.addf %73, %78 : vector<8x144xf32>
    %c4_78 = arith.constant 4 : index
    %c0_79 = arith.constant 0 : index
    %c0_80 = arith.constant 0 : index
    %80 = vector.load %arg1[%c4_78, %c0_79, %c0_80] : memref<26x8x26xbf16, #tpu.memory_space<vmem>>, vector<1x8x26xbf16>
    %81 = vector.shape_cast %80 : vector<1x8x26xbf16> to vector<8x26xbf16>
    %c1_81 = arith.constant 1 : index
    %c0_82 = arith.constant 0 : index
    %c0_83 = arith.constant 0 : index
    %82 = vector.load %arg2[%c1_81, %c0_82, %c0_83] : memref<3x26x144xbf16, #tpu.memory_space<vmem>>, vector<1x26x144xbf16>
    %83 = vector.shape_cast %82 : vector<1x26x144xbf16> to vector<26x144xbf16>
    %cst_84 = arith.constant dense<0.000000e+00> : vector<8x144xf32>
    %84 = tpu.matmul %81, %83, %cst_84 {dimension_numbers = #tpu.dot_dimension_numbers<[1], [0], [0], [1], [0, 0, 1, 1], [], []>} : vector<8x26xbf16>, vector<26x144xbf16>, vector<8x144xf32> -> vector<8x144xf32>
    %85 = arith.addf %79, %84 : vector<8x144xf32>
    %c5 = arith.constant 5 : index
    %c0_85 = arith.constant 0 : index
    %c0_86 = arith.constant 0 : index
    %86 = vector.load %arg1[%c5, %c0_85, %c0_86] : memref<26x8x26xbf16, #tpu.memory_space<vmem>>, vector<1x8x26xbf16>
    %87 = vector.shape_cast %86 : vector<1x8x26xbf16> to vector<8x26xbf16>
    %c2_87 = arith.constant 2 : index
    %c0_88 = arith.constant 0 : index
    %c0_89 = arith.constant 0 : index
    %88 = vector.load %arg2[%c2_87, %c0_88, %c0_89] : memref<3x26x144xbf16, #tpu.memory_space<vmem>>, vector<1x26x144xbf16>
    %89 = vector.shape_cast %88 : vector<1x26x144xbf16> to vector<26x144xbf16>
    %cst_90 = arith.constant dense<0.000000e+00> : vector<8x144xf32>
    %90 = tpu.matmul %87, %89, %cst_90 {dimension_numbers = #tpu.dot_dimension_numbers<[1], [0], [0], [1], [0, 0, 1, 1], [], []>} : vector<8x26xbf16>, vector<26x144xbf16>, vector<8x144xf32> -> vector<8x144xf32>
    %91 = arith.addf %85, %90 : vector<8x144xf32>
    %92 = arith.maximumf %70, %91 : vector<8x144xf32>
    %93 = arith.truncf %92 : vector<8x144xf32> to vector<8x144xbf16>
    %c0_91 = arith.constant 0 : index
    %c0_92 = arith.constant 0 : index
    %94 = vector.load %arg4[%c0_91, %c0_92] : memref<144x72xbf16, #tpu.memory_space<vmem>>, vector<144x72xbf16>
    %cst_93 = arith.constant dense<0.000000e+00> : vector<8x72xf32>
    %95 = tpu.matmul %93, %94, %cst_93 {dimension_numbers = #tpu.dot_dimension_numbers<[1], [0], [0], [1], [0, 0, 1, 1], [], []>} : vector<8x144xbf16>, vector<144x72xbf16>, vector<8x72xf32> -> vector<8x72xf32>
    %c0_94 = arith.constant 0 : index
    %c0_95 = arith.constant 0 : index
    %96 = vector.load %arg5[%c0_94, %c0_95] : memref<144x72xbf16, #tpu.memory_space<vmem>>, vector<144x72xbf16>
    %cst_96 = arith.constant dense<0.000000e+00> : vector<8x72xf32>
    %97 = tpu.matmul %93, %96, %cst_96 {dimension_numbers = #tpu.dot_dimension_numbers<[1], [0], [0], [1], [0, 0, 1, 1], [], []>} : vector<8x144xbf16>, vector<144x72xbf16>, vector<8x72xf32> -> vector<8x72xf32>
    %98 = arith.maximumf %95, %97 : vector<8x72xf32>
    %99 = arith.truncf %98 : vector<8x72xf32> to vector<8x72xbf16>
    %c0_97 = arith.constant 0 : index
    %c0_98 = arith.constant 0 : index
    %100 = vector.load %arg3[%c0_97, %c0_98] : memref<1x144xf32, #tpu.memory_space<vmem>>, vector<1x144xf32>
    %101 = vector.shape_cast %100 : vector<1x144xf32> to vector<1x144xf32>
    %102 = vector.broadcast %101 : vector<1x144xf32> to vector<8x144xf32>
    %c4_99 = arith.constant 4 : index
    %c0_100 = arith.constant 0 : index
    %c0_101 = arith.constant 0 : index
    %103 = vector.load %arg1[%c4_99, %c0_100, %c0_101] : memref<26x8x26xbf16, #tpu.memory_space<vmem>>, vector<1x8x26xbf16>
    %104 = vector.shape_cast %103 : vector<1x8x26xbf16> to vector<8x26xbf16>
    %c0_102 = arith.constant 0 : index
    %c0_103 = arith.constant 0 : index
    %c0_104 = arith.constant 0 : index
    %105 = vector.load %arg2[%c0_102, %c0_103, %c0_104] : memref<3x26x144xbf16, #tpu.memory_space<vmem>>, vector<1x26x144xbf16>
    %106 = vector.shape_cast %105 : vector<1x26x144xbf16> to vector<26x144xbf16>
    %cst_105 = arith.constant dense<0.000000e+00> : vector<8x144xf32>
    %107 = tpu.matmul %104, %106, %cst_105 {dimension_numbers = #tpu.dot_dimension_numbers<[1], [0], [0], [1], [0, 0, 1, 1], [], []>} : vector<8x26xbf16>, vector<26x144xbf16>, vector<8x144xf32> -> vector<8x144xf32>
    %108 = arith.addf %102, %107 : vector<8x144xf32>
    %c5_106 = arith.constant 5 : index
    %c0_107 = arith.constant 0 : index
    %c0_108 = arith.constant 0 : index
    %109 = vector.load %arg1[%c5_106, %c0_107, %c0_108] : memref<26x8x26xbf16, #tpu.memory_space<vmem>>, vector<1x8x26xbf16>
    %110 = vector.shape_cast %109 : vector<1x8x26xbf16> to vector<8x26xbf16>
    %c1_109 = arith.constant 1 : index
    %c0_110 = arith.constant 0 : index
    %c0_111 = arith.constant 0 : index
    %111 = vector.load %arg2[%c1_109, %c0_110, %c0_111] : memref<3x26x144xbf16, #tpu.memory_space<vmem>>, vector<1x26x144xbf16>
    %112 = vector.shape_cast %111 : vector<1x26x144xbf16> to vector<26x144xbf16>
    %cst_112 = arith.constant dense<0.000000e+00> : vector<8x144xf32>
    %113 = tpu.matmul %110, %112, %cst_112 {dimension_numbers = #tpu.dot_dimension_numbers<[1], [0], [0], [1], [0, 0, 1, 1], [], []>} : vector<8x26xbf16>, vector<26x144xbf16>, vector<8x144xf32> -> vector<8x144xf32>
    %114 = arith.addf %108, %113 : vector<8x144xf32>
    %c6 = arith.constant 6 : index
    %c0_113 = arith.constant 0 : index
    %c0_114 = arith.constant 0 : index
    %115 = vector.load %arg1[%c6, %c0_113, %c0_114] : memref<26x8x26xbf16, #tpu.memory_space<vmem>>, vector<1x8x26xbf16>
    %116 = vector.shape_cast %115 : vector<1x8x26xbf16> to vector<8x26xbf16>
    %c2_115 = arith.constant 2 : index
    %c0_116 = arith.constant 0 : index
    %c0_117 = arith.constant 0 : index
    %117 = vector.load %arg2[%c2_115, %c0_116, %c0_117] : memref<3x26x144xbf16, #tpu.memory_space<vmem>>, vector<1x26x144xbf16>
    %118 = vector.shape_cast %117 : vector<1x26x144xbf16> to vector<26x144xbf16>
    %cst_118 = arith.constant dense<0.000000e+00> : vector<8x144xf32>
    %119 = tpu.matmul %116, %118, %cst_118 {dimension_numbers = #tpu.dot_dimension_numbers<[1], [0], [0], [1], [0, 0, 1, 1], [], []>} : vector<8x26xbf16>, vector<26x144xbf16>, vector<8x144xf32> -> vector<8x144xf32>
    %120 = arith.addf %114, %119 : vector<8x144xf32>
    %c0_119 = arith.constant 0 : index
    %c0_120 = arith.constant 0 : index
    %121 = vector.load %arg3[%c0_119, %c0_120] : memref<1x144xf32, #tpu.memory_space<vmem>>, vector<1x144xf32>
    %122 = vector.shape_cast %121 : vector<1x144xf32> to vector<1x144xf32>
    %123 = vector.broadcast %122 : vector<1x144xf32> to vector<8x144xf32>
    %c5_121 = arith.constant 5 : index
    %c0_122 = arith.constant 0 : index
    %c0_123 = arith.constant 0 : index
    %124 = vector.load %arg1[%c5_121, %c0_122, %c0_123] : memref<26x8x26xbf16, #tpu.memory_space<vmem>>, vector<1x8x26xbf16>
    %125 = vector.shape_cast %124 : vector<1x8x26xbf16> to vector<8x26xbf16>
    %c0_124 = arith.constant 0 : index
    %c0_125 = arith.constant 0 : index
    %c0_126 = arith.constant 0 : index
    %126 = vector.load %arg2[%c0_124, %c0_125, %c0_126] : memref<3x26x144xbf16, #tpu.memory_space<vmem>>, vector<1x26x144xbf16>
    %127 = vector.shape_cast %126 : vector<1x26x144xbf16> to vector<26x144xbf16>
    %cst_127 = arith.constant dense<0.000000e+00> : vector<8x144xf32>
    %128 = tpu.matmul %125, %127, %cst_127 {dimension_numbers = #tpu.dot_dimension_numbers<[1], [0], [0], [1], [0, 0, 1, 1], [], []>} : vector<8x26xbf16>, vector<26x144xbf16>, vector<8x144xf32> -> vector<8x144xf32>
    %129 = arith.addf %123, %128 : vector<8x144xf32>
    %c6_128 = arith.constant 6 : index
    %c0_129 = arith.constant 0 : index
    %c0_130 = arith.constant 0 : index
    %130 = vector.load %arg1[%c6_128, %c0_129, %c0_130] : memref<26x8x26xbf16, #tpu.memory_space<vmem>>, vector<1x8x26xbf16>
    %131 = vector.shape_cast %130 : vector<1x8x26xbf16> to vector<8x26xbf16>
    %c1_131 = arith.constant 1 : index
    %c0_132 = arith.constant 0 : index
    %c0_133 = arith.constant 0 : index
    %132 = vector.load %arg2[%c1_131, %c0_132, %c0_133] : memref<3x26x144xbf16, #tpu.memory_space<vmem>>, vector<1x26x144xbf16>
    %133 = vector.shape_cast %132 : vector<1x26x144xbf16> to vector<26x144xbf16>
    %cst_134 = arith.constant dense<0.000000e+00> : vector<8x144xf32>
    %134 = tpu.matmul %131, %133, %cst_134 {dimension_numbers = #tpu.dot_dimension_numbers<[1], [0], [0], [1], [0, 0, 1, 1], [], []>} : vector<8x26xbf16>, vector<26x144xbf16>, vector<8x144xf32> -> vector<8x144xf32>
    %135 = arith.addf %129, %134 : vector<8x144xf32>
    %c7 = arith.constant 7 : index
    %c0_135 = arith.constant 0 : index
    %c0_136 = arith.constant 0 : index
    %136 = vector.load %arg1[%c7, %c0_135, %c0_136] : memref<26x8x26xbf16, #tpu.memory_space<vmem>>, vector<1x8x26xbf16>
    %137 = vector.shape_cast %136 : vector<1x8x26xbf16> to vector<8x26xbf16>
    %c2_137 = arith.constant 2 : index
    %c0_138 = arith.constant 0 : index
    %c0_139 = arith.constant 0 : index
    %138 = vector.load %arg2[%c2_137, %c0_138, %c0_139] : memref<3x26x144xbf16, #tpu.memory_space<vmem>>, vector<1x26x144xbf16>
    %139 = vector.shape_cast %138 : vector<1x26x144xbf16> to vector<26x144xbf16>
    %cst_140 = arith.constant dense<0.000000e+00> : vector<8x144xf32>
    %140 = tpu.matmul %137, %139, %cst_140 {dimension_numbers = #tpu.dot_dimension_numbers<[1], [0], [0], [1], [0, 0, 1, 1], [], []>} : vector<8x26xbf16>, vector<26x144xbf16>, vector<8x144xf32> -> vector<8x144xf32>
    %141 = arith.addf %135, %140 : vector<8x144xf32>
    %142 = arith.maximumf %120, %141 : vector<8x144xf32>
    %143 = arith.truncf %142 : vector<8x144xf32> to vector<8x144xbf16>
    %c0_141 = arith.constant 0 : index
    %c0_142 = arith.constant 0 : index
    %144 = vector.load %arg4[%c0_141, %c0_142] : memref<144x72xbf16, #tpu.memory_space<vmem>>, vector<144x72xbf16>
    %cst_143 = arith.constant dense<0.000000e+00> : vector<8x72xf32>
    %145 = tpu.matmul %143, %144, %cst_143 {dimension_numbers = #tpu.dot_dimension_numbers<[1], [0], [0], [1], [0, 0, 1, 1], [], []>} : vector<8x144xbf16>, vector<144x72xbf16>, vector<8x72xf32> -> vector<8x72xf32>
    %c0_144 = arith.constant 0 : index
    %c0_145 = arith.constant 0 : index
    %146 = vector.load %arg5[%c0_144, %c0_145] : memref<144x72xbf16, #tpu.memory_space<vmem>>, vector<144x72xbf16>
    %cst_146 = arith.constant dense<0.000000e+00> : vector<8x72xf32>
    %147 = tpu.matmul %143, %146, %cst_146 {dimension_numbers = #tpu.dot_dimension_numbers<[1], [0], [0], [1], [0, 0, 1, 1], [], []>} : vector<8x144xbf16>, vector<144x72xbf16>, vector<8x72xf32> -> vector<8x72xf32>
    %148 = arith.maximumf %145, %147 : vector<8x72xf32>
    %149 = arith.truncf %148 : vector<8x72xf32> to vector<8x72xbf16>
    %c0_147 = arith.constant 0 : index
    %c0_148 = arith.constant 0 : index
    %150 = vector.load %arg3[%c0_147, %c0_148] : memref<1x144xf32, #tpu.memory_space<vmem>>, vector<1x144xf32>
    %151 = vector.shape_cast %150 : vector<1x144xf32> to vector<1x144xf32>
    %152 = vector.broadcast %151 : vector<1x144xf32> to vector<8x144xf32>
    %c6_149 = arith.constant 6 : index
    %c0_150 = arith.constant 0 : index
    %c0_151 = arith.constant 0 : index
    %153 = vector.load %arg1[%c6_149, %c0_150, %c0_151] : memref<26x8x26xbf16, #tpu.memory_space<vmem>>, vector<1x8x26xbf16>
    %154 = vector.shape_cast %153 : vector<1x8x26xbf16> to vector<8x26xbf16>
    %c0_152 = arith.constant 0 : index
    %c0_153 = arith.constant 0 : index
    %c0_154 = arith.constant 0 : index
    %155 = vector.load %arg2[%c0_152, %c0_153, %c0_154] : memref<3x26x144xbf16, #tpu.memory_space<vmem>>, vector<1x26x144xbf16>
    %156 = vector.shape_cast %155 : vector<1x26x144xbf16> to vector<26x144xbf16>
    %cst_155 = arith.constant dense<0.000000e+00> : vector<8x144xf32>
    %157 = tpu.matmul %154, %156, %cst_155 {dimension_numbers = #tpu.dot_dimension_numbers<[1], [0], [0], [1], [0, 0, 1, 1], [], []>} : vector<8x26xbf16>, vector<26x144xbf16>, vector<8x144xf32> -> vector<8x144xf32>
    %158 = arith.addf %152, %157 : vector<8x144xf32>
    %c7_156 = arith.constant 7 : index
    %c0_157 = arith.constant 0 : index
    %c0_158 = arith.constant 0 : index
    %159 = vector.load %arg1[%c7_156, %c0_157, %c0_158] : memref<26x8x26xbf16, #tpu.memory_space<vmem>>, vector<1x8x26xbf16>
    %160 = vector.shape_cast %159 : vector<1x8x26xbf16> to vector<8x26xbf16>
    %c1_159 = arith.constant 1 : index
    %c0_160 = arith.constant 0 : index
    %c0_161 = arith.constant 0 : index
    %161 = vector.load %arg2[%c1_159, %c0_160, %c0_161] : memref<3x26x144xbf16, #tpu.memory_space<vmem>>, vector<1x26x144xbf16>
    %162 = vector.shape_cast %161 : vector<1x26x144xbf16> to vector<26x144xbf16>
    %cst_162 = arith.constant dense<0.000000e+00> : vector<8x144xf32>
    %163 = tpu.matmul %160, %162, %cst_162 {dimension_numbers = #tpu.dot_dimension_numbers<[1], [0], [0], [1], [0, 0, 1, 1], [], []>} : vector<8x26xbf16>, vector<26x144xbf16>, vector<8x144xf32> -> vector<8x144xf32>
    %164 = arith.addf %158, %163 : vector<8x144xf32>
    %c8 = arith.constant 8 : index
    %c0_163 = arith.constant 0 : index
    %c0_164 = arith.constant 0 : index
    %165 = vector.load %arg1[%c8, %c0_163, %c0_164] : memref<26x8x26xbf16, #tpu.memory_space<vmem>>, vector<1x8x26xbf16>
    %166 = vector.shape_cast %165 : vector<1x8x26xbf16> to vector<8x26xbf16>
    %c2_165 = arith.constant 2 : index
    %c0_166 = arith.constant 0 : index
    %c0_167 = arith.constant 0 : index
    %167 = vector.load %arg2[%c2_165, %c0_166, %c0_167] : memref<3x26x144xbf16, #tpu.memory_space<vmem>>, vector<1x26x144xbf16>
    %168 = vector.shape_cast %167 : vector<1x26x144xbf16> to vector<26x144xbf16>
    %cst_168 = arith.constant dense<0.000000e+00> : vector<8x144xf32>
    %169 = tpu.matmul %166, %168, %cst_168 {dimension_numbers = #tpu.dot_dimension_numbers<[1], [0], [0], [1], [0, 0, 1, 1], [], []>} : vector<8x26xbf16>, vector<26x144xbf16>, vector<8x144xf32> -> vector<8x144xf32>
    %170 = arith.addf %164, %169 : vector<8x144xf32>
    %c0_169 = arith.constant 0 : index
    %c0_170 = arith.constant 0 : index
    %171 = vector.load %arg3[%c0_169, %c0_170] : memref<1x144xf32, #tpu.memory_space<vmem>>, vector<1x144xf32>
    %172 = vector.shape_cast %171 : vector<1x144xf32> to vector<1x144xf32>
    %173 = vector.broadcast %172 : vector<1x144xf32> to vector<8x144xf32>
    %c7_171 = arith.constant 7 : index
    %c0_172 = arith.constant 0 : index
    %c0_173 = arith.constant 0 : index
    %174 = vector.load %arg1[%c7_171, %c0_172, %c0_173] : memref<26x8x26xbf16, #tpu.memory_space<vmem>>, vector<1x8x26xbf16>
    %175 = vector.shape_cast %174 : vector<1x8x26xbf16> to vector<8x26xbf16>
    %c0_174 = arith.constant 0 : index
    %c0_175 = arith.constant 0 : index
    %c0_176 = arith.constant 0 : index
    %176 = vector.load %arg2[%c0_174, %c0_175, %c0_176] : memref<3x26x144xbf16, #tpu.memory_space<vmem>>, vector<1x26x144xbf16>
    %177 = vector.shape_cast %176 : vector<1x26x144xbf16> to vector<26x144xbf16>
    %cst_177 = arith.constant dense<0.000000e+00> : vector<8x144xf32>
    %178 = tpu.matmul %175, %177, %cst_177 {dimension_numbers = #tpu.dot_dimension_numbers<[1], [0], [0], [1], [0, 0, 1, 1], [], []>} : vector<8x26xbf16>, vector<26x144xbf16>, vector<8x144xf32> -> vector<8x144xf32>
    %179 = arith.addf %173, %178 : vector<8x144xf32>
    %c8_178 = arith.constant 8 : index
    %c0_179 = arith.constant 0 : index
    %c0_180 = arith.constant 0 : index
    %180 = vector.load %arg1[%c8_178, %c0_179, %c0_180] : memref<26x8x26xbf16, #tpu.memory_space<vmem>>, vector<1x8x26xbf16>
    %181 = vector.shape_cast %180 : vector<1x8x26xbf16> to vector<8x26xbf16>
    %c1_181 = arith.constant 1 : index
    %c0_182 = arith.constant 0 : index
    %c0_183 = arith.constant 0 : index
    %182 = vector.load %arg2[%c1_181, %c0_182, %c0_183] : memref<3x26x144xbf16, #tpu.memory_space<vmem>>, vector<1x26x144xbf16>
    %183 = vector.shape_cast %182 : vector<1x26x144xbf16> to vector<26x144xbf16>
    %cst_184 = arith.constant dense<0.000000e+00> : vector<8x144xf32>
    %184 = tpu.matmul %181, %183, %cst_184 {dimension_numbers = #tpu.dot_dimension_numbers<[1], [0], [0], [1], [0, 0, 1, 1], [], []>} : vector<8x26xbf16>, vector<26x144xbf16>, vector<8x144xf32> -> vector<8x144xf32>
    %185 = arith.addf %179, %184 : vector<8x144xf32>
    %c9 = arith.constant 9 : index
    %c0_185 = arith.constant 0 : index
    %c0_186 = arith.constant 0 : index
    %186 = vector.load %arg1[%c9, %c0_185, %c0_186] : memref<26x8x26xbf16, #tpu.memory_space<vmem>>, vector<1x8x26xbf16>
    %187 = vector.shape_cast %186 : vector<1x8x26xbf16> to vector<8x26xbf16>
    %c2_187 = arith.constant 2 : index
    %c0_188 = arith.constant 0 : index
    %c0_189 = arith.constant 0 : index
    %188 = vector.load %arg2[%c2_187, %c0_188, %c0_189] : memref<3x26x144xbf16, #tpu.memory_space<vmem>>, vector<1x26x144xbf16>
    %189 = vector.shape_cast %188 : vector<1x26x144xbf16> to vector<26x144xbf16>
    %cst_190 = arith.constant dense<0.000000e+00> : vector<8x144xf32>
    %190 = tpu.matmul %187, %189, %cst_190 {dimension_numbers = #tpu.dot_dimension_numbers<[1], [0], [0], [1], [0, 0, 1, 1], [], []>} : vector<8x26xbf16>, vector<26x144xbf16>, vector<8x144xf32> -> vector<8x144xf32>
    %191 = arith.addf %185, %190 : vector<8x144xf32>
    %192 = arith.maximumf %170, %191 : vector<8x144xf32>
    %193 = arith.truncf %192 : vector<8x144xf32> to vector<8x144xbf16>
    %c0_191 = arith.constant 0 : index
    %c0_192 = arith.constant 0 : index
    %194 = vector.load %arg4[%c0_191, %c0_192] : memref<144x72xbf16, #tpu.memory_space<vmem>>, vector<144x72xbf16>
    %cst_193 = arith.constant dense<0.000000e+00> : vector<8x72xf32>
    %195 = tpu.matmul %193, %194, %cst_193 {dimension_numbers = #tpu.dot_dimension_numbers<[1], [0], [0], [1], [0, 0, 1, 1], [], []>} : vector<8x144xbf16>, vector<144x72xbf16>, vector<8x72xf32> -> vector<8x72xf32>
    %c0_194 = arith.constant 0 : index
    %c0_195 = arith.constant 0 : index
    %196 = vector.load %arg5[%c0_194, %c0_195] : memref<144x72xbf16, #tpu.memory_space<vmem>>, vector<144x72xbf16>
    %cst_196 = arith.constant dense<0.000000e+00> : vector<8x72xf32>
    %197 = tpu.matmul %193, %196, %cst_196 {dimension_numbers = #tpu.dot_dimension_numbers<[1], [0], [0], [1], [0, 0, 1, 1], [], []>} : vector<8x144xbf16>, vector<144x72xbf16>, vector<8x72xf32> -> vector<8x72xf32>
    %198 = arith.maximumf %195, %197 : vector<8x72xf32>
    %199 = arith.truncf %198 : vector<8x72xf32> to vector<8x72xbf16>
    %c0_197 = arith.constant 0 : index
    %c0_198 = arith.constant 0 : index
    %200 = vector.load %arg3[%c0_197, %c0_198] : memref<1x144xf32, #tpu.memory_space<vmem>>, vector<1x144xf32>
    %201 = vector.shape_cast %200 : vector<1x144xf32> to vector<1x144xf32>
    %202 = vector.broadcast %201 : vector<1x144xf32> to vector<8x144xf32>
    %c8_199 = arith.constant 8 : index
    %c0_200 = arith.constant 0 : index
    %c0_201 = arith.constant 0 : index
    %203 = vector.load %arg1[%c8_199, %c0_200, %c0_201] : memref<26x8x26xbf16, #tpu.memory_space<vmem>>, vector<1x8x26xbf16>
    %204 = vector.shape_cast %203 : vector<1x8x26xbf16> to vector<8x26xbf16>
    %c0_202 = arith.constant 0 : index
    %c0_203 = arith.constant 0 : index
    %c0_204 = arith.constant 0 : index
    %205 = vector.load %arg2[%c0_202, %c0_203, %c0_204] : memref<3x26x144xbf16, #tpu.memory_space<vmem>>, vector<1x26x144xbf16>
    %206 = vector.shape_cast %205 : vector<1x26x144xbf16> to vector<26x144xbf16>
    %cst_205 = arith.constant dense<0.000000e+00> : vector<8x144xf32>
    %207 = tpu.matmul %204, %206, %cst_205 {dimension_numbers = #tpu.dot_dimension_numbers<[1], [0], [0], [1], [0, 0, 1, 1], [], []>} : vector<8x26xbf16>, vector<26x144xbf16>, vector<8x144xf32> -> vector<8x144xf32>
    %208 = arith.addf %202, %207 : vector<8x144xf32>
    %c9_206 = arith.constant 9 : index
    %c0_207 = arith.constant 0 : index
    %c0_208 = arith.constant 0 : index
    %209 = vector.load %arg1[%c9_206, %c0_207, %c0_208] : memref<26x8x26xbf16, #tpu.memory_space<vmem>>, vector<1x8x26xbf16>
    %210 = vector.shape_cast %209 : vector<1x8x26xbf16> to vector<8x26xbf16>
    %c1_209 = arith.constant 1 : index
    %c0_210 = arith.constant 0 : index
    %c0_211 = arith.constant 0 : index
    %211 = vector.load %arg2[%c1_209, %c0_210, %c0_211] : memref<3x26x144xbf16, #tpu.memory_space<vmem>>, vector<1x26x144xbf16>
    %212 = vector.shape_cast %211 : vector<1x26x144xbf16> to vector<26x144xbf16>
    %cst_212 = arith.constant dense<0.000000e+00> : vector<8x144xf32>
    %213 = tpu.matmul %210, %212, %cst_212 {dimension_numbers = #tpu.dot_dimension_numbers<[1], [0], [0], [1], [0, 0, 1, 1], [], []>} : vector<8x26xbf16>, vector<26x144xbf16>, vector<8x144xf32> -> vector<8x144xf32>
    %214 = arith.addf %208, %213 : vector<8x144xf32>
    %c10 = arith.constant 10 : index
    %c0_213 = arith.constant 0 : index
    %c0_214 = arith.constant 0 : index
    %215 = vector.load %arg1[%c10, %c0_213, %c0_214] : memref<26x8x26xbf16, #tpu.memory_space<vmem>>, vector<1x8x26xbf16>
    %216 = vector.shape_cast %215 : vector<1x8x26xbf16> to vector<8x26xbf16>
    %c2_215 = arith.constant 2 : index
    %c0_216 = arith.constant 0 : index
    %c0_217 = arith.constant 0 : index
    %217 = vector.load %arg2[%c2_215, %c0_216, %c0_217] : memref<3x26x144xbf16, #tpu.memory_space<vmem>>, vector<1x26x144xbf16>
    %218 = vector.shape_cast %217 : vector<1x26x144xbf16> to vector<26x144xbf16>
    %cst_218 = arith.constant dense<0.000000e+00> : vector<8x144xf32>
    %219 = tpu.matmul %216, %218, %cst_218 {dimension_numbers = #tpu.dot_dimension_numbers<[1], [0], [0], [1], [0, 0, 1, 1], [], []>} : vector<8x26xbf16>, vector<26x144xbf16>, vector<8x144xf32> -> vector<8x144xf32>
    %220 = arith.addf %214, %219 : vector<8x144xf32>
    %c0_219 = arith.constant 0 : index
    %c0_220 = arith.constant 0 : index
    %221 = vector.load %arg3[%c0_219, %c0_220] : memref<1x144xf32, #tpu.memory_space<vmem>>, vector<1x144xf32>
    %222 = vector.shape_cast %221 : vector<1x144xf32> to vector<1x144xf32>
    %223 = vector.broadcast %222 : vector<1x144xf32> to vector<8x144xf32>
    %c9_221 = arith.constant 9 : index
    %c0_222 = arith.constant 0 : index
    %c0_223 = arith.constant 0 : index
    %224 = vector.load %arg1[%c9_221, %c0_222, %c0_223] : memref<26x8x26xbf16, #tpu.memory_space<vmem>>, vector<1x8x26xbf16>
    %225 = vector.shape_cast %224 : vector<1x8x26xbf16> to vector<8x26xbf16>
    %c0_224 = arith.constant 0 : index
    %c0_225 = arith.constant 0 : index
    %c0_226 = arith.constant 0 : index
    %226 = vector.load %arg2[%c0_224, %c0_225, %c0_226] : memref<3x26x144xbf16, #tpu.memory_space<vmem>>, vector<1x26x144xbf16>
    %227 = vector.shape_cast %226 : vector<1x26x144xbf16> to vector<26x144xbf16>
    %cst_227 = arith.constant dense<0.000000e+00> : vector<8x144xf32>
    %228 = tpu.matmul %225, %227, %cst_227 {dimension_numbers = #tpu.dot_dimension_numbers<[1], [0], [0], [1], [0, 0, 1, 1], [], []>} : vector<8x26xbf16>, vector<26x144xbf16>, vector<8x144xf32> -> vector<8x144xf32>
    %229 = arith.addf %223, %228 : vector<8x144xf32>
    %c10_228 = arith.constant 10 : index
    %c0_229 = arith.constant 0 : index
    %c0_230 = arith.constant 0 : index
    %230 = vector.load %arg1[%c10_228, %c0_229, %c0_230] : memref<26x8x26xbf16, #tpu.memory_space<vmem>>, vector<1x8x26xbf16>
    %231 = vector.shape_cast %230 : vector<1x8x26xbf16> to vector<8x26xbf16>
    %c1_231 = arith.constant 1 : index
    %c0_232 = arith.constant 0 : index
    %c0_233 = arith.constant 0 : index
    %232 = vector.load %arg2[%c1_231, %c0_232, %c0_233] : memref<3x26x144xbf16, #tpu.memory_space<vmem>>, vector<1x26x144xbf16>
    %233 = vector.shape_cast %232 : vector<1x26x144xbf16> to vector<26x144xbf16>
    %cst_234 = arith.constant dense<0.000000e+00> : vector<8x144xf32>
    %234 = tpu.matmul %231, %233, %cst_234 {dimension_numbers = #tpu.dot_dimension_numbers<[1], [0], [0], [1], [0, 0, 1, 1], [], []>} : vector<8x26xbf16>, vector<26x144xbf16>, vector<8x144xf32> -> vector<8x144xf32>
    %235 = arith.addf %229, %234 : vector<8x144xf32>
    %c11 = arith.constant 11 : index
    %c0_235 = arith.constant 0 : index
    %c0_236 = arith.constant 0 : index
    %236 = vector.load %arg1[%c11, %c0_235, %c0_236] : memref<26x8x26xbf16, #tpu.memory_space<vmem>>, vector<1x8x26xbf16>
    %237 = vector.shape_cast %236 : vector<1x8x26xbf16> to vector<8x26xbf16>
    %c2_237 = arith.constant 2 : index
    %c0_238 = arith.constant 0 : index
    %c0_239 = arith.constant 0 : index
    %238 = vector.load %arg2[%c2_237, %c0_238, %c0_239] : memref<3x26x144xbf16, #tpu.memory_space<vmem>>, vector<1x26x144xbf16>
    %239 = vector.shape_cast %238 : vector<1x26x144xbf16> to vector<26x144xbf16>
    %cst_240 = arith.constant dense<0.000000e+00> : vector<8x144xf32>
    %240 = tpu.matmul %237, %239, %cst_240 {dimension_numbers = #tpu.dot_dimension_numbers<[1], [0], [0], [1], [0, 0, 1, 1], [], []>} : vector<8x26xbf16>, vector<26x144xbf16>, vector<8x144xf32> -> vector<8x144xf32>
    %241 = arith.addf %235, %240 : vector<8x144xf32>
    %242 = arith.maximumf %220, %241 : vector<8x144xf32>
    %243 = arith.truncf %242 : vector<8x144xf32> to vector<8x144xbf16>
    %c0_241 = arith.constant 0 : index
    %c0_242 = arith.constant 0 : index
    %244 = vector.load %arg4[%c0_241, %c0_242] : memref<144x72xbf16, #tpu.memory_space<vmem>>, vector<144x72xbf16>
    %cst_243 = arith.constant dense<0.000000e+00> : vector<8x72xf32>
    %245 = tpu.matmul %243, %244, %cst_243 {dimension_numbers = #tpu.dot_dimension_numbers<[1], [0], [0], [1], [0, 0, 1, 1], [], []>} : vector<8x144xbf16>, vector<144x72xbf16>, vector<8x72xf32> -> vector<8x72xf32>
    %c0_244 = arith.constant 0 : index
    %c0_245 = arith.constant 0 : index
    %246 = vector.load %arg5[%c0_244, %c0_245] : memref<144x72xbf16, #tpu.memory_space<vmem>>, vector<144x72xbf16>
    %cst_246 = arith.constant dense<0.000000e+00> : vector<8x72xf32>
    %247 = tpu.matmul %243, %246, %cst_246 {dimension_numbers = #tpu.dot_dimension_numbers<[1], [0], [0], [1], [0, 0, 1, 1], [], []>} : vector<8x144xbf16>, vector<144x72xbf16>, vector<8x72xf32> -> vector<8x72xf32>
    %248 = arith.maximumf %245, %247 : vector<8x72xf32>
    %249 = arith.truncf %248 : vector<8x72xf32> to vector<8x72xbf16>
    %c0_247 = arith.constant 0 : index
    %c0_248 = arith.constant 0 : index
    %250 = vector.load %arg3[%c0_247, %c0_248] : memref<1x144xf32, #tpu.memory_space<vmem>>, vector<1x144xf32>
    %251 = vector.shape_cast %250 : vector<1x144xf32> to vector<1x144xf32>
    %252 = vector.broadcast %251 : vector<1x144xf32> to vector<8x144xf32>
    %c10_249 = arith.constant 10 : index
    %c0_250 = arith.constant 0 : index
    %c0_251 = arith.constant 0 : index
    %253 = vector.load %arg1[%c10_249, %c0_250, %c0_251] : memref<26x8x26xbf16, #tpu.memory_space<vmem>>, vector<1x8x26xbf16>
    %254 = vector.shape_cast %253 : vector<1x8x26xbf16> to vector<8x26xbf16>
    %c0_252 = arith.constant 0 : index
    %c0_253 = arith.constant 0 : index
    %c0_254 = arith.constant 0 : index
    %255 = vector.load %arg2[%c0_252, %c0_253, %c0_254] : memref<3x26x144xbf16, #tpu.memory_space<vmem>>, vector<1x26x144xbf16>
    %256 = vector.shape_cast %255 : vector<1x26x144xbf16> to vector<26x144xbf16>
    %cst_255 = arith.constant dense<0.000000e+00> : vector<8x144xf32>
    %257 = tpu.matmul %254, %256, %cst_255 {dimension_numbers = #tpu.dot_dimension_numbers<[1], [0], [0], [1], [0, 0, 1, 1], [], []>} : vector<8x26xbf16>, vector<26x144xbf16>, vector<8x144xf32> -> vector<8x144xf32>
    %258 = arith.addf %252, %257 : vector<8x144xf32>
    %c11_256 = arith.constant 11 : index
    %c0_257 = arith.constant 0 : index
    %c0_258 = arith.constant 0 : index
    %259 = vector.load %arg1[%c11_256, %c0_257, %c0_258] : memref<26x8x26xbf16, #tpu.memory_space<vmem>>, vector<1x8x26xbf16>
    %260 = vector.shape_cast %259 : vector<1x8x26xbf16> to vector<8x26xbf16>
    %c1_259 = arith.constant 1 : index
    %c0_260 = arith.constant 0 : index
    %c0_261 = arith.constant 0 : index
    %261 = vector.load %arg2[%c1_259, %c0_260, %c0_261] : memref<3x26x144xbf16, #tpu.memory_space<vmem>>, vector<1x26x144xbf16>
    %262 = vector.shape_cast %261 : vector<1x26x144xbf16> to vector<26x144xbf16>
    %cst_262 = arith.constant dense<0.000000e+00> : vector<8x144xf32>
    %263 = tpu.matmul %260, %262, %cst_262 {dimension_numbers = #tpu.dot_dimension_numbers<[1], [0], [0], [1], [0, 0, 1, 1], [], []>} : vector<8x26xbf16>, vector<26x144xbf16>, vector<8x144xf32> -> vector<8x144xf32>
    %264 = arith.addf %258, %263 : vector<8x144xf32>
    %c12 = arith.constant 12 : index
    %c0_263 = arith.constant 0 : index
    %c0_264 = arith.constant 0 : index
    %265 = vector.load %arg1[%c12, %c0_263, %c0_264] : memref<26x8x26xbf16, #tpu.memory_space<vmem>>, vector<1x8x26xbf16>
    %266 = vector.shape_cast %265 : vector<1x8x26xbf16> to vector<8x26xbf16>
    %c2_265 = arith.constant 2 : index
    %c0_266 = arith.constant 0 : index
    %c0_267 = arith.constant 0 : index
    %267 = vector.load %arg2[%c2_265, %c0_266, %c0_267] : memref<3x26x144xbf16, #tpu.memory_space<vmem>>, vector<1x26x144xbf16>
    %268 = vector.shape_cast %267 : vector<1x26x144xbf16> to vector<26x144xbf16>
    %cst_268 = arith.constant dense<0.000000e+00> : vector<8x144xf32>
    %269 = tpu.matmul %266, %268, %cst_268 {dimension_numbers = #tpu.dot_dimension_numbers<[1], [0], [0], [1], [0, 0, 1, 1], [], []>} : vector<8x26xbf16>, vector<26x144xbf16>, vector<8x144xf32> -> vector<8x144xf32>
    %270 = arith.addf %264, %269 : vector<8x144xf32>
    %c0_269 = arith.constant 0 : index
    %c0_270 = arith.constant 0 : index
    %271 = vector.load %arg3[%c0_269, %c0_270] : memref<1x144xf32, #tpu.memory_space<vmem>>, vector<1x144xf32>
    %272 = vector.shape_cast %271 : vector<1x144xf32> to vector<1x144xf32>
    %273 = vector.broadcast %272 : vector<1x144xf32> to vector<8x144xf32>
    %c11_271 = arith.constant 11 : index
    %c0_272 = arith.constant 0 : index
    %c0_273 = arith.constant 0 : index
    %274 = vector.load %arg1[%c11_271, %c0_272, %c0_273] : memref<26x8x26xbf16, #tpu.memory_space<vmem>>, vector<1x8x26xbf16>
    %275 = vector.shape_cast %274 : vector<1x8x26xbf16> to vector<8x26xbf16>
    %c0_274 = arith.constant 0 : index
    %c0_275 = arith.constant 0 : index
    %c0_276 = arith.constant 0 : index
    %276 = vector.load %arg2[%c0_274, %c0_275, %c0_276] : memref<3x26x144xbf16, #tpu.memory_space<vmem>>, vector<1x26x144xbf16>
    %277 = vector.shape_cast %276 : vector<1x26x144xbf16> to vector<26x144xbf16>
    %cst_277 = arith.constant dense<0.000000e+00> : vector<8x144xf32>
    %278 = tpu.matmul %275, %277, %cst_277 {dimension_numbers = #tpu.dot_dimension_numbers<[1], [0], [0], [1], [0, 0, 1, 1], [], []>} : vector<8x26xbf16>, vector<26x144xbf16>, vector<8x144xf32> -> vector<8x144xf32>
    %279 = arith.addf %273, %278 : vector<8x144xf32>
    %c12_278 = arith.constant 12 : index
    %c0_279 = arith.constant 0 : index
    %c0_280 = arith.constant 0 : index
    %280 = vector.load %arg1[%c12_278, %c0_279, %c0_280] : memref<26x8x26xbf16, #tpu.memory_space<vmem>>, vector<1x8x26xbf16>
    %281 = vector.shape_cast %280 : vector<1x8x26xbf16> to vector<8x26xbf16>
    %c1_281 = arith.constant 1 : index
    %c0_282 = arith.constant 0 : index
    %c0_283 = arith.constant 0 : index
    %282 = vector.load %arg2[%c1_281, %c0_282, %c0_283] : memref<3x26x144xbf16, #tpu.memory_space<vmem>>, vector<1x26x144xbf16>
    %283 = vector.shape_cast %282 : vector<1x26x144xbf16> to vector<26x144xbf16>
    %cst_284 = arith.constant dense<0.000000e+00> : vector<8x144xf32>
    %284 = tpu.matmul %281, %283, %cst_284 {dimension_numbers = #tpu.dot_dimension_numbers<[1], [0], [0], [1], [0, 0, 1, 1], [], []>} : vector<8x26xbf16>, vector<26x144xbf16>, vector<8x144xf32> -> vector<8x144xf32>
    %285 = arith.addf %279, %284 : vector<8x144xf32>
    %c13 = arith.constant 13 : index
    %c0_285 = arith.constant 0 : index
    %c0_286 = arith.constant 0 : index
    %286 = vector.load %arg1[%c13, %c0_285, %c0_286] : memref<26x8x26xbf16, #tpu.memory_space<vmem>>, vector<1x8x26xbf16>
    %287 = vector.shape_cast %286 : vector<1x8x26xbf16> to vector<8x26xbf16>
    %c2_287 = arith.constant 2 : index
    %c0_288 = arith.constant 0 : index
    %c0_289 = arith.constant 0 : index
    %288 = vector.load %arg2[%c2_287, %c0_288, %c0_289] : memref<3x26x144xbf16, #tpu.memory_space<vmem>>, vector<1x26x144xbf16>
    %289 = vector.shape_cast %288 : vector<1x26x144xbf16> to vector<26x144xbf16>
    %cst_290 = arith.constant dense<0.000000e+00> : vector<8x144xf32>
    %290 = tpu.matmul %287, %289, %cst_290 {dimension_numbers = #tpu.dot_dimension_numbers<[1], [0], [0], [1], [0, 0, 1, 1], [], []>} : vector<8x26xbf16>, vector<26x144xbf16>, vector<8x144xf32> -> vector<8x144xf32>
    %291 = arith.addf %285, %290 : vector<8x144xf32>
    %292 = arith.maximumf %270, %291 : vector<8x144xf32>
    %293 = arith.truncf %292 : vector<8x144xf32> to vector<8x144xbf16>
    %c0_291 = arith.constant 0 : index
    %c0_292 = arith.constant 0 : index
    %294 = vector.load %arg4[%c0_291, %c0_292] : memref<144x72xbf16, #tpu.memory_space<vmem>>, vector<144x72xbf16>
    %cst_293 = arith.constant dense<0.000000e+00> : vector<8x72xf32>
    %295 = tpu.matmul %293, %294, %cst_293 {dimension_numbers = #tpu.dot_dimension_numbers<[1], [0], [0], [1], [0, 0, 1, 1], [], []>} : vector<8x144xbf16>, vector<144x72xbf16>, vector<8x72xf32> -> vector<8x72xf32>
    %c0_294 = arith.constant 0 : index
    %c0_295 = arith.constant 0 : index
    %296 = vector.load %arg5[%c0_294, %c0_295] : memref<144x72xbf16, #tpu.memory_space<vmem>>, vector<144x72xbf16>
    %cst_296 = arith.constant dense<0.000000e+00> : vector<8x72xf32>
    %297 = tpu.matmul %293, %296, %cst_296 {dimension_numbers = #tpu.dot_dimension_numbers<[1], [0], [0], [1], [0, 0, 1, 1], [], []>} : vector<8x144xbf16>, vector<144x72xbf16>, vector<8x72xf32> -> vector<8x72xf32>
    %298 = arith.maximumf %295, %297 : vector<8x72xf32>
    %299 = arith.truncf %298 : vector<8x72xf32> to vector<8x72xbf16>
    %c0_297 = arith.constant 0 : index
    %c0_298 = arith.constant 0 : index
    %300 = vector.load %arg3[%c0_297, %c0_298] : memref<1x144xf32, #tpu.memory_space<vmem>>, vector<1x144xf32>
    %301 = vector.shape_cast %300 : vector<1x144xf32> to vector<1x144xf32>
    %302 = vector.broadcast %301 : vector<1x144xf32> to vector<8x144xf32>
    %c12_299 = arith.constant 12 : index
    %c0_300 = arith.constant 0 : index
    %c0_301 = arith.constant 0 : index
    %303 = vector.load %arg1[%c12_299, %c0_300, %c0_301] : memref<26x8x26xbf16, #tpu.memory_space<vmem>>, vector<1x8x26xbf16>
    %304 = vector.shape_cast %303 : vector<1x8x26xbf16> to vector<8x26xbf16>
    %c0_302 = arith.constant 0 : index
    %c0_303 = arith.constant 0 : index
    %c0_304 = arith.constant 0 : index
    %305 = vector.load %arg2[%c0_302, %c0_303, %c0_304] : memref<3x26x144xbf16, #tpu.memory_space<vmem>>, vector<1x26x144xbf16>
    %306 = vector.shape_cast %305 : vector<1x26x144xbf16> to vector<26x144xbf16>
    %cst_305 = arith.constant dense<0.000000e+00> : vector<8x144xf32>
    %307 = tpu.matmul %304, %306, %cst_305 {dimension_numbers = #tpu.dot_dimension_numbers<[1], [0], [0], [1], [0, 0, 1, 1], [], []>} : vector<8x26xbf16>, vector<26x144xbf16>, vector<8x144xf32> -> vector<8x144xf32>
    %308 = arith.addf %302, %307 : vector<8x144xf32>
    %c13_306 = arith.constant 13 : index
    %c0_307 = arith.constant 0 : index
    %c0_308 = arith.constant 0 : index
    %309 = vector.load %arg1[%c13_306, %c0_307, %c0_308] : memref<26x8x26xbf16, #tpu.memory_space<vmem>>, vector<1x8x26xbf16>
    %310 = vector.shape_cast %309 : vector<1x8x26xbf16> to vector<8x26xbf16>
    %c1_309 = arith.constant 1 : index
    %c0_310 = arith.constant 0 : index
    %c0_311 = arith.constant 0 : index
    %311 = vector.load %arg2[%c1_309, %c0_310, %c0_311] : memref<3x26x144xbf16, #tpu.memory_space<vmem>>, vector<1x26x144xbf16>
    %312 = vector.shape_cast %311 : vector<1x26x144xbf16> to vector<26x144xbf16>
    %cst_312 = arith.constant dense<0.000000e+00> : vector<8x144xf32>
    %313 = tpu.matmul %310, %312, %cst_312 {dimension_numbers = #tpu.dot_dimension_numbers<[1], [0], [0], [1], [0, 0, 1, 1], [], []>} : vector<8x26xbf16>, vector<26x144xbf16>, vector<8x144xf32> -> vector<8x144xf32>
    %314 = arith.addf %308, %313 : vector<8x144xf32>
    %c14 = arith.constant 14 : index
    %c0_313 = arith.constant 0 : index
    %c0_314 = arith.constant 0 : index
    %315 = vector.load %arg1[%c14, %c0_313, %c0_314] : memref<26x8x26xbf16, #tpu.memory_space<vmem>>, vector<1x8x26xbf16>
    %316 = vector.shape_cast %315 : vector<1x8x26xbf16> to vector<8x26xbf16>
    %c2_315 = arith.constant 2 : index
    %c0_316 = arith.constant 0 : index
    %c0_317 = arith.constant 0 : index
    %317 = vector.load %arg2[%c2_315, %c0_316, %c0_317] : memref<3x26x144xbf16, #tpu.memory_space<vmem>>, vector<1x26x144xbf16>
    %318 = vector.shape_cast %317 : vector<1x26x144xbf16> to vector<26x144xbf16>
    %cst_318 = arith.constant dense<0.000000e+00> : vector<8x144xf32>
    %319 = tpu.matmul %316, %318, %cst_318 {dimension_numbers = #tpu.dot_dimension_numbers<[1], [0], [0], [1], [0, 0, 1, 1], [], []>} : vector<8x26xbf16>, vector<26x144xbf16>, vector<8x144xf32> -> vector<8x144xf32>
    %320 = arith.addf %314, %319 : vector<8x144xf32>
    %c0_319 = arith.constant 0 : index
    %c0_320 = arith.constant 0 : index
    %321 = vector.load %arg3[%c0_319, %c0_320] : memref<1x144xf32, #tpu.memory_space<vmem>>, vector<1x144xf32>
    %322 = vector.shape_cast %321 : vector<1x144xf32> to vector<1x144xf32>
    %323 = vector.broadcast %322 : vector<1x144xf32> to vector<8x144xf32>
    %c13_321 = arith.constant 13 : index
    %c0_322 = arith.constant 0 : index
    %c0_323 = arith.constant 0 : index
    %324 = vector.load %arg1[%c13_321, %c0_322, %c0_323] : memref<26x8x26xbf16, #tpu.memory_space<vmem>>, vector<1x8x26xbf16>
    %325 = vector.shape_cast %324 : vector<1x8x26xbf16> to vector<8x26xbf16>
    %c0_324 = arith.constant 0 : index
    %c0_325 = arith.constant 0 : index
    %c0_326 = arith.constant 0 : index
    %326 = vector.load %arg2[%c0_324, %c0_325, %c0_326] : memref<3x26x144xbf16, #tpu.memory_space<vmem>>, vector<1x26x144xbf16>
    %327 = vector.shape_cast %326 : vector<1x26x144xbf16> to vector<26x144xbf16>
    %cst_327 = arith.constant dense<0.000000e+00> : vector<8x144xf32>
    %328 = tpu.matmul %325, %327, %cst_327 {dimension_numbers = #tpu.dot_dimension_numbers<[1], [0], [0], [1], [0, 0, 1, 1], [], []>} : vector<8x26xbf16>, vector<26x144xbf16>, vector<8x144xf32> -> vector<8x144xf32>
    %329 = arith.addf %323, %328 : vector<8x144xf32>
    %c14_328 = arith.constant 14 : index
    %c0_329 = arith.constant 0 : index
    %c0_330 = arith.constant 0 : index
    %330 = vector.load %arg1[%c14_328, %c0_329, %c0_330] : memref<26x8x26xbf16, #tpu.memory_space<vmem>>, vector<1x8x26xbf16>
    %331 = vector.shape_cast %330 : vector<1x8x26xbf16> to vector<8x26xbf16>
    %c1_331 = arith.constant 1 : index
    %c0_332 = arith.constant 0 : index
    %c0_333 = arith.constant 0 : index
    %332 = vector.load %arg2[%c1_331, %c0_332, %c0_333] : memref<3x26x144xbf16, #tpu.memory_space<vmem>>, vector<1x26x144xbf16>
    %333 = vector.shape_cast %332 : vector<1x26x144xbf16> to vector<26x144xbf16>
    %cst_334 = arith.constant dense<0.000000e+00> : vector<8x144xf32>
    %334 = tpu.matmul %331, %333, %cst_334 {dimension_numbers = #tpu.dot_dimension_numbers<[1], [0], [0], [1], [0, 0, 1, 1], [], []>} : vector<8x26xbf16>, vector<26x144xbf16>, vector<8x144xf32> -> vector<8x144xf32>
    %335 = arith.addf %329, %334 : vector<8x144xf32>
    %c15 = arith.constant 15 : index
    %c0_335 = arith.constant 0 : index
    %c0_336 = arith.constant 0 : index
    %336 = vector.load %arg1[%c15, %c0_335, %c0_336] : memref<26x8x26xbf16, #tpu.memory_space<vmem>>, vector<1x8x26xbf16>
    %337 = vector.shape_cast %336 : vector<1x8x26xbf16> to vector<8x26xbf16>
    %c2_337 = arith.constant 2 : index
    %c0_338 = arith.constant 0 : index
    %c0_339 = arith.constant 0 : index
    %338 = vector.load %arg2[%c2_337, %c0_338, %c0_339] : memref<3x26x144xbf16, #tpu.memory_space<vmem>>, vector<1x26x144xbf16>
    %339 = vector.shape_cast %338 : vector<1x26x144xbf16> to vector<26x144xbf16>
    %cst_340 = arith.constant dense<0.000000e+00> : vector<8x144xf32>
    %340 = tpu.matmul %337, %339, %cst_340 {dimension_numbers = #tpu.dot_dimension_numbers<[1], [0], [0], [1], [0, 0, 1, 1], [], []>} : vector<8x26xbf16>, vector<26x144xbf16>, vector<8x144xf32> -> vector<8x144xf32>
    %341 = arith.addf %335, %340 : vector<8x144xf32>
    %342 = arith.maximumf %320, %341 : vector<8x144xf32>
    %343 = arith.truncf %342 : vector<8x144xf32> to vector<8x144xbf16>
    %c0_341 = arith.constant 0 : index
    %c0_342 = arith.constant 0 : index
    %344 = vector.load %arg4[%c0_341, %c0_342] : memref<144x72xbf16, #tpu.memory_space<vmem>>, vector<144x72xbf16>
    %cst_343 = arith.constant dense<0.000000e+00> : vector<8x72xf32>
    %345 = tpu.matmul %343, %344, %cst_343 {dimension_numbers = #tpu.dot_dimension_numbers<[1], [0], [0], [1], [0, 0, 1, 1], [], []>} : vector<8x144xbf16>, vector<144x72xbf16>, vector<8x72xf32> -> vector<8x72xf32>
    %c0_344 = arith.constant 0 : index
    %c0_345 = arith.constant 0 : index
    %346 = vector.load %arg5[%c0_344, %c0_345] : memref<144x72xbf16, #tpu.memory_space<vmem>>, vector<144x72xbf16>
    %cst_346 = arith.constant dense<0.000000e+00> : vector<8x72xf32>
    %347 = tpu.matmul %343, %346, %cst_346 {dimension_numbers = #tpu.dot_dimension_numbers<[1], [0], [0], [1], [0, 0, 1, 1], [], []>} : vector<8x144xbf16>, vector<144x72xbf16>, vector<8x72xf32> -> vector<8x72xf32>
    %348 = arith.maximumf %345, %347 : vector<8x72xf32>
    %349 = arith.truncf %348 : vector<8x72xf32> to vector<8x72xbf16>
    %c0_347 = arith.constant 0 : index
    %c0_348 = arith.constant 0 : index
    %350 = vector.load %arg3[%c0_347, %c0_348] : memref<1x144xf32, #tpu.memory_space<vmem>>, vector<1x144xf32>
    %351 = vector.shape_cast %350 : vector<1x144xf32> to vector<1x144xf32>
    %352 = vector.broadcast %351 : vector<1x144xf32> to vector<8x144xf32>
    %c14_349 = arith.constant 14 : index
    %c0_350 = arith.constant 0 : index
    %c0_351 = arith.constant 0 : index
    %353 = vector.load %arg1[%c14_349, %c0_350, %c0_351] : memref<26x8x26xbf16, #tpu.memory_space<vmem>>, vector<1x8x26xbf16>
    %354 = vector.shape_cast %353 : vector<1x8x26xbf16> to vector<8x26xbf16>
    %c0_352 = arith.constant 0 : index
    %c0_353 = arith.constant 0 : index
    %c0_354 = arith.constant 0 : index
    %355 = vector.load %arg2[%c0_352, %c0_353, %c0_354] : memref<3x26x144xbf16, #tpu.memory_space<vmem>>, vector<1x26x144xbf16>
    %356 = vector.shape_cast %355 : vector<1x26x144xbf16> to vector<26x144xbf16>
    %cst_355 = arith.constant dense<0.000000e+00> : vector<8x144xf32>
    %357 = tpu.matmul %354, %356, %cst_355 {dimension_numbers = #tpu.dot_dimension_numbers<[1], [0], [0], [1], [0, 0, 1, 1], [], []>} : vector<8x26xbf16>, vector<26x144xbf16>, vector<8x144xf32> -> vector<8x144xf32>
    %358 = arith.addf %352, %357 : vector<8x144xf32>
    %c15_356 = arith.constant 15 : index
    %c0_357 = arith.constant 0 : index
    %c0_358 = arith.constant 0 : index
    %359 = vector.load %arg1[%c15_356, %c0_357, %c0_358] : memref<26x8x26xbf16, #tpu.memory_space<vmem>>, vector<1x8x26xbf16>
    %360 = vector.shape_cast %359 : vector<1x8x26xbf16> to vector<8x26xbf16>
    %c1_359 = arith.constant 1 : index
    %c0_360 = arith.constant 0 : index
    %c0_361 = arith.constant 0 : index
    %361 = vector.load %arg2[%c1_359, %c0_360, %c0_361] : memref<3x26x144xbf16, #tpu.memory_space<vmem>>, vector<1x26x144xbf16>
    %362 = vector.shape_cast %361 : vector<1x26x144xbf16> to vector<26x144xbf16>
    %cst_362 = arith.constant dense<0.000000e+00> : vector<8x144xf32>
    %363 = tpu.matmul %360, %362, %cst_362 {dimension_numbers = #tpu.dot_dimension_numbers<[1], [0], [0], [1], [0, 0, 1, 1], [], []>} : vector<8x26xbf16>, vector<26x144xbf16>, vector<8x144xf32> -> vector<8x144xf32>
    %364 = arith.addf %358, %363 : vector<8x144xf32>
    %c16 = arith.constant 16 : index
    %c0_363 = arith.constant 0 : index
    %c0_364 = arith.constant 0 : index
    %365 = vector.load %arg1[%c16, %c0_363, %c0_364] : memref<26x8x26xbf16, #tpu.memory_space<vmem>>, vector<1x8x26xbf16>
    %366 = vector.shape_cast %365 : vector<1x8x26xbf16> to vector<8x26xbf16>
    %c2_365 = arith.constant 2 : index
    %c0_366 = arith.constant 0 : index
    %c0_367 = arith.constant 0 : index
    %367 = vector.load %arg2[%c2_365, %c0_366, %c0_367] : memref<3x26x144xbf16, #tpu.memory_space<vmem>>, vector<1x26x144xbf16>
    %368 = vector.shape_cast %367 : vector<1x26x144xbf16> to vector<26x144xbf16>
    %cst_368 = arith.constant dense<0.000000e+00> : vector<8x144xf32>
    %369 = tpu.matmul %366, %368, %cst_368 {dimension_numbers = #tpu.dot_dimension_numbers<[1], [0], [0], [1], [0, 0, 1, 1], [], []>} : vector<8x26xbf16>, vector<26x144xbf16>, vector<8x144xf32> -> vector<8x144xf32>
    %370 = arith.addf %364, %369 : vector<8x144xf32>
    %c0_369 = arith.constant 0 : index
    %c0_370 = arith.constant 0 : index
    %371 = vector.load %arg3[%c0_369, %c0_370] : memref<1x144xf32, #tpu.memory_space<vmem>>, vector<1x144xf32>
    %372 = vector.shape_cast %371 : vector<1x144xf32> to vector<1x144xf32>
    %373 = vector.broadcast %372 : vector<1x144xf32> to vector<8x144xf32>
    %c15_371 = arith.constant 15 : index
    %c0_372 = arith.constant 0 : index
    %c0_373 = arith.constant 0 : index
    %374 = vector.load %arg1[%c15_371, %c0_372, %c0_373] : memref<26x8x26xbf16, #tpu.memory_space<vmem>>, vector<1x8x26xbf16>
    %375 = vector.shape_cast %374 : vector<1x8x26xbf16> to vector<8x26xbf16>
    %c0_374 = arith.constant 0 : index
    %c0_375 = arith.constant 0 : index
    %c0_376 = arith.constant 0 : index
    %376 = vector.load %arg2[%c0_374, %c0_375, %c0_376] : memref<3x26x144xbf16, #tpu.memory_space<vmem>>, vector<1x26x144xbf16>
    %377 = vector.shape_cast %376 : vector<1x26x144xbf16> to vector<26x144xbf16>
    %cst_377 = arith.constant dense<0.000000e+00> : vector<8x144xf32>
    %378 = tpu.matmul %375, %377, %cst_377 {dimension_numbers = #tpu.dot_dimension_numbers<[1], [0], [0], [1], [0, 0, 1, 1], [], []>} : vector<8x26xbf16>, vector<26x144xbf16>, vector<8x144xf32> -> vector<8x144xf32>
    %379 = arith.addf %373, %378 : vector<8x144xf32>
    %c16_378 = arith.constant 16 : index
    %c0_379 = arith.constant 0 : index
    %c0_380 = arith.constant 0 : index
    %380 = vector.load %arg1[%c16_378, %c0_379, %c0_380] : memref<26x8x26xbf16, #tpu.memory_space<vmem>>, vector<1x8x26xbf16>
    %381 = vector.shape_cast %380 : vector<1x8x26xbf16> to vector<8x26xbf16>
    %c1_381 = arith.constant 1 : index
    %c0_382 = arith.constant 0 : index
    %c0_383 = arith.constant 0 : index
    %382 = vector.load %arg2[%c1_381, %c0_382, %c0_383] : memref<3x26x144xbf16, #tpu.memory_space<vmem>>, vector<1x26x144xbf16>
    %383 = vector.shape_cast %382 : vector<1x26x144xbf16> to vector<26x144xbf16>
    %cst_384 = arith.constant dense<0.000000e+00> : vector<8x144xf32>
    %384 = tpu.matmul %381, %383, %cst_384 {dimension_numbers = #tpu.dot_dimension_numbers<[1], [0], [0], [1], [0, 0, 1, 1], [], []>} : vector<8x26xbf16>, vector<26x144xbf16>, vector<8x144xf32> -> vector<8x144xf32>
    %385 = arith.addf %379, %384 : vector<8x144xf32>
    %c17 = arith.constant 17 : index
    %c0_385 = arith.constant 0 : index
    %c0_386 = arith.constant 0 : index
    %386 = vector.load %arg1[%c17, %c0_385, %c0_386] : memref<26x8x26xbf16, #tpu.memory_space<vmem>>, vector<1x8x26xbf16>
    %387 = vector.shape_cast %386 : vector<1x8x26xbf16> to vector<8x26xbf16>
    %c2_387 = arith.constant 2 : index
    %c0_388 = arith.constant 0 : index
    %c0_389 = arith.constant 0 : index
    %388 = vector.load %arg2[%c2_387, %c0_388, %c0_389] : memref<3x26x144xbf16, #tpu.memory_space<vmem>>, vector<1x26x144xbf16>
    %389 = vector.shape_cast %388 : vector<1x26x144xbf16> to vector<26x144xbf16>
    %cst_390 = arith.constant dense<0.000000e+00> : vector<8x144xf32>
    %390 = tpu.matmul %387, %389, %cst_390 {dimension_numbers = #tpu.dot_dimension_numbers<[1], [0], [0], [1], [0, 0, 1, 1], [], []>} : vector<8x26xbf16>, vector<26x144xbf16>, vector<8x144xf32> -> vector<8x144xf32>
    %391 = arith.addf %385, %390 : vector<8x144xf32>
    %392 = arith.maximumf %370, %391 : vector<8x144xf32>
    %393 = arith.truncf %392 : vector<8x144xf32> to vector<8x144xbf16>
    %c0_391 = arith.constant 0 : index
    %c0_392 = arith.constant 0 : index
    %394 = vector.load %arg4[%c0_391, %c0_392] : memref<144x72xbf16, #tpu.memory_space<vmem>>, vector<144x72xbf16>
    %cst_393 = arith.constant dense<0.000000e+00> : vector<8x72xf32>
    %395 = tpu.matmul %393, %394, %cst_393 {dimension_numbers = #tpu.dot_dimension_numbers<[1], [0], [0], [1], [0, 0, 1, 1], [], []>} : vector<8x144xbf16>, vector<144x72xbf16>, vector<8x72xf32> -> vector<8x72xf32>
    %c0_394 = arith.constant 0 : index
    %c0_395 = arith.constant 0 : index
    %396 = vector.load %arg5[%c0_394, %c0_395] : memref<144x72xbf16, #tpu.memory_space<vmem>>, vector<144x72xbf16>
    %cst_396 = arith.constant dense<0.000000e+00> : vector<8x72xf32>
    %397 = tpu.matmul %393, %396, %cst_396 {dimension_numbers = #tpu.dot_dimension_numbers<[1], [0], [0], [1], [0, 0, 1, 1], [], []>} : vector<8x144xbf16>, vector<144x72xbf16>, vector<8x72xf32> -> vector<8x72xf32>
    %398 = arith.maximumf %395, %397 : vector<8x72xf32>
    %399 = arith.truncf %398 : vector<8x72xf32> to vector<8x72xbf16>
    %c0_397 = arith.constant 0 : index
    %c0_398 = arith.constant 0 : index
    %400 = vector.load %arg3[%c0_397, %c0_398] : memref<1x144xf32, #tpu.memory_space<vmem>>, vector<1x144xf32>
    %401 = vector.shape_cast %400 : vector<1x144xf32> to vector<1x144xf32>
    %402 = vector.broadcast %401 : vector<1x144xf32> to vector<8x144xf32>
    %c16_399 = arith.constant 16 : index
    %c0_400 = arith.constant 0 : index
    %c0_401 = arith.constant 0 : index
    %403 = vector.load %arg1[%c16_399, %c0_400, %c0_401] : memref<26x8x26xbf16, #tpu.memory_space<vmem>>, vector<1x8x26xbf16>
    %404 = vector.shape_cast %403 : vector<1x8x26xbf16> to vector<8x26xbf16>
    %c0_402 = arith.constant 0 : index
    %c0_403 = arith.constant 0 : index
    %c0_404 = arith.constant 0 : index
    %405 = vector.load %arg2[%c0_402, %c0_403, %c0_404] : memref<3x26x144xbf16, #tpu.memory_space<vmem>>, vector<1x26x144xbf16>
    %406 = vector.shape_cast %405 : vector<1x26x144xbf16> to vector<26x144xbf16>
    %cst_405 = arith.constant dense<0.000000e+00> : vector<8x144xf32>
    %407 = tpu.matmul %404, %406, %cst_405 {dimension_numbers = #tpu.dot_dimension_numbers<[1], [0], [0], [1], [0, 0, 1, 1], [], []>} : vector<8x26xbf16>, vector<26x144xbf16>, vector<8x144xf32> -> vector<8x144xf32>
    %408 = arith.addf %402, %407 : vector<8x144xf32>
    %c17_406 = arith.constant 17 : index
    %c0_407 = arith.constant 0 : index
    %c0_408 = arith.constant 0 : index
    %409 = vector.load %arg1[%c17_406, %c0_407, %c0_408] : memref<26x8x26xbf16, #tpu.memory_space<vmem>>, vector<1x8x26xbf16>
    %410 = vector.shape_cast %409 : vector<1x8x26xbf16> to vector<8x26xbf16>
    %c1_409 = arith.constant 1 : index
    %c0_410 = arith.constant 0 : index
    %c0_411 = arith.constant 0 : index
    %411 = vector.load %arg2[%c1_409, %c0_410, %c0_411] : memref<3x26x144xbf16, #tpu.memory_space<vmem>>, vector<1x26x144xbf16>
    %412 = vector.shape_cast %411 : vector<1x26x144xbf16> to vector<26x144xbf16>
    %cst_412 = arith.constant dense<0.000000e+00> : vector<8x144xf32>
    %413 = tpu.matmul %410, %412, %cst_412 {dimension_numbers = #tpu.dot_dimension_numbers<[1], [0], [0], [1], [0, 0, 1, 1], [], []>} : vector<8x26xbf16>, vector<26x144xbf16>, vector<8x144xf32> -> vector<8x144xf32>
    %414 = arith.addf %408, %413 : vector<8x144xf32>
    %c18 = arith.constant 18 : index
    %c0_413 = arith.constant 0 : index
    %c0_414 = arith.constant 0 : index
    %415 = vector.load %arg1[%c18, %c0_413, %c0_414] : memref<26x8x26xbf16, #tpu.memory_space<vmem>>, vector<1x8x26xbf16>
    %416 = vector.shape_cast %415 : vector<1x8x26xbf16> to vector<8x26xbf16>
    %c2_415 = arith.constant 2 : index
    %c0_416 = arith.constant 0 : index
    %c0_417 = arith.constant 0 : index
    %417 = vector.load %arg2[%c2_415, %c0_416, %c0_417] : memref<3x26x144xbf16, #tpu.memory_space<vmem>>, vector<1x26x144xbf16>
    %418 = vector.shape_cast %417 : vector<1x26x144xbf16> to vector<26x144xbf16>
    %cst_418 = arith.constant dense<0.000000e+00> : vector<8x144xf32>
    %419 = tpu.matmul %416, %418, %cst_418 {dimension_numbers = #tpu.dot_dimension_numbers<[1], [0], [0], [1], [0, 0, 1, 1], [], []>} : vector<8x26xbf16>, vector<26x144xbf16>, vector<8x144xf32> -> vector<8x144xf32>
    %420 = arith.addf %414, %419 : vector<8x144xf32>
    %c0_419 = arith.constant 0 : index
    %c0_420 = arith.constant 0 : index
    %421 = vector.load %arg3[%c0_419, %c0_420] : memref<1x144xf32, #tpu.memory_space<vmem>>, vector<1x144xf32>
    %422 = vector.shape_cast %421 : vector<1x144xf32> to vector<1x144xf32>
    %423 = vector.broadcast %422 : vector<1x144xf32> to vector<8x144xf32>
    %c17_421 = arith.constant 17 : index
    %c0_422 = arith.constant 0 : index
    %c0_423 = arith.constant 0 : index
    %424 = vector.load %arg1[%c17_421, %c0_422, %c0_423] : memref<26x8x26xbf16, #tpu.memory_space<vmem>>, vector<1x8x26xbf16>
    %425 = vector.shape_cast %424 : vector<1x8x26xbf16> to vector<8x26xbf16>
    %c0_424 = arith.constant 0 : index
    %c0_425 = arith.constant 0 : index
    %c0_426 = arith.constant 0 : index
    %426 = vector.load %arg2[%c0_424, %c0_425, %c0_426] : memref<3x26x144xbf16, #tpu.memory_space<vmem>>, vector<1x26x144xbf16>
    %427 = vector.shape_cast %426 : vector<1x26x144xbf16> to vector<26x144xbf16>
    %cst_427 = arith.constant dense<0.000000e+00> : vector<8x144xf32>
    %428 = tpu.matmul %425, %427, %cst_427 {dimension_numbers = #tpu.dot_dimension_numbers<[1], [0], [0], [1], [0, 0, 1, 1], [], []>} : vector<8x26xbf16>, vector<26x144xbf16>, vector<8x144xf32> -> vector<8x144xf32>
    %429 = arith.addf %423, %428 : vector<8x144xf32>
    %c18_428 = arith.constant 18 : index
    %c0_429 = arith.constant 0 : index
    %c0_430 = arith.constant 0 : index
    %430 = vector.load %arg1[%c18_428, %c0_429, %c0_430] : memref<26x8x26xbf16, #tpu.memory_space<vmem>>, vector<1x8x26xbf16>
    %431 = vector.shape_cast %430 : vector<1x8x26xbf16> to vector<8x26xbf16>
    %c1_431 = arith.constant 1 : index
    %c0_432 = arith.constant 0 : index
    %c0_433 = arith.constant 0 : index
    %432 = vector.load %arg2[%c1_431, %c0_432, %c0_433] : memref<3x26x144xbf16, #tpu.memory_space<vmem>>, vector<1x26x144xbf16>
    %433 = vector.shape_cast %432 : vector<1x26x144xbf16> to vector<26x144xbf16>
    %cst_434 = arith.constant dense<0.000000e+00> : vector<8x144xf32>
    %434 = tpu.matmul %431, %433, %cst_434 {dimension_numbers = #tpu.dot_dimension_numbers<[1], [0], [0], [1], [0, 0, 1, 1], [], []>} : vector<8x26xbf16>, vector<26x144xbf16>, vector<8x144xf32> -> vector<8x144xf32>
    %435 = arith.addf %429, %434 : vector<8x144xf32>
    %c19 = arith.constant 19 : index
    %c0_435 = arith.constant 0 : index
    %c0_436 = arith.constant 0 : index
    %436 = vector.load %arg1[%c19, %c0_435, %c0_436] : memref<26x8x26xbf16, #tpu.memory_space<vmem>>, vector<1x8x26xbf16>
    %437 = vector.shape_cast %436 : vector<1x8x26xbf16> to vector<8x26xbf16>
    %c2_437 = arith.constant 2 : index
    %c0_438 = arith.constant 0 : index
    %c0_439 = arith.constant 0 : index
    %438 = vector.load %arg2[%c2_437, %c0_438, %c0_439] : memref<3x26x144xbf16, #tpu.memory_space<vmem>>, vector<1x26x144xbf16>
    %439 = vector.shape_cast %438 : vector<1x26x144xbf16> to vector<26x144xbf16>
    %cst_440 = arith.constant dense<0.000000e+00> : vector<8x144xf32>
    %440 = tpu.matmul %437, %439, %cst_440 {dimension_numbers = #tpu.dot_dimension_numbers<[1], [0], [0], [1], [0, 0, 1, 1], [], []>} : vector<8x26xbf16>, vector<26x144xbf16>, vector<8x144xf32> -> vector<8x144xf32>
    %441 = arith.addf %435, %440 : vector<8x144xf32>
    %442 = arith.maximumf %420, %441 : vector<8x144xf32>
    %443 = arith.truncf %442 : vector<8x144xf32> to vector<8x144xbf16>
    %c0_441 = arith.constant 0 : index
    %c0_442 = arith.constant 0 : index
    %444 = vector.load %arg4[%c0_441, %c0_442] : memref<144x72xbf16, #tpu.memory_space<vmem>>, vector<144x72xbf16>
    %cst_443 = arith.constant dense<0.000000e+00> : vector<8x72xf32>
    %445 = tpu.matmul %443, %444, %cst_443 {dimension_numbers = #tpu.dot_dimension_numbers<[1], [0], [0], [1], [0, 0, 1, 1], [], []>} : vector<8x144xbf16>, vector<144x72xbf16>, vector<8x72xf32> -> vector<8x72xf32>
    %c0_444 = arith.constant 0 : index
    %c0_445 = arith.constant 0 : index
    %446 = vector.load %arg5[%c0_444, %c0_445] : memref<144x72xbf16, #tpu.memory_space<vmem>>, vector<144x72xbf16>
    %cst_446 = arith.constant dense<0.000000e+00> : vector<8x72xf32>
    %447 = tpu.matmul %443, %446, %cst_446 {dimension_numbers = #tpu.dot_dimension_numbers<[1], [0], [0], [1], [0, 0, 1, 1], [], []>} : vector<8x144xbf16>, vector<144x72xbf16>, vector<8x72xf32> -> vector<8x72xf32>
    %448 = arith.maximumf %445, %447 : vector<8x72xf32>
    %449 = arith.truncf %448 : vector<8x72xf32> to vector<8x72xbf16>
    %c0_447 = arith.constant 0 : index
    %c0_448 = arith.constant 0 : index
    %450 = vector.load %arg3[%c0_447, %c0_448] : memref<1x144xf32, #tpu.memory_space<vmem>>, vector<1x144xf32>
    %451 = vector.shape_cast %450 : vector<1x144xf32> to vector<1x144xf32>
    %452 = vector.broadcast %451 : vector<1x144xf32> to vector<8x144xf32>
    %c18_449 = arith.constant 18 : index
    %c0_450 = arith.constant 0 : index
    %c0_451 = arith.constant 0 : index
    %453 = vector.load %arg1[%c18_449, %c0_450, %c0_451] : memref<26x8x26xbf16, #tpu.memory_space<vmem>>, vector<1x8x26xbf16>
    %454 = vector.shape_cast %453 : vector<1x8x26xbf16> to vector<8x26xbf16>
    %c0_452 = arith.constant 0 : index
    %c0_453 = arith.constant 0 : index
    %c0_454 = arith.constant 0 : index
    %455 = vector.load %arg2[%c0_452, %c0_453, %c0_454] : memref<3x26x144xbf16, #tpu.memory_space<vmem>>, vector<1x26x144xbf16>
    %456 = vector.shape_cast %455 : vector<1x26x144xbf16> to vector<26x144xbf16>
    %cst_455 = arith.constant dense<0.000000e+00> : vector<8x144xf32>
    %457 = tpu.matmul %454, %456, %cst_455 {dimension_numbers = #tpu.dot_dimension_numbers<[1], [0], [0], [1], [0, 0, 1, 1], [], []>} : vector<8x26xbf16>, vector<26x144xbf16>, vector<8x144xf32> -> vector<8x144xf32>
    %458 = arith.addf %452, %457 : vector<8x144xf32>
    %c19_456 = arith.constant 19 : index
    %c0_457 = arith.constant 0 : index
    %c0_458 = arith.constant 0 : index
    %459 = vector.load %arg1[%c19_456, %c0_457, %c0_458] : memref<26x8x26xbf16, #tpu.memory_space<vmem>>, vector<1x8x26xbf16>
    %460 = vector.shape_cast %459 : vector<1x8x26xbf16> to vector<8x26xbf16>
    %c1_459 = arith.constant 1 : index
    %c0_460 = arith.constant 0 : index
    %c0_461 = arith.constant 0 : index
    %461 = vector.load %arg2[%c1_459, %c0_460, %c0_461] : memref<3x26x144xbf16, #tpu.memory_space<vmem>>, vector<1x26x144xbf16>
    %462 = vector.shape_cast %461 : vector<1x26x144xbf16> to vector<26x144xbf16>
    %cst_462 = arith.constant dense<0.000000e+00> : vector<8x144xf32>
    %463 = tpu.matmul %460, %462, %cst_462 {dimension_numbers = #tpu.dot_dimension_numbers<[1], [0], [0], [1], [0, 0, 1, 1], [], []>} : vector<8x26xbf16>, vector<26x144xbf16>, vector<8x144xf32> -> vector<8x144xf32>
    %464 = arith.addf %458, %463 : vector<8x144xf32>
    %c20 = arith.constant 20 : index
    %c0_463 = arith.constant 0 : index
    %c0_464 = arith.constant 0 : index
    %465 = vector.load %arg1[%c20, %c0_463, %c0_464] : memref<26x8x26xbf16, #tpu.memory_space<vmem>>, vector<1x8x26xbf16>
    %466 = vector.shape_cast %465 : vector<1x8x26xbf16> to vector<8x26xbf16>
    %c2_465 = arith.constant 2 : index
    %c0_466 = arith.constant 0 : index
    %c0_467 = arith.constant 0 : index
    %467 = vector.load %arg2[%c2_465, %c0_466, %c0_467] : memref<3x26x144xbf16, #tpu.memory_space<vmem>>, vector<1x26x144xbf16>
    %468 = vector.shape_cast %467 : vector<1x26x144xbf16> to vector<26x144xbf16>
    %cst_468 = arith.constant dense<0.000000e+00> : vector<8x144xf32>
    %469 = tpu.matmul %466, %468, %cst_468 {dimension_numbers = #tpu.dot_dimension_numbers<[1], [0], [0], [1], [0, 0, 1, 1], [], []>} : vector<8x26xbf16>, vector<26x144xbf16>, vector<8x144xf32> -> vector<8x144xf32>
    %470 = arith.addf %464, %469 : vector<8x144xf32>
    %c0_469 = arith.constant 0 : index
    %c0_470 = arith.constant 0 : index
    %471 = vector.load %arg3[%c0_469, %c0_470] : memref<1x144xf32, #tpu.memory_space<vmem>>, vector<1x144xf32>
    %472 = vector.shape_cast %471 : vector<1x144xf32> to vector<1x144xf32>
    %473 = vector.broadcast %472 : vector<1x144xf32> to vector<8x144xf32>
    %c19_471 = arith.constant 19 : index
    %c0_472 = arith.constant 0 : index
    %c0_473 = arith.constant 0 : index
    %474 = vector.load %arg1[%c19_471, %c0_472, %c0_473] : memref<26x8x26xbf16, #tpu.memory_space<vmem>>, vector<1x8x26xbf16>
    %475 = vector.shape_cast %474 : vector<1x8x26xbf16> to vector<8x26xbf16>
    %c0_474 = arith.constant 0 : index
    %c0_475 = arith.constant 0 : index
    %c0_476 = arith.constant 0 : index
    %476 = vector.load %arg2[%c0_474, %c0_475, %c0_476] : memref<3x26x144xbf16, #tpu.memory_space<vmem>>, vector<1x26x144xbf16>
    %477 = vector.shape_cast %476 : vector<1x26x144xbf16> to vector<26x144xbf16>
    %cst_477 = arith.constant dense<0.000000e+00> : vector<8x144xf32>
    %478 = tpu.matmul %475, %477, %cst_477 {dimension_numbers = #tpu.dot_dimension_numbers<[1], [0], [0], [1], [0, 0, 1, 1], [], []>} : vector<8x26xbf16>, vector<26x144xbf16>, vector<8x144xf32> -> vector<8x144xf32>
    %479 = arith.addf %473, %478 : vector<8x144xf32>
    %c20_478 = arith.constant 20 : index
    %c0_479 = arith.constant 0 : index
    %c0_480 = arith.constant 0 : index
    %480 = vector.load %arg1[%c20_478, %c0_479, %c0_480] : memref<26x8x26xbf16, #tpu.memory_space<vmem>>, vector<1x8x26xbf16>
    %481 = vector.shape_cast %480 : vector<1x8x26xbf16> to vector<8x26xbf16>
    %c1_481 = arith.constant 1 : index
    %c0_482 = arith.constant 0 : index
    %c0_483 = arith.constant 0 : index
    %482 = vector.load %arg2[%c1_481, %c0_482, %c0_483] : memref<3x26x144xbf16, #tpu.memory_space<vmem>>, vector<1x26x144xbf16>
    %483 = vector.shape_cast %482 : vector<1x26x144xbf16> to vector<26x144xbf16>
    %cst_484 = arith.constant dense<0.000000e+00> : vector<8x144xf32>
    %484 = tpu.matmul %481, %483, %cst_484 {dimension_numbers = #tpu.dot_dimension_numbers<[1], [0], [0], [1], [0, 0, 1, 1], [], []>} : vector<8x26xbf16>, vector<26x144xbf16>, vector<8x144xf32> -> vector<8x144xf32>
    %485 = arith.addf %479, %484 : vector<8x144xf32>
    %c21 = arith.constant 21 : index
    %c0_485 = arith.constant 0 : index
    %c0_486 = arith.constant 0 : index
    %486 = vector.load %arg1[%c21, %c0_485, %c0_486] : memref<26x8x26xbf16, #tpu.memory_space<vmem>>, vector<1x8x26xbf16>
    %487 = vector.shape_cast %486 : vector<1x8x26xbf16> to vector<8x26xbf16>
    %c2_487 = arith.constant 2 : index
    %c0_488 = arith.constant 0 : index
    %c0_489 = arith.constant 0 : index
    %488 = vector.load %arg2[%c2_487, %c0_488, %c0_489] : memref<3x26x144xbf16, #tpu.memory_space<vmem>>, vector<1x26x144xbf16>
    %489 = vector.shape_cast %488 : vector<1x26x144xbf16> to vector<26x144xbf16>
    %cst_490 = arith.constant dense<0.000000e+00> : vector<8x144xf32>
    %490 = tpu.matmul %487, %489, %cst_490 {dimension_numbers = #tpu.dot_dimension_numbers<[1], [0], [0], [1], [0, 0, 1, 1], [], []>} : vector<8x26xbf16>, vector<26x144xbf16>, vector<8x144xf32> -> vector<8x144xf32>
    %491 = arith.addf %485, %490 : vector<8x144xf32>
    %492 = arith.maximumf %470, %491 : vector<8x144xf32>
    %493 = arith.truncf %492 : vector<8x144xf32> to vector<8x144xbf16>
    %c0_491 = arith.constant 0 : index
    %c0_492 = arith.constant 0 : index
    %494 = vector.load %arg4[%c0_491, %c0_492] : memref<144x72xbf16, #tpu.memory_space<vmem>>, vector<144x72xbf16>
    %cst_493 = arith.constant dense<0.000000e+00> : vector<8x72xf32>
    %495 = tpu.matmul %493, %494, %cst_493 {dimension_numbers = #tpu.dot_dimension_numbers<[1], [0], [0], [1], [0, 0, 1, 1], [], []>} : vector<8x144xbf16>, vector<144x72xbf16>, vector<8x72xf32> -> vector<8x72xf32>
    %c0_494 = arith.constant 0 : index
    %c0_495 = arith.constant 0 : index
    %496 = vector.load %arg5[%c0_494, %c0_495] : memref<144x72xbf16, #tpu.memory_space<vmem>>, vector<144x72xbf16>
    %cst_496 = arith.constant dense<0.000000e+00> : vector<8x72xf32>
    %497 = tpu.matmul %493, %496, %cst_496 {dimension_numbers = #tpu.dot_dimension_numbers<[1], [0], [0], [1], [0, 0, 1, 1], [], []>} : vector<8x144xbf16>, vector<144x72xbf16>, vector<8x72xf32> -> vector<8x72xf32>
    %498 = arith.maximumf %495, %497 : vector<8x72xf32>
    %499 = arith.truncf %498 : vector<8x72xf32> to vector<8x72xbf16>
    %c0_497 = arith.constant 0 : index
    %c0_498 = arith.constant 0 : index
    %500 = vector.load %arg3[%c0_497, %c0_498] : memref<1x144xf32, #tpu.memory_space<vmem>>, vector<1x144xf32>
    %501 = vector.shape_cast %500 : vector<1x144xf32> to vector<1x144xf32>
    %502 = vector.broadcast %501 : vector<1x144xf32> to vector<8x144xf32>
    %c20_499 = arith.constant 20 : index
    %c0_500 = arith.constant 0 : index
    %c0_501 = arith.constant 0 : index
    %503 = vector.load %arg1[%c20_499, %c0_500, %c0_501] : memref<26x8x26xbf16, #tpu.memory_space<vmem>>, vector<1x8x26xbf16>
    %504 = vector.shape_cast %503 : vector<1x8x26xbf16> to vector<8x26xbf16>
    %c0_502 = arith.constant 0 : index
    %c0_503 = arith.constant 0 : index
    %c0_504 = arith.constant 0 : index
    %505 = vector.load %arg2[%c0_502, %c0_503, %c0_504] : memref<3x26x144xbf16, #tpu.memory_space<vmem>>, vector<1x26x144xbf16>
    %506 = vector.shape_cast %505 : vector<1x26x144xbf16> to vector<26x144xbf16>
    %cst_505 = arith.constant dense<0.000000e+00> : vector<8x144xf32>
    %507 = tpu.matmul %504, %506, %cst_505 {dimension_numbers = #tpu.dot_dimension_numbers<[1], [0], [0], [1], [0, 0, 1, 1], [], []>} : vector<8x26xbf16>, vector<26x144xbf16>, vector<8x144xf32> -> vector<8x144xf32>
    %508 = arith.addf %502, %507 : vector<8x144xf32>
    %c21_506 = arith.constant 21 : index
    %c0_507 = arith.constant 0 : index
    %c0_508 = arith.constant 0 : index
    %509 = vector.load %arg1[%c21_506, %c0_507, %c0_508] : memref<26x8x26xbf16, #tpu.memory_space<vmem>>, vector<1x8x26xbf16>
    %510 = vector.shape_cast %509 : vector<1x8x26xbf16> to vector<8x26xbf16>
    %c1_509 = arith.constant 1 : index
    %c0_510 = arith.constant 0 : index
    %c0_511 = arith.constant 0 : index
    %511 = vector.load %arg2[%c1_509, %c0_510, %c0_511] : memref<3x26x144xbf16, #tpu.memory_space<vmem>>, vector<1x26x144xbf16>
    %512 = vector.shape_cast %511 : vector<1x26x144xbf16> to vector<26x144xbf16>
    %cst_512 = arith.constant dense<0.000000e+00> : vector<8x144xf32>
    %513 = tpu.matmul %510, %512, %cst_512 {dimension_numbers = #tpu.dot_dimension_numbers<[1], [0], [0], [1], [0, 0, 1, 1], [], []>} : vector<8x26xbf16>, vector<26x144xbf16>, vector<8x144xf32> -> vector<8x144xf32>
    %514 = arith.addf %508, %513 : vector<8x144xf32>
    %c22 = arith.constant 22 : index
    %c0_513 = arith.constant 0 : index
    %c0_514 = arith.constant 0 : index
    %515 = vector.load %arg1[%c22, %c0_513, %c0_514] : memref<26x8x26xbf16, #tpu.memory_space<vmem>>, vector<1x8x26xbf16>
    %516 = vector.shape_cast %515 : vector<1x8x26xbf16> to vector<8x26xbf16>
    %c2_515 = arith.constant 2 : index
    %c0_516 = arith.constant 0 : index
    %c0_517 = arith.constant 0 : index
    %517 = vector.load %arg2[%c2_515, %c0_516, %c0_517] : memref<3x26x144xbf16, #tpu.memory_space<vmem>>, vector<1x26x144xbf16>
    %518 = vector.shape_cast %517 : vector<1x26x144xbf16> to vector<26x144xbf16>
    %cst_518 = arith.constant dense<0.000000e+00> : vector<8x144xf32>
    %519 = tpu.matmul %516, %518, %cst_518 {dimension_numbers = #tpu.dot_dimension_numbers<[1], [0], [0], [1], [0, 0, 1, 1], [], []>} : vector<8x26xbf16>, vector<26x144xbf16>, vector<8x144xf32> -> vector<8x144xf32>
    %520 = arith.addf %514, %519 : vector<8x144xf32>
    %c0_519 = arith.constant 0 : index
    %c0_520 = arith.constant 0 : index
    %521 = vector.load %arg3[%c0_519, %c0_520] : memref<1x144xf32, #tpu.memory_space<vmem>>, vector<1x144xf32>
    %522 = vector.shape_cast %521 : vector<1x144xf32> to vector<1x144xf32>
    %523 = vector.broadcast %522 : vector<1x144xf32> to vector<8x144xf32>
    %c21_521 = arith.constant 21 : index
    %c0_522 = arith.constant 0 : index
    %c0_523 = arith.constant 0 : index
    %524 = vector.load %arg1[%c21_521, %c0_522, %c0_523] : memref<26x8x26xbf16, #tpu.memory_space<vmem>>, vector<1x8x26xbf16>
    %525 = vector.shape_cast %524 : vector<1x8x26xbf16> to vector<8x26xbf16>
    %c0_524 = arith.constant 0 : index
    %c0_525 = arith.constant 0 : index
    %c0_526 = arith.constant 0 : index
    %526 = vector.load %arg2[%c0_524, %c0_525, %c0_526] : memref<3x26x144xbf16, #tpu.memory_space<vmem>>, vector<1x26x144xbf16>
    %527 = vector.shape_cast %526 : vector<1x26x144xbf16> to vector<26x144xbf16>
    %cst_527 = arith.constant dense<0.000000e+00> : vector<8x144xf32>
    %528 = tpu.matmul %525, %527, %cst_527 {dimension_numbers = #tpu.dot_dimension_numbers<[1], [0], [0], [1], [0, 0, 1, 1], [], []>} : vector<8x26xbf16>, vector<26x144xbf16>, vector<8x144xf32> -> vector<8x144xf32>
    %529 = arith.addf %523, %528 : vector<8x144xf32>
    %c22_528 = arith.constant 22 : index
    %c0_529 = arith.constant 0 : index
    %c0_530 = arith.constant 0 : index
    %530 = vector.load %arg1[%c22_528, %c0_529, %c0_530] : memref<26x8x26xbf16, #tpu.memory_space<vmem>>, vector<1x8x26xbf16>
    %531 = vector.shape_cast %530 : vector<1x8x26xbf16> to vector<8x26xbf16>
    %c1_531 = arith.constant 1 : index
    %c0_532 = arith.constant 0 : index
    %c0_533 = arith.constant 0 : index
    %532 = vector.load %arg2[%c1_531, %c0_532, %c0_533] : memref<3x26x144xbf16, #tpu.memory_space<vmem>>, vector<1x26x144xbf16>
    %533 = vector.shape_cast %532 : vector<1x26x144xbf16> to vector<26x144xbf16>
    %cst_534 = arith.constant dense<0.000000e+00> : vector<8x144xf32>
    %534 = tpu.matmul %531, %533, %cst_534 {dimension_numbers = #tpu.dot_dimension_numbers<[1], [0], [0], [1], [0, 0, 1, 1], [], []>} : vector<8x26xbf16>, vector<26x144xbf16>, vector<8x144xf32> -> vector<8x144xf32>
    %535 = arith.addf %529, %534 : vector<8x144xf32>
    %c23 = arith.constant 23 : index
    %c0_535 = arith.constant 0 : index
    %c0_536 = arith.constant 0 : index
    %536 = vector.load %arg1[%c23, %c0_535, %c0_536] : memref<26x8x26xbf16, #tpu.memory_space<vmem>>, vector<1x8x26xbf16>
    %537 = vector.shape_cast %536 : vector<1x8x26xbf16> to vector<8x26xbf16>
    %c2_537 = arith.constant 2 : index
    %c0_538 = arith.constant 0 : index
    %c0_539 = arith.constant 0 : index
    %538 = vector.load %arg2[%c2_537, %c0_538, %c0_539] : memref<3x26x144xbf16, #tpu.memory_space<vmem>>, vector<1x26x144xbf16>
    %539 = vector.shape_cast %538 : vector<1x26x144xbf16> to vector<26x144xbf16>
    %cst_540 = arith.constant dense<0.000000e+00> : vector<8x144xf32>
    %540 = tpu.matmul %537, %539, %cst_540 {dimension_numbers = #tpu.dot_dimension_numbers<[1], [0], [0], [1], [0, 0, 1, 1], [], []>} : vector<8x26xbf16>, vector<26x144xbf16>, vector<8x144xf32> -> vector<8x144xf32>
    %541 = arith.addf %535, %540 : vector<8x144xf32>
    %542 = arith.maximumf %520, %541 : vector<8x144xf32>
    %543 = arith.truncf %542 : vector<8x144xf32> to vector<8x144xbf16>
    %c0_541 = arith.constant 0 : index
    %c0_542 = arith.constant 0 : index
    %544 = vector.load %arg4[%c0_541, %c0_542] : memref<144x72xbf16, #tpu.memory_space<vmem>>, vector<144x72xbf16>
    %cst_543 = arith.constant dense<0.000000e+00> : vector<8x72xf32>
    %545 = tpu.matmul %543, %544, %cst_543 {dimension_numbers = #tpu.dot_dimension_numbers<[1], [0], [0], [1], [0, 0, 1, 1], [], []>} : vector<8x144xbf16>, vector<144x72xbf16>, vector<8x72xf32> -> vector<8x72xf32>
    %c0_544 = arith.constant 0 : index
    %c0_545 = arith.constant 0 : index
    %546 = vector.load %arg5[%c0_544, %c0_545] : memref<144x72xbf16, #tpu.memory_space<vmem>>, vector<144x72xbf16>
    %cst_546 = arith.constant dense<0.000000e+00> : vector<8x72xf32>
    %547 = tpu.matmul %543, %546, %cst_546 {dimension_numbers = #tpu.dot_dimension_numbers<[1], [0], [0], [1], [0, 0, 1, 1], [], []>} : vector<8x144xbf16>, vector<144x72xbf16>, vector<8x72xf32> -> vector<8x72xf32>
    %548 = arith.maximumf %545, %547 : vector<8x72xf32>
    %549 = arith.truncf %548 : vector<8x72xf32> to vector<8x72xbf16>
    %c0_547 = arith.constant 0 : index
    %c0_548 = arith.constant 0 : index
    %550 = vector.load %arg3[%c0_547, %c0_548] : memref<1x144xf32, #tpu.memory_space<vmem>>, vector<1x144xf32>
    %551 = vector.shape_cast %550 : vector<1x144xf32> to vector<1x144xf32>
    %552 = vector.broadcast %551 : vector<1x144xf32> to vector<8x144xf32>
    %c22_549 = arith.constant 22 : index
    %c0_550 = arith.constant 0 : index
    %c0_551 = arith.constant 0 : index
    %553 = vector.load %arg1[%c22_549, %c0_550, %c0_551] : memref<26x8x26xbf16, #tpu.memory_space<vmem>>, vector<1x8x26xbf16>
    %554 = vector.shape_cast %553 : vector<1x8x26xbf16> to vector<8x26xbf16>
    %c0_552 = arith.constant 0 : index
    %c0_553 = arith.constant 0 : index
    %c0_554 = arith.constant 0 : index
    %555 = vector.load %arg2[%c0_552, %c0_553, %c0_554] : memref<3x26x144xbf16, #tpu.memory_space<vmem>>, vector<1x26x144xbf16>
    %556 = vector.shape_cast %555 : vector<1x26x144xbf16> to vector<26x144xbf16>
    %cst_555 = arith.constant dense<0.000000e+00> : vector<8x144xf32>
    %557 = tpu.matmul %554, %556, %cst_555 {dimension_numbers = #tpu.dot_dimension_numbers<[1], [0], [0], [1], [0, 0, 1, 1], [], []>} : vector<8x26xbf16>, vector<26x144xbf16>, vector<8x144xf32> -> vector<8x144xf32>
    %558 = arith.addf %552, %557 : vector<8x144xf32>
    %c23_556 = arith.constant 23 : index
    %c0_557 = arith.constant 0 : index
    %c0_558 = arith.constant 0 : index
    %559 = vector.load %arg1[%c23_556, %c0_557, %c0_558] : memref<26x8x26xbf16, #tpu.memory_space<vmem>>, vector<1x8x26xbf16>
    %560 = vector.shape_cast %559 : vector<1x8x26xbf16> to vector<8x26xbf16>
    %c1_559 = arith.constant 1 : index
    %c0_560 = arith.constant 0 : index
    %c0_561 = arith.constant 0 : index
    %561 = vector.load %arg2[%c1_559, %c0_560, %c0_561] : memref<3x26x144xbf16, #tpu.memory_space<vmem>>, vector<1x26x144xbf16>
    %562 = vector.shape_cast %561 : vector<1x26x144xbf16> to vector<26x144xbf16>
    %cst_562 = arith.constant dense<0.000000e+00> : vector<8x144xf32>
    %563 = tpu.matmul %560, %562, %cst_562 {dimension_numbers = #tpu.dot_dimension_numbers<[1], [0], [0], [1], [0, 0, 1, 1], [], []>} : vector<8x26xbf16>, vector<26x144xbf16>, vector<8x144xf32> -> vector<8x144xf32>
    %564 = arith.addf %558, %563 : vector<8x144xf32>
    %c24 = arith.constant 24 : index
    %c0_563 = arith.constant 0 : index
    %c0_564 = arith.constant 0 : index
    %565 = vector.load %arg1[%c24, %c0_563, %c0_564] : memref<26x8x26xbf16, #tpu.memory_space<vmem>>, vector<1x8x26xbf16>
    %566 = vector.shape_cast %565 : vector<1x8x26xbf16> to vector<8x26xbf16>
    %c2_565 = arith.constant 2 : index
    %c0_566 = arith.constant 0 : index
    %c0_567 = arith.constant 0 : index
    %567 = vector.load %arg2[%c2_565, %c0_566, %c0_567] : memref<3x26x144xbf16, #tpu.memory_space<vmem>>, vector<1x26x144xbf16>
    %568 = vector.shape_cast %567 : vector<1x26x144xbf16> to vector<26x144xbf16>
    %cst_568 = arith.constant dense<0.000000e+00> : vector<8x144xf32>
    %569 = tpu.matmul %566, %568, %cst_568 {dimension_numbers = #tpu.dot_dimension_numbers<[1], [0], [0], [1], [0, 0, 1, 1], [], []>} : vector<8x26xbf16>, vector<26x144xbf16>, vector<8x144xf32> -> vector<8x144xf32>
    %570 = arith.addf %564, %569 : vector<8x144xf32>
    %c0_569 = arith.constant 0 : index
    %c0_570 = arith.constant 0 : index
    %571 = vector.load %arg3[%c0_569, %c0_570] : memref<1x144xf32, #tpu.memory_space<vmem>>, vector<1x144xf32>
    %572 = vector.shape_cast %571 : vector<1x144xf32> to vector<1x144xf32>
    %573 = vector.broadcast %572 : vector<1x144xf32> to vector<8x144xf32>
    %c23_571 = arith.constant 23 : index
    %c0_572 = arith.constant 0 : index
    %c0_573 = arith.constant 0 : index
    %574 = vector.load %arg1[%c23_571, %c0_572, %c0_573] : memref<26x8x26xbf16, #tpu.memory_space<vmem>>, vector<1x8x26xbf16>
    %575 = vector.shape_cast %574 : vector<1x8x26xbf16> to vector<8x26xbf16>
    %c0_574 = arith.constant 0 : index
    %c0_575 = arith.constant 0 : index
    %c0_576 = arith.constant 0 : index
    %576 = vector.load %arg2[%c0_574, %c0_575, %c0_576] : memref<3x26x144xbf16, #tpu.memory_space<vmem>>, vector<1x26x144xbf16>
    %577 = vector.shape_cast %576 : vector<1x26x144xbf16> to vector<26x144xbf16>
    %cst_577 = arith.constant dense<0.000000e+00> : vector<8x144xf32>
    %578 = tpu.matmul %575, %577, %cst_577 {dimension_numbers = #tpu.dot_dimension_numbers<[1], [0], [0], [1], [0, 0, 1, 1], [], []>} : vector<8x26xbf16>, vector<26x144xbf16>, vector<8x144xf32> -> vector<8x144xf32>
    %579 = arith.addf %573, %578 : vector<8x144xf32>
    %c24_578 = arith.constant 24 : index
    %c0_579 = arith.constant 0 : index
    %c0_580 = arith.constant 0 : index
    %580 = vector.load %arg1[%c24_578, %c0_579, %c0_580] : memref<26x8x26xbf16, #tpu.memory_space<vmem>>, vector<1x8x26xbf16>
    %581 = vector.shape_cast %580 : vector<1x8x26xbf16> to vector<8x26xbf16>
    %c1_581 = arith.constant 1 : index
    %c0_582 = arith.constant 0 : index
    %c0_583 = arith.constant 0 : index
    %582 = vector.load %arg2[%c1_581, %c0_582, %c0_583] : memref<3x26x144xbf16, #tpu.memory_space<vmem>>, vector<1x26x144xbf16>
    %583 = vector.shape_cast %582 : vector<1x26x144xbf16> to vector<26x144xbf16>
    %cst_584 = arith.constant dense<0.000000e+00> : vector<8x144xf32>
    %584 = tpu.matmul %581, %583, %cst_584 {dimension_numbers = #tpu.dot_dimension_numbers<[1], [0], [0], [1], [0, 0, 1, 1], [], []>} : vector<8x26xbf16>, vector<26x144xbf16>, vector<8x144xf32> -> vector<8x144xf32>
    %585 = arith.addf %579, %584 : vector<8x144xf32>
    %c25 = arith.constant 25 : index
    %c0_585 = arith.constant 0 : index
    %c0_586 = arith.constant 0 : index
    %586 = vector.load %arg1[%c25, %c0_585, %c0_586] : memref<26x8x26xbf16, #tpu.memory_space<vmem>>, vector<1x8x26xbf16>
    %587 = vector.shape_cast %586 : vector<1x8x26xbf16> to vector<8x26xbf16>
    %c2_587 = arith.constant 2 : index
    %c0_588 = arith.constant 0 : index
    %c0_589 = arith.constant 0 : index
    %588 = vector.load %arg2[%c2_587, %c0_588, %c0_589] : memref<3x26x144xbf16, #tpu.memory_space<vmem>>, vector<1x26x144xbf16>
    %589 = vector.shape_cast %588 : vector<1x26x144xbf16> to vector<26x144xbf16>
    %cst_590 = arith.constant dense<0.000000e+00> : vector<8x144xf32>
    %590 = tpu.matmul %587, %589, %cst_590 {dimension_numbers = #tpu.dot_dimension_numbers<[1], [0], [0], [1], [0, 0, 1, 1], [], []>} : vector<8x26xbf16>, vector<26x144xbf16>, vector<8x144xf32> -> vector<8x144xf32>
    %591 = arith.addf %585, %590 : vector<8x144xf32>
    %592 = arith.maximumf %570, %591 : vector<8x144xf32>
    %593 = arith.truncf %592 : vector<8x144xf32> to vector<8x144xbf16>
    %c0_591 = arith.constant 0 : index
    %c0_592 = arith.constant 0 : index
    %594 = vector.load %arg4[%c0_591, %c0_592] : memref<144x72xbf16, #tpu.memory_space<vmem>>, vector<144x72xbf16>
    %cst_593 = arith.constant dense<0.000000e+00> : vector<8x72xf32>
    %595 = tpu.matmul %593, %594, %cst_593 {dimension_numbers = #tpu.dot_dimension_numbers<[1], [0], [0], [1], [0, 0, 1, 1], [], []>} : vector<8x144xbf16>, vector<144x72xbf16>, vector<8x72xf32> -> vector<8x72xf32>
    %c0_594 = arith.constant 0 : index
    %c0_595 = arith.constant 0 : index
    %596 = vector.load %arg5[%c0_594, %c0_595] : memref<144x72xbf16, #tpu.memory_space<vmem>>, vector<144x72xbf16>
    %cst_596 = arith.constant dense<0.000000e+00> : vector<8x72xf32>
    %597 = tpu.matmul %593, %596, %cst_596 {dimension_numbers = #tpu.dot_dimension_numbers<[1], [0], [0], [1], [0, 0, 1, 1], [], []>} : vector<8x144xbf16>, vector<144x72xbf16>, vector<8x72xf32> -> vector<8x72xf32>
    %598 = arith.maximumf %595, %597 : vector<8x72xf32>
    %599 = arith.truncf %598 : vector<8x72xf32> to vector<8x72xbf16>
    %c0_597 = arith.constant 0 : index
    %c0_598 = arith.constant 0 : index
    %600 = vector.load %arg7[%c0_597, %c0_598] : memref<1x160xf32, #tpu.memory_space<vmem>>, vector<1x160xf32>
    %601 = vector.shape_cast %600 : vector<1x160xf32> to vector<1x160xf32>
    %602 = vector.broadcast %601 : vector<1x160xf32> to vector<8x160xf32>
    %c0_599 = arith.constant 0 : index
    %c0_600 = arith.constant 0 : index
    %c0_601 = arith.constant 0 : index
    %603 = vector.load %arg6[%c0_599, %c0_600, %c0_601] : memref<3x72x160xbf16, #tpu.memory_space<vmem>>, vector<1x72x160xbf16>
    %604 = vector.shape_cast %603 : vector<1x72x160xbf16> to vector<72x160xbf16>
    %cst_602 = arith.constant dense<0.000000e+00> : vector<8x160xf32>
    %605 = tpu.matmul %49, %604, %cst_602 {dimension_numbers = #tpu.dot_dimension_numbers<[1], [0], [0], [1], [0, 0, 1, 1], [], []>} : vector<8x72xbf16>, vector<72x160xbf16>, vector<8x160xf32> -> vector<8x160xf32>
    %606 = arith.addf %602, %605 : vector<8x160xf32>
    %c1_603 = arith.constant 1 : index
    %c0_604 = arith.constant 0 : index
    %c0_605 = arith.constant 0 : index
    %607 = vector.load %arg6[%c1_603, %c0_604, %c0_605] : memref<3x72x160xbf16, #tpu.memory_space<vmem>>, vector<1x72x160xbf16>
    %608 = vector.shape_cast %607 : vector<1x72x160xbf16> to vector<72x160xbf16>
    %cst_606 = arith.constant dense<0.000000e+00> : vector<8x160xf32>
    %609 = tpu.matmul %99, %608, %cst_606 {dimension_numbers = #tpu.dot_dimension_numbers<[1], [0], [0], [1], [0, 0, 1, 1], [], []>} : vector<8x72xbf16>, vector<72x160xbf16>, vector<8x160xf32> -> vector<8x160xf32>
    %610 = arith.addf %606, %609 : vector<8x160xf32>
    %c2_607 = arith.constant 2 : index
    %c0_608 = arith.constant 0 : index
    %c0_609 = arith.constant 0 : index
    %611 = vector.load %arg6[%c2_607, %c0_608, %c0_609] : memref<3x72x160xbf16, #tpu.memory_space<vmem>>, vector<1x72x160xbf16>
    %612 = vector.shape_cast %611 : vector<1x72x160xbf16> to vector<72x160xbf16>
    %cst_610 = arith.constant dense<0.000000e+00> : vector<8x160xf32>
    %613 = tpu.matmul %149, %612, %cst_610 {dimension_numbers = #tpu.dot_dimension_numbers<[1], [0], [0], [1], [0, 0, 1, 1], [], []>} : vector<8x72xbf16>, vector<72x160xbf16>, vector<8x160xf32> -> vector<8x160xf32>
    %614 = arith.addf %610, %613 : vector<8x160xf32>
    %c0_611 = arith.constant 0 : index
    %c0_612 = arith.constant 0 : index
    %615 = vector.load %arg7[%c0_611, %c0_612] : memref<1x160xf32, #tpu.memory_space<vmem>>, vector<1x160xf32>
    %616 = vector.shape_cast %615 : vector<1x160xf32> to vector<1x160xf32>
    %617 = vector.broadcast %616 : vector<1x160xf32> to vector<8x160xf32>
    %c0_613 = arith.constant 0 : index
    %c0_614 = arith.constant 0 : index
    %c0_615 = arith.constant 0 : index
    %618 = vector.load %arg6[%c0_613, %c0_614, %c0_615] : memref<3x72x160xbf16, #tpu.memory_space<vmem>>, vector<1x72x160xbf16>
    %619 = vector.shape_cast %618 : vector<1x72x160xbf16> to vector<72x160xbf16>
    %cst_616 = arith.constant dense<0.000000e+00> : vector<8x160xf32>
    %620 = tpu.matmul %99, %619, %cst_616 {dimension_numbers = #tpu.dot_dimension_numbers<[1], [0], [0], [1], [0, 0, 1, 1], [], []>} : vector<8x72xbf16>, vector<72x160xbf16>, vector<8x160xf32> -> vector<8x160xf32>
    %621 = arith.addf %617, %620 : vector<8x160xf32>
    %c1_617 = arith.constant 1 : index
    %c0_618 = arith.constant 0 : index
    %c0_619 = arith.constant 0 : index
    %622 = vector.load %arg6[%c1_617, %c0_618, %c0_619] : memref<3x72x160xbf16, #tpu.memory_space<vmem>>, vector<1x72x160xbf16>
    %623 = vector.shape_cast %622 : vector<1x72x160xbf16> to vector<72x160xbf16>
    %cst_620 = arith.constant dense<0.000000e+00> : vector<8x160xf32>
    %624 = tpu.matmul %149, %623, %cst_620 {dimension_numbers = #tpu.dot_dimension_numbers<[1], [0], [0], [1], [0, 0, 1, 1], [], []>} : vector<8x72xbf16>, vector<72x160xbf16>, vector<8x160xf32> -> vector<8x160xf32>
    %625 = arith.addf %621, %624 : vector<8x160xf32>
    %c2_621 = arith.constant 2 : index
    %c0_622 = arith.constant 0 : index
    %c0_623 = arith.constant 0 : index
    %626 = vector.load %arg6[%c2_621, %c0_622, %c0_623] : memref<3x72x160xbf16, #tpu.memory_space<vmem>>, vector<1x72x160xbf16>
    %627 = vector.shape_cast %626 : vector<1x72x160xbf16> to vector<72x160xbf16>
    %cst_624 = arith.constant dense<0.000000e+00> : vector<8x160xf32>
    %628 = tpu.matmul %199, %627, %cst_624 {dimension_numbers = #tpu.dot_dimension_numbers<[1], [0], [0], [1], [0, 0, 1, 1], [], []>} : vector<8x72xbf16>, vector<72x160xbf16>, vector<8x160xf32> -> vector<8x160xf32>
    %629 = arith.addf %625, %628 : vector<8x160xf32>
    %630 = arith.maximumf %614, %629 : vector<8x160xf32>
    %631 = arith.truncf %630 : vector<8x160xf32> to vector<8x160xbf16>
    %c0_625 = arith.constant 0 : index
    %c0_626 = arith.constant 0 : index
    %632 = vector.load %arg8[%c0_625, %c0_626] : memref<160x80xbf16, #tpu.memory_space<vmem>>, vector<160x80xbf16>
    %cst_627 = arith.constant dense<0.000000e+00> : vector<8x80xf32>
    %633 = tpu.matmul %631, %632, %cst_627 {dimension_numbers = #tpu.dot_dimension_numbers<[1], [0], [0], [1], [0, 0, 1, 1], [], []>} : vector<8x160xbf16>, vector<160x80xbf16>, vector<8x80xf32> -> vector<8x80xf32>
    %c0_628 = arith.constant 0 : index
    %c0_629 = arith.constant 0 : index
    %634 = vector.load %arg9[%c0_628, %c0_629] : memref<160x80xbf16, #tpu.memory_space<vmem>>, vector<160x80xbf16>
    %cst_630 = arith.constant dense<0.000000e+00> : vector<8x80xf32>
    %635 = tpu.matmul %631, %634, %cst_630 {dimension_numbers = #tpu.dot_dimension_numbers<[1], [0], [0], [1], [0, 0, 1, 1], [], []>} : vector<8x160xbf16>, vector<160x80xbf16>, vector<8x80xf32> -> vector<8x80xf32>
    %636 = arith.maximumf %633, %635 : vector<8x80xf32>
    %637 = arith.truncf %636 : vector<8x80xf32> to vector<8x80xbf16>
    %c0_631 = arith.constant 0 : index
    %c0_632 = arith.constant 0 : index
    %638 = vector.load %arg7[%c0_631, %c0_632] : memref<1x160xf32, #tpu.memory_space<vmem>>, vector<1x160xf32>
    %639 = vector.shape_cast %638 : vector<1x160xf32> to vector<1x160xf32>
    %640 = vector.broadcast %639 : vector<1x160xf32> to vector<8x160xf32>
    %c0_633 = arith.constant 0 : index
    %c0_634 = arith.constant 0 : index
    %c0_635 = arith.constant 0 : index
    %641 = vector.load %arg6[%c0_633, %c0_634, %c0_635] : memref<3x72x160xbf16, #tpu.memory_space<vmem>>, vector<1x72x160xbf16>
    %642 = vector.shape_cast %641 : vector<1x72x160xbf16> to vector<72x160xbf16>
    %cst_636 = arith.constant dense<0.000000e+00> : vector<8x160xf32>
    %643 = tpu.matmul %149, %642, %cst_636 {dimension_numbers = #tpu.dot_dimension_numbers<[1], [0], [0], [1], [0, 0, 1, 1], [], []>} : vector<8x72xbf16>, vector<72x160xbf16>, vector<8x160xf32> -> vector<8x160xf32>
    %644 = arith.addf %640, %643 : vector<8x160xf32>
    %c1_637 = arith.constant 1 : index
    %c0_638 = arith.constant 0 : index
    %c0_639 = arith.constant 0 : index
    %645 = vector.load %arg6[%c1_637, %c0_638, %c0_639] : memref<3x72x160xbf16, #tpu.memory_space<vmem>>, vector<1x72x160xbf16>
    %646 = vector.shape_cast %645 : vector<1x72x160xbf16> to vector<72x160xbf16>
    %cst_640 = arith.constant dense<0.000000e+00> : vector<8x160xf32>
    %647 = tpu.matmul %199, %646, %cst_640 {dimension_numbers = #tpu.dot_dimension_numbers<[1], [0], [0], [1], [0, 0, 1, 1], [], []>} : vector<8x72xbf16>, vector<72x160xbf16>, vector<8x160xf32> -> vector<8x160xf32>
    %648 = arith.addf %644, %647 : vector<8x160xf32>
    %c2_641 = arith.constant 2 : index
    %c0_642 = arith.constant 0 : index
    %c0_643 = arith.constant 0 : index
    %649 = vector.load %arg6[%c2_641, %c0_642, %c0_643] : memref<3x72x160xbf16, #tpu.memory_space<vmem>>, vector<1x72x160xbf16>
    %650 = vector.shape_cast %649 : vector<1x72x160xbf16> to vector<72x160xbf16>
    %cst_644 = arith.constant dense<0.000000e+00> : vector<8x160xf32>
    %651 = tpu.matmul %249, %650, %cst_644 {dimension_numbers = #tpu.dot_dimension_numbers<[1], [0], [0], [1], [0, 0, 1, 1], [], []>} : vector<8x72xbf16>, vector<72x160xbf16>, vector<8x160xf32> -> vector<8x160xf32>
    %652 = arith.addf %648, %651 : vector<8x160xf32>
    %c0_645 = arith.constant 0 : index
    %c0_646 = arith.constant 0 : index
    %653 = vector.load %arg7[%c0_645, %c0_646] : memref<1x160xf32, #tpu.memory_space<vmem>>, vector<1x160xf32>
    %654 = vector.shape_cast %653 : vector<1x160xf32> to vector<1x160xf32>
    %655 = vector.broadcast %654 : vector<1x160xf32> to vector<8x160xf32>
    %c0_647 = arith.constant 0 : index
    %c0_648 = arith.constant 0 : index
    %c0_649 = arith.constant 0 : index
    %656 = vector.load %arg6[%c0_647, %c0_648, %c0_649] : memref<3x72x160xbf16, #tpu.memory_space<vmem>>, vector<1x72x160xbf16>
    %657 = vector.shape_cast %656 : vector<1x72x160xbf16> to vector<72x160xbf16>
    %cst_650 = arith.constant dense<0.000000e+00> : vector<8x160xf32>
    %658 = tpu.matmul %199, %657, %cst_650 {dimension_numbers = #tpu.dot_dimension_numbers<[1], [0], [0], [1], [0, 0, 1, 1], [], []>} : vector<8x72xbf16>, vector<72x160xbf16>, vector<8x160xf32> -> vector<8x160xf32>
    %659 = arith.addf %655, %658 : vector<8x160xf32>
    %c1_651 = arith.constant 1 : index
    %c0_652 = arith.constant 0 : index
    %c0_653 = arith.constant 0 : index
    %660 = vector.load %arg6[%c1_651, %c0_652, %c0_653] : memref<3x72x160xbf16, #tpu.memory_space<vmem>>, vector<1x72x160xbf16>
    %661 = vector.shape_cast %660 : vector<1x72x160xbf16> to vector<72x160xbf16>
    %cst_654 = arith.constant dense<0.000000e+00> : vector<8x160xf32>
    %662 = tpu.matmul %249, %661, %cst_654 {dimension_numbers = #tpu.dot_dimension_numbers<[1], [0], [0], [1], [0, 0, 1, 1], [], []>} : vector<8x72xbf16>, vector<72x160xbf16>, vector<8x160xf32> -> vector<8x160xf32>
    %663 = arith.addf %659, %662 : vector<8x160xf32>
    %c2_655 = arith.constant 2 : index
    %c0_656 = arith.constant 0 : index
    %c0_657 = arith.constant 0 : index
    %664 = vector.load %arg6[%c2_655, %c0_656, %c0_657] : memref<3x72x160xbf16, #tpu.memory_space<vmem>>, vector<1x72x160xbf16>
    %665 = vector.shape_cast %664 : vector<1x72x160xbf16> to vector<72x160xbf16>
    %cst_658 = arith.constant dense<0.000000e+00> : vector<8x160xf32>
    %666 = tpu.matmul %299, %665, %cst_658 {dimension_numbers = #tpu.dot_dimension_numbers<[1], [0], [0], [1], [0, 0, 1, 1], [], []>} : vector<8x72xbf16>, vector<72x160xbf16>, vector<8x160xf32> -> vector<8x160xf32>
    %667 = arith.addf %663, %666 : vector<8x160xf32>
    %668 = arith.maximumf %652, %667 : vector<8x160xf32>
    %669 = arith.truncf %668 : vector<8x160xf32> to vector<8x160xbf16>
    %c0_659 = arith.constant 0 : index
    %c0_660 = arith.constant 0 : index
    %670 = vector.load %arg8[%c0_659, %c0_660] : memref<160x80xbf16, #tpu.memory_space<vmem>>, vector<160x80xbf16>
    %cst_661 = arith.constant dense<0.000000e+00> : vector<8x80xf32>
    %671 = tpu.matmul %669, %670, %cst_661 {dimension_numbers = #tpu.dot_dimension_numbers<[1], [0], [0], [1], [0, 0, 1, 1], [], []>} : vector<8x160xbf16>, vector<160x80xbf16>, vector<8x80xf32> -> vector<8x80xf32>
    %c0_662 = arith.constant 0 : index
    %c0_663 = arith.constant 0 : index
    %672 = vector.load %arg9[%c0_662, %c0_663] : memref<160x80xbf16, #tpu.memory_space<vmem>>, vector<160x80xbf16>
    %cst_664 = arith.constant dense<0.000000e+00> : vector<8x80xf32>
    %673 = tpu.matmul %669, %672, %cst_664 {dimension_numbers = #tpu.dot_dimension_numbers<[1], [0], [0], [1], [0, 0, 1, 1], [], []>} : vector<8x160xbf16>, vector<160x80xbf16>, vector<8x80xf32> -> vector<8x80xf32>
    %674 = arith.maximumf %671, %673 : vector<8x80xf32>
    %675 = arith.truncf %674 : vector<8x80xf32> to vector<8x80xbf16>
    %c0_665 = arith.constant 0 : index
    %c0_666 = arith.constant 0 : index
    %676 = vector.load %arg7[%c0_665, %c0_666] : memref<1x160xf32, #tpu.memory_space<vmem>>, vector<1x160xf32>
    %677 = vector.shape_cast %676 : vector<1x160xf32> to vector<1x160xf32>
    %678 = vector.broadcast %677 : vector<1x160xf32> to vector<8x160xf32>
    %c0_667 = arith.constant 0 : index
    %c0_668 = arith.constant 0 : index
    %c0_669 = arith.constant 0 : index
    %679 = vector.load %arg6[%c0_667, %c0_668, %c0_669] : memref<3x72x160xbf16, #tpu.memory_space<vmem>>, vector<1x72x160xbf16>
    %680 = vector.shape_cast %679 : vector<1x72x160xbf16> to vector<72x160xbf16>
    %cst_670 = arith.constant dense<0.000000e+00> : vector<8x160xf32>
    %681 = tpu.matmul %249, %680, %cst_670 {dimension_numbers = #tpu.dot_dimension_numbers<[1], [0], [0], [1], [0, 0, 1, 1], [], []>} : vector<8x72xbf16>, vector<72x160xbf16>, vector<8x160xf32> -> vector<8x160xf32>
    %682 = arith.addf %678, %681 : vector<8x160xf32>
    %c1_671 = arith.constant 1 : index
    %c0_672 = arith.constant 0 : index
    %c0_673 = arith.constant 0 : index
    %683 = vector.load %arg6[%c1_671, %c0_672, %c0_673] : memref<3x72x160xbf16, #tpu.memory_space<vmem>>, vector<1x72x160xbf16>
    %684 = vector.shape_cast %683 : vector<1x72x160xbf16> to vector<72x160xbf16>
    %cst_674 = arith.constant dense<0.000000e+00> : vector<8x160xf32>
    %685 = tpu.matmul %299, %684, %cst_674 {dimension_numbers = #tpu.dot_dimension_numbers<[1], [0], [0], [1], [0, 0, 1, 1], [], []>} : vector<8x72xbf16>, vector<72x160xbf16>, vector<8x160xf32> -> vector<8x160xf32>
    %686 = arith.addf %682, %685 : vector<8x160xf32>
    %c2_675 = arith.constant 2 : index
    %c0_676 = arith.constant 0 : index
    %c0_677 = arith.constant 0 : index
    %687 = vector.load %arg6[%c2_675, %c0_676, %c0_677] : memref<3x72x160xbf16, #tpu.memory_space<vmem>>, vector<1x72x160xbf16>
    %688 = vector.shape_cast %687 : vector<1x72x160xbf16> to vector<72x160xbf16>
    %cst_678 = arith.constant dense<0.000000e+00> : vector<8x160xf32>
    %689 = tpu.matmul %349, %688, %cst_678 {dimension_numbers = #tpu.dot_dimension_numbers<[1], [0], [0], [1], [0, 0, 1, 1], [], []>} : vector<8x72xbf16>, vector<72x160xbf16>, vector<8x160xf32> -> vector<8x160xf32>
    %690 = arith.addf %686, %689 : vector<8x160xf32>
    %c0_679 = arith.constant 0 : index
    %c0_680 = arith.constant 0 : index
    %691 = vector.load %arg7[%c0_679, %c0_680] : memref<1x160xf32, #tpu.memory_space<vmem>>, vector<1x160xf32>
    %692 = vector.shape_cast %691 : vector<1x160xf32> to vector<1x160xf32>
    %693 = vector.broadcast %692 : vector<1x160xf32> to vector<8x160xf32>
    %c0_681 = arith.constant 0 : index
    %c0_682 = arith.constant 0 : index
    %c0_683 = arith.constant 0 : index
    %694 = vector.load %arg6[%c0_681, %c0_682, %c0_683] : memref<3x72x160xbf16, #tpu.memory_space<vmem>>, vector<1x72x160xbf16>
    %695 = vector.shape_cast %694 : vector<1x72x160xbf16> to vector<72x160xbf16>
    %cst_684 = arith.constant dense<0.000000e+00> : vector<8x160xf32>
    %696 = tpu.matmul %299, %695, %cst_684 {dimension_numbers = #tpu.dot_dimension_numbers<[1], [0], [0], [1], [0, 0, 1, 1], [], []>} : vector<8x72xbf16>, vector<72x160xbf16>, vector<8x160xf32> -> vector<8x160xf32>
    %697 = arith.addf %693, %696 : vector<8x160xf32>
    %c1_685 = arith.constant 1 : index
    %c0_686 = arith.constant 0 : index
    %c0_687 = arith.constant 0 : index
    %698 = vector.load %arg6[%c1_685, %c0_686, %c0_687] : memref<3x72x160xbf16, #tpu.memory_space<vmem>>, vector<1x72x160xbf16>
    %699 = vector.shape_cast %698 : vector<1x72x160xbf16> to vector<72x160xbf16>
    %cst_688 = arith.constant dense<0.000000e+00> : vector<8x160xf32>
    %700 = tpu.matmul %349, %699, %cst_688 {dimension_numbers = #tpu.dot_dimension_numbers<[1], [0], [0], [1], [0, 0, 1, 1], [], []>} : vector<8x72xbf16>, vector<72x160xbf16>, vector<8x160xf32> -> vector<8x160xf32>
    %701 = arith.addf %697, %700 : vector<8x160xf32>
    %c2_689 = arith.constant 2 : index
    %c0_690 = arith.constant 0 : index
    %c0_691 = arith.constant 0 : index
    %702 = vector.load %arg6[%c2_689, %c0_690, %c0_691] : memref<3x72x160xbf16, #tpu.memory_space<vmem>>, vector<1x72x160xbf16>
    %703 = vector.shape_cast %702 : vector<1x72x160xbf16> to vector<72x160xbf16>
    %cst_692 = arith.constant dense<0.000000e+00> : vector<8x160xf32>
    %704 = tpu.matmul %399, %703, %cst_692 {dimension_numbers = #tpu.dot_dimension_numbers<[1], [0], [0], [1], [0, 0, 1, 1], [], []>} : vector<8x72xbf16>, vector<72x160xbf16>, vector<8x160xf32> -> vector<8x160xf32>
    %705 = arith.addf %701, %704 : vector<8x160xf32>
    %706 = arith.maximumf %690, %705 : vector<8x160xf32>
    %707 = arith.truncf %706 : vector<8x160xf32> to vector<8x160xbf16>
    %c0_693 = arith.constant 0 : index
    %c0_694 = arith.constant 0 : index
    %708 = vector.load %arg8[%c0_693, %c0_694] : memref<160x80xbf16, #tpu.memory_space<vmem>>, vector<160x80xbf16>
    %cst_695 = arith.constant dense<0.000000e+00> : vector<8x80xf32>
    %709 = tpu.matmul %707, %708, %cst_695 {dimension_numbers = #tpu.dot_dimension_numbers<[1], [0], [0], [1], [0, 0, 1, 1], [], []>} : vector<8x160xbf16>, vector<160x80xbf16>, vector<8x80xf32> -> vector<8x80xf32>
    %c0_696 = arith.constant 0 : index
    %c0_697 = arith.constant 0 : index
    %710 = vector.load %arg9[%c0_696, %c0_697] : memref<160x80xbf16, #tpu.memory_space<vmem>>, vector<160x80xbf16>
    %cst_698 = arith.constant dense<0.000000e+00> : vector<8x80xf32>
    %711 = tpu.matmul %707, %710, %cst_698 {dimension_numbers = #tpu.dot_dimension_numbers<[1], [0], [0], [1], [0, 0, 1, 1], [], []>} : vector<8x160xbf16>, vector<160x80xbf16>, vector<8x80xf32> -> vector<8x80xf32>
    %712 = arith.maximumf %709, %711 : vector<8x80xf32>
    %713 = arith.truncf %712 : vector<8x80xf32> to vector<8x80xbf16>
    %c0_699 = arith.constant 0 : index
    %c0_700 = arith.constant 0 : index
    %714 = vector.load %arg7[%c0_699, %c0_700] : memref<1x160xf32, #tpu.memory_space<vmem>>, vector<1x160xf32>
    %715 = vector.shape_cast %714 : vector<1x160xf32> to vector<1x160xf32>
    %716 = vector.broadcast %715 : vector<1x160xf32> to vector<8x160xf32>
    %c0_701 = arith.constant 0 : index
    %c0_702 = arith.constant 0 : index
    %c0_703 = arith.constant 0 : index
    %717 = vector.load %arg6[%c0_701, %c0_702, %c0_703] : memref<3x72x160xbf16, #tpu.memory_space<vmem>>, vector<1x72x160xbf16>
    %718 = vector.shape_cast %717 : vector<1x72x160xbf16> to vector<72x160xbf16>
    %cst_704 = arith.constant dense<0.000000e+00> : vector<8x160xf32>
    %719 = tpu.matmul %349, %718, %cst_704 {dimension_numbers = #tpu.dot_dimension_numbers<[1], [0], [0], [1], [0, 0, 1, 1], [], []>} : vector<8x72xbf16>, vector<72x160xbf16>, vector<8x160xf32> -> vector<8x160xf32>
    %720 = arith.addf %716, %719 : vector<8x160xf32>
    %c1_705 = arith.constant 1 : index
    %c0_706 = arith.constant 0 : index
    %c0_707 = arith.constant 0 : index
    %721 = vector.load %arg6[%c1_705, %c0_706, %c0_707] : memref<3x72x160xbf16, #tpu.memory_space<vmem>>, vector<1x72x160xbf16>
    %722 = vector.shape_cast %721 : vector<1x72x160xbf16> to vector<72x160xbf16>
    %cst_708 = arith.constant dense<0.000000e+00> : vector<8x160xf32>
    %723 = tpu.matmul %399, %722, %cst_708 {dimension_numbers = #tpu.dot_dimension_numbers<[1], [0], [0], [1], [0, 0, 1, 1], [], []>} : vector<8x72xbf16>, vector<72x160xbf16>, vector<8x160xf32> -> vector<8x160xf32>
    %724 = arith.addf %720, %723 : vector<8x160xf32>
    %c2_709 = arith.constant 2 : index
    %c0_710 = arith.constant 0 : index
    %c0_711 = arith.constant 0 : index
    %725 = vector.load %arg6[%c2_709, %c0_710, %c0_711] : memref<3x72x160xbf16, #tpu.memory_space<vmem>>, vector<1x72x160xbf16>
    %726 = vector.shape_cast %725 : vector<1x72x160xbf16> to vector<72x160xbf16>
    %cst_712 = arith.constant dense<0.000000e+00> : vector<8x160xf32>
    %727 = tpu.matmul %449, %726, %cst_712 {dimension_numbers = #tpu.dot_dimension_numbers<[1], [0], [0], [1], [0, 0, 1, 1], [], []>} : vector<8x72xbf16>, vector<72x160xbf16>, vector<8x160xf32> -> vector<8x160xf32>
    %728 = arith.addf %724, %727 : vector<8x160xf32>
    %c0_713 = arith.constant 0 : index
    %c0_714 = arith.constant 0 : index
    %729 = vector.load %arg7[%c0_713, %c0_714] : memref<1x160xf32, #tpu.memory_space<vmem>>, vector<1x160xf32>
    %730 = vector.shape_cast %729 : vector<1x160xf32> to vector<1x160xf32>
    %731 = vector.broadcast %730 : vector<1x160xf32> to vector<8x160xf32>
    %c0_715 = arith.constant 0 : index
    %c0_716 = arith.constant 0 : index
    %c0_717 = arith.constant 0 : index
    %732 = vector.load %arg6[%c0_715, %c0_716, %c0_717] : memref<3x72x160xbf16, #tpu.memory_space<vmem>>, vector<1x72x160xbf16>
    %733 = vector.shape_cast %732 : vector<1x72x160xbf16> to vector<72x160xbf16>
    %cst_718 = arith.constant dense<0.000000e+00> : vector<8x160xf32>
    %734 = tpu.matmul %399, %733, %cst_718 {dimension_numbers = #tpu.dot_dimension_numbers<[1], [0], [0], [1], [0, 0, 1, 1], [], []>} : vector<8x72xbf16>, vector<72x160xbf16>, vector<8x160xf32> -> vector<8x160xf32>
    %735 = arith.addf %731, %734 : vector<8x160xf32>
    %c1_719 = arith.constant 1 : index
    %c0_720 = arith.constant 0 : index
    %c0_721 = arith.constant 0 : index
    %736 = vector.load %arg6[%c1_719, %c0_720, %c0_721] : memref<3x72x160xbf16, #tpu.memory_space<vmem>>, vector<1x72x160xbf16>
    %737 = vector.shape_cast %736 : vector<1x72x160xbf16> to vector<72x160xbf16>
    %cst_722 = arith.constant dense<0.000000e+00> : vector<8x160xf32>
    %738 = tpu.matmul %449, %737, %cst_722 {dimension_numbers = #tpu.dot_dimension_numbers<[1], [0], [0], [1], [0, 0, 1, 1], [], []>} : vector<8x72xbf16>, vector<72x160xbf16>, vector<8x160xf32> -> vector<8x160xf32>
    %739 = arith.addf %735, %738 : vector<8x160xf32>
    %c2_723 = arith.constant 2 : index
    %c0_724 = arith.constant 0 : index
    %c0_725 = arith.constant 0 : index
    %740 = vector.load %arg6[%c2_723, %c0_724, %c0_725] : memref<3x72x160xbf16, #tpu.memory_space<vmem>>, vector<1x72x160xbf16>
    %741 = vector.shape_cast %740 : vector<1x72x160xbf16> to vector<72x160xbf16>
    %cst_726 = arith.constant dense<0.000000e+00> : vector<8x160xf32>
    %742 = tpu.matmul %499, %741, %cst_726 {dimension_numbers = #tpu.dot_dimension_numbers<[1], [0], [0], [1], [0, 0, 1, 1], [], []>} : vector<8x72xbf16>, vector<72x160xbf16>, vector<8x160xf32> -> vector<8x160xf32>
    %743 = arith.addf %739, %742 : vector<8x160xf32>
    %744 = arith.maximumf %728, %743 : vector<8x160xf32>
    %745 = arith.truncf %744 : vector<8x160xf32> to vector<8x160xbf16>
    %c0_727 = arith.constant 0 : index
    %c0_728 = arith.constant 0 : index
    %746 = vector.load %arg8[%c0_727, %c0_728] : memref<160x80xbf16, #tpu.memory_space<vmem>>, vector<160x80xbf16>
    %cst_729 = arith.constant dense<0.000000e+00> : vector<8x80xf32>
    %747 = tpu.matmul %745, %746, %cst_729 {dimension_numbers = #tpu.dot_dimension_numbers<[1], [0], [0], [1], [0, 0, 1, 1], [], []>} : vector<8x160xbf16>, vector<160x80xbf16>, vector<8x80xf32> -> vector<8x80xf32>
    %c0_730 = arith.constant 0 : index
    %c0_731 = arith.constant 0 : index
    %748 = vector.load %arg9[%c0_730, %c0_731] : memref<160x80xbf16, #tpu.memory_space<vmem>>, vector<160x80xbf16>
    %cst_732 = arith.constant dense<0.000000e+00> : vector<8x80xf32>
    %749 = tpu.matmul %745, %748, %cst_732 {dimension_numbers = #tpu.dot_dimension_numbers<[1], [0], [0], [1], [0, 0, 1, 1], [], []>} : vector<8x160xbf16>, vector<160x80xbf16>, vector<8x80xf32> -> vector<8x80xf32>
    %750 = arith.maximumf %747, %749 : vector<8x80xf32>
    %751 = arith.truncf %750 : vector<8x80xf32> to vector<8x80xbf16>
    %c0_733 = arith.constant 0 : index
    %c0_734 = arith.constant 0 : index
    %752 = vector.load %arg7[%c0_733, %c0_734] : memref<1x160xf32, #tpu.memory_space<vmem>>, vector<1x160xf32>
    %753 = vector.shape_cast %752 : vector<1x160xf32> to vector<1x160xf32>
    %754 = vector.broadcast %753 : vector<1x160xf32> to vector<8x160xf32>
    %c0_735 = arith.constant 0 : index
    %c0_736 = arith.constant 0 : index
    %c0_737 = arith.constant 0 : index
    %755 = vector.load %arg6[%c0_735, %c0_736, %c0_737] : memref<3x72x160xbf16, #tpu.memory_space<vmem>>, vector<1x72x160xbf16>
    %756 = vector.shape_cast %755 : vector<1x72x160xbf16> to vector<72x160xbf16>
    %cst_738 = arith.constant dense<0.000000e+00> : vector<8x160xf32>
    %757 = tpu.matmul %449, %756, %cst_738 {dimension_numbers = #tpu.dot_dimension_numbers<[1], [0], [0], [1], [0, 0, 1, 1], [], []>} : vector<8x72xbf16>, vector<72x160xbf16>, vector<8x160xf32> -> vector<8x160xf32>
    %758 = arith.addf %754, %757 : vector<8x160xf32>
    %c1_739 = arith.constant 1 : index
    %c0_740 = arith.constant 0 : index
    %c0_741 = arith.constant 0 : index
    %759 = vector.load %arg6[%c1_739, %c0_740, %c0_741] : memref<3x72x160xbf16, #tpu.memory_space<vmem>>, vector<1x72x160xbf16>
    %760 = vector.shape_cast %759 : vector<1x72x160xbf16> to vector<72x160xbf16>
    %cst_742 = arith.constant dense<0.000000e+00> : vector<8x160xf32>
    %761 = tpu.matmul %499, %760, %cst_742 {dimension_numbers = #tpu.dot_dimension_numbers<[1], [0], [0], [1], [0, 0, 1, 1], [], []>} : vector<8x72xbf16>, vector<72x160xbf16>, vector<8x160xf32> -> vector<8x160xf32>
    %762 = arith.addf %758, %761 : vector<8x160xf32>
    %c2_743 = arith.constant 2 : index
    %c0_744 = arith.constant 0 : index
    %c0_745 = arith.constant 0 : index
    %763 = vector.load %arg6[%c2_743, %c0_744, %c0_745] : memref<3x72x160xbf16, #tpu.memory_space<vmem>>, vector<1x72x160xbf16>
    %764 = vector.shape_cast %763 : vector<1x72x160xbf16> to vector<72x160xbf16>
    %cst_746 = arith.constant dense<0.000000e+00> : vector<8x160xf32>
    %765 = tpu.matmul %549, %764, %cst_746 {dimension_numbers = #tpu.dot_dimension_numbers<[1], [0], [0], [1], [0, 0, 1, 1], [], []>} : vector<8x72xbf16>, vector<72x160xbf16>, vector<8x160xf32> -> vector<8x160xf32>
    %766 = arith.addf %762, %765 : vector<8x160xf32>
    %c0_747 = arith.constant 0 : index
    %c0_748 = arith.constant 0 : index
    %767 = vector.load %arg7[%c0_747, %c0_748] : memref<1x160xf32, #tpu.memory_space<vmem>>, vector<1x160xf32>
    %768 = vector.shape_cast %767 : vector<1x160xf32> to vector<1x160xf32>
    %769 = vector.broadcast %768 : vector<1x160xf32> to vector<8x160xf32>
    %c0_749 = arith.constant 0 : index
    %c0_750 = arith.constant 0 : index
    %c0_751 = arith.constant 0 : index
    %770 = vector.load %arg6[%c0_749, %c0_750, %c0_751] : memref<3x72x160xbf16, #tpu.memory_space<vmem>>, vector<1x72x160xbf16>
    %771 = vector.shape_cast %770 : vector<1x72x160xbf16> to vector<72x160xbf16>
    %cst_752 = arith.constant dense<0.000000e+00> : vector<8x160xf32>
    %772 = tpu.matmul %499, %771, %cst_752 {dimension_numbers = #tpu.dot_dimension_numbers<[1], [0], [0], [1], [0, 0, 1, 1], [], []>} : vector<8x72xbf16>, vector<72x160xbf16>, vector<8x160xf32> -> vector<8x160xf32>
    %773 = arith.addf %769, %772 : vector<8x160xf32>
    %c1_753 = arith.constant 1 : index
    %c0_754 = arith.constant 0 : index
    %c0_755 = arith.constant 0 : index
    %774 = vector.load %arg6[%c1_753, %c0_754, %c0_755] : memref<3x72x160xbf16, #tpu.memory_space<vmem>>, vector<1x72x160xbf16>
    %775 = vector.shape_cast %774 : vector<1x72x160xbf16> to vector<72x160xbf16>
    %cst_756 = arith.constant dense<0.000000e+00> : vector<8x160xf32>
    %776 = tpu.matmul %549, %775, %cst_756 {dimension_numbers = #tpu.dot_dimension_numbers<[1], [0], [0], [1], [0, 0, 1, 1], [], []>} : vector<8x72xbf16>, vector<72x160xbf16>, vector<8x160xf32> -> vector<8x160xf32>
    %777 = arith.addf %773, %776 : vector<8x160xf32>
    %c2_757 = arith.constant 2 : index
    %c0_758 = arith.constant 0 : index
    %c0_759 = arith.constant 0 : index
    %778 = vector.load %arg6[%c2_757, %c0_758, %c0_759] : memref<3x72x160xbf16, #tpu.memory_space<vmem>>, vector<1x72x160xbf16>
    %779 = vector.shape_cast %778 : vector<1x72x160xbf16> to vector<72x160xbf16>
    %cst_760 = arith.constant dense<0.000000e+00> : vector<8x160xf32>
    %780 = tpu.matmul %599, %779, %cst_760 {dimension_numbers = #tpu.dot_dimension_numbers<[1], [0], [0], [1], [0, 0, 1, 1], [], []>} : vector<8x72xbf16>, vector<72x160xbf16>, vector<8x160xf32> -> vector<8x160xf32>
    %781 = arith.addf %777, %780 : vector<8x160xf32>
    %782 = arith.maximumf %766, %781 : vector<8x160xf32>
    %783 = arith.truncf %782 : vector<8x160xf32> to vector<8x160xbf16>
    %c0_761 = arith.constant 0 : index
    %c0_762 = arith.constant 0 : index
    %784 = vector.load %arg8[%c0_761, %c0_762] : memref<160x80xbf16, #tpu.memory_space<vmem>>, vector<160x80xbf16>
    %cst_763 = arith.constant dense<0.000000e+00> : vector<8x80xf32>
    %785 = tpu.matmul %783, %784, %cst_763 {dimension_numbers = #tpu.dot_dimension_numbers<[1], [0], [0], [1], [0, 0, 1, 1], [], []>} : vector<8x160xbf16>, vector<160x80xbf16>, vector<8x80xf32> -> vector<8x80xf32>
    %c0_764 = arith.constant 0 : index
    %c0_765 = arith.constant 0 : index
    %786 = vector.load %arg9[%c0_764, %c0_765] : memref<160x80xbf16, #tpu.memory_space<vmem>>, vector<160x80xbf16>
    %cst_766 = arith.constant dense<0.000000e+00> : vector<8x80xf32>
    %787 = tpu.matmul %783, %786, %cst_766 {dimension_numbers = #tpu.dot_dimension_numbers<[1], [0], [0], [1], [0, 0, 1, 1], [], []>} : vector<8x160xbf16>, vector<160x80xbf16>, vector<8x80xf32> -> vector<8x80xf32>
    %788 = arith.maximumf %785, %787 : vector<8x80xf32>
    %789 = arith.truncf %788 : vector<8x80xf32> to vector<8x80xbf16>
    %c0_767 = arith.constant 0 : index
    %c0_768 = arith.constant 0 : index
    %790 = vector.load %arg11[%c0_767, %c0_768] : memref<1x120xf32, #tpu.memory_space<vmem>>, vector<1x120xf32>
    %791 = vector.shape_cast %790 : vector<1x120xf32> to vector<1x120xf32>
    %792 = vector.broadcast %791 : vector<1x120xf32> to vector<8x120xf32>
    %c0_769 = arith.constant 0 : index
    %c0_770 = arith.constant 0 : index
    %c0_771 = arith.constant 0 : index
    %793 = vector.load %arg10[%c0_769, %c0_770, %c0_771] : memref<5x80x120xbf16, #tpu.memory_space<vmem>>, vector<1x80x120xbf16>
    %794 = vector.shape_cast %793 : vector<1x80x120xbf16> to vector<80x120xbf16>
    %cst_772 = arith.constant dense<0.000000e+00> : vector<8x120xf32>
    %795 = tpu.matmul %637, %794, %cst_772 {dimension_numbers = #tpu.dot_dimension_numbers<[1], [0], [0], [1], [0, 0, 1, 1], [], []>} : vector<8x80xbf16>, vector<80x120xbf16>, vector<8x120xf32> -> vector<8x120xf32>
    %796 = arith.addf %792, %795 : vector<8x120xf32>
    %c1_773 = arith.constant 1 : index
    %c0_774 = arith.constant 0 : index
    %c0_775 = arith.constant 0 : index
    %797 = vector.load %arg10[%c1_773, %c0_774, %c0_775] : memref<5x80x120xbf16, #tpu.memory_space<vmem>>, vector<1x80x120xbf16>
    %798 = vector.shape_cast %797 : vector<1x80x120xbf16> to vector<80x120xbf16>
    %cst_776 = arith.constant dense<0.000000e+00> : vector<8x120xf32>
    %799 = tpu.matmul %675, %798, %cst_776 {dimension_numbers = #tpu.dot_dimension_numbers<[1], [0], [0], [1], [0, 0, 1, 1], [], []>} : vector<8x80xbf16>, vector<80x120xbf16>, vector<8x120xf32> -> vector<8x120xf32>
    %800 = arith.addf %796, %799 : vector<8x120xf32>
    %c2_777 = arith.constant 2 : index
    %c0_778 = arith.constant 0 : index
    %c0_779 = arith.constant 0 : index
    %801 = vector.load %arg10[%c2_777, %c0_778, %c0_779] : memref<5x80x120xbf16, #tpu.memory_space<vmem>>, vector<1x80x120xbf16>
    %802 = vector.shape_cast %801 : vector<1x80x120xbf16> to vector<80x120xbf16>
    %cst_780 = arith.constant dense<0.000000e+00> : vector<8x120xf32>
    %803 = tpu.matmul %713, %802, %cst_780 {dimension_numbers = #tpu.dot_dimension_numbers<[1], [0], [0], [1], [0, 0, 1, 1], [], []>} : vector<8x80xbf16>, vector<80x120xbf16>, vector<8x120xf32> -> vector<8x120xf32>
    %804 = arith.addf %800, %803 : vector<8x120xf32>
    %c3_781 = arith.constant 3 : index
    %c0_782 = arith.constant 0 : index
    %c0_783 = arith.constant 0 : index
    %805 = vector.load %arg10[%c3_781, %c0_782, %c0_783] : memref<5x80x120xbf16, #tpu.memory_space<vmem>>, vector<1x80x120xbf16>
    %806 = vector.shape_cast %805 : vector<1x80x120xbf16> to vector<80x120xbf16>
    %cst_784 = arith.constant dense<0.000000e+00> : vector<8x120xf32>
    %807 = tpu.matmul %751, %806, %cst_784 {dimension_numbers = #tpu.dot_dimension_numbers<[1], [0], [0], [1], [0, 0, 1, 1], [], []>} : vector<8x80xbf16>, vector<80x120xbf16>, vector<8x120xf32> -> vector<8x120xf32>
    %808 = arith.addf %804, %807 : vector<8x120xf32>
    %c4_785 = arith.constant 4 : index
    %c0_786 = arith.constant 0 : index
    %c0_787 = arith.constant 0 : index
    %809 = vector.load %arg10[%c4_785, %c0_786, %c0_787] : memref<5x80x120xbf16, #tpu.memory_space<vmem>>, vector<1x80x120xbf16>
    %810 = vector.shape_cast %809 : vector<1x80x120xbf16> to vector<80x120xbf16>
    %cst_788 = arith.constant dense<0.000000e+00> : vector<8x120xf32>
    %811 = tpu.matmul %789, %810, %cst_788 {dimension_numbers = #tpu.dot_dimension_numbers<[1], [0], [0], [1], [0, 0, 1, 1], [], []>} : vector<8x80xbf16>, vector<80x120xbf16>, vector<8x120xf32> -> vector<8x120xf32>
    %812 = arith.addf %808, %811 : vector<8x120xf32>
    %cst_789 = arith.constant 0.000000e+00 : f32
    %813 = vector.broadcast %cst_789 : f32 to vector<8x120xf32>
    %814 = arith.maximumf %812, %813 : vector<8x120xf32>
    %815 = arith.truncf %814 : vector<8x120xf32> to vector<8x120xbf16>
    %c0_790 = arith.constant 0 : index
    %c0_791 = arith.constant 0 : index
    %816 = vector.load %arg12[%c0_790, %c0_791] : memref<120x128xbf16, #tpu.memory_space<vmem>>, vector<120x128xbf16>
    %cst_792 = arith.constant dense<0.000000e+00> : vector<8x128xf32>
    %817 = tpu.matmul %815, %816, %cst_792 {dimension_numbers = #tpu.dot_dimension_numbers<[1], [0], [0], [1], [0, 0, 1, 1], [], []>} : vector<8x120xbf16>, vector<120x128xbf16>, vector<8x128xf32> -> vector<8x128xf32>
    %c0_793 = arith.constant 0 : index
    %c0_794 = arith.constant 0 : index
    %818 = vector.load %arg13[%c0_793, %c0_794] : memref<1x128xf32, #tpu.memory_space<vmem>>, vector<1x128xf32>
    %819 = vector.broadcast %818 : vector<1x128xf32> to vector<8x128xf32>
    %820 = arith.addf %817, %819 : vector<8x128xf32>
    %c0_795 = arith.constant 0 : index
    %c0_796 = arith.constant 0 : index
    %821 = vector.load %arg14[%c0_795, %c0_796] : memref<8x128xf32, #tpu.memory_space<vmem>>, vector<8x128xf32>
    tpu.vector_store %arg14[%c0_795, %c0_796], %820 {strides = array<i32>} : memref<8x128xf32, #tpu.memory_space<vmem>>, vector<8x128xf32>,
    return
  }
  func.func @transform_0(%arg0: i32) -> (i32, i32, i32) {
    %c0_i32 = arith.constant 0 : i32
    %c0_i32_0 = arith.constant 0 : i32
    %c0_i32_1 = arith.constant 0 : i32
    return %c0_i32, %arg0, %c0_i32_0 : i32, i32, i32
  }
  func.func @transform_1(%arg0: i32) -> (i32, i32, i32) {
    %c0_i32 = arith.constant 0 : i32
    %c0_i32_0 = arith.constant 0 : i32
    %c0_i32_1 = arith.constant 0 : i32
    %c0_i32_2 = arith.constant 0 : i32
    return %c0_i32, %c0_i32_0, %c0_i32_1 : i32, i32, i32
  }
  func.func @transform_2(%arg0: i32) -> (i32, i32) {
    %c0_i32 = arith.constant 0 : i32
    %c0_i32_0 = arith.constant 0 : i32
    %c0_i32_1 = arith.constant 0 : i32
    return %c0_i32, %c0_i32_0 : i32, i32
  }
  func.func @transform_3(%arg0: i32) -> (i32, i32) {
    %c0_i32 = arith.constant 0 : i32
    %c0_i32_0 = arith.constant 0 : i32
    %c0_i32_1 = arith.constant 0 : i32
    return %c0_i32, %c0_i32_0 : i32, i32
  }
  func.func @transform_4(%arg0: i32) -> (i32, i32) {
    %c0_i32 = arith.constant 0 : i32
    %c0_i32_0 = arith.constant 0 : i32
    %c0_i32_1 = arith.constant 0 : i32
    return %c0_i32, %c0_i32_0 : i32, i32
  }
  func.func @transform_5(%arg0: i32) -> (i32, i32, i32) {
    %c0_i32 = arith.constant 0 : i32
    %c0_i32_0 = arith.constant 0 : i32
    %c0_i32_1 = arith.constant 0 : i32
    %c0_i32_2 = arith.constant 0 : i32
    return %c0_i32, %c0_i32_0, %c0_i32_1 : i32, i32, i32
  }
  func.func @transform_6(%arg0: i32) -> (i32, i32) {
    %c0_i32 = arith.constant 0 : i32
    %c0_i32_0 = arith.constant 0 : i32
    %c0_i32_1 = arith.constant 0 : i32
    return %c0_i32, %c0_i32_0 : i32, i32
  }
  func.func @transform_7(%arg0: i32) -> (i32, i32) {
    %c0_i32 = arith.constant 0 : i32
    %c0_i32_0 = arith.constant 0 : i32
    %c0_i32_1 = arith.constant 0 : i32
    return %c0_i32, %c0_i32_0 : i32, i32
  }
  func.func @transform_8(%arg0: i32) -> (i32, i32) {
    %c0_i32 = arith.constant 0 : i32
    %c0_i32_0 = arith.constant 0 : i32
    %c0_i32_1 = arith.constant 0 : i32
    return %c0_i32, %c0_i32_0 : i32, i32
  }
  func.func @transform_9(%arg0: i32) -> (i32, i32, i32) {
    %c0_i32 = arith.constant 0 : i32
    %c0_i32_0 = arith.constant 0 : i32
    %c0_i32_1 = arith.constant 0 : i32
    %c0_i32_2 = arith.constant 0 : i32
    return %c0_i32, %c0_i32_0, %c0_i32_1 : i32, i32, i32
  }
  func.func @transform_10(%arg0: i32) -> (i32, i32) {
    %c0_i32 = arith.constant 0 : i32
    %c0_i32_0 = arith.constant 0 : i32
    %c0_i32_1 = arith.constant 0 : i32
    return %c0_i32, %c0_i32_0 : i32, i32
  }
  func.func @transform_11(%arg0: i32) -> (i32, i32) {
    %c0_i32 = arith.constant 0 : i32
    %c0_i32_0 = arith.constant 0 : i32
    %c0_i32_1 = arith.constant 0 : i32
    return %c0_i32, %c0_i32_0 : i32, i32
  }
  func.func @transform_12(%arg0: i32) -> (i32, i32) {
    %c0_i32 = arith.constant 0 : i32
    %c0_i32_0 = arith.constant 0 : i32
    %c0_i32_1 = arith.constant 0 : i32
    return %c0_i32, %c0_i32_0 : i32, i32
  }
  func.func @transform_13(%arg0: i32) -> (i32, i32) {
    %c0_i32 = arith.constant 0 : i32
    %c0_i32_0 = arith.constant 0 : i32
    return %arg0, %c0_i32 : i32, i32
  }
}

</mosaic_0001>

<llo_original>
// kernel: tile.13
$region0: #{tile.13}
  #allocation0 [shape = 's32[1]{0}', space=sflag, size = 0x4, scoped, tag = 'scoped memory for tile.13']
  %s0 = inlined_call_operand.vmem [shape: f32[6], index: 0, kind: input, shape index: {}]
  %s1 = inlined_call_operand.vmem [shape: f32[24,6], index: 1, kind: output, shape index: {}]
  // Predicated region
  $region2: #{tile.13} parent=0 // pred_check
    _
  $region3: #{tile.13} parent=0 // pred_check_branch
    %3 = sbr.rel (0) target = $region5
  $region4: #{tile.13} parent=0 // pred_region
    _
  $region5: #{tile.13} parent=0 // pred_fallthru
    _
  %v4 = vld [vmem:[%s0] ss:$0 sm:$0xff]
  %5 = vst [vmem:[%s1] sm:$0xff] %v4
  %s6 = scalar_lea.vmem %s1, 8
  %7 = vst [vmem:[%s6] sm:$0xff] %v4
  %s8 = scalar_lea.vmem %s1, 16
  %9 = vst [vmem:[%s8] sm:$0xff] %v4

// kernel: tile.18
$region0: #{tile.18}
  #allocation0 [shape = 's32[1]{0}', space=sflag, size = 0x4, scoped, tag = 'scoped memory for tile.18']
  %s0 = inlined_call_operand.vmem [shape: f32[16], index: 0, kind: input, shape index: {}]
  %s1 = inlined_call_operand.vmem [shape: f32[10,16], index: 1, kind: output, shape index: {}]
  // Predicated region
  $region2: #{tile.18} parent=0 // pred_check
    _
  $region3: #{tile.18} parent=0 // pred_check_branch
    %3 = sbr.rel (0) target = $region5
  $region4: #{tile.18} parent=0 // pred_region
    _
  $region5: #{tile.18} parent=0 // pred_fallthru
    _
  %v4 = vld [vmem:[%s0] ss:$0 sm:$0xff]
  %5 = vst [vmem:[%s1] sm:$0xff] %v4
  %s6 = scalar_lea.vmem %s1, 8
  %7 = vst [vmem:[%s6] sm:$0xff] %v4

// kernel: tile.19
$region0: #{tile.19}
  %s0 = inlined_call_operand.vmem [shape: f32[10,16], index: 0, kind: input, shape index: {}]
  %s1 = inlined_call_operand.vmem [shape: f32[1,160], index: 1, kind: output, shape index: {}]
  $region1: #{tile.19} parent=0
    #allocation0 [shape = 'u8[8192]{0}', space=vmem, size = 0x2000, scoped, tag = 'scoped mem for output reshape']
    %s2 = smov 3
    %v3 = vld [vmem:[%s0] ss:$8 sm:%s2]
    %vm4 = vcmask 130048
    %5 = vst.msk [vmem:[#allocation0] ss:$8 sm:$0x3] %vm4, %v3
    %s6 = scalar_lea.vmem %s0, 7
    %v7 = vld [vmem:[%s6] sm:$0x1]
    %8 = vrot.lane.b32.xlu0 %v7, 112
    %v9 = vpop.permute.xlu0 %8
    %vm10 = vcmask 1048448
    %11 = vst.msk [vmem:[#allocation0] sm:$0x1] %vm10, %v9
    %s12 = scalar_lea.vmem %s0, 6
    %v13 = vld [vmem:[%s12] sm:$0x1]
    %14 = vrot.lane.b32.xlu0 %v13, 96
    %v15 = vpop.permute.xlu0 %14
    %vm16 = vcmask 917248
    %17 = vst.msk [vmem:[#allocation0] sm:$0x1] %vm16, %v15
    %s18 = scalar_lea.vmem %s0, 5
    %v19 = vld [vmem:[%s18] sm:$0x1]
    %20 = vrot.lane.b32.xlu0 %v19, 80
    %v21 = vpop.permute.xlu0 %20
    %vm22 = vcmask 786048
    %23 = vst.msk [vmem:[#allocation0] sm:$0x1] %vm22, %v21
    %s24 = scalar_lea.vmem %s0, 4
    %v25 = vld [vmem:[%s24] sm:$0x1]
    %26 = vrot.lane.b32.xlu0 %v25, 64
    %v27 = vpop.permute.xlu0 %26
    %vm28 = vcmask 654848
    %29 = vst.msk [vmem:[#allocation0] sm:$0x1] %vm28, %v27
    %s30 = scalar_lea.vmem %s0, 3
    %v31 = vld [vmem:[%s30] sm:$0x1]
    %32 = vrot.lane.b32.xlu0 %v31, 48
    %v33 = vpop.permute.xlu0 %32
    %vm34 = vcmask 523648
    %35 = vst.msk [vmem:[#allocation0] sm:$0x1] %vm34, %v33
    %s36 = scalar_lea.vmem %s0, 2
    %v37 = vld [vmem:[%s36] sm:$0x1]
    %38 = vrot.lane.b32.xlu0 %v37, 32
    %v39 = vpop.permute.xlu0 %38
    %vm40 = vcmask 392448
    %41 = vst.msk [vmem:[#allocation0] sm:$0x1] %vm40, %v39
    %s42 = scalar_lea.vmem %s0, 1
    %s43 = smov 3
    %v44 = vld [vmem:[%s42] ss:$8 sm:%s43]
    %45 = vrot.lane.b32.xlu0 %v44, 16
    %v46 = vpop.permute.xlu0 %45
    %vm47 = vcmask 261248
    %48 = vst.msk [vmem:[#allocation0] ss:$8 sm:$0x3] %vm47, %v46
    %s50 = sshllo.u32 0, 1
    %v52 = vld [vmem:[#allocation0] sm:%s50]
    %s53 = sshllo.u32 0, 1
    %54 = vst [vmem:[%s1] sm:%s53] %v52
    %s55 = scalar_lea.vmem [#allocation0], 8
    %v56 = vld [vmem:[%s55] sm:%s50]
    %s57 = sshllo.u32 0, 1
    %s58 = scalar_lea.vmem %s1, 1
    %59 = vst [vmem:[%s58] sm:%s57] %v56

// kernel: tile.14
$region0: #{tile.14}
  %s0 = inlined_call_operand.vmem [shape: f32[24,6], index: 0, kind: input, shape index: {}]
  %s1 = inlined_call_operand.vmem [shape: f32[1,144], index: 1, kind: output, shape index: {}]
  $region1: #{tile.14} parent=0
    #allocation0 [shape = 'u8[8192]{0}', space=vmem, size = 0x2000, scoped, tag = 'scoped mem for output reshape']
    %v2 = vld [vmem:[%s0] sm:$0x1]
    %vm3 = vcmask 48128
    %4 = vst.msk [vmem:[#allocation0] sm:$0x1] %vm3, %v2
    %s5 = scalar_lea.vmem %s0, 21
    %v6 = vld [vmem:[%s5] sm:$0x1]
    %s7 = scalar_lea.vmem %s0, 21
    %v8 = vld [vmem:[%s7] sm:$0x1]
    %vm9 = vcmask 15360
    %v10 = vsel %vm9, %v8, %v6
    %11 = vrot.lane.b32.xlu0 %v10, 126
    %v12 = vpop.permute.xlu0 %11
    %vm13 = vcmask 31744
    %s14 = scalar_lea.vmem [#allocation0], 8
    %15 = vst.msk [vmem:[%s14] sm:$0x1] %vm13, %v12
    %vm16 = vcmask 1048560
    %17 = vst.msk [vmem:[#allocation0] sm:$0x1] %vm16, %v12
    %s18 = scalar_lea.vmem %s0, 20
    %v19 = vld [vmem:[%s18] sm:$0x1]
    %20 = vrot.lane.b32.xlu0 %v19, 120
    %v21 = vpop.permute.xlu0 %20
    %vm22 = vcmask 1032128
    %23 = vst.msk [vmem:[#allocation0] sm:$0x1] %vm22, %v21
    %s24 = scalar_lea.vmem %s0, 19
    %v25 = vld [vmem:[%s24] sm:$0x1]
    %26 = vrot.lane.b32.xlu0 %v25, 114
    %v27 = vpop.permute.xlu0 %26
    %vm28 = vcmask 982928
    %29 = vst.msk [vmem:[#allocation0] sm:$0x1] %vm28, %v27
    %s30 = scalar_lea.vmem %s0, 18
    %v31 = vld [vmem:[%s30] sm:$0x1]
    %32 = vrot.lane.b32.xlu0 %v31, 108
    %v33 = vpop.permute.xlu0 %32
    %vm34 = vcmask 933728
    %35 = vst.msk [vmem:[#allocation0] sm:$0x1] %vm34, %v33
    %s36 = scalar_lea.vmem %s0, 17
    %v37 = vld [vmem:[%s36] sm:$0x1]
    %38 = vrot.lane.b32.xlu0 %v37, 102
    %v39 = vpop.permute.xlu0 %38
    %vm40 = vcmask 884528
    %41 = vst.msk [vmem:[#allocation0] sm:$0x1] %vm40, %v39
    %s42 = scalar_lea.vmem %s0, 16
    %v43 = vld [vmem:[%s42] sm:$0x1]
    %44 = vrot.lane.b32.xlu0 %v43, 96
    %v45 = vpop.permute.xlu0 %44
    %vm46 = vcmask 835328
    %47 = vst.msk [vmem:[#allocation0] sm:$0x1] %vm46, %v45
    %s48 = scalar_lea.vmem %s0, 15
    %v49 = vld [vmem:[%s48] sm:$0x1]
    %50 = vrot.lane.b32.xlu0 %v49, 90
    %v51 = vpop.permute.xlu0 %50
    %vm52 = vcmask 786128
    %53 = vst.msk [vmem:[#allocation0] sm:$0x1] %vm52, %v51
    %s54 = scalar_lea.vmem %s0, 14
    %v55 = vld [vmem:[%s54] sm:$0x1]
    %56 = vrot.lane.b32.xlu0 %v55, 84
    %v57 = vpop.permute.xlu0 %56
    %vm58 = vcmask 736928
    %59 = vst.msk [vmem:[#allocation0] sm:$0x1] %vm58, %v57
    %s60 = scalar_lea.vmem %s0, 13
    %v61 = vld [vmem:[%s60] sm:$0x1]
    %62 = vrot.lane.b32.xlu0 %v61, 78
    %v63 = vpop.permute.xlu0 %62
    %vm64 = vcmask 687728
    %65 = vst.msk [vmem:[#allocation0] sm:$0x1] %vm64, %v63
    %s66 = scalar_lea.vmem %s0, 12
    %v67 = vld [vmem:[%s66] sm:$0x1]
    %68 = vrot.lane.b32.xlu0 %v67, 72
    %v69 = vpop.permute.xlu0 %68
    %vm70 = vcmask 638528
    %71 = vst.msk [vmem:[#allocation0] sm:$0x1] %vm70, %v69
    %s72 = scalar_lea.vmem %s0, 11
    %v73 = vld [vmem:[%s72] sm:$0x1]
    %74 = vrot.lane.b32.xlu0 %v73, 66
    %v75 = vpop.permute.xlu0 %74
    %vm76 = vcmask 589328
    %77 = vst.msk [vmem:[#allocation0] sm:$0x1] %vm76, %v75
    %s78 = scalar_lea.vmem %s0, 10
    %v79 = vld [vmem:[%s78] sm:$0x1]
    %80 = vrot.lane.b32.xlu0 %v79, 60
    %v81 = vpop.permute.xlu0 %80
    %vm82 = vcmask 540128
    %83 = vst.msk [vmem:[#allocation0] sm:$0x1] %vm82, %v81
    %s84 = scalar_lea.vmem %s0, 9
    %v85 = vld [vmem:[%s84] sm:$0x1]
    %86 = vrot.lane.b32.xlu0 %v85, 54
    %v87 = vpop.permute.xlu0 %86
    %vm88 = vcmask 490928
    %89 = vst.msk [vmem:[#allocation0] sm:$0x1] %vm88, %v87
    %s90 = scalar_lea.vmem %s0, 8
    %v91 = vld [vmem:[%s90] sm:$0x1]
    %92 = vrot.lane.b32.xlu0 %v91, 48
    %v93 = vpop.permute.xlu0 %92
    %vm94 = vcmask 441728
    %95 = vst.msk [vmem:[#allocation0] sm:$0x1] %vm94, %v93
    %s96 = scalar_lea.vmem %s0, 7
    %v97 = vld [vmem:[%s96] sm:$0x1]
    %98 = vrot.lane.b32.xlu0 %v97, 42
    %v99 = vpop.permute.xlu0 %98
    %vm100 = vcmask 392528
    %101 = vst.msk [vmem:[#allocation0] sm:$0x1] %vm100, %v99
    %s102 = scalar_lea.vmem %s0, 6
    %v103 = vld [vmem:[%s102] sm:$0x1]
    %104 = vrot.lane.b32.xlu0 %v103, 36
    %v105 = vpop.permute.xlu0 %104
    %vm106 = vcmask 343328
    %107 = vst.msk [vmem:[#allocation0] sm:$0x1] %vm106, %v105
    %s108 = scalar_lea.vmem %s0, 5
    %v109 = vld [vmem:[%s108] sm:$0x1]
    %110 = vrot.lane.b32.xlu0 %v109, 30
    %v111 = vpop.permute.xlu0 %110
    %vm112 = vcmask 294128
    %113 = vst.msk [vmem:[#allocation0] sm:$0x1] %vm112, %v111
    %s114 = scalar_lea.vmem %s0, 4
    %v115 = vld [vmem:[%s114] sm:$0x1]
    %116 = vrot.lane.b32.xlu0 %v115, 24
    %v117 = vpop.permute.xlu0 %116
    %vm118 = vcmask 244928
    %119 = vst.msk [vmem:[#allocation0] sm:$0x1] %vm118, %v117
    %s120 = scalar_lea.vmem %s0, 3
    %v121 = vld [vmem:[%s120] sm:$0x1]
    %122 = vrot.lane.b32.xlu0 %v121, 18
    %v123 = vpop.permute.xlu0 %122
    %vm124 = vcmask 195728
    %125 = vst.msk [vmem:[#allocation0] sm:$0x1] %vm124, %v123
    %s126 = scalar_lea.vmem %s0, 2
    %v127 = vld [vmem:[%s126] sm:$0x1]
    %128 = vrot.lane.b32.xlu0 %v127, 12
    %v129 = vpop.permute.xlu0 %128
    %vm130 = vcmask 146528
    %131 = vst.msk [vmem:[#allocation0] sm:$0x1] %vm130, %v129
    %s132 = scalar_lea.vmem %s0, 23
    %v133 = vld [vmem:[%s132] sm:$0x1]
    %134 = vrot.lane.b32.xlu0 %v133, 10
    %v135 = vpop.permute.xlu0 %134
    %vm136 = vcmask 130128
    %s137 = scalar_lea.vmem [#allocation0], 8
    %138 = vst.msk [vmem:[%s137] sm:$0x1] %vm136, %v135
    %s139 = scalar_lea.vmem %s0, 1
    %v140 = vld [vmem:[%s139] sm:$0x1]
    %141 = vrot.lane.b32.xlu0 %v140, 6
    %v142 = vpop.permute.xlu0 %141
    %vm143 = vcmask 97328
    %144 = vst.msk [vmem:[#allocation0] sm:$0x1] %vm143, %v142
    %s145 = scalar_lea.vmem %s0, 22
    %v146 = vld [vmem:[%s145] sm:$0x1]
    %147 = vrot.lane.b32.xlu0 %v146, 4
    %v148 = vpop.permute.xlu0 %147
    %vm149 = vcmask 80928
    %s150 = scalar_lea.vmem [#allocation0], 8
    %151 = vst.msk [vmem:[%s150] sm:$0x1] %vm149, %v148
    %s153 = sshllo.u32 0, 1
    %v155 = vld [vmem:[#allocation0] sm:%s153]
    %s156 = sshllo.u32 0, 1
    %157 = vst [vmem:[%s1] sm:%s156] %v155
    %s158 = scalar_lea.vmem [#allocation0], 8
    %v159 = vld [vmem:[%s158] sm:%s153]
    %s160 = sshllo.u32 0, 1
    %s161 = scalar_lea.vmem %s1, 1
    %162 = vst [vmem:[%s161] sm:%s160] %v159

// kernel: convolution_forward.1
$region0: #{convolution_forward.1}
  #allocation0 [shape = 'u32[]', space=smem, size = 0x4, offset = 0x4, fixed_abs, tag = 'smem constant byte address 0x4 - core index']
  #allocation1 [shape = 'u32[144,128]{1,0:T(1,128)}', space=vmem, size = 0x12000, scoped, tag = 'internal scratch']
  %s0 = inlined_call_operand.vmem [shape: bf16[26,16,26], index: 0, kind: input, shape index: {}]
  %s1 = inlined_call_operand.vmem [shape: bf16[3,26,144], index: 1, kind: input, shape index: {}]
  %s2 = inlined_call_operand.vmem [shape: f32[1,144], index: 2, kind: input, shape index: {}]
  %s3 = inlined_call_operand.vmem [shape: bf16[144,72], index: 3, kind: input, shape index: {}]
  %s4 = inlined_call_operand.vmem [shape: bf16[144,72], index: 4, kind: input, shape index: {}]
  %s5 = inlined_call_operand.vmem [shape: bf16[3,72,160], index: 5, kind: input, shape index: {}]
  %s6 = inlined_call_operand.vmem [shape: f32[1,160], index: 6, kind: input, shape index: {}]
  %s7 = inlined_call_operand.vmem [shape: bf16[160,80], index: 7, kind: input, shape index: {}]
  %s8 = inlined_call_operand.vmem [shape: bf16[160,80], index: 8, kind: input, shape index: {}]
  %s9 = inlined_call_operand.vmem [shape: bf16[5,80,120], index: 9, kind: input, shape index: {}]
  %s10 = inlined_call_operand.vmem [shape: f32[1,120], index: 10, kind: input, shape index: {}]
  %s11 = inlined_call_operand.vmem [shape: bf16[120,128], index: 11, kind: input, shape index: {}]
  %s12 = inlined_call_operand.vmem [shape: f32[1,128], index: 12, kind: input, shape index: {}]
  %s13 = inlined_call_operand.vmem [shape: f32[16,128], index: 13, kind: output, shape index: {}]
  %s14 = sld [smem:[#allocation0]]
  $region126: #{convolution_forward.1} parent=0
    _
  %s16 = ssub.s32 1, %s14
  %s17 = scalar_select 0, %s16, %s14
  $region1: #{convolution_forward.1} parent=0
    #allocation2 [shape = 'u8[106496]{0}', space=vmem, size = 0x1a000, scoped, tag = 'input window, operand 0']
    loop: start=0, step=1, limit=4
    $region2: #{convolution_forward.1} parent=1 // loop_pre_header
      _
    $region3: #{convolution_forward.1} parent=1 // loop_header
      %s19 = sphi 0, %s23
      %p20 = scmp.ge.s32.totalorder %s19, 4
      %s29 = sphi 0, %s31
      %s32 = sphi 0, %s29
      %s33 = sphi 0, %s32
      %s49 = sphi 0, %s33
      %s53 = sphi 0, %s53
      %s55 = sphi 0, %s53
      %s56 = sphi 0, %s55
      %s70 = sphi 0, %s56
      %s74 = sphi 0, %s74
      %s76 = sphi 0, %s74
      %s77 = sphi 0, %s76
      %s91 = sphi 0, %s77
      %s95 = sphi 0, %s95
      %s97 = sphi 0, %s95
      %s98 = sphi 0, %s97
      %s112 = sphi 0, %s98
      %s116 = sphi 0, %s116
      %s118 = sphi 0, %s116
      %s119 = sphi 0, %s118
      %s133 = sphi 0, %s119
      %s137 = sphi 0, %s137
      %s139 = sphi 0, %s137
      %s140 = sphi 0, %s139
      %s154 = sphi 0, %s140
      %s158 = sphi 0, %s158
      %s160 = sphi 0, %s158
      %s161 = sphi 0, %s160
      %s175 = sphi 0, %s161
      %s179 = sphi 0, %s179
      %s181 = sphi 0, %s179
      %s182 = sphi 0, %s181
      %s196 = sphi 0, %s182
      %s200 = sphi 0, %s200
      %s202 = sphi 0, %s200
      %s203 = sphi 0, %s202
      %s217 = sphi 0, %s203
      %s221 = sphi 0, %s221
      %s223 = sphi 0, %s221
      %s224 = sphi 0, %s223
      %s238 = sphi 0, %s224
      %s242 = sphi 0, %s242
      %s244 = sphi 0, %s242
      %s245 = sphi 0, %s244
      %s259 = sphi 0, %s245
      %s263 = sphi 0, %s263
      %s265 = sphi 0, %s263
      %s266 = sphi 0, %s265
      %s280 = sphi 0, %s266
      %s284 = sphi 0, %s284
      %s286 = sphi 0, %s284
      %s287 = sphi 0, %s286
      %s301 = sphi 0, %s287
      %s307 = sphi 0, %s309
      %s310 = sphi 0, %s307
      %s311 = sphi 0, %s310
      %s327 = sphi 0, %s311
    $region4: #{convolution_forward.1} parent=1 // loop_header_branch
      %22 = sbr.rel (%p20) target = $region8
    $region5: #{convolution_forward.1} parent=1 // loop_body
      %s24 = ssub.s32 %s19, 1
      %s25 = ssub.s32 %s19, 2
      %s26 = sadd.s32 %s19, 1
      %s27 = ssub.s32 %s19, %s26
      %p28 = scmp.eq.s32.totalorder %s27, 0
      %s30 = sadd.s32 %s29, 1
      %s31 = scalar_select %p28, %s29, %s30
      %p34 = pneg %p28
      %p35 = scmp.eq.s32.totalorder %s19, 1
      %p36 = por %p34, %p35
      %p37 = scmp.ne.s32.totalorder %s29, %s32
      %p38 = scmp.eq.s32.totalorder %s19, 0
      %p39 = por %p37, %p38
      %p40 = scmp.ne.s32.totalorder %s29, %s32
      %p41 = scmp.eq.s32.totalorder %s24, 1
      %p42 = por %p40, %p41
      %p43 = scmp.ne.s32.totalorder %s32, %s33
      %p44 = scmp.eq.s32.totalorder %s24, 0
      %p45 = por %p43, %p44
      %p46 = scmp.ne.s32.totalorder %s32, %s33
      %p47 = scmp.eq.s32.totalorder %s25, 1
      %p48 = por %p46, %p47
      %p50 = scmp.ne.s32.totalorder %s33, %s49
      %p51 = scmp.eq.s32.totalorder %s25, 0
      %p52 = por %p50, %p51
      %s54 = sadd.s32 %s53, 1
      %p57 = scmp.eq.s32.totalorder %s19, 1
      %p58 = scmp.ne.s32.totalorder %s53, %s55
      %p59 = scmp.eq.s32.totalorder %s19, 0
      %p60 = por %p58, %p59
      %p61 = scmp.ne.s32.totalorder %s53, %s55
      %p62 = scmp.eq.s32.totalorder %s24, 1
      %p63 = por %p61, %p62
      %p64 = scmp.ne.s32.totalorder %s55, %s56
      %p65 = scmp.eq.s32.totalorder %s24, 0
      %p66 = por %p64, %p65
      %p67 = scmp.ne.s32.totalorder %s55, %s56
      %p68 = scmp.eq.s32.totalorder %s25, 1
      %p69 = por %p67, %p68
      %p71 = scmp.ne.s32.totalorder %s56, %s70
      %p72 = scmp.eq.s32.totalorder %s25, 0
      %p73 = por %p71, %p72
      %s75 = sadd.s32 %s74, 1
      %p78 = scmp.eq.s32.totalorder %s19, 1
      %p79 = scmp.ne.s32.totalorder %s74, %s76
      %p80 = scmp.eq.s32.totalorder %s19, 0
      %p81 = por %p79, %p80
      %p82 = scmp.ne.s32.totalorder %s74, %s76
      %p83 = scmp.eq.s32.totalorder %s24, 1
      %p84 = por %p82, %p83
      %p85 = scmp.ne.s32.totalorder %s76, %s77
      %p86 = scmp.eq.s32.totalorder %s24, 0
      %p87 = por %p85, %p86
      %p88 = scmp.ne.s32.totalorder %s76, %s77
      %p89 = scmp.eq.s32.totalorder %s25, 1
      %p90 = por %p88, %p89
      %p92 = scmp.ne.s32.totalorder %s77, %s91
      %p93 = scmp.eq.s32.totalorder %s25, 0
      %p94 = por %p92, %p93
      %s96 = sadd.s32 %s95, 1
      %p99 = scmp.eq.s32.totalorder %s19, 1
      %p100 = scmp.ne.s32.totalorder %s95, %s97
      %p101 = scmp.eq.s32.totalorder %s19, 0
      %p102 = por %p100, %p101
      %p103 = scmp.ne.s32.totalorder %s95, %s97
      %p104 = scmp.eq.s32.totalorder %s24, 1
      %p105 = por %p103, %p104
      %p106 = scmp.ne.s32.totalorder %s97, %s98
      %p107 = scmp.eq.s32.totalorder %s24, 0
      %p108 = por %p106, %p107
      %p109 = scmp.ne.s32.totalorder %s97, %s98
      %p110 = scmp.eq.s32.totalorder %s25, 1
      %p111 = por %p109, %p110
      %p113 = scmp.ne.s32.totalorder %s98, %s112
      %p114 = scmp.eq.s32.totalorder %s25, 0
      %p115 = por %p113, %p114
      %s117 = sadd.s32 %s116, 1
      %p120 = scmp.eq.s32.totalorder %s19, 1
      %p121 = scmp.ne.s32.totalorder %s116, %s118
      %p122 = scmp.eq.s32.totalorder %s19, 0
      %p123 = por %p121, %p122
      %p124 = scmp.ne.s32.totalorder %s116, %s118
      %p125 = scmp.eq.s32.totalorder %s24, 1
      %p126 = por %p124, %p125
      %p127 = scmp.ne.s32.totalorder %s118, %s119
      %p128 = scmp.eq.s32.totalorder %s24, 0
      %p129 = por %p127, %p128
      %p130 = scmp.ne.s32.totalorder %s118, %s119
      %p131 = scmp.eq.s32.totalorder %s25, 1
      %p132 = por %p130, %p131
      %p134 = scmp.ne.s32.totalorder %s119, %s133
      %p135 = scmp.eq.s32.totalorder %s25, 0
      %p136 = por %p134, %p135
      %s138 = sadd.s32 %s137, 1
      %p141 = scmp.eq.s32.totalorder %s19, 1
      %p142 = scmp.ne.s32.totalorder %s137, %s139
      %p143 = scmp.eq.s32.totalorder %s19, 0
      %p144 = por %p142, %p143
      %p145 = scmp.ne.s32.totalorder %s137, %s139
      %p146 = scmp.eq.s32.totalorder %s24, 1
      %p147 = por %p145, %p146
      %p148 = scmp.ne.s32.totalorder %s139, %s140
      %p149 = scmp.eq.s32.totalorder %s24, 0
      %p150 = por %p148, %p149
      %p151 = scmp.ne.s32.totalorder %s139, %s140
      %p152 = scmp.eq.s32.totalorder %s25, 1
      %p153 = por %p151, %p152
      %p155 = scmp.ne.s32.totalorder %s140, %s154
      %p156 = scmp.eq.s32.totalorder %s25, 0
      %p157 = por %p155, %p156
      %s159 = sadd.s32 %s158, 1
      %p162 = scmp.eq.s32.totalorder %s19, 1
      %p163 = scmp.ne.s32.totalorder %s158, %s160
      %p164 = scmp.eq.s32.totalorder %s19, 0
      %p165 = por %p163, %p164
      %p166 = scmp.ne.s32.totalorder %s158, %s160
      %p167 = scmp.eq.s32.totalorder %s24, 1
      %p168 = por %p166, %p167
      %p169 = scmp.ne.s32.totalorder %s160, %s161
      %p170 = scmp.eq.s32.totalorder %s24, 0
      %p171 = por %p169, %p170
      %p172 = scmp.ne.s32.totalorder %s160, %s161
      %p173 = scmp.eq.s32.totalorder %s25, 1
      %p174 = por %p172, %p173
      %p176 = scmp.ne.s32.totalorder %s161, %s175
      %p177 = scmp.eq.s32.totalorder %s25, 0
      %p178 = por %p176, %p177
      %s180 = sadd.s32 %s179, 1
      %p183 = scmp.eq.s32.totalorder %s19, 1
      %p184 = scmp.ne.s32.totalorder %s179, %s181
      %p185 = scmp.eq.s32.totalorder %s19, 0
      %p186 = por %p184, %p185
      %p187 = scmp.ne.s32.totalorder %s179, %s181
      %p188 = scmp.eq.s32.totalorder %s24, 1
      %p189 = por %p187, %p188
      %p190 = scmp.ne.s32.totalorder %s181, %s182
      %p191 = scmp.eq.s32.totalorder %s24, 0
      %p192 = por %p190, %p191
      %p193 = scmp.ne.s32.totalorder %s181, %s182
      %p194 = scmp.eq.s32.totalorder %s25, 1
      %p195 = por %p193, %p194
      %p197 = scmp.ne.s32.totalorder %s182, %s196
      %p198 = scmp.eq.s32.totalorder %s25, 0
      %p199 = por %p197, %p198
      %s201 = sadd.s32 %s200, 1
      %p204 = scmp.eq.s32.totalorder %s19, 1
      %p205 = scmp.ne.s32.totalorder %s200, %s202
      %p206 = scmp.eq.s32.totalorder %s19, 0
      %p207 = por %p205, %p206
      %p208 = scmp.ne.s32.totalorder %s200, %s202
      %p209 = scmp.eq.s32.totalorder %s24, 1
      %p210 = por %p208, %p209
      %p211 = scmp.ne.s32.totalorder %s202, %s203
      %p212 = scmp.eq.s32.totalorder %s24, 0
      %p213 = por %p211, %p212
      %p214 = scmp.ne.s32.totalorder %s202, %s203
      %p215 = scmp.eq.s32.totalorder %s25, 1
      %p216 = por %p214, %p215
      %p218 = scmp.ne.s32.totalorder %s203, %s217
      %p219 = scmp.eq.s32.totalorder %s25, 0
      %p220 = por %p218, %p219
      %s222 = sadd.s32 %s221, 1
      %p225 = scmp.eq.s32.totalorder %s19, 1
      %p226 = scmp.ne.s32.totalorder %s221, %s223
      %p227 = scmp.eq.s32.totalorder %s19, 0
      %p228 = por %p226, %p227
      %p229 = scmp.ne.s32.totalorder %s221, %s223
      %p230 = scmp.eq.s32.totalorder %s24, 1
      %p231 = por %p229, %p230
      %p232 = scmp.ne.s32.totalorder %s223, %s224
      %p233 = scmp.eq.s32.totalorder %s24, 0
      %p234 = por %p232, %p233
      %p235 = scmp.ne.s32.totalorder %s223, %s224
      %p236 = scmp.eq.s32.totalorder %s25, 1
      %p237 = por %p235, %p236
      %p239 = scmp.ne.s32.totalorder %s224, %s238
      %p240 = scmp.eq.s32.totalorder %s25, 0
      %p241 = por %p239, %p240
      %s243 = sadd.s32 %s242, 1
      %p246 = scmp.eq.s32.totalorder %s19, 1
      %p247 = scmp.ne.s32.totalorder %s242, %s244
      %p248 = scmp.eq.s32.totalorder %s19, 0
      %p249 = por %p247, %p248
      %p250 = scmp.ne.s32.totalorder %s242, %s244
      %p251 = scmp.eq.s32.totalorder %s24, 1
      %p252 = por %p250, %p251
      %p253 = scmp.ne.s32.totalorder %s244, %s245
      %p254 = scmp.eq.s32.totalorder %s24, 0
      %p255 = por %p253, %p254
      %p256 = scmp.ne.s32.totalorder %s244, %s245
      %p257 = scmp.eq.s32.totalorder %s25, 1
      %p258 = por %p256, %p257
      %p260 = scmp.ne.s32.totalorder %s245, %s259
      %p261 = scmp.eq.s32.totalorder %s25, 0
      %p262 = por %p260, %p261
      %s264 = sadd.s32 %s263, 1
      %p267 = scmp.eq.s32.totalorder %s19, 1
      %p268 = scmp.ne.s32.totalorder %s263, %s265
      %p269 = scmp.eq.s32.totalorder %s19, 0
      %p270 = por %p268, %p269
      %p271 = scmp.ne.s32.totalorder %s263, %s265
      %p272 = scmp.eq.s32.totalorder %s24, 1
      %p273 = por %p271, %p272
      %p274 = scmp.ne.s32.totalorder %s265, %s266
      %p275 = scmp.eq.s32.totalorder %s24, 0
      %p276 = por %p274, %p275
      %p277 = scmp.ne.s32.totalorder %s265, %s266
      %p278 = scmp.eq.s32.totalorder %s25, 1
      %p279 = por %p277, %p278
      %p281 = scmp.ne.s32.totalorder %s266, %s280
      %p282 = scmp.eq.s32.totalorder %s25, 0
      %p283 = por %p281, %p282
      %s285 = sadd.s32 %s284, 1
      %p288 = scmp.eq.s32.totalorder %s19, 1
      %p289 = scmp.ne.s32.totalorder %s284, %s286
      %p290 = scmp.eq.s32.totalorder %s19, 0
      %p291 = por %p289, %p290
      %p292 = scmp.ne.s32.totalorder %s284, %s286
      %p293 = scmp.eq.s32.totalorder %s24, 1
      %p294 = por %p292, %p293
      %p295 = scmp.ne.s32.totalorder %s286, %s287
      %p296 = scmp.eq.s32.totalorder %s24, 0
      %p297 = por %p295, %p296
      %p298 = scmp.ne.s32.totalorder %s286, %s287
      %p299 = scmp.eq.s32.totalorder %s25, 1
      %p300 = por %p298, %p299
      %p302 = scmp.ne.s32.totalorder %s287, %s301
      %p303 = scmp.eq.s32.totalorder %s25, 0
      %p304 = por %p302, %p303
      %s305 = ssub.s32 %s19, %s26
      %p306 = scmp.eq.s32.totalorder %s305, 0
      %s308 = sadd.s32 %s307, 1
      %s309 = scalar_select %p306, %s307, %s308
      %p312 = pneg %p306
      %p313 = scmp.eq.s32.totalorder %s19, 1
      %p314 = por %p312, %p313
      %p315 = scmp.ne.s32.totalorder %s307, %s310
      %p316 = scmp.eq.s32.totalorder %s19, 0
      %p317 = por %p315, %p316
      %p318 = scmp.ne.s32.totalorder %s307, %s310
      %p319 = scmp.eq.s32.totalorder %s24, 1
      %p320 = por %p318, %p319
      %p321 = scmp.ne.s32.totalorder %s310, %s311
      %p322 = scmp.eq.s32.totalorder %s24, 0
      %p323 = por %p321, %p322
      %p324 = scmp.ne.s32.totalorder %s310, %s311
      %p325 = scmp.eq.s32.totalorder %s25, 1
      %p326 = por %p324, %p325
      %p328 = scmp.ne.s32.totalorder %s311, %s327
      %p329 = scmp.eq.s32.totalorder %s25, 0
      %p330 = por %p328, %p329
      %p331 = scmp.le.s32.totalorder 1, %s19
      %p332 = scmp.lt.s32.totalorder %s19, 3
      %p333 = pnand %p331, %p332
      %p334 = pneg %p333
      // Predicated region
      $region9: #{convolution_forward.1} parent=5 // pred_check
        _
      $region10: #{convolution_forward.1} parent=5 // pred_check_branch
        %336 = sbr.rel (%p333) target = $region12
      $region11: #{convolution_forward.1} parent=5 // pred_region
        %s337 = ssub.s32 %s19, 1
        // Predicated region
        $region13: #{convolution_forward.1} parent=11 // pred_check
          %p338 = pneg %p66
        $region14: #{convolution_forward.1} parent=11 // pred_check_branch
          %340 = sbr.rel (%p338) target = $region16
        $region15: #{convolution_forward.1} parent=11 // pred_region
          _
        $region16: #{convolution_forward.1} parent=11 // pred_fallthru
          _
        // Predicated region
        $region17: #{convolution_forward.1} parent=11 // pred_check
          %p341 = pneg %p87
        $region18: #{convolution_forward.1} parent=11 // pred_check_branch
          %343 = sbr.rel (%p341) target = $region20
        $region19: #{convolution_forward.1} parent=11 // pred_region
          _
        $region20: #{convolution_forward.1} parent=11 // pred_fallthru
          _
        // Predicated region
        $region21: #{convolution_forward.1} parent=11 // pred_check
          %p344 = pneg %p108
        $region22: #{convolution_forward.1} parent=11 // pred_check_branch
          %346 = sbr.rel (%p344) target = $region24
        $region23: #{convolution_forward.1} parent=11 // pred_region
          _
        $region24: #{convolution_forward.1} parent=11 // pred_fallthru
          _
        // Predicated region
        $region25: #{convolution_forward.1} parent=11 // pred_check
          %p347 = pneg %p129
        $region26: #{convolution_forward.1} parent=11 // pred_check_branch
          %349 = sbr.rel (%p347) target = $region28
        $region27: #{convolution_forward.1} parent=11 // pred_region
          _
        $region28: #{convolution_forward.1} parent=11 // pred_fallthru
          _
        // Predicated region
        $region29: #{convolution_forward.1} parent=11 // pred_check
          %p350 = pneg %p150
        $region30: #{convolution_forward.1} parent=11 // pred_check_branch
          %352 = sbr.rel (%p350) target = $region32
        $region31: #{convolution_forward.1} parent=11 // pred_region
          _
        $region32: #{convolution_forward.1} parent=11 // pred_fallthru
          _
        // Predicated region
        $region33: #{convolution_forward.1} parent=11 // pred_check
          %p353 = pneg %p171
        $region34: #{convolution_forward.1} parent=11 // pred_check_branch
          %355 = sbr.rel (%p353) target = $region36
        $region35: #{convolution_forward.1} parent=11 // pred_region
          _
        $region36: #{convolution_forward.1} parent=11 // pred_fallthru
          _
        // Predicated region
        $region37: #{convolution_forward.1} parent=11 // pred_check
          %p356 = pneg %p192
        $region38: #{convolution_forward.1} parent=11 // pred_check_branch
          %358 = sbr.rel (%p356) target = $region40
        $region39: #{convolution_forward.1} parent=11 // pred_region
          _
        $region40: #{convolution_forward.1} parent=11 // pred_fallthru
          _
        // Predicated region
        $region41: #{convolution_forward.1} parent=11 // pred_check
          %p359 = pneg %p213
        $region42: #{convolution_forward.1} parent=11 // pred_check_branch
          %361 = sbr.rel (%p359) target = $region44
        $region43: #{convolution_forward.1} parent=11 // pred_region
          _
        $region44: #{convolution_forward.1} parent=11 // pred_fallthru
          _
        // Predicated region
        $region45: #{convolution_forward.1} parent=11 // pred_check
          %p362 = pneg %p234
        $region46: #{convolution_forward.1} parent=11 // pred_check_branch
          %364 = sbr.rel (%p362) target = $region48
        $region47: #{convolution_forward.1} parent=11 // pred_region
          _
        $region48: #{convolution_forward.1} parent=11 // pred_fallthru
          _
        // Predicated region
        $region49: #{convolution_forward.1} parent=11 // pred_check
          %p365 = pneg %p255
        $region50: #{convolution_forward.1} parent=11 // pred_check_branch
          %367 = sbr.rel (%p365) target = $region52
        $region51: #{convolution_forward.1} parent=11 // pred_region
          _
        $region52: #{convolution_forward.1} parent=11 // pred_fallthru
          _
        // Predicated region
        $region53: #{convolution_forward.1} parent=11 // pred_check
          %p368 = pneg %p276
        $region54: #{convolution_forward.1} parent=11 // pred_check_branch
          %370 = sbr.rel (%p368) target = $region56
        $region55: #{convolution_forward.1} parent=11 // pred_region
          _
        $region56: #{convolution_forward.1} parent=11 // pred_fallthru
          _
        // Predicated region
        $region57: #{convolution_forward.1} parent=11 // pred_check
          %p371 = pneg %p297
        $region58: #{convolution_forward.1} parent=11 // pred_check_branch
          %373 = sbr.rel (%p371) target = $region60
        $region59: #{convolution_forward.1} parent=11 // pred_region
          _
        $region60: #{convolution_forward.1} parent=11 // pred_fallthru
          _
      $region12: #{convolution_forward.1} parent=5 // pred_fallthru
        _
      %p374 = scmp.lt.s32.totalorder %s19, 2
      // Predicated region
      $region61: #{convolution_forward.1} parent=5 // pred_check
        %p375 = pneg %p374
      $region62: #{convolution_forward.1} parent=5 // pred_check_branch
        %377 = sbr.rel (%p375) target = $region64
      $region63: #{convolution_forward.1} parent=5 // pred_region
        // Predicated region
        $region65: #{convolution_forward.1} parent=63 // pred_check
          %p378 = pneg %p39
        $region66: #{convolution_forward.1} parent=63 // pred_check_branch
          %380 = sbr.rel (%p378) target = $region68
        $region67: #{convolution_forward.1} parent=63 // pred_region
          %s381 = sand.u32 %s29, 1
          %s382 = sand.u32 %s29, 1
          %s383 = smul.addr %s382, 104
          %s384 = scalar_lea.vmem [#allocation2], %s383
          %s385 = smul.addr %s19, 4
          %s386 = scalar_lea.vmem %s0, %s385
          // Predicated region
          $region69: #{convolution_forward.1} parent=67 // pred_check
            _
          $region70: #{convolution_forward.1} parent=67 // pred_check_branch
            %388 = sbr.rel (0) target = $region72
          $region71: #{convolution_forward.1} parent=67 // pred_region
            // Predicated region
            $region73: #{convolution_forward.1} parent=71 // pred_check
              _
            $region74: #{convolution_forward.1} parent=71 // pred_check_branch
              %390 = sbr.rel target = $region76
            $region75: #{convolution_forward.1} parent=71 // pred_region
              // Predicated region
              $region88: #{convolution_forward.1} parent=75 // pred_check
                _
              $region89: #{convolution_forward.1} parent=75 // pred_check_branch
                %455 = sbr.rel (0) target = $region91
              $region90: #{convolution_forward.1} parent=75 // pred_region
                loop: start=0, step=1, limit=1
                $region92: #{convolution_forward.1} parent=90 // loop_pre_header
                  _
                $region93: #{convolution_forward.1} parent=90 // loop_header
                  %s457 = sphi 0, %s461
                  %p458 = scmp.ge.s32.totalorder %s457, 1
                  %s462 = sphi %s386, %s386
                  %s463 = sphi %s384, %s384
                $region94: #{convolution_forward.1} parent=90 // loop_header_branch
                  %460 = sbr.rel (%p458) target = $region98
                $region95: #{convolution_forward.1} parent=90 // loop_body
                  _
                $region96: #{convolution_forward.1} parent=90 // loop_footer
                  %s461 = sadd.s32 1, %s457
                $region97: #{convolution_forward.1} parent=90 // loop_footer_branch
                  %456 = sbr.rel target = $region93
                $region98: #{convolution_forward.1} parent=90 // loop_exit
                  _
                loop: start=0, step=1, limit=1
                $region99: #{convolution_forward.1} parent=90 // loop_pre_header
                  _
                $region100: #{convolution_forward.1} parent=90 // loop_header
                  %s466 = sphi 0, %s470
                  %p467 = scmp.ge.s32.totalorder %s466, 1
                  %s471 = sphi %s386, %s386
                  %s472 = sphi %s384, %s384
                $region101: #{convolution_forward.1} parent=90 // loop_header_branch
                  %469 = sbr.rel (%p467) target = $region105
                $region102: #{convolution_forward.1} parent=90 // loop_body
                  %v473 = vld [vmem:[%s471] sm:$0xf]
                  %474 = vst [vmem:[%s472] sm:$0xf] %v473
                  %v475 = vld [vmem:[%s471 + $0x8] sm:$0xf]
                  %476 = vst [vmem:[%s472 + $0x4] sm:$0xf] %v475
                  %v477 = vld [vmem:[%s471 + $0x10] sm:$0xf]
                  %478 = vst [vmem:[%s472 + $0x8] sm:$0xf] %v477
                  %v479 = vld [vmem:[%s471 + $0x18] sm:$0xf]
                  %480 = vst [vmem:[%s472 + $0xc] sm:$0xf] %v479
                  %v481 = vld [vmem:[%s471 + $0x20] sm:$0xf]
                  %482 = vst [vmem:[%s472 + $0x10] sm:$0xf] %v481
                  %v483 = vld [vmem:[%s471 + $0x28] sm:$0xf]
                  %484 = vst [vmem:[%s472 + $0x14] sm:$0xf] %v483
                  %v485 = vld [vmem:[%s471 + $0x30] sm:$0xf]
                  %486 = vst [vmem:[%s472 + $0x18] sm:$0xf] %v485
                  %v487 = vld [vmem:[%s471 + $0x38] sm:$0xf]
                  %488 = vst [vmem:[%s472 + $0x1c] sm:$0xf] %v487
                  %v489 = vld [vmem:[%s471 + $0x40] sm:$0xf]
                  %490 = vst [vmem:[%s472 + $0x20] sm:$0xf] %v489
                  %v491 = vld [vmem:[%s471 + $0x48] sm:$0xf]
                  %492 = vst [vmem:[%s472 + $0x24] sm:$0xf] %v491
                  %v493 = vld [vmem:[%s471 + $0x50] sm:$0xf]
                  %494 = vst [vmem:[%s472 + $0x28] sm:$0xf] %v493
                  %v495 = vld [vmem:[%s471 + $0x58] sm:$0xf]
                  %496 = vst [vmem:[%s472 + $0x2c] sm:$0xf] %v495
                  %v497 = vld [vmem:[%s471 + $0x60] sm:$0xf]
                  %498 = vst [vmem:[%s472 + $0x30] sm:$0xf] %v497
                  %v499 = vld [vmem:[%s471 + $0x68] sm:$0xf]
                  %500 = vst [vmem:[%s472 + $0x34] sm:$0xf] %v499
                  %v501 = vld [vmem:[%s471 + $0x70] sm:$0xf]
                  %502 = vst [vmem:[%s472 + $0x38] sm:$0xf] %v501
                  %v503 = vld [vmem:[%s471 + $0x78] sm:$0xf]
                  %504 = vst [vmem:[%s472 + $0x3c] sm:$0xf] %v503
                  %v505 = vld [vmem:[%s471 + $0x80] sm:$0xf]
                  %506 = vst [vmem:[%s472 + $0x40] sm:$0xf] %v505
                  %v507 = vld [vmem:[%s471 + $0x88] sm:$0xf]
                  %508 = vst [vmem:[%s472 + $0x44] sm:$0xf] %v507
                  %v509 = vld [vmem:[%s471 + $0x90] sm:$0xf]
                  %510 = vst [vmem:[%s472 + $0x48] sm:$0xf] %v509
                  %v511 = vld [vmem:[%s471 + $0x98] sm:$0xf]
                  %512 = vst [vmem:[%s472 + $0x4c] sm:$0xf] %v511
                  %v513 = vld [vmem:[%s471 + $0xa0] sm:$0xf]
                  %514 = vst [vmem:[%s472 + $0x50] sm:$0xf] %v513
                  %v515 = vld [vmem:[%s471 + $0xa8] sm:$0xf]
                  %516 = vst [vmem:[%s472 + $0x54] sm:$0xf] %v515
                  %v517 = vld [vmem:[%s471 + $0xb0] sm:$0xf]
                  %518 = vst [vmem:[%s472 + $0x58] sm:$0xf] %v517
                  %v519 = vld [vmem:[%s471 + $0xb8] sm:$0xf]
                  %520 = vst [vmem:[%s472 + $0x5c] sm:$0xf] %v519
                  %v521 = vld [vmem:[%s471 + $0xc0] sm:$0xf]
                  %522 = vst [vmem:[%s472 + $0x60] sm:$0xf] %v521
                  %v523 = vld [vmem:[%s471 + $0xc8] sm:$0xf]
                  %524 = vst [vmem:[%s472 + $0x64] sm:$0xf] %v523
                $region103: #{convolution_forward.1} parent=90 // loop_footer
                  %s470 = sadd.s32 1, %s466
                $region104: #{convolution_forward.1} parent=90 // loop_footer_branch
                  %465 = sbr.rel target = $region100
                $region105: #{convolution_forward.1} parent=90 // loop_exit
                  _
              $region91: #{convolution_forward.1} parent=75 // pred_fallthru
                _
            $region76: #{convolution_forward.1} parent=71 // pred_fallthru
              _
            // Predicated region
            $region77: #{convolution_forward.1} parent=71 // pred_check
              _
            $region78: #{convolution_forward.1} parent=71 // pred_check_branch
              %392 = sbr.rel (0) target = $region80
            $region79: #{convolution_forward.1} parent=71 // pred_region
              loop: start=0, step=1, limit=1
              $region81: #{convolution_forward.1} parent=79 // loop_pre_header
                _
              $region82: #{convolution_forward.1} parent=79 // loop_header
                %s395 = sphi 0, %s399
                %p396 = scmp.ge.s32.totalorder %s395, 1
                %s400 = sphi %s386, %s386
                %s401 = sphi %s384, %s384
              $region83: #{convolution_forward.1} parent=79 // loop_header_branch
                %398 = sbr.rel (%p396) target = $region87
              $region84: #{convolution_forward.1} parent=79 // loop_body
                %v402 = vld [vmem:[%s400] sm:$0xf]
                %403 = vst [vmem:[%s401] sm:$0xf] %v402
                %v404 = vld [vmem:[%s400 + $0x8] sm:$0xf]
                %405 = vst [vmem:[%s401 + $0x4] sm:$0xf] %v404
                %v406 = vld [vmem:[%s400 + $0x10] sm:$0xf]
                %407 = vst [vmem:[%s401 + $0x8] sm:$0xf] %v406
                %v408 = vld [vmem:[%s400 + $0x18] sm:$0xf]
                %409 = vst [vmem:[%s401 + $0xc] sm:$0xf] %v408
                %v410 = vld [vmem:[%s400 + $0x20] sm:$0xf]
                %411 = vst [vmem:[%s401 + $0x10] sm:$0xf] %v410
                %v412 = vld [vmem:[%s400 + $0x28] sm:$0xf]
                %413 = vst [vmem:[%s401 + $0x14] sm:$0xf] %v412
                %v414 = vld [vmem:[%s400 + $0x30] sm:$0xf]
                %415 = vst [vmem:[%s401 + $0x18] sm:$0xf] %v414
                %v416 = vld [vmem:[%s400 + $0x38] sm:$0xf]
                %417 = vst [vmem:[%s401 + $0x1c] sm:$0xf] %v416
                %v418 = vld [vmem:[%s400 + $0x40] sm:$0xf]
                %419 = vst [vmem:[%s401 + $0x20] sm:$0xf] %v418
                %v420 = vld [vmem:[%s400 + $0x48] sm:$0xf]
                %421 = vst [vmem:[%s401 + $0x24] sm:$0xf] %v420
                %v422 = vld [vmem:[%s400 + $0x50] sm:$0xf]
                %423 = vst [vmem:[%s401 + $0x28] sm:$0xf] %v422
                %v424 = vld [vmem:[%s400 + $0x58] sm:$0xf]
                %425 = vst [vmem:[%s401 + $0x2c] sm:$0xf] %v424
                %v426 = vld [vmem:[%s400 + $0x60] sm:$0xf]
                %427 = vst [vmem:[%s401 + $0x30] sm:$0xf] %v426
                %v428 = vld [vmem:[%s400 + $0x68] sm:$0xf]
                %429 = vst [vmem:[%s401 + $0x34] sm:$0xf] %v428
                %v430 = vld [vmem:[%s400 + $0x70] sm:$0xf]
                %431 = vst [vmem:[%s401 + $0x38] sm:$0xf] %v430
                %v432 = vld [vmem:[%s400 + $0x78] sm:$0xf]
                %433 = vst [vmem:[%s401 + $0x3c] sm:$0xf] %v432
                %v434 = vld [vmem:[%s400 + $0x80] sm:$0xf]
                %435 = vst [vmem:[%s401 + $0x40] sm:$0xf] %v434
                %v436 = vld [vmem:[%s400 + $0x88] sm:$0xf]
                %437 = vst [vmem:[%s401 + $0x44] sm:$0xf] %v436
                %v438 = vld [vmem:[%s400 + $0x90] sm:$0xf]
                %439 = vst [vmem:[%s401 + $0x48] sm:$0xf] %v438
                %v440 = vld [vmem:[%s400 + $0x98] sm:$0xf]
                %441 = vst [vmem:[%s401 + $0x4c] sm:$0xf] %v440
                %v442 = vld [vmem:[%s400 + $0xa0] sm:$0xf]
                %443 = vst [vmem:[%s401 + $0x50] sm:$0xf] %v442
                %v444 = vld [vmem:[%s400 + $0xa8] sm:$0xf]
                %445 = vst [vmem:[%s401 + $0x54] sm:$0xf] %v444
                %v446 = vld [vmem:[%s400 + $0xb0] sm:$0xf]
                %447 = vst [vmem:[%s401 + $0x58] sm:$0xf] %v446
                %v448 = vld [vmem:[%s400 + $0xb8] sm:$0xf]
                %449 = vst [vmem:[%s401 + $0x5c] sm:$0xf] %v448
                %v450 = vld [vmem:[%s400 + $0xc0] sm:$0xf]
                %451 = vst [vmem:[%s401 + $0x60] sm:$0xf] %v450
                %v452 = vld [vmem:[%s400 + $0xc8] sm:$0xf]
                %453 = vst [vmem:[%s401 + $0x64] sm:$0xf] %v452
              $region85: #{convolution_forward.1} parent=79 // loop_footer
                %s399 = sadd.s32 1, %s395
              $region86: #{convolution_forward.1} parent=79 // loop_footer_branch
                %394 = sbr.rel target = $region82
              $region87: #{convolution_forward.1} parent=79 // loop_exit
                _
            $region80: #{convolution_forward.1} parent=71 // pred_fallthru
              _
          $region72: #{convolution_forward.1} parent=67 // pred_fallthru
            _
          %525 = vnop
        $region68: #{convolution_forward.1} parent=63 // pred_fallthru
          _
      $region64: #{convolution_forward.1} parent=5 // pred_fallthru
        _
      %p526 = scmp.le.s32.totalorder 1, %s19
      %p527 = scmp.lt.s32.totalorder %s19, 3
      %p528 = pnand %p526, %p527
      %p529 = pneg %p528
      // Predicated region
      $region106: #{convolution_forward.1} parent=5 // pred_check
        _
      $region107: #{convolution_forward.1} parent=5 // pred_check_branch
        %531 = sbr.rel (%p528) target = $region109
      $region108: #{convolution_forward.1} parent=5 // pred_region
        %s532 = ssub.s32 %s19, 1
        %s533 = sand.u32 %s32, 1
        %s534 = sand.u32 %s32, 1
        %s535 = smul.addr %s534, 104
        %s536 = scalar_lea.vmem [#allocation2], %s535
        // Predicated region
        $region110: #{convolution_forward.1} parent=108 // pred_check
          %p537 = pneg %p45
        $region111: #{convolution_forward.1} parent=108 // pred_check_branch
          %539 = sbr.rel (%p537) target = $region113
        $region112: #{convolution_forward.1} parent=108 // pred_region
          _
        $region113: #{convolution_forward.1} parent=108 // pred_fallthru
          _
        %s540 = sand.u32 %s32, 1
        %s541 = sand.u32 %s32, 1
        %s542 = smul.addr %s541, 104
        %s543 = scalar_lea.vmem [#allocation2], %s542
        %p544 = pneg %p45
        %p545 = pneg %p42
        %p546 = pneg %p66
        %p547 = pneg %p63
        %p548 = pneg %p87
        %p549 = pneg %p84
        %p550 = pneg %p108
        %p551 = pneg %p105
        %p552 = pneg %p129
        %p553 = pneg %p126
        %p554 = pneg %p150
        %p555 = pneg %p147
        %p556 = pneg %p171
        %p557 = pneg %p168
        %p558 = pneg %p192
        %p559 = pneg %p189
        %p560 = pneg %p213
        %p561 = pneg %p210
        %p562 = pneg %p234
        %p563 = pneg %p231
        %p564 = pneg %p255
        %p565 = pneg %p252
        %p566 = pneg %p276
        %p567 = pneg %p273
        %p568 = pneg %p297
        %p569 = pneg %p294
        %p570 = pneg %p323
        %p571 = pneg %p320
        %p572 = scmp.lt.s32.totalorder %s24, 1
        %s573 = scalar_select %p572, %s24, 1
        %s574 = smul.addr %s573, 8
        %s575 = scalar_lea.vmem %s13, %s574
        %p576 = scmp.lt.s32.totalorder %s24, 1
        %s577 = scalar_select %p576, %s24, 1
        %s578 = smul.addr %s577, 8
        %s579 = scalar_lea.vmem %s13, %s578
        %v581 = vld [vmem:[%s2] sm:$0x3]
        %v583 = vlaneseq
        %v584 = vshrl.u32 %v583, 7
        %v585 = vsub.s32 0, %v584
        %v586 = vrot.slane %v581, %v585
        %v587 = vlaneseq
        %v588 = vshrl.u32 %v587, 7
        %v589 = vsub.s32 1, %v588
        %v590 = vrot.slane %v581, %v589
        %v593 = vld [vmem:[%s536] sm:$0xf]
        %v594 = vld [vmem:[%s1] sm:$0xff]
        %v595 = vld [vmem:[%s1 + $0x8] sm:$0xff]
        %v596 = vld [vmem:[%s1 + $0x10] sm:$0xff]
        %v597 = vld [vmem:[%s1 + $0x18] sm:$0x11]
        %v602 = vunpack.c.l.b16 %v594
        %v603 = vunpack.c.h.b16 %v594
        %v604 = vunpack.c.l.b16 %v595
        %v605 = vunpack.c.h.b16 %v595
        %v606 = vunpack.c.l.b16 %v596
        %v607 = vunpack.c.h.b16 %v596
        %v608 = vunpack.c.l.b16 %v597
        %v609 = vunpack.c.h.b16 %v597
        %v610 = vpack.c.b16 %v604, %v602
        %v611 = vpack.c.b16 %v605, %v603
        %v612 = vpack.c.b16 %v608, %v606
        %v613 = vpack.c.b16 %v609, %v607
        %vm616 = vcmask 211968
        %v618 = vsel %vm616, %v593, 0
        %vm620 = vcmask 1044480
        %v622 = vsel %vm620, %v612, 0
        %v625 = vsel %vm620, %v613, 0
        %627 = vmatprep.subr.bf16.mxu0 %v611
        %628 = vmatpush1.bf16.msra.mxu0 %v610
        %629 = vmatprep.subr.bf16.mxu0 %v625
        %630 = vmatpush1.bf16.msra.mxu0 %v622
        %631 = vmatprep.subr.bf16.mxu0 0
        %632 = vmatpush1.bf16.msra.mxu0 0
        %633 = vmatprep.subr.bf16.mxu0 0
        %634 = vmatpush1.bf16.msra.mxu0 0
        %635 = vmatprep.subr.bf16.mxu0 0
        %636 = vmatpush1.bf16.msra.mxu0 0
        %637 = vmatprep.subr.bf16.mxu0 0
        %638 = vmatpush1.bf16.msra.mxu0 0
        %639 = vmatprep.subr.bf16.mxu0 0
        %640 = vmatpush1.bf16.msra.mxu0 0
        %641 = vmatprep.subr.bf16.mxu0 0
        %642 = vmatpush1.bf16.msra.mxu0 0
        %643 = vmatprep.subr.bf16.mxu0 0
        %644 = vmatpush1.bf16.msra.mxu0 0
        %645 = vmatprep.subr.bf16.mxu0 0
        %646 = vmatpush1.bf16.msra.mxu0 0
        %647 = vmatprep.subr.bf16.mxu0 0
        %648 = vmatpush1.bf16.msra.mxu0 0
        %649 = vmatprep.subr.bf16.mxu0 0
        %650 = vmatpush1.bf16.msra.mxu0 0
        %651 = vmatprep.subr.bf16.mxu0 0
        %652 = vmatpush1.bf16.msra.mxu0 0
        %653 = vmatprep.subr.bf16.mxu0 0
        %654 = vmatpush1.bf16.msra.mxu0 0
        %655 = vmatprep.subr.bf16.mxu0 0
        %656 = vmatpush1.bf16.msra.mxu0 0
        %657 = vmatprep.subr.bf16.mxu0 0
        %658 = vmatpush1.bf16.msra.mxu0 0
        %659 = vmatprep.mubr.bf16.mxu0 0
        %660 = vmatmul.mubr.bf16.gmra.mrb[0].mxu0 %v618
        %v661 = vpop.f32.mrb[0].mxu0
        %v662 = vadd.f32 0.0, %v661
        %v663 = vpop.f32.mrb[0].mxu0
        %v664 = vadd.f32 0.0, %v663
        %v665 = vpop.f32.mrb[0].mxu0
        %v666 = vpop.f32.mrb[0].mxu0
        %667 = vdwg.mxu0
        %v668 = vadd.f32 %v586, %v662
        %v669 = vadd.f32 %v590, %v664
        %s670 = scalar_lea.vmem %s536, 4 [#allocation2]
        %v671 = vld [vmem:[%s670] sm:$0xf]
        %s672 = scalar_lea.vmem %s1, 32
        %v673 = vld [vmem:[%s672] sm:$0xff]
        %v674 = vld [vmem:[%s672 + $0x8] sm:$0xff]
        %v675 = vld [vmem:[%s672 + $0x10] sm:$0xff]
        %v676 = vld [vmem:[%s672 + $0x18] sm:$0x11]
        %v681 = vunpack.c.l.b16 %v673
        %v682 = vunpack.c.h.b16 %v673
        %v683 = vunpack.c.l.b16 %v674
        %v684 = vunpack.c.h.b16 %v674
        %v685 = vunpack.c.l.b16 %v675
        %v686 = vunpack.c.h.b16 %v675
        %v687 = vunpack.c.l.b16 %v676
        %v688 = vunpack.c.h.b16 %v676
        %v689 = vpack.c.b16 %v683, %v681
        %v690 = vpack.c.b16 %v684, %v682
        %v691 = vpack.c.b16 %v687, %v685
        %v692 = vpack.c.b16 %v688, %v686
        %v696 = vsel %vm616, %v671, 0
        %v699 = vsel %vm620, %v691, 0
        %v702 = vsel %vm620, %v692, 0
        %704 = vmatprep.subr.bf16.mxu0 %v690
        %705 = vmatpush1.bf16.msra.mxu0 %v689
        %706 = vmatprep.subr.bf16.mxu0 %v702
        %707 = vmatpush1.bf16.msra.mxu0 %v699
        %708 = vmatprep.subr.bf16.mxu0 0
        %709 = vmatpush1.bf16.msra.mxu0 0
        %710 = vmatprep.subr.bf16.mxu0 0
        %711 = vmatpush1.bf16.msra.mxu0 0
        %712 = vmatprep.subr.bf16.mxu0 0
        %713 = vmatpush1.bf16.msra.mxu0 0
        %714 = vmatprep.subr.bf16.mxu0 0
        %715 = vmatpush1.bf16.msra.mxu0 0
        %716 = vmatprep.subr.bf16.mxu0 0
        %717 = vmatpush1.bf16.msra.mxu0 0
        %718 = vmatprep.subr.bf16.mxu0 0
        %719 = vmatpush1.bf16.msra.mxu0 0
        %720 = vmatprep.subr.bf16.mxu0 0
        %721 = vmatpush1.bf16.msra.mxu0 0
        %722 = vmatprep.subr.bf16.mxu0 0
        %723 = vmatpush1.bf16.msra.mxu0 0
        %724 = vmatprep.subr.bf16.mxu0 0
        %725 = vmatpush1.bf16.msra.mxu0 0
        %726 = vmatprep.subr.bf16.mxu0 0
        %727 = vmatpush1.bf16.msra.mxu0 0
        %728 = vmatprep.subr.bf16.mxu0 0
        %729 = vmatpush1.bf16.msra.mxu0 0
        %730 = vmatprep.subr.bf16.mxu0 0
        %731 = vmatpush1.bf16.msra.mxu0 0
        %732 = vmatprep.subr.bf16.mxu0 0
        %733 = vmatpush1.bf16.msra.mxu0 0
        %734 = vmatprep.subr.bf16.mxu0 0
        %735 = vmatpush1.bf16.msra.mxu0 0
        %736 = vmatprep.mubr.bf16.mxu0 0
        %737 = vmatmul.mubr.bf16.gmra.mrb[0].mxu0 %v696
        %v738 = vpop.f32.mrb[0].mxu0
        %v739 = vadd.f32 0.0, %v738
        %v740 = vpop.f32.mrb[0].mxu0
        %v741 = vadd.f32 0.0, %v740
        %v742 = vpop.f32.mrb[0].mxu0
        %v743 = vpop.f32.mrb[0].mxu0
        %744 = vdwg.mxu0
        %v745 = vadd.f32 %v668, %v739
        %v746 = vadd.f32 %v669, %v741
        %s747 = scalar_lea.vmem %s536, 8 [#allocation2]
        %v748 = vld [vmem:[%s747] sm:$0xf]
        %s749 = scalar_lea.vmem %s1, 64
        %v750 = vld [vmem:[%s749] sm:$0xff]
        %v751 = vld [vmem:[%s749 + $0x8] sm:$0xff]
        %v752 = vld [vmem:[%s749 + $0x10] sm:$0xff]
        %v753 = vld [vmem:[%s749 + $0x18] sm:$0x11]
        %v758 = vunpack.c.l.b16 %v750
        %v759 = vunpack.c.h.b16 %v750
        %v760 = vunpack.c.l.b16 %v751
        %v761 = vunpack.c.h.b16 %v751
        %v762 = vunpack.c.l.b16 %v752
        %v763 = vunpack.c.h.b16 %v752
        %v764 = vunpack.c.l.b16 %v753
        %v765 = vunpack.c.h.b16 %v753
        %v766 = vpack.c.b16 %v760, %v758
        %v767 = vpack.c.b16 %v761, %v759
        %v768 = vpack.c.b16 %v764, %v762
        %v769 = vpack.c.b16 %v765, %v763
        %v773 = vsel %vm616, %v748, 0
        %v776 = vsel %vm620, %v768, 0
        %v779 = vsel %vm620, %v769, 0
        %781 = vmatprep.subr.bf16.mxu0 %v767
        %782 = vmatpush1.bf16.msra.mxu0 %v766
        %783 = vmatprep.subr.bf16.mxu0 %v779
        %784 = vmatpush1.bf16.msra.mxu0 %v776
        %785 = vmatprep.subr.bf16.mxu0 0
        %786 = vmatpush1.bf16.msra.mxu0 0
        %787 = vmatprep.subr.bf16.mxu0 0
        %788 = vmatpush1.bf16.msra.mxu0 0
        %789 = vmatprep.subr.bf16.mxu0 0
        %790 = vmatpush1.bf16.msra.mxu0 0
        %791 = vmatprep.subr.bf16.mxu0 0
        %792 = vmatpush1.bf16.msra.mxu0 0
        %793 = vmatprep.subr.bf16.mxu0 0
        %794 = vmatpush1.bf16.msra.mxu0 0
        %795 = vmatprep.subr.bf16.mxu0 0
        %796 = vmatpush1.bf16.msra.mxu0 0
        %797 = vmatprep.subr.bf16.mxu0 0
        %798 = vmatpush1.bf16.msra.mxu0 0
        %799 = vmatprep.subr.bf16.mxu0 0
        %800 = vmatpush1.bf16.msra.mxu0 0
        %801 = vmatprep.subr.bf16.mxu0 0
        %802 = vmatpush1.bf16.msra.mxu0 0
        %803 = vmatprep.subr.bf16.mxu0 0
        %804 = vmatpush1.bf16.msra.mxu0 0
        %805 = vmatprep.subr.bf16.mxu0 0
        %806 = vmatpush1.bf16.msra.mxu0 0
        %807 = vmatprep.subr.bf16.mxu0 0
        %808 = vmatpush1.bf16.msra.mxu0 0
        %809 = vmatprep.subr.bf16.mxu0 0
        %810 = vmatpush1.bf16.msra.mxu0 0
        %811 = vmatprep.subr.bf16.mxu0 0
        %812 = vmatpush1.bf16.msra.mxu0 0
        %813 = vmatprep.mubr.bf16.mxu0 0
        %814 = vmatmul.mubr.bf16.gmra.mrb[0].mxu0 %v773
        %v815 = vpop.f32.mrb[0].mxu0
        %v816 = vadd.f32 0.0, %v815
        %v817 = vpop.f32.mrb[0].mxu0
        %v818 = vadd.f32 0.0, %v817
        %v819 = vpop.f32.mrb[0].mxu0
        %v820 = vpop.f32.mrb[0].mxu0
        %821 = vdwg.mxu0
        %v822 = vadd.f32 %v745, %v816
        %v823 = vadd.f32 %v746, %v818
        %824 = vmatprep.subr.bf16.mxu0 %v611
        %825 = vmatpush1.bf16.msra.mxu0 %v610
        %826 = vmatprep.subr.bf16.mxu0 %v625
        %827 = vmatpush1.bf16.msra.mxu0 %v622
        %828 = vmatprep.subr.bf16.mxu0 0
        %829 = vmatpush1.bf16.msra.mxu0 0
        %830 = vmatprep.subr.bf16.mxu0 0
        %831 = vmatpush1.bf16.msra.mxu0 0
        %832 = vmatprep.subr.bf16.mxu0 0
        %833 = vmatpush1.bf16.msra.mxu0 0
        %834 = vmatprep.subr.bf16.mxu0 0
        %835 = vmatpush1.bf16.msra.mxu0 0
        %836 = vmatprep.subr.bf16.mxu0 0
        %837 = vmatpush1.bf16.msra.mxu0 0
        %838 = vmatprep.subr.bf16.mxu0 0
        %839 = vmatpush1.bf16.msra.mxu0 0
        %840 = vmatprep.subr.bf16.mxu0 0
        %841 = vmatpush1.bf16.msra.mxu0 0
        %842 = vmatprep.subr.bf16.mxu0 0
        %843 = vmatpush1.bf16.msra.mxu0 0
        %844 = vmatprep.subr.bf16.mxu0 0
        %845 = vmatpush1.bf16.msra.mxu0 0
        %846 = vmatprep.subr.bf16.mxu0 0
        %847 = vmatpush1.bf16.msra.mxu0 0
        %848 = vmatprep.subr.bf16.mxu0 0
        %849 = vmatpush1.bf16.msra.mxu0 0
        %850 = vmatprep.subr.bf16.mxu0 0
        %851 = vmatpush1.bf16.msra.mxu0 0
        %852 = vmatprep.subr.bf16.mxu0 0
        %853 = vmatpush1.bf16.msra.mxu0 0
        %854 = vmatprep.subr.bf16.mxu0 0
        %855 = vmatpush1.bf16.msra.mxu0 0
        %856 = vmatprep.mubr.bf16.mxu0 0
        %857 = vmatmul.mubr.bf16.gmra.mrb[0].mxu0 %v696
        %v858 = vpop.f32.mrb[0].mxu0
        %v859 = vadd.f32 0.0, %v858
        %v860 = vpop.f32.mrb[0].mxu0
        %v861 = vadd.f32 0.0, %v860
        %v862 = vpop.f32.mrb[0].mxu0
        %v863 = vpop.f32.mrb[0].mxu0
        %864 = vdwg.mxu0
        %v865 = vadd.f32 %v586, %v859
        %v866 = vadd.f32 %v590, %v861
        %867 = vmatprep.subr.bf16.mxu0 %v690
        %868 = vmatpush1.bf16.msra.mxu0 %v689
        %869 = vmatprep.subr.bf16.mxu0 %v702
        %870 = vmatpush1.bf16.msra.mxu0 %v699
        %871 = vmatprep.subr.bf16.mxu0 0
        %872 = vmatpush1.bf16.msra.mxu0 0
        %873 = vmatprep.subr.bf16.mxu0 0
        %874 = vmatpush1.bf16.msra.mxu0 0
        %875 = vmatprep.subr.bf16.mxu0 0
        %876 = vmatpush1.bf16.msra.mxu0 0
        %877 = vmatprep.subr.bf16.mxu0 0
        %878 = vmatpush1.bf16.msra.mxu0 0
        %879 = vmatprep.subr.bf16.mxu0 0
        %880 = vmatpush1.bf16.msra.mxu0 0
        %881 = vmatprep.subr.bf16.mxu0 0
        %882 = vmatpush1.bf16.msra.mxu0 0
        %883 = vmatprep.subr.bf16.mxu0 0
        %884 = vmatpush1.bf16.msra.mxu0 0
        %885 = vmatprep.subr.bf16.mxu0 0
        %886 = vmatpush1.bf16.msra.mxu0 0
        %887 = vmatprep.subr.bf16.mxu0 0
        %888 = vmatpush1.bf16.msra.mxu0 0
        %889 = vmatprep.subr.bf16.mxu0 0
        %890 = vmatpush1.bf16.msra.mxu0 0
        %891 = vmatprep.subr.bf16.mxu0 0
        %892 = vmatpush1.bf16.msra.mxu0 0
        %893 = vmatprep.subr.bf16.mxu0 0
        %894 = vmatpush1.bf16.msra.mxu0 0
        %895 = vmatprep.subr.bf16.mxu0 0
        %896 = vmatpush1.bf16.msra.mxu0 0
        %897 = vmatprep.subr.bf16.mxu0 0
        %898 = vmatpush1.bf16.msra.mxu0 0
        %899 = vmatprep.mubr.bf16.mxu0 0
        %900 = vmatmul.mubr.bf16.gmra.mrb[0].mxu0 %v773
        %v901 = vpop.f32.mrb[0].mxu0
        %v902 = vadd.f32 0.0, %v901
        %v903 = vpop.f32.mrb[0].mxu0
        %v904 = vadd.f32 0.0, %v903
        %v905 = vpop.f32.mrb[0].mxu0
        %v906 = vpop.f32.mrb[0].mxu0
        %907 = vdwg.mxu0
        %v908 = vadd.f32 %v865, %v902
        %v909 = vadd.f32 %v866, %v904
        %s910 = scalar_lea.vmem %s536, 12 [#allocation2]
        %v911 = vld [vmem:[%s910] sm:$0xf]
        %v913 = vsel %vm616, %v911, 0
        %915 = vmatprep.subr.bf16.mxu0 %v767
        %916 = vmatpush1.bf16.msra.mxu0 %v766
        %917 = vmatprep.subr.bf16.mxu0 %v779
        %918 = vmatpush1.bf16.msra.mxu0 %v776
        %919 = vmatprep.subr.bf16.mxu0 0
        %920 = vmatpush1.bf16.msra.mxu0 0
        %921 = vmatprep.subr.bf16.mxu0 0
        %922 = vmatpush1.bf16.msra.mxu0 0
        %923 = vmatprep.subr.bf16.mxu0 0
        %924 = vmatpush1.bf16.msra.mxu0 0
        %925 = vmatprep.subr.bf16.mxu0 0
        %926 = vmatpush1.bf16.msra.mxu0 0
        %927 = vmatprep.subr.bf16.mxu0 0
        %928 = vmatpush1.bf16.msra.mxu0 0
        %929 = vmatprep.subr.bf16.mxu0 0
        %930 = vmatpush1.bf16.msra.mxu0 0
        %931 = vmatprep.subr.bf16.mxu0 0
        %932 = vmatpush1.bf16.msra.mxu0 0
        %933 = vmatprep.subr.bf16.mxu0 0
        %934 = vmatpush1.bf16.msra.mxu0 0
        %935 = vmatprep.subr.bf16.mxu0 0
        %936 = vmatpush1.bf16.msra.mxu0 0
        %937 = vmatprep.subr.bf16.mxu0 0
        %938 = vmatpush1.bf16.msra.mxu0 0
        %939 = vmatprep.subr.bf16.mxu0 0
        %940 = vmatpush1.bf16.msra.mxu0 0
        %941 = vmatprep.subr.bf16.mxu0 0
        %942 = vmatpush1.bf16.msra.mxu0 0
        %943 = vmatprep.subr.bf16.mxu0 0
        %944 = vmatpush1.bf16.msra.mxu0 0
        %945 = vmatprep.subr.bf16.mxu0 0
        %946 = vmatpush1.bf16.msra.mxu0 0
        %947 = vmatprep.mubr.bf16.mxu0 0
        %948 = vmatmul.mubr.bf16.gmra.mrb[0].mxu0 %v913
        %v949 = vpop.f32.mrb[0].mxu0
        %v950 = vadd.f32 0.0, %v949
        %v951 = vpop.f32.mrb[0].mxu0
        %v952 = vadd.f32 0.0, %v951
        %v953 = vpop.f32.mrb[0].mxu0
        %v954 = vpop.f32.mrb[0].mxu0
        %955 = vdwg.mxu0
        %v956 = vadd.f32 %v908, %v950
        %v957 = vadd.f32 %v909, %v952
        %v958 = vmax.f32 %v822, %v956
        %v959 = vmax.f32 %v823, %v957
        %v960 = vpack.c.bf16 %v958, %v958
        %v961 = vpack.c.bf16 %v959, %v959
        %v962 = vld [vmem:[%s3] sm:$0xf]
        %v963 = vld [vmem:[%s3 + $0x4] sm:$0xf]
        %v964 = vld [vmem:[%s3 + $0x8] sm:$0xf]
        %v965 = vld [vmem:[%s3 + $0xc] sm:$0xf]
        %v966 = vld [vmem:[%s3 + $0x10] sm:$0xf]
        %v967 = vld [vmem:[%s3 + $0x14] sm:$0xf]
        %v968 = vld [vmem:[%s3 + $0x18] sm:$0xf]
        %v969 = vld [vmem:[%s3 + $0x1c] sm:$0xf]
        %v970 = vld [vmem:[%s3 + $0x20] sm:$0xf]
        %v971 = vld [vmem:[%s3 + $0x24] sm:$0xf]
        %v972 = vld [vmem:[%s3 + $0x28] sm:$0xf]
        %v973 = vld [vmem:[%s3 + $0x2c] sm:$0xf]
        %v974 = vld [vmem:[%s3 + $0x30] sm:$0xf]
        %v975 = vld [vmem:[%s3 + $0x34] sm:$0xf]
        %v976 = vld [vmem:[%s3 + $0x38] sm:$0xf]
        %v977 = vld [vmem:[%s3 + $0x3c] sm:$0xf]
        %v978 = vld [vmem:[%s3 + $0x40] sm:$0xf]
        %v979 = vld [vmem:[%s3 + $0x44] sm:$0xf]
        %v998 = vunpack.c.l.b16 %v962
        %v999 = vunpack.c.l.b16 %v963
        %v1000 = vunpack.c.l.b16 %v964
        %v1001 = vunpack.c.l.b16 %v965
        %v1002 = vunpack.c.l.b16 %v966
        %v1003 = vunpack.c.l.b16 %v967
        %v1004 = vunpack.c.l.b16 %v968
        %v1005 = vunpack.c.l.b16 %v969
        %v1006 = vunpack.c.l.b16 %v970
        %v1007 = vunpack.c.l.b16 %v971
        %v1008 = vunpack.c.l.b16 %v972
        %v1009 = vunpack.c.l.b16 %v973
        %v1010 = vunpack.c.l.b16 %v974
        %v1011 = vunpack.c.l.b16 %v975
        %v1012 = vunpack.c.l.b16 %v976
        %v1013 = vunpack.c.l.b16 %v977
        %v1014 = vunpack.c.l.b16 %v978
        %v1015 = vunpack.c.l.b16 %v979
        %v1016 = vpack.c.b16 %v999, %v998
        %v1017 = vpack.c.b16 %v1001, %v1000
        %v1018 = vpack.c.b16 %v1003, %v1002
        %v1019 = vpack.c.b16 %v1005, %v1004
        %v1020 = vpack.c.b16 %v1007, %v1006
        %v1021 = vpack.c.b16 %v1009, %v1008
        %v1022 = vpack.c.b16 %v1011, %v1010
        %v1023 = vpack.c.b16 %v1013, %v1012
        %v1024 = vpack.c.b16 %v1015, %v1014
        %vm1034 = vcmask 130048
        %v1036 = vsel %vm1034, %v961, 0
        %1038 = vmatprep.subr.bf16.mxu0 0
        %1039 = vmatpush1.bf16.msra.mxu0 %v1016
        %1040 = vmatprep.subr.bf16.mxu0 0
        %1041 = vmatpush1.bf16.msra.mxu0 %v1017
        %1042 = vmatprep.subr.bf16.mxu0 0
        %1043 = vmatpush1.bf16.msra.mxu0 %v1018
        %1044 = vmatprep.subr.bf16.mxu0 0
        %1045 = vmatpush1.bf16.msra.mxu0 %v1019
        %1046 = vmatprep.subr.bf16.mxu0 0
        %1047 = vmatpush1.bf16.msra.mxu0 %v1020
        %1048 = vmatprep.subr.bf16.mxu0 0
        %1049 = vmatpush1.bf16.msra.mxu0 %v1021
        %1050 = vmatprep.subr.bf16.mxu0 0
        %1051 = vmatpush1.bf16.msra.mxu0 %v1022
        %1052 = vmatprep.subr.bf16.mxu0 0
        %1053 = vmatpush1.bf16.msra.mxu0 %v1023
        %1054 = vmatprep.subr.bf16.mxu0 0
        %1055 = vmatpush1.bf16.msra.mxu0 %v1024
        %1056 = vmatprep.subr.bf16.mxu0 0
        %1057 = vmatpush1.bf16.msra.mxu0 0
        %1058 = vmatprep.subr.bf16.mxu0 0
        %1059 = vmatpush1.bf16.msra.mxu0 0
        %1060 = vmatprep.subr.bf16.mxu0 0
        %1061 = vmatpush1.bf16.msra.mxu0 0
        %1062 = vmatprep.subr.bf16.mxu0 0
        %1063 = vmatpush1.bf16.msra.mxu0 0
        %1064 = vmatprep.subr.bf16.mxu0 0
        %1065 = vmatpush1.bf16.msra.mxu0 0
        %1066 = vmatprep.subr.bf16.mxu0 0
        %1067 = vmatpush1.bf16.msra.mxu0 0
        %1068 = vmatprep.subr.bf16.mxu0 0
        %1069 = vmatpush1.bf16.msra.mxu0 0
        %1070 = vmatprep.mubr.bf16.mxu0 %v1036
        %1071 = vmatmul.mubr.bf16.gmra.mrb[0].mxu0 %v960
        %v1072 = vpop.f32.mrb[0].mxu0
        %v1073 = vadd.f32 0.0, %v1072
        %v1074 = vpop.f32.mrb[0].mxu0
        %v1075 = vpop.f32.mrb[0].mxu0
        %v1076 = vpop.f32.mrb[0].mxu0
        %1077 = vdwg.mxu0
        %v1078 = vld [vmem:[%s4] sm:$0xf]
        %v1079 = vld [vmem:[%s4 + $0x4] sm:$0xf]
        %v1080 = vld [vmem:[%s4 + $0x8] sm:$0xf]
        %v1081 = vld [vmem:[%s4 + $0xc] sm:$0xf]
        %v1082 = vld [vmem:[%s4 + $0x10] sm:$0xf]
        %v1083 = vld [vmem:[%s4 + $0x14] sm:$0xf]
        %v1084 = vld [vmem:[%s4 + $0x18] sm:$0xf]
        %v1085 = vld [vmem:[%s4 + $0x1c] sm:$0xf]
        %v1086 = vld [vmem:[%s4 + $0x20] sm:$0xf]
        %v1087 = vld [vmem:[%s4 + $0x24] sm:$0xf]
        %v1088 = vld [vmem:[%s4 + $0x28] sm:$0xf]
        %v1089 = vld [vmem:[%s4 + $0x2c] sm:$0xf]
        %v1090 = vld [vmem:[%s4 + $0x30] sm:$0xf]
        %v1091 = vld [vmem:[%s4 + $0x34] sm:$0xf]
        %v1092 = vld [vmem:[%s4 + $0x38] sm:$0xf]
        %v1093 = vld [vmem:[%s4 + $0x3c] sm:$0xf]
        %v1094 = vld [vmem:[%s4 + $0x40] sm:$0xf]
        %v1095 = vld [vmem:[%s4 + $0x44] sm:$0xf]
        %v1114 = vunpack.c.l.b16 %v1078
        %v1115 = vunpack.c.l.b16 %v1079
        %v1116 = vunpack.c.l.b16 %v1080
        %v1117 = vunpack.c.l.b16 %v1081
        %v1118 = vunpack.c.l.b16 %v1082
        %v1119 = vunpack.c.l.b16 %v1083
        %v1120 = vunpack.c.l.b16 %v1084
        %v1121 = vunpack.c.l.b16 %v1085
        %v1122 = vunpack.c.l.b16 %v1086
        %v1123 = vunpack.c.l.b16 %v1087
        %v1124 = vunpack.c.l.b16 %v1088
        %v1125 = vunpack.c.l.b16 %v1089
        %v1126 = vunpack.c.l.b16 %v1090
        %v1127 = vunpack.c.l.b16 %v1091
        %v1128 = vunpack.c.l.b16 %v1092
        %v1129 = vunpack.c.l.b16 %v1093
        %v1130 = vunpack.c.l.b16 %v1094
        %v1131 = vunpack.c.l.b16 %v1095
        %v1132 = vpack.c.b16 %v1115, %v1114
        %v1133 = vpack.c.b16 %v1117, %v1116
        %v1134 = vpack.c.b16 %v1119, %v1118
        %v1135 = vpack.c.b16 %v1121, %v1120
        %v1136 = vpack.c.b16 %v1123, %v1122
        %v1137 = vpack.c.b16 %v1125, %v1124
        %v1138 = vpack.c.b16 %v1127, %v1126
        %v1139 = vpack.c.b16 %v1129, %v1128
        %v1140 = vpack.c.b16 %v1131, %v1130
        %1150 = vmatprep.subr.bf16.mxu0 0
        %1151 = vmatpush1.bf16.msra.mxu0 %v1132
        %1152 = vmatprep.subr.bf16.mxu0 0
        %1153 = vmatpush1.bf16.msra.mxu0 %v1133
        %1154 = vmatprep.subr.bf16.mxu0 0
        %1155 = vmatpush1.bf16.msra.mxu0 %v1134
        %1156 = vmatprep.subr.bf16.mxu0 0
        %1157 = vmatpush1.bf16.msra.mxu0 %v1135
        %1158 = vmatprep.subr.bf16.mxu0 0
        %1159 = vmatpush1.bf16.msra.mxu0 %v1136
        %1160 = vmatprep.subr.bf16.mxu0 0
        %1161 = vmatpush1.bf16.msra.mxu0 %v1137
        %1162 = vmatprep.subr.bf16.mxu0 0
        %1163 = vmatpush1.bf16.msra.mxu0 %v1138
        %1164 = vmatprep.subr.bf16.mxu0 0
        %1165 = vmatpush1.bf16.msra.mxu0 %v1139
        %1166 = vmatprep.subr.bf16.mxu0 0
        %1167 = vmatpush1.bf16.msra.mxu0 %v1140
        %1168 = vmatprep.subr.bf16.mxu0 0
        %1169 = vmatpush1.bf16.msra.mxu0 0
        %1170 = vmatprep.subr.bf16.mxu0 0
        %1171 = vmatpush1.bf16.msra.mxu0 0
        %1172 = vmatprep.subr.bf16.mxu0 0
        %1173 = vmatpush1.bf16.msra.mxu0 0
        %1174 = vmatprep.subr.bf16.mxu0 0
        %1175 = vmatpush1.bf16.msra.mxu0 0
        %1176 = vmatprep.subr.bf16.mxu0 0
        %1177 = vmatpush1.bf16.msra.mxu0 0
        %1178 = vmatprep.subr.bf16.mxu0 0
        %1179 = vmatpush1.bf16.msra.mxu0 0
        %1180 = vmatprep.subr.bf16.mxu0 0
        %1181 = vmatpush1.bf16.msra.mxu0 0
        %1182 = vmatprep.mubr.bf16.mxu0 %v1036
        %1183 = vmatmul.mubr.bf16.gmra.mrb[0].mxu0 %v960
        %v1184 = vpop.f32.mrb[0].mxu0
        %v1185 = vadd.f32 0.0, %v1184
        %v1186 = vpop.f32.mrb[0].mxu0
        %v1187 = vpop.f32.mrb[0].mxu0
        %v1188 = vpop.f32.mrb[0].mxu0
        %1189 = vdwg.mxu0
        %v1190 = vmax.f32 %v1073, %v1185
        %v1191 = vpack.c.bf16 %v1190, %v1190
        %1192 = vmatprep.subr.bf16.mxu0 %v611
        %1193 = vmatpush1.bf16.msra.mxu0 %v610
        %1194 = vmatprep.subr.bf16.mxu0 %v625
        %1195 = vmatpush1.bf16.msra.mxu0 %v622
        %1196 = vmatprep.subr.bf16.mxu0 0
        %1197 = vmatpush1.bf16.msra.mxu0 0
        %1198 = vmatprep.subr.bf16.mxu0 0
        %1199 = vmatpush1.bf16.msra.mxu0 0
        %1200 = vmatprep.subr.bf16.mxu0 0
        %1201 = vmatpush1.bf16.msra.mxu0 0
        %1202 = vmatprep.subr.bf16.mxu0 0
        %1203 = vmatpush1.bf16.msra.mxu0 0
        %1204 = vmatprep.subr.bf16.mxu0 0
        %1205 = vmatpush1.bf16.msra.mxu0 0
        %1206 = vmatprep.subr.bf16.mxu0 0
        %1207 = vmatpush1.bf16.msra.mxu0 0
        %1208 = vmatprep.subr.bf16.mxu0 0
        %1209 = vmatpush1.bf16.msra.mxu0 0
        %1210 = vmatprep.subr.bf16.mxu0 0
        %1211 = vmatpush1.bf16.msra.mxu0 0
        %1212 = vmatprep.subr.bf16.mxu0 0
        %1213 = vmatpush1.bf16.msra.mxu0 0
        %1214 = vmatprep.subr.bf16.mxu0 0
        %1215 = vmatpush1.bf16.msra.mxu0 0
        %1216 = vmatprep.subr.bf16.mxu0 0
        %1217 = vmatpush1.bf16.msra.mxu0 0
        %1218 = vmatprep.subr.bf16.mxu0 0
        %1219 = vmatpush1.bf16.msra.mxu0 0
        %1220 = vmatprep.subr.bf16.mxu0 0
        %1221 = vmatpush1.bf16.msra.mxu0 0
        %1222 = vmatprep.subr.bf16.mxu0 0
        %1223 = vmatpush1.bf16.msra.mxu0 0
        %1224 = vmatprep.mubr.bf16.mxu0 0
        %1225 = vmatmul.mubr.bf16.gmra.mrb[0].mxu0 %v773
        %v1226 = vpop.f32.mrb[0].mxu0
        %v1227 = vadd.f32 0.0, %v1226
        %v1228 = vpop.f32.mrb[0].mxu0
        %v1229 = vadd.f32 0.0, %v1228
        %v1230 = vpop.f32.mrb[0].mxu0
        %v1231 = vpop.f32.mrb[0].mxu0
        %1232 = vdwg.mxu0
        %v1233 = vadd.f32 %v586, %v1227
        %v1234 = vadd.f32 %v590, %v1229
        %1235 = vmatprep.subr.bf16.mxu0 %v690
        %1236 = vmatpush1.bf16.msra.mxu0 %v689
        %1237 = vmatprep.subr.bf16.mxu0 %v702
        %1238 = vmatpush1.bf16.msra.mxu0 %v699
        %1239 = vmatprep.subr.bf16.mxu0 0
        %1240 = vmatpush1.bf16.msra.mxu0 0
        %1241 = vmatprep.subr.bf16.mxu0 0
        %1242 = vmatpush1.bf16.msra.mxu0 0
        %1243 = vmatprep.subr.bf16.mxu0 0
        %1244 = vmatpush1.bf16.msra.mxu0 0
        %1245 = vmatprep.subr.bf16.mxu0 0
        %1246 = vmatpush1.bf16.msra.mxu0 0
        %1247 = vmatprep.subr.bf16.mxu0 0
        %1248 = vmatpush1.bf16.msra.mxu0 0
        %1249 = vmatprep.subr.bf16.mxu0 0
        %1250 = vmatpush1.bf16.msra.mxu0 0
        %1251 = vmatprep.subr.bf16.mxu0 0
        %1252 = vmatpush1.bf16.msra.mxu0 0
        %1253 = vmatprep.subr.bf16.mxu0 0
        %1254 = vmatpush1.bf16.msra.mxu0 0
        %1255 = vmatprep.subr.bf16.mxu0 0
        %1256 = vmatpush1.bf16.msra.mxu0 0
        %1257 = vmatprep.subr.bf16.mxu0 0
        %1258 = vmatpush1.bf16.msra.mxu0 0
        %1259 = vmatprep.subr.bf16.mxu0 0
        %1260 = vmatpush1.bf16.msra.mxu0 0
        %1261 = vmatprep.subr.bf16.mxu0 0
        %1262 = vmatpush1.bf16.msra.mxu0 0
        %1263 = vmatprep.subr.bf16.mxu0 0
        %1264 = vmatpush1.bf16.msra.mxu0 0
        %1265 = vmatprep.subr.bf16.mxu0 0
        %1266 = vmatpush1.bf16.msra.mxu0 0
        %1267 = vmatprep.mubr.bf16.mxu0 0
        %1268 = vmatmul.mubr.bf16.gmra.mrb[0].mxu0 %v913
        %v1269 = vpop.f32.mrb[0].mxu0
        %v1270 = vadd.f32 0.0, %v1269
        %v1271 = vpop.f32.mrb[0].mxu0
        %v1272 = vadd.f32 0.0, %v1271
        %v1273 = vpop.f32.mrb[0].mxu0
        %v1274 = vpop.f32.mrb[0].mxu0
        %1275 = vdwg.mxu0
        %v1276 = vadd.f32 %v1233, %v1270
        %v1277 = vadd.f32 %v1234, %v1272
        %s1278 = scalar_lea.vmem %s536, 16 [#allocation2]
        %v1279 = vld [vmem:[%s1278] sm:$0xf]
        %v1281 = vsel %vm616, %v1279, 0
        %1283 = vmatprep.subr.bf16.mxu0 %v767
        %1284 = vmatpush1.bf16.msra.mxu0 %v766
        %1285 = vmatprep.subr.bf16.mxu0 %v779
        %1286 = vmatpush1.bf16.msra.mxu0 %v776
        %1287 = vmatprep.subr.bf16.mxu0 0
        %1288 = vmatpush1.bf16.msra.mxu0 0
        %1289 = vmatprep.subr.bf16.mxu0 0
        %1290 = vmatpush1.bf16.msra.mxu0 0
        %1291 = vmatprep.subr.bf16.mxu0 0
        %1292 = vmatpush1.bf16.msra.mxu0 0
        %1293 = vmatprep.subr.bf16.mxu0 0
        %1294 = vmatpush1.bf16.msra.mxu0 0
        %1295 = vmatprep.subr.bf16.mxu0 0
        %1296 = vmatpush1.bf16.msra.mxu0 0
        %1297 = vmatprep.subr.bf16.mxu0 0
        %1298 = vmatpush1.bf16.msra.mxu0 0
        %1299 = vmatprep.subr.bf16.mxu0 0
        %1300 = vmatpush1.bf16.msra.mxu0 0
        %1301 = vmatprep.subr.bf16.mxu0 0
        %1302 = vmatpush1.bf16.msra.mxu0 0
        %1303 = vmatprep.subr.bf16.mxu0 0
        %1304 = vmatpush1.bf16.msra.mxu0 0
        %1305 = vmatprep.subr.bf16.mxu0 0
        %1306 = vmatpush1.bf16.msra.mxu0 0
        %1307 = vmatprep.subr.bf16.mxu0 0
        %1308 = vmatpush1.bf16.msra.mxu0 0
        %1309 = vmatprep.subr.bf16.mxu0 0
        %1310 = vmatpush1.bf16.msra.mxu0 0
        %1311 = vmatprep.subr.bf16.mxu0 0
        %1312 = vmatpush1.bf16.msra.mxu0 0
        %1313 = vmatprep.subr.bf16.mxu0 0
        %1314 = vmatpush1.bf16.msra.mxu0 0
        %1315 = vmatprep.mubr.bf16.mxu0 0
        %1316 = vmatmul.mubr.bf16.gmra.mrb[0].mxu0 %v1281
        %v1317 = vpop.f32.mrb[0].mxu0
        %v1318 = vadd.f32 0.0, %v1317
        %v1319 = vpop.f32.mrb[0].mxu0
        %v1320 = vadd.f32 0.0, %v1319
        %v1321 = vpop.f32.mrb[0].mxu0
        %v1322 = vpop.f32.mrb[0].mxu0
        %1323 = vdwg.mxu0
        %v1324 = vadd.f32 %v1276, %v1318
        %v1325 = vadd.f32 %v1277, %v1320
        %1326 = vmatprep.subr.bf16.mxu0 %v611
        %1327 = vmatpush1.bf16.msra.mxu0 %v610
        %1328 = vmatprep.subr.bf16.mxu0 %v625
        %1329 = vmatpush1.bf16.msra.mxu0 %v622
        %1330 = vmatprep.subr.bf16.mxu0 0
        %1331 = vmatpush1.bf16.msra.mxu0 0
        %1332 = vmatprep.subr.bf16.mxu0 0
        %1333 = vmatpush1.bf16.msra.mxu0 0
        %1334 = vmatprep.subr.bf16.mxu0 0
        %1335 = vmatpush1.bf16.msra.mxu0 0
        %1336 = vmatprep.subr.bf16.mxu0 0
        %1337 = vmatpush1.bf16.msra.mxu0 0
        %1338 = vmatprep.subr.bf16.mxu0 0
        %1339 = vmatpush1.bf16.msra.mxu0 0
        %1340 = vmatprep.subr.bf16.mxu0 0
        %1341 = vmatpush1.bf16.msra.mxu0 0
        %1342 = vmatprep.subr.bf16.mxu0 0
        %1343 = vmatpush1.bf16.msra.mxu0 0
        %1344 = vmatprep.subr.bf16.mxu0 0
        %1345 = vmatpush1.bf16.msra.mxu0 0
        %1346 = vmatprep.subr.bf16.mxu0 0
        %1347 = vmatpush1.bf16.msra.mxu0 0
        %1348 = vmatprep.subr.bf16.mxu0 0
        %1349 = vmatpush1.bf16.msra.mxu0 0
        %1350 = vmatprep.subr.bf16.mxu0 0
        %1351 = vmatpush1.bf16.msra.mxu0 0
        %1352 = vmatprep.subr.bf16.mxu0 0
        %1353 = vmatpush1.bf16.msra.mxu0 0
        %1354 = vmatprep.subr.bf16.mxu0 0
        %1355 = vmatpush1.bf16.msra.mxu0 0
        %1356 = vmatprep.subr.bf16.mxu0 0
        %1357 = vmatpush1.bf16.msra.mxu0 0
        %1358 = vmatprep.mubr.bf16.mxu0 0
        %1359 = vmatmul.mubr.bf16.gmra.mrb[0].mxu0 %v913
        %v1360 = vpop.f32.mrb[0].mxu0
        %v1361 = vadd.f32 0.0, %v1360
        %v1362 = vpop.f32.mrb[0].mxu0
        %v1363 = vadd.f32 0.0, %v1362
        %v1364 = vpop.f32.mrb[0].mxu0
        %v1365 = vpop.f32.mrb[0].mxu0
        %1366 = vdwg.mxu0
        %v1367 = vadd.f32 %v586, %v1361
        %v1368 = vadd.f32 %v590, %v1363
        %1369 = vmatprep.subr.bf16.mxu0 %v690
        %1370 = vmatpush1.bf16.msra.mxu0 %v689
        %1371 = vmatprep.subr.bf16.mxu0 %v702
        %1372 = vmatpush1.bf16.msra.mxu0 %v699
        %1373 = vmatprep.subr.bf16.mxu0 0
        %1374 = vmatpush1.bf16.msra.mxu0 0
        %1375 = vmatprep.subr.bf16.mxu0 0
        %1376 = vmatpush1.bf16.msra.mxu0 0
        %1377 = vmatprep.subr.bf16.mxu0 0
        %1378 = vmatpush1.bf16.msra.mxu0 0
        %1379 = vmatprep.subr.bf16.mxu0 0
        %1380 = vmatpush1.bf16.msra.mxu0 0
        %1381 = vmatprep.subr.bf16.mxu0 0
        %1382 = vmatpush1.bf16.msra.mxu0 0
        %1383 = vmatprep.subr.bf16.mxu0 0
        %1384 = vmatpush1.bf16.msra.mxu0 0
        %1385 = vmatprep.subr.bf16.mxu0 0
        %1386 = vmatpush1.bf16.msra.mxu0 0
        %1387 = vmatprep.subr.bf16.mxu0 0
        %1388 = vmatpush1.bf16.msra.mxu0 0
        %1389 = vmatprep.subr.bf16.mxu0 0
        %1390 = vmatpush1.bf16.msra.mxu0 0
        %1391 = vmatprep.subr.bf16.mxu0 0
        %1392 = vmatpush1.bf16.msra.mxu0 0
        %1393 = vmatprep.subr.bf16.mxu0 0
        %1394 = vmatpush1.bf16.msra.mxu0 0
        %1395 = vmatprep.subr.bf16.mxu0 0
        %1396 = vmatpush1.bf16.msra.mxu0 0
        %1397 = vmatprep.subr.bf16.mxu0 0
        %1398 = vmatpush1.bf16.msra.mxu0 0
        %1399 = vmatprep.subr.bf16.mxu0 0
        %1400 = vmatpush1.bf16.msra.mxu0 0
        %1401 = vmatprep.mubr.bf16.mxu0 0
        %1402 = vmatmul.mubr.bf16.gmra.mrb[0].mxu0 %v1281
        %v1403 = vpop.f32.mrb[0].mxu0
        %v1404 = vadd.f32 0.0, %v1403
        %v1405 = vpop.f32.mrb[0].mxu0
        %v1406 = vadd.f32 0.0, %v1405
        %v1407 = vpop.f32.mrb[0].mxu0
        %v1408 = vpop.f32.mrb[0].mxu0
        %1409 = vdwg.mxu0
        %v1410 = vadd.f32 %v1367, %v1404
        %v1411 = vadd.f32 %v1368, %v1406
        %s1412 = scalar_lea.vmem %s536, 20 [#allocation2]
        %v1413 = vld [vmem:[%s1412] sm:$0xf]
        %v1415 = vsel %vm616, %v1413, 0
        %1417 = vmatprep.subr.bf16.mxu0 %v767
        %1418 = vmatpush1.bf16.msra.mxu0 %v766
        %1419 = vmatprep.subr.bf16.mxu0 %v779
        %1420 = vmatpush1.bf16.msra.mxu0 %v776
        %1421 = vmatprep.subr.bf16.mxu0 0
        %1422 = vmatpush1.bf16.msra.mxu0 0
        %1423 = vmatprep.subr.bf16.mxu0 0
        %1424 = vmatpush1.bf16.msra.mxu0 0
        %1425 = vmatprep.subr.bf16.mxu0 0
        %1426 = vmatpush1.bf16.msra.mxu0 0
        %1427 = vmatprep.subr.bf16.mxu0 0
        %1428 = vmatpush1.bf16.msra.mxu0 0
        %1429 = vmatprep.subr.bf16.mxu0 0
        %1430 = vmatpush1.bf16.msra.mxu0 0
        %1431 = vmatprep.subr.bf16.mxu0 0
        %1432 = vmatpush1.bf16.msra.mxu0 0
        %1433 = vmatprep.subr.bf16.mxu0 0
        %1434 = vmatpush1.bf16.msra.mxu0 0
        %1435 = vmatprep.subr.bf16.mxu0 0
        %1436 = vmatpush1.bf16.msra.mxu0 0
        %1437 = vmatprep.subr.bf16.mxu0 0
        %1438 = vmatpush1.bf16.msra.mxu0 0
        %1439 = vmatprep.subr.bf16.mxu0 0
        %1440 = vmatpush1.bf16.msra.mxu0 0
        %1441 = vmatprep.subr.bf16.mxu0 0
        %1442 = vmatpush1.bf16.msra.mxu0 0
        %1443 = vmatprep.subr.bf16.mxu0 0
        %1444 = vmatpush1.bf16.msra.mxu0 0
        %1445 = vmatprep.subr.bf16.mxu0 0
        %1446 = vmatpush1.bf16.msra.mxu0 0
        %1447 = vmatprep.subr.bf16.mxu0 0
        %1448 = vmatpush1.bf16.msra.mxu0 0
        %1449 = vmatprep.mubr.bf16.mxu0 0
        %1450 = vmatmul.mubr.bf16.gmra.mrb[0].mxu0 %v1415
        %v1451 = vpop.f32.mrb[0].mxu0
        %v1452 = vadd.f32 0.0, %v1451
        %v1453 = vpop.f32.mrb[0].mxu0
        %v1454 = vadd.f32 0.0, %v1453
        %v1455 = vpop.f32.mrb[0].mxu0
        %v1456 = vpop.f32.mrb[0].mxu0
        %1457 = vdwg.mxu0
        %v1458 = vadd.f32 %v1410, %v1452
        %v1459 = vadd.f32 %v1411, %v1454
        %v1460 = vmax.f32 %v1324, %v1458
        %v1461 = vmax.f32 %v1325, %v1459
        %v1462 = vpack.c.bf16 %v1460, %v1460
        %v1463 = vpack.c.bf16 %v1461, %v1461
        %v1465 = vsel %vm1034, %v1463, 0
        %1467 = vmatprep.subr.bf16.mxu0 0
        %1468 = vmatpush1.bf16.msra.mxu0 %v1016
        %1469 = vmatprep.subr.bf16.mxu0 0
        %1470 = vmatpush1.bf16.msra.mxu0 %v1017
        %1471 = vmatprep.subr.bf16.mxu0 0
        %1472 = vmatpush1.bf16.msra.mxu0 %v1018
        %1473 = vmatprep.subr.bf16.mxu0 0
        %1474 = vmatpush1.bf16.msra.mxu0 %v1019
        %1475 = vmatprep.subr.bf16.mxu0 0
        %1476 = vmatpush1.bf16.msra.mxu0 %v1020
        %1477 = vmatprep.subr.bf16.mxu0 0
        %1478 = vmatpush1.bf16.msra.mxu0 %v1021
        %1479 = vmatprep.subr.bf16.mxu0 0
        %1480 = vmatpush1.bf16.msra.mxu0 %v1022
        %1481 = vmatprep.subr.bf16.mxu0 0
        %1482 = vmatpush1.bf16.msra.mxu0 %v1023
        %1483 = vmatprep.subr.bf16.mxu0 0
        %1484 = vmatpush1.bf16.msra.mxu0 %v1024
        %1485 = vmatprep.subr.bf16.mxu0 0
        %1486 = vmatpush1.bf16.msra.mxu0 0
        %1487 = vmatprep.subr.bf16.mxu0 0
        %1488 = vmatpush1.bf16.msra.mxu0 0
        %1489 = vmatprep.subr.bf16.mxu0 0
        %1490 = vmatpush1.bf16.msra.mxu0 0
        %1491 = vmatprep.subr.bf16.mxu0 0
        %1492 = vmatpush1.bf16.msra.mxu0 0
        %1493 = vmatprep.subr.bf16.mxu0 0
        %1494 = vmatpush1.bf16.msra.mxu0 0
        %1495 = vmatprep.subr.bf16.mxu0 0
        %1496 = vmatpush1.bf16.msra.mxu0 0
        %1497 = vmatprep.subr.bf16.mxu0 0
        %1498 = vmatpush1.bf16.msra.mxu0 0
        %1499 = vmatprep.mubr.bf16.mxu0 %v1465
        %1500 = vmatmul.mubr.bf16.gmra.mrb[0].mxu0 %v1462
        %v1501 = vpop.f32.mrb[0].mxu0
        %v1502 = vadd.f32 0.0, %v1501
        %v1503 = vpop.f32.mrb[0].mxu0
        %v1504 = vpop.f32.mrb[0].mxu0
        %v1505 = vpop.f32.mrb[0].mxu0
        %1506 = vdwg.mxu0
        %1507 = vmatprep.subr.bf16.mxu0 0
        %1508 = vmatpush1.bf16.msra.mxu0 %v1132
        %1509 = vmatprep.subr.bf16.mxu0 0
        %1510 = vmatpush1.bf16.msra.mxu0 %v1133
        %1511 = vmatprep.subr.bf16.mxu0 0
        %1512 = vmatpush1.bf16.msra.mxu0 %v1134
        %1513 = vmatprep.subr.bf16.mxu0 0
        %1514 = vmatpush1.bf16.msra.mxu0 %v1135
        %1515 = vmatprep.subr.bf16.mxu0 0
        %1516 = vmatpush1.bf16.msra.mxu0 %v1136
        %1517 = vmatprep.subr.bf16.mxu0 0
        %1518 = vmatpush1.bf16.msra.mxu0 %v1137
        %1519 = vmatprep.subr.bf16.mxu0 0
        %1520 = vmatpush1.bf16.msra.mxu0 %v1138
        %1521 = vmatprep.subr.bf16.mxu0 0
        %1522 = vmatpush1.bf16.msra.mxu0 %v1139
        %1523 = vmatprep.subr.bf16.mxu0 0
        %1524 = vmatpush1.bf16.msra.mxu0 %v1140
        %1525 = vmatprep.subr.bf16.mxu0 0
        %1526 = vmatpush1.bf16.msra.mxu0 0
        %1527 = vmatprep.subr.bf16.mxu0 0
        %1528 = vmatpush1.bf16.msra.mxu0 0
        %1529 = vmatprep.subr.bf16.mxu0 0
        %1530 = vmatpush1.bf16.msra.mxu0 0
        %1531 = vmatprep.subr.bf16.mxu0 0
        %1532 = vmatpush1.bf16.msra.mxu0 0
        %1533 = vmatprep.subr.bf16.mxu0 0
        %1534 = vmatpush1.bf16.msra.mxu0 0
        %1535 = vmatprep.subr.bf16.mxu0 0
        %1536 = vmatpush1.bf16.msra.mxu0 0
        %1537 = vmatprep.subr.bf16.mxu0 0
        %1538 = vmatpush1.bf16.msra.mxu0 0
        %1539 = vmatprep.mubr.bf16.mxu0 %v1465
        %1540 = vmatmul.mubr.bf16.gmra.mrb[0].mxu0 %v1462
        %v1541 = vpop.f32.mrb[0].mxu0
        %v1542 = vadd.f32 0.0, %v1541
        %v1543 = vpop.f32.mrb[0].mxu0
        %v1544 = vpop.f32.mrb[0].mxu0
        %v1545 = vpop.f32.mrb[0].mxu0
        %1546 = vdwg.mxu0
        %v1547 = vmax.f32 %v1502, %v1542
        %v1548 = vpack.c.bf16 %v1547, %v1547
        %1549 = vmatprep.subr.bf16.mxu0 %v611
        %1550 = vmatpush1.bf16.msra.mxu0 %v610
        %1551 = vmatprep.subr.bf16.mxu0 %v625
        %1552 = vmatpush1.bf16.msra.mxu0 %v622
        %1553 = vmatprep.subr.bf16.mxu0 0
        %1554 = vmatpush1.bf16.msra.mxu0 0
        %1555 = vmatprep.subr.bf16.mxu0 0
        %1556 = vmatpush1.bf16.msra.mxu0 0
        %1557 = vmatprep.subr.bf16.mxu0 0
        %1558 = vmatpush1.bf16.msra.mxu0 0
        %1559 = vmatprep.subr.bf16.mxu0 0
        %1560 = vmatpush1.bf16.msra.mxu0 0
        %1561 = vmatprep.subr.bf16.mxu0 0
        %1562 = vmatpush1.bf16.msra.mxu0 0
        %1563 = vmatprep.subr.bf16.mxu0 0
        %1564 = vmatpush1.bf16.msra.mxu0 0
        %1565 = vmatprep.subr.bf16.mxu0 0
        %1566 = vmatpush1.bf16.msra.mxu0 0
        %1567 = vmatprep.subr.bf16.mxu0 0
        %1568 = vmatpush1.bf16.msra.mxu0 0
        %1569 = vmatprep.subr.bf16.mxu0 0
        %1570 = vmatpush1.bf16.msra.mxu0 0
        %1571 = vmatprep.subr.bf16.mxu0 0
        %1572 = vmatpush1.bf16.msra.mxu0 0
        %1573 = vmatprep.subr.bf16.mxu0 0
        %1574 = vmatpush1.bf16.msra.mxu0 0
        %1575 = vmatprep.subr.bf16.mxu0 0
        %1576 = vmatpush1.bf16.msra.mxu0 0
        %1577 = vmatprep.subr.bf16.mxu0 0
        %1578 = vmatpush1.bf16.msra.mxu0 0
        %1579 = vmatprep.subr.bf16.mxu0 0
        %1580 = vmatpush1.bf16.msra.mxu0 0
        %1581 = vmatprep.mubr.bf16.mxu0 0
        %1582 = vmatmul.mubr.bf16.gmra.mrb[0].mxu0 %v1281
        %v1583 = vpop.f32.mrb[0].mxu0
        %v1584 = vadd.f32 0.0, %v1583
        %v1585 = vpop.f32.mrb[0].mxu0
        %v1586 = vadd.f32 0.0, %v1585
        %v1587 = vpop.f32.mrb[0].mxu0
        %v1588 = vpop.f32.mrb[0].mxu0
        %1589 = vdwg.mxu0
        %v1590 = vadd.f32 %v586, %v1584
        %v1591 = vadd.f32 %v590, %v1586
        %1592 = vmatprep.subr.bf16.mxu0 %v690
        %1593 = vmatpush1.bf16.msra.mxu0 %v689
        %1594 = vmatprep.subr.bf16.mxu0 %v702
        %1595 = vmatpush1.bf16.msra.mxu0 %v699
        %1596 = vmatprep.subr.bf16.mxu0 0
        %1597 = vmatpush1.bf16.msra.mxu0 0
        %1598 = vmatprep.subr.bf16.mxu0 0
        %1599 = vmatpush1.bf16.msra.mxu0 0
        %1600 = vmatprep.subr.bf16.mxu0 0
        %1601 = vmatpush1.bf16.msra.mxu0 0
        %1602 = vmatprep.subr.bf16.mxu0 0
        %1603 = vmatpush1.bf16.msra.mxu0 0
        %1604 = vmatprep.subr.bf16.mxu0 0
        %1605 = vmatpush1.bf16.msra.mxu0 0
        %1606 = vmatprep.subr.bf16.mxu0 0
        %1607 = vmatpush1.bf16.msra.mxu0 0
        %1608 = vmatprep.subr.bf16.mxu0 0
        %1609 = vmatpush1.bf16.msra.mxu0 0
        %1610 = vmatprep.subr.bf16.mxu0 0
        %1611 = vmatpush1.bf16.msra.mxu0 0
        %1612 = vmatprep.subr.bf16.mxu0 0
        %1613 = vmatpush1.bf16.msra.mxu0 0
        %1614 = vmatprep.subr.bf16.mxu0 0
        %1615 = vmatpush1.bf16.msra.mxu0 0
        %1616 = vmatprep.subr.bf16.mxu0 0
        %1617 = vmatpush1.bf16.msra.mxu0 0
        %1618 = vmatprep.subr.bf16.mxu0 0
        %1619 = vmatpush1.bf16.msra.mxu0 0
        %1620 = vmatprep.subr.bf16.mxu0 0
        %1621 = vmatpush1.bf16.msra.mxu0 0
        %1622 = vmatprep.subr.bf16.mxu0 0
        %1623 = vmatpush1.bf16.msra.mxu0 0
        %1624 = vmatprep.mubr.bf16.mxu0 0
        %1625 = vmatmul.mubr.bf16.gmra.mrb[0].mxu0 %v1415
        %v1626 = vpop.f32.mrb[0].mxu0
        %v1627 = vadd.f32 0.0, %v1626
        %v1628 = vpop.f32.mrb[0].mxu0
        %v1629 = vadd.f32 0.0, %v1628
        %v1630 = vpop.f32.mrb[0].mxu0
        %v1631 = vpop.f32.mrb[0].mxu0
        %1632 = vdwg.mxu0
        %v1633 = vadd.f32 %v1590, %v1627
        %v1634 = vadd.f32 %v1591, %v1629
        %s1635 = scalar_lea.vmem %s536, 24 [#allocation2]
        %v1636 = vld [vmem:[%s1635] sm:$0xf]
        %v1638 = vsel %vm616, %v1636, 0
        %1640 = vmatprep.subr.bf16.mxu0 %v767
        %1641 = vmatpush1.bf16.msra.mxu0 %v766
        %1642 = vmatprep.subr.bf16.mxu0 %v779
        %1643 = vmatpush1.bf16.msra.mxu0 %v776
        %1644 = vmatprep.subr.bf16.mxu0 0
        %1645 = vmatpush1.bf16.msra.mxu0 0
        %1646 = vmatprep.subr.bf16.mxu0 0
        %1647 = vmatpush1.bf16.msra.mxu0 0
        %1648 = vmatprep.subr.bf16.mxu0 0
        %1649 = vmatpush1.bf16.msra.mxu0 0
        %1650 = vmatprep.subr.bf16.mxu0 0
        %1651 = vmatpush1.bf16.msra.mxu0 0
        %1652 = vmatprep.subr.bf16.mxu0 0
        %1653 = vmatpush1.bf16.msra.mxu0 0
        %1654 = vmatprep.subr.bf16.mxu0 0
        %1655 = vmatpush1.bf16.msra.mxu0 0
        %1656 = vmatprep.subr.bf16.mxu0 0
        %1657 = vmatpush1.bf16.msra.mxu0 0
        %1658 = vmatprep.subr.bf16.mxu0 0
        %1659 = vmatpush1.bf16.msra.mxu0 0
        %1660 = vmatprep.subr.bf16.mxu0 0
        %1661 = vmatpush1.bf16.msra.mxu0 0
        %1662 = vmatprep.subr.bf16.mxu0 0
        %1663 = vmatpush1.bf16.msra.mxu0 0
        %1664 = vmatprep.subr.bf16.mxu0 0
        %1665 = vmatpush1.bf16.msra.mxu0 0
        %1666 = vmatprep.subr.bf16.mxu0 0
        %1667 = vmatpush1.bf16.msra.mxu0 0
        %1668 = vmatprep.subr.bf16.mxu0 0
        %1669 = vmatpush1.bf16.msra.mxu0 0
        %1670 = vmatprep.subr.bf16.mxu0 0
        %1671 = vmatpush1.bf16.msra.mxu0 0
        %1672 = vmatprep.mubr.bf16.mxu0 0
        %1673 = vmatmul.mubr.bf16.gmra.mrb[0].mxu0 %v1638
        %v1674 = vpop.f32.mrb[0].mxu0
        %v1675 = vadd.f32 0.0, %v1674
        %v1676 = vpop.f32.mrb[0].mxu0
        %v1677 = vadd.f32 0.0, %v1676
        %v1678 = vpop.f32.mrb[0].mxu0
        %v1679 = vpop.f32.mrb[0].mxu0
        %1680 = vdwg.mxu0
        %v1681 = vadd.f32 %v1633, %v1675
        %v1682 = vadd.f32 %v1634, %v1677
        %1683 = vmatprep.subr.bf16.mxu0 %v611
        %1684 = vmatpush1.bf16.msra.mxu0 %v610
        %1685 = vmatprep.subr.bf16.mxu0 %v625
        %1686 = vmatpush1.bf16.msra.mxu0 %v622
        %1687 = vmatprep.subr.bf16.mxu0 0
        %1688 = vmatpush1.bf16.msra.mxu0 0
        %1689 = vmatprep.subr.bf16.mxu0 0
        %1690 = vmatpush1.bf16.msra.mxu0 0
        %1691 = vmatprep.subr.bf16.mxu0 0
        %1692 = vmatpush1.bf16.msra.mxu0 0
        %1693 = vmatprep.subr.bf16.mxu0 0
        %1694 = vmatpush1.bf16.msra.mxu0 0
        %1695 = vmatprep.subr.bf16.mxu0 0
        %1696 = vmatpush1.bf16.msra.mxu0 0
        %1697 = vmatprep.subr.bf16.mxu0 0
        %1698 = vmatpush1.bf16.msra.mxu0 0
        %1699 = vmatprep.subr.bf16.mxu0 0
        %1700 = vmatpush1.bf16.msra.mxu0 0
        %1701 = vmatprep.subr.bf16.mxu0 0
        %1702 = vmatpush1.bf16.msra.mxu0 0
        %1703 = vmatprep.subr.bf16.mxu0 0
        %1704 = vmatpush1.bf16.msra.mxu0 0
        %1705 = vmatprep.subr.bf16.mxu0 0
        %1706 = vmatpush1.bf16.msra.mxu0 0
        %1707 = vmatprep.subr.bf16.mxu0 0
        %1708 = vmatpush1.bf16.msra.mxu0 0
        %1709 = vmatprep.subr.bf16.mxu0 0
        %1710 = vmatpush1.bf16.msra.mxu0 0
        %1711 = vmatprep.subr.bf16.mxu0 0
        %1712 = vmatpush1.bf16.msra.mxu0 0
        %1713 = vmatprep.subr.bf16.mxu0 0
        %1714 = vmatpush1.bf16.msra.mxu0 0
        %1715 = vmatprep.mubr.bf16.mxu0 0
        %1716 = vmatmul.mubr.bf16.gmra.mrb[0].mxu0 %v1415
        %v1717 = vpop.f32.mrb[0].mxu0
        %v1718 = vadd.f32 0.0, %v1717
        %v1719 = vpop.f32.mrb[0].mxu0
        %v1720 = vadd.f32 0.0, %v1719
        %v1721 = vpop.f32.mrb[0].mxu0
        %v1722 = vpop.f32.mrb[0].mxu0
        %1723 = vdwg.mxu0
        %v1724 = vadd.f32 %v586, %v1718
        %v1725 = vadd.f32 %v590, %v1720
        %1726 = vmatprep.subr.bf16.mxu0 %v690
        %1727 = vmatpush1.bf16.msra.mxu0 %v689
        %1728 = vmatprep.subr.bf16.mxu0 %v702
        %1729 = vmatpush1.bf16.msra.mxu0 %v699
        %1730 = vmatprep.subr.bf16.mxu0 0
        %1731 = vmatpush1.bf16.msra.mxu0 0
        %1732 = vmatprep.subr.bf16.mxu0 0
        %1733 = vmatpush1.bf16.msra.mxu0 0
        %1734 = vmatprep.subr.bf16.mxu0 0
        %1735 = vmatpush1.bf16.msra.mxu0 0
        %1736 = vmatprep.subr.bf16.mxu0 0
        %1737 = vmatpush1.bf16.msra.mxu0 0
        %1738 = vmatprep.subr.bf16.mxu0 0
        %1739 = vmatpush1.bf16.msra.mxu0 0
        %1740 = vmatprep.subr.bf16.mxu0 0
        %1741 = vmatpush1.bf16.msra.mxu0 0
        %1742 = vmatprep.subr.bf16.mxu0 0
        %1743 = vmatpush1.bf16.msra.mxu0 0
        %1744 = vmatprep.subr.bf16.mxu0 0
        %1745 = vmatpush1.bf16.msra.mxu0 0
        %1746 = vmatprep.subr.bf16.mxu0 0
        %1747 = vmatpush1.bf16.msra.mxu0 0
        %1748 = vmatprep.subr.bf16.mxu0 0
        %1749 = vmatpush1.bf16.msra.mxu0 0
        %1750 = vmatprep.subr.bf16.mxu0 0
        %1751 = vmatpush1.bf16.msra.mxu0 0
        %1752 = vmatprep.subr.bf16.mxu0 0
        %1753 = vmatpush1.bf16.msra.mxu0 0
        %1754 = vmatprep.subr.bf16.mxu0 0
        %1755 = vmatpush1.bf16.msra.mxu0 0
        %1756 = vmatprep.subr.bf16.mxu0 0
        %1757 = vmatpush1.bf16.msra.mxu0 0
        %1758 = vmatprep.mubr.bf16.mxu0 0
        %1759 = vmatmul.mubr.bf16.gmra.mrb[0].mxu0 %v1638
        %v1760 = vpop.f32.mrb[0].mxu0
        %v1761 = vadd.f32 0.0, %v1760
        %v1762 = vpop.f32.mrb[0].mxu0
        %v1763 = vadd.f32 0.0, %v1762
        %v1764 = vpop.f32.mrb[0].mxu0
        %v1765 = vpop.f32.mrb[0].mxu0
        %1766 = vdwg.mxu0
        %v1767 = vadd.f32 %v1724, %v1761
        %v1768 = vadd.f32 %v1725, %v1763
        %s1769 = scalar_lea.vmem %s536, 28 [#allocation2]
        %v1770 = vld [vmem:[%s1769] sm:$0xf]
        %v1772 = vsel %vm616, %v1770, 0
        %1774 = vmatprep.subr.bf16.mxu0 %v767
        %1775 = vmatpush1.bf16.msra.mxu0 %v766
        %1776 = vmatprep.subr.bf16.mxu0 %v779
        %1777 = vmatpush1.bf16.msra.mxu0 %v776
        %1778 = vmatprep.subr.bf16.mxu0 0
        %1779 = vmatpush1.bf16.msra.mxu0 0
        %1780 = vmatprep.subr.bf16.mxu0 0
        %1781 = vmatpush1.bf16.msra.mxu0 0
        %1782 = vmatprep.subr.bf16.mxu0 0
        %1783 = vmatpush1.bf16.msra.mxu0 0
        %1784 = vmatprep.subr.bf16.mxu0 0
        %1785 = vmatpush1.bf16.msra.mxu0 0
        %1786 = vmatprep.subr.bf16.mxu0 0
        %1787 = vmatpush1.bf16.msra.mxu0 0
        %1788 = vmatprep.subr.bf16.mxu0 0
        %1789 = vmatpush1.bf16.msra.mxu0 0
        %1790 = vmatprep.subr.bf16.mxu0 0
        %1791 = vmatpush1.bf16.msra.mxu0 0
        %1792 = vmatprep.subr.bf16.mxu0 0
        %1793 = vmatpush1.bf16.msra.mxu0 0
        %1794 = vmatprep.subr.bf16.mxu0 0
        %1795 = vmatpush1.bf16.msra.mxu0 0
        %1796 = vmatprep.subr.bf16.mxu0 0
        %1797 = vmatpush1.bf16.msra.mxu0 0
        %1798 = vmatprep.subr.bf16.mxu0 0
        %1799 = vmatpush1.bf16.msra.mxu0 0
        %1800 = vmatprep.subr.bf16.mxu0 0
        %1801 = vmatpush1.bf16.msra.mxu0 0
        %1802 = vmatprep.subr.bf16.mxu0 0
        %1803 = vmatpush1.bf16.msra.mxu0 0
        %1804 = vmatprep.subr.bf16.mxu0 0
        %1805 = vmatpush1.bf16.msra.mxu0 0
        %1806 = vmatprep.mubr.bf16.mxu0 0
        %1807 = vmatmul.mubr.bf16.gmra.mrb[0].mxu0 %v1772
        %v1808 = vpop.f32.mrb[0].mxu0
        %v1809 = vadd.f32 0.0, %v1808
        %v1810 = vpop.f32.mrb[0].mxu0
        %v1811 = vadd.f32 0.0, %v1810
        %v1812 = vpop.f32.mrb[0].mxu0
        %v1813 = vpop.f32.mrb[0].mxu0
        %1814 = vdwg.mxu0
        %v1815 = vadd.f32 %v1767, %v1809
        %v1816 = vadd.f32 %v1768, %v1811
        %v1817 = vmax.f32 %v1681, %v1815
        %v1818 = vmax.f32 %v1682, %v1816
        %v1819 = vpack.c.bf16 %v1817, %v1817
        %v1820 = vpack.c.bf16 %v1818, %v1818
        %v1822 = vsel %vm1034, %v1820, 0
        %1824 = vmatprep.subr.bf16.mxu0 0
        %1825 = vmatpush1.bf16.msra.mxu0 %v1016
        %1826 = vmatprep.subr.bf16.mxu0 0
        %1827 = vmatpush1.bf16.msra.mxu0 %v1017
        %1828 = vmatprep.subr.bf16.mxu0 0
        %1829 = vmatpush1.bf16.msra.mxu0 %v1018
        %1830 = vmatprep.subr.bf16.mxu0 0
        %1831 = vmatpush1.bf16.msra.mxu0 %v1019
        %1832 = vmatprep.subr.bf16.mxu0 0
        %1833 = vmatpush1.bf16.msra.mxu0 %v1020
        %1834 = vmatprep.subr.bf16.mxu0 0
        %1835 = vmatpush1.bf16.msra.mxu0 %v1021
        %1836 = vmatprep.subr.bf16.mxu0 0
        %1837 = vmatpush1.bf16.msra.mxu0 %v1022
        %1838 = vmatprep.subr.bf16.mxu0 0
        %1839 = vmatpush1.bf16.msra.mxu0 %v1023
        %1840 = vmatprep.subr.bf16.mxu0 0
        %1841 = vmatpush1.bf16.msra.mxu0 %v1024
        %1842 = vmatprep.subr.bf16.mxu0 0
        %1843 = vmatpush1.bf16.msra.mxu0 0
        %1844 = vmatprep.subr.bf16.mxu0 0
        %1845 = vmatpush1.bf16.msra.mxu0 0
        %1846 = vmatprep.subr.bf16.mxu0 0
        %1847 = vmatpush1.bf16.msra.mxu0 0
        %1848 = vmatprep.subr.bf16.mxu0 0
        %1849 = vmatpush1.bf16.msra.mxu0 0
        %1850 = vmatprep.subr.bf16.mxu0 0
        %1851 = vmatpush1.bf16.msra.mxu0 0
        %1852 = vmatprep.subr.bf16.mxu0 0
        %1853 = vmatpush1.bf16.msra.mxu0 0
        %1854 = vmatprep.subr.bf16.mxu0 0
        %1855 = vmatpush1.bf16.msra.mxu0 0
        %1856 = vmatprep.mubr.bf16.mxu0 %v1822
        %1857 = vmatmul.mubr.bf16.gmra.mrb[0].mxu0 %v1819
        %v1858 = vpop.f32.mrb[0].mxu0
        %v1859 = vadd.f32 0.0, %v1858
        %v1860 = vpop.f32.mrb[0].mxu0
        %v1861 = vpop.f32.mrb[0].mxu0
        %v1862 = vpop.f32.mrb[0].mxu0
        %1863 = vdwg.mxu0
        %1864 = vmatprep.subr.bf16.mxu0 0
        %1865 = vmatpush1.bf16.msra.mxu0 %v1132
        %1866 = vmatprep.subr.bf16.mxu0 0
        %1867 = vmatpush1.bf16.msra.mxu0 %v1133
        %1868 = vmatprep.subr.bf16.mxu0 0
        %1869 = vmatpush1.bf16.msra.mxu0 %v1134
        %1870 = vmatprep.subr.bf16.mxu0 0
        %1871 = vmatpush1.bf16.msra.mxu0 %v1135
        %1872 = vmatprep.subr.bf16.mxu0 0
        %1873 = vmatpush1.bf16.msra.mxu0 %v1136
        %1874 = vmatprep.subr.bf16.mxu0 0
        %1875 = vmatpush1.bf16.msra.mxu0 %v1137
        %1876 = vmatprep.subr.bf16.mxu0 0
        %1877 = vmatpush1.bf16.msra.mxu0 %v1138
        %1878 = vmatprep.subr.bf16.mxu0 0
        %1879 = vmatpush1.bf16.msra.mxu0 %v1139
        %1880 = vmatprep.subr.bf16.mxu0 0
        %1881 = vmatpush1.bf16.msra.mxu0 %v1140
        %1882 = vmatprep.subr.bf16.mxu0 0
        %1883 = vmatpush1.bf16.msra.mxu0 0
        %1884 = vmatprep.subr.bf16.mxu0 0
        %1885 = vmatpush1.bf16.msra.mxu0 0
        %1886 = vmatprep.subr.bf16.mxu0 0
        %1887 = vmatpush1.bf16.msra.mxu0 0
        %1888 = vmatprep.subr.bf16.mxu0 0
        %1889 = vmatpush1.bf16.msra.mxu0 0
        %1890 = vmatprep.subr.bf16.mxu0 0
        %1891 = vmatpush1.bf16.msra.mxu0 0
        %1892 = vmatprep.subr.bf16.mxu0 0
        %1893 = vmatpush1.bf16.msra.mxu0 0
        %1894 = vmatprep.subr.bf16.mxu0 0
        %1895 = vmatpush1.bf16.msra.mxu0 0
        %1896 = vmatprep.mubr.bf16.mxu0 %v1822
        %1897 = vmatmul.mubr.bf16.gmra.mrb[0].mxu0 %v1819
        %v1898 = vpop.f32.mrb[0].mxu0
        %v1899 = vadd.f32 0.0, %v1898
        %v1900 = vpop.f32.mrb[0].mxu0
        %v1901 = vpop.f32.mrb[0].mxu0
        %v1902 = vpop.f32.mrb[0].mxu0
        %1903 = vdwg.mxu0
        %v1904 = vmax.f32 %v1859, %v1899
        %v1905 = vpack.c.bf16 %v1904, %v1904
        %1906 = vmatprep.subr.bf16.mxu0 %v611
        %1907 = vmatpush1.bf16.msra.mxu0 %v610
        %1908 = vmatprep.subr.bf16.mxu0 %v625
        %1909 = vmatpush1.bf16.msra.mxu0 %v622
        %1910 = vmatprep.subr.bf16.mxu0 0
        %1911 = vmatpush1.bf16.msra.mxu0 0
        %1912 = vmatprep.subr.bf16.mxu0 0
        %1913 = vmatpush1.bf16.msra.mxu0 0
        %1914 = vmatprep.subr.bf16.mxu0 0
        %1915 = vmatpush1.bf16.msra.mxu0 0
        %1916 = vmatprep.subr.bf16.mxu0 0
        %1917 = vmatpush1.bf16.msra.mxu0 0
        %1918 = vmatprep.subr.bf16.mxu0 0
        %1919 = vmatpush1.bf16.msra.mxu0 0
        %1920 = vmatprep.subr.bf16.mxu0 0
        %1921 = vmatpush1.bf16.msra.mxu0 0
        %1922 = vmatprep.subr.bf16.mxu0 0
        %1923 = vmatpush1.bf16.msra.mxu0 0
        %1924 = vmatprep.subr.bf16.mxu0 0
        %1925 = vmatpush1.bf16.msra.mxu0 0
        %1926 = vmatprep.subr.bf16.mxu0 0
        %1927 = vmatpush1.bf16.msra.mxu0 0
        %1928 = vmatprep.subr.bf16.mxu0 0
        %1929 = vmatpush1.bf16.msra.mxu0 0
        %1930 = vmatprep.subr.bf16.mxu0 0
        %1931 = vmatpush1.bf16.msra.mxu0 0
        %1932 = vmatprep.subr.bf16.mxu0 0
        %1933 = vmatpush1.bf16.msra.mxu0 0
        %1934 = vmatprep.subr.bf16.mxu0 0
        %1935 = vmatpush1.bf16.msra.mxu0 0
        %1936 = vmatprep.subr.bf16.mxu0 0
        %1937 = vmatpush1.bf16.msra.mxu0 0
        %1938 = vmatprep.mubr.bf16.mxu0 0
        %1939 = vmatmul.mubr.bf16.gmra.mrb[0].mxu0 %v1638
        %v1940 = vpop.f32.mrb[0].mxu0
        %v1941 = vadd.f32 0.0, %v1940
        %v1942 = vpop.f32.mrb[0].mxu0
        %v1943 = vadd.f32 0.0, %v1942
        %v1944 = vpop.f32.mrb[0].mxu0
        %v1945 = vpop.f32.mrb[0].mxu0
        %1946 = vdwg.mxu0
        %v1947 = vadd.f32 %v586, %v1941
        %v1948 = vadd.f32 %v590, %v1943
        %1949 = vmatprep.subr.bf16.mxu0 %v690
        %1950 = vmatpush1.bf16.msra.mxu0 %v689
        %1951 = vmatprep.subr.bf16.mxu0 %v702
        %1952 = vmatpush1.bf16.msra.mxu0 %v699
        %1953 = vmatprep.subr.bf16.mxu0 0
        %1954 = vmatpush1.bf16.msra.mxu0 0
        %1955 = vmatprep.subr.bf16.mxu0 0
        %1956 = vmatpush1.bf16.msra.mxu0 0
        %1957 = vmatprep.subr.bf16.mxu0 0
        %1958 = vmatpush1.bf16.msra.mxu0 0
        %1959 = vmatprep.subr.bf16.mxu0 0
        %1960 = vmatpush1.bf16.msra.mxu0 0
        %1961 = vmatprep.subr.bf16.mxu0 0
        %1962 = vmatpush1.bf16.msra.mxu0 0
        %1963 = vmatprep.subr.bf16.mxu0 0
        %1964 = vmatpush1.bf16.msra.mxu0 0
        %1965 = vmatprep.subr.bf16.mxu0 0
        %1966 = vmatpush1.bf16.msra.mxu0 0
        %1967 = vmatprep.subr.bf16.mxu0 0
        %1968 = vmatpush1.bf16.msra.mxu0 0
        %1969 = vmatprep.subr.bf16.mxu0 0
        %1970 = vmatpush1.bf16.msra.mxu0 0
        %1971 = vmatprep.subr.bf16.mxu0 0
        %1972 = vmatpush1.bf16.msra.mxu0 0
        %1973 = vmatprep.subr.bf16.mxu0 0
        %1974 = vmatpush1.bf16.msra.mxu0 0
        %1975 = vmatprep.subr.bf16.mxu0 0
        %1976 = vmatpush1.bf16.msra.mxu0 0
        %1977 = vmatprep.subr.bf16.mxu0 0
        %1978 = vmatpush1.bf16.msra.mxu0 0
        %1979 = vmatprep.subr.bf16.mxu0 0
        %1980 = vmatpush1.bf16.msra.mxu0 0
        %1981 = vmatprep.mubr.bf16.mxu0 0
        %1982 = vmatmul.mubr.bf16.gmra.mrb[0].mxu0 %v1772
        %v1983 = vpop.f32.mrb[0].mxu0
        %v1984 = vadd.f32 0.0, %v1983
        %v1985 = vpop.f32.mrb[0].mxu0
        %v1986 = vadd.f32 0.0, %v1985
        %v1987 = vpop.f32.mrb[0].mxu0
        %v1988 = vpop.f32.mrb[0].mxu0
        %1989 = vdwg.mxu0
        %v1990 = vadd.f32 %v1947, %v1984
        %v1991 = vadd.f32 %v1948, %v1986
        %s1992 = scalar_lea.vmem %s536, 32 [#allocation2]
        %v1993 = vld [vmem:[%s1992] sm:$0xf]
        %v1995 = vsel %vm616, %v1993, 0
        %1997 = vmatprep.subr.bf16.mxu0 %v767
        %1998 = vmatpush1.bf16.msra.mxu0 %v766
        %1999 = vmatprep.subr.bf16.mxu0 %v779
        %2000 = vmatpush1.bf16.msra.mxu0 %v776
        %2001 = vmatprep.subr.bf16.mxu0 0
        %2002 = vmatpush1.bf16.msra.mxu0 0
        %2003 = vmatprep.subr.bf16.mxu0 0
        %2004 = vmatpush1.bf16.msra.mxu0 0
        %2005 = vmatprep.subr.bf16.mxu0 0
        %2006 = vmatpush1.bf16.msra.mxu0 0
        %2007 = vmatprep.subr.bf16.mxu0 0
        %2008 = vmatpush1.bf16.msra.mxu0 0
        %2009 = vmatprep.subr.bf16.mxu0 0
        %2010 = vmatpush1.bf16.msra.mxu0 0
        %2011 = vmatprep.subr.bf16.mxu0 0
        %2012 = vmatpush1.bf16.msra.mxu0 0
        %2013 = vmatprep.subr.bf16.mxu0 0
        %2014 = vmatpush1.bf16.msra.mxu0 0
        %2015 = vmatprep.subr.bf16.mxu0 0
        %2016 = vmatpush1.bf16.msra.mxu0 0
        %2017 = vmatprep.subr.bf16.mxu0 0
        %2018 = vmatpush1.bf16.msra.mxu0 0
        %2019 = vmatprep.subr.bf16.mxu0 0
        %2020 = vmatpush1.bf16.msra.mxu0 0
        %2021 = vmatprep.subr.bf16.mxu0 0
        %2022 = vmatpush1.bf16.msra.mxu0 0
        %2023 = vmatprep.subr.bf16.mxu0 0
        %2024 = vmatpush1.bf16.msra.mxu0 0
        %2025 = vmatprep.subr.bf16.mxu0 0
        %2026 = vmatpush1.bf16.msra.mxu0 0
        %2027 = vmatprep.subr.bf16.mxu0 0
        %2028 = vmatpush1.bf16.msra.mxu0 0
        %2029 = vmatprep.mubr.bf16.mxu0 0
        %2030 = vmatmul.mubr.bf16.gmra.mrb[0].mxu0 %v1995
        %v2031 = vpop.f32.mrb[0].mxu0
        %v2032 = vadd.f32 0.0, %v2031
        %v2033 = vpop.f32.mrb[0].mxu0
        %v2034 = vadd.f32 0.0, %v2033
        %v2035 = vpop.f32.mrb[0].mxu0
        %v2036 = vpop.f32.mrb[0].mxu0
        %2037 = vdwg.mxu0
        %v2038 = vadd.f32 %v1990, %v2032
        %v2039 = vadd.f32 %v1991, %v2034
        %2040 = vmatprep.subr.bf16.mxu0 %v611
        %2041 = vmatpush1.bf16.msra.mxu0 %v610
        %2042 = vmatprep.subr.bf16.mxu0 %v625
        %2043 = vmatpush1.bf16.msra.mxu0 %v622
        %2044 = vmatprep.subr.bf16.mxu0 0
        %2045 = vmatpush1.bf16.msra.mxu0 0
        %2046 = vmatprep.subr.bf16.mxu0 0
        %2047 = vmatpush1.bf16.msra.mxu0 0
        %2048 = vmatprep.subr.bf16.mxu0 0
        %2049 = vmatpush1.bf16.msra.mxu0 0
        %2050 = vmatprep.subr.bf16.mxu0 0
        %2051 = vmatpush1.bf16.msra.mxu0 0
        %2052 = vmatprep.subr.bf16.mxu0 0
        %2053 = vmatpush1.bf16.msra.mxu0 0
        %2054 = vmatprep.subr.bf16.mxu0 0
        %2055 = vmatpush1.bf16.msra.mxu0 0
        %2056 = vmatprep.subr.bf16.mxu0 0
        %2057 = vmatpush1.bf16.msra.mxu0 0
        %2058 = vmatprep.subr.bf16.mxu0 0
        %2059 = vmatpush1.bf16.msra.mxu0 0
        %2060 = vmatprep.subr.bf16.mxu0 0
        %2061 = vmatpush1.bf16.msra.mxu0 0
        %2062 = vmatprep.subr.bf16.mxu0 0
        %2063 = vmatpush1.bf16.msra.mxu0 0
        %2064 = vmatprep.subr.bf16.mxu0 0
        %2065 = vmatpush1.bf16.msra.mxu0 0
        %2066 = vmatprep.subr.bf16.mxu0 0
        %2067 = vmatpush1.bf16.msra.mxu0 0
        %2068 = vmatprep.subr.bf16.mxu0 0
        %2069 = vmatpush1.bf16.msra.mxu0 0
        %2070 = vmatprep.subr.bf16.mxu0 0
        %2071 = vmatpush1.bf16.msra.mxu0 0
        %2072 = vmatprep.mubr.bf16.mxu0 0
        %2073 = vmatmul.mubr.bf16.gmra.mrb[0].mxu0 %v1772
        %v2074 = vpop.f32.mrb[0].mxu0
        %v2075 = vadd.f32 0.0, %v2074
        %v2076 = vpop.f32.mrb[0].mxu0
        %v2077 = vadd.f32 0.0, %v2076
        %v2078 = vpop.f32.mrb[0].mxu0
        %v2079 = vpop.f32.mrb[0].mxu0
        %2080 = vdwg.mxu0
        %v2081 = vadd.f32 %v586, %v2075
        %v2082 = vadd.f32 %v590, %v2077
        %2083 = vmatprep.subr.bf16.mxu0 %v690
        %2084 = vmatpush1.bf16.msra.mxu0 %v689
        %2085 = vmatprep.subr.bf16.mxu0 %v702
        %2086 = vmatpush1.bf16.msra.mxu0 %v699
        %2087 = vmatprep.subr.bf16.mxu0 0
        %2088 = vmatpush1.bf16.msra.mxu0 0
        %2089 = vmatprep.subr.bf16.mxu0 0
        %2090 = vmatpush1.bf16.msra.mxu0 0
        %2091 = vmatprep.subr.bf16.mxu0 0
        %2092 = vmatpush1.bf16.msra.mxu0 0
        %2093 = vmatprep.subr.bf16.mxu0 0
        %2094 = vmatpush1.bf16.msra.mxu0 0
        %2095 = vmatprep.subr.bf16.mxu0 0
        %2096 = vmatpush1.bf16.msra.mxu0 0
        %2097 = vmatprep.subr.bf16.mxu0 0
        %2098 = vmatpush1.bf16.msra.mxu0 0
        %2099 = vmatprep.subr.bf16.mxu0 0
        %2100 = vmatpush1.bf16.msra.mxu0 0
        %2101 = vmatprep.subr.bf16.mxu0 0
        %2102 = vmatpush1.bf16.msra.mxu0 0
        %2103 = vmatprep.subr.bf16.mxu0 0
        %2104 = vmatpush1.bf16.msra.mxu0 0
        %2105 = vmatprep.subr.bf16.mxu0 0
        %2106 = vmatpush1.bf16.msra.mxu0 0
        %2107 = vmatprep.subr.bf16.mxu0 0
        %2108 = vmatpush1.bf16.msra.mxu0 0
        %2109 = vmatprep.subr.bf16.mxu0 0
        %2110 = vmatpush1.bf16.msra.mxu0 0
        %2111 = vmatprep.subr.bf16.mxu0 0
        %2112 = vmatpush1.bf16.msra.mxu0 0
        %2113 = vmatprep.subr.bf16.mxu0 0
        %2114 = vmatpush1.bf16.msra.mxu0 0
        %2115 = vmatprep.mubr.bf16.mxu0 0
        %2116 = vmatmul.mubr.bf16.gmra.mrb[0].mxu0 %v1995
        %v2117 = vpop.f32.mrb[0].mxu0
        %v2118 = vadd.f32 0.0, %v2117
        %v2119 = vpop.f32.mrb[0].mxu0
        %v2120 = vadd.f32 0.0, %v2119
        %v2121 = vpop.f32.mrb[0].mxu0
        %v2122 = vpop.f32.mrb[0].mxu0
        %2123 = vdwg.mxu0
        %v2124 = vadd.f32 %v2081, %v2118
        %v2125 = vadd.f32 %v2082, %v2120
        %s2126 = scalar_lea.vmem %s536, 36 [#allocation2]
        %v2127 = vld [vmem:[%s2126] sm:$0xf]
        %v2129 = vsel %vm616, %v2127, 0
        %2131 = vmatprep.subr.bf16.mxu0 %v767
        %2132 = vmatpush1.bf16.msra.mxu0 %v766
        %2133 = vmatprep.subr.bf16.mxu0 %v779
        %2134 = vmatpush1.bf16.msra.mxu0 %v776
        %2135 = vmatprep.subr.bf16.mxu0 0
        %2136 = vmatpush1.bf16.msra.mxu0 0
        %2137 = vmatprep.subr.bf16.mxu0 0
        %2138 = vmatpush1.bf16.msra.mxu0 0
        %2139 = vmatprep.subr.bf16.mxu0 0
        %2140 = vmatpush1.bf16.msra.mxu0 0
        %2141 = vmatprep.subr.bf16.mxu0 0
        %2142 = vmatpush1.bf16.msra.mxu0 0
        %2143 = vmatprep.subr.bf16.mxu0 0
        %2144 = vmatpush1.bf16.msra.mxu0 0
        %2145 = vmatprep.subr.bf16.mxu0 0
        %2146 = vmatpush1.bf16.msra.mxu0 0
        %2147 = vmatprep.subr.bf16.mxu0 0
        %2148 = vmatpush1.bf16.msra.mxu0 0
        %2149 = vmatprep.subr.bf16.mxu0 0
        %2150 = vmatpush1.bf16.msra.mxu0 0
        %2151 = vmatprep.subr.bf16.mxu0 0
        %2152 = vmatpush1.bf16.msra.mxu0 0
        %2153 = vmatprep.subr.bf16.mxu0 0
        %2154 = vmatpush1.bf16.msra.mxu0 0
        %2155 = vmatprep.subr.bf16.mxu0 0
        %2156 = vmatpush1.bf16.msra.mxu0 0
        %2157 = vmatprep.subr.bf16.mxu0 0
        %2158 = vmatpush1.bf16.msra.mxu0 0
        %2159 = vmatprep.subr.bf16.mxu0 0
        %2160 = vmatpush1.bf16.msra.mxu0 0
        %2161 = vmatprep.subr.bf16.mxu0 0
        %2162 = vmatpush1.bf16.msra.mxu0 0
        %2163 = vmatprep.mubr.bf16.mxu0 0
        %2164 = vmatmul.mubr.bf16.gmra.mrb[0].mxu0 %v2129
        %v2165 = vpop.f32.mrb[0].mxu0
        %v2166 = vadd.f32 0.0, %v2165
        %v2167 = vpop.f32.mrb[0].mxu0
        %v2168 = vadd.f32 0.0, %v2167
        %v2169 = vpop.f32.mrb[0].mxu0
        %v2170 = vpop.f32.mrb[0].mxu0
        %2171 = vdwg.mxu0
        %v2172 = vadd.f32 %v2124, %v2166
        %v2173 = vadd.f32 %v2125, %v2168
        %v2174 = vmax.f32 %v2038, %v2172
        %v2175 = vmax.f32 %v2039, %v2173
        %v2176 = vpack.c.bf16 %v2174, %v2174
        %v2177 = vpack.c.bf16 %v2175, %v2175
        %v2179 = vsel %vm1034, %v2177, 0
        %2181 = vmatprep.subr.bf16.mxu0 0
        %2182 = vmatpush1.bf16.msra.mxu0 %v1016
        %2183 = vmatprep.subr.bf16.mxu0 0
        %2184 = vmatpush1.bf16.msra.mxu0 %v1017
        %2185 = vmatprep.subr.bf16.mxu0 0
        %2186 = vmatpush1.bf16.msra.mxu0 %v1018
        %2187 = vmatprep.subr.bf16.mxu0 0
        %2188 = vmatpush1.bf16.msra.mxu0 %v1019
        %2189 = vmatprep.subr.bf16.mxu0 0
        %2190 = vmatpush1.bf16.msra.mxu0 %v1020
        %2191 = vmatprep.subr.bf16.mxu0 0
        %2192 = vmatpush1.bf16.msra.mxu0 %v1021
        %2193 = vmatprep.subr.bf16.mxu0 0
        %2194 = vmatpush1.bf16.msra.mxu0 %v1022
        %2195 = vmatprep.subr.bf16.mxu0 0
        %2196 = vmatpush1.bf16.msra.mxu0 %v1023
        %2197 = vmatprep.subr.bf16.mxu0 0
        %2198 = vmatpush1.bf16.msra.mxu0 %v1024
        %2199 = vmatprep.subr.bf16.mxu0 0
        %2200 = vmatpush1.bf16.msra.mxu0 0
        %2201 = vmatprep.subr.bf16.mxu0 0
        %2202 = vmatpush1.bf16.msra.mxu0 0
        %2203 = vmatprep.subr.bf16.mxu0 0
        %2204 = vmatpush1.bf16.msra.mxu0 0
        %2205 = vmatprep.subr.bf16.mxu0 0
        %2206 = vmatpush1.bf16.msra.mxu0 0
        %2207 = vmatprep.subr.bf16.mxu0 0
        %2208 = vmatpush1.bf16.msra.mxu0 0
        %2209 = vmatprep.subr.bf16.mxu0 0
        %2210 = vmatpush1.bf16.msra.mxu0 0
        %2211 = vmatprep.subr.bf16.mxu0 0
        %2212 = vmatpush1.bf16.msra.mxu0 0
        %2213 = vmatprep.mubr.bf16.mxu0 %v2179
        %2214 = vmatmul.mubr.bf16.gmra.mrb[0].mxu0 %v2176
        %v2215 = vpop.f32.mrb[0].mxu0
        %v2216 = vadd.f32 0.0, %v2215
        %v2217 = vpop.f32.mrb[0].mxu0
        %v2218 = vpop.f32.mrb[0].mxu0
        %v2219 = vpop.f32.mrb[0].mxu0
        %2220 = vdwg.mxu0
        %2221 = vmatprep.subr.bf16.mxu0 0
        %2222 = vmatpush1.bf16.msra.mxu0 %v1132
        %2223 = vmatprep.subr.bf16.mxu0 0
        %2224 = vmatpush1.bf16.msra.mxu0 %v1133
        %2225 = vmatprep.subr.bf16.mxu0 0
        %2226 = vmatpush1.bf16.msra.mxu0 %v1134
        %2227 = vmatprep.subr.bf16.mxu0 0
        %2228 = vmatpush1.bf16.msra.mxu0 %v1135
        %2229 = vmatprep.subr.bf16.mxu0 0
        %2230 = vmatpush1.bf16.msra.mxu0 %v1136
        %2231 = vmatprep.subr.bf16.mxu0 0
        %2232 = vmatpush1.bf16.msra.mxu0 %v1137
        %2233 = vmatprep.subr.bf16.mxu0 0
        %2234 = vmatpush1.bf16.msra.mxu0 %v1138
        %2235 = vmatprep.subr.bf16.mxu0 0
        %2236 = vmatpush1.bf16.msra.mxu0 %v1139
        %2237 = vmatprep.subr.bf16.mxu0 0
        %2238 = vmatpush1.bf16.msra.mxu0 %v1140
        %2239 = vmatprep.subr.bf16.mxu0 0
        %2240 = vmatpush1.bf16.msra.mxu0 0
        %2241 = vmatprep.subr.bf16.mxu0 0
        %2242 = vmatpush1.bf16.msra.mxu0 0
        %2243 = vmatprep.subr.bf16.mxu0 0
        %2244 = vmatpush1.bf16.msra.mxu0 0
        %2245 = vmatprep.subr.bf16.mxu0 0
        %2246 = vmatpush1.bf16.msra.mxu0 0
        %2247 = vmatprep.subr.bf16.mxu0 0
        %2248 = vmatpush1.bf16.msra.mxu0 0
        %2249 = vmatprep.subr.bf16.mxu0 0
        %2250 = vmatpush1.bf16.msra.mxu0 0
        %2251 = vmatprep.subr.bf16.mxu0 0
        %2252 = vmatpush1.bf16.msra.mxu0 0
        %2253 = vmatprep.mubr.bf16.mxu0 %v2179
        %2254 = vmatmul.mubr.bf16.gmra.mrb[0].mxu0 %v2176
        %v2255 = vpop.f32.mrb[0].mxu0
        %v2256 = vadd.f32 0.0, %v2255
        %v2257 = vpop.f32.mrb[0].mxu0
        %v2258 = vpop.f32.mrb[0].mxu0
        %v2259 = vpop.f32.mrb[0].mxu0
        %2260 = vdwg.mxu0
        %v2261 = vmax.f32 %v2216, %v2256
        %v2262 = vpack.c.bf16 %v2261, %v2261
        %2263 = vmatprep.subr.bf16.mxu0 %v611
        %2264 = vmatpush1.bf16.msra.mxu0 %v610
        %2265 = vmatprep.subr.bf16.mxu0 %v625
        %2266 = vmatpush1.bf16.msra.mxu0 %v622
        %2267 = vmatprep.subr.bf16.mxu0 0
        %2268 = vmatpush1.bf16.msra.mxu0 0
        %2269 = vmatprep.subr.bf16.mxu0 0
        %2270 = vmatpush1.bf16.msra.mxu0 0
        %2271 = vmatprep.subr.bf16.mxu0 0
        %2272 = vmatpush1.bf16.msra.mxu0 0
        %2273 = vmatprep.subr.bf16.mxu0 0
        %2274 = vmatpush1.bf16.msra.mxu0 0
        %2275 = vmatprep.subr.bf16.mxu0 0
        %2276 = vmatpush1.bf16.msra.mxu0 0
        %2277 = vmatprep.subr.bf16.mxu0 0
        %2278 = vmatpush1.bf16.msra.mxu0 0
        %2279 = vmatprep.subr.bf16.mxu0 0
        %2280 = vmatpush1.bf16.msra.mxu0 0
        %2281 = vmatprep.subr.bf16.mxu0 0
        %2282 = vmatpush1.bf16.msra.mxu0 0
        %2283 = vmatprep.subr.bf16.mxu0 0
        %2284 = vmatpush1.bf16.msra.mxu0 0
        %2285 = vmatprep.subr.bf16.mxu0 0
        %2286 = vmatpush1.bf16.msra.mxu0 0
        %2287 = vmatprep.subr.bf16.mxu0 0
        %2288 = vmatpush1.bf16.msra.mxu0 0
        %2289 = vmatprep.subr.bf16.mxu0 0
        %2290 = vmatpush1.bf16.msra.mxu0 0
        %2291 = vmatprep.subr.bf16.mxu0 0
        %2292 = vmatpush1.bf16.msra.mxu0 0
        %2293 = vmatprep.subr.bf16.mxu0 0
        %2294 = vmatpush1.bf16.msra.mxu0 0
        %2295 = vmatprep.mubr.bf16.mxu0 0
        %2296 = vmatmul.mubr.bf16.gmra.mrb[0].mxu0 %v1995
        %v2297 = vpop.f32.mrb[0].mxu0
        %v2298 = vadd.f32 0.0, %v2297
        %v2299 = vpop.f32.mrb[0].mxu0
        %v2300 = vadd.f32 0.0, %v2299
        %v2301 = vpop.f32.mrb[0].mxu0
        %v2302 = vpop.f32.mrb[0].mxu0
        %2303 = vdwg.mxu0
        %v2304 = vadd.f32 %v586, %v2298
        %v2305 = vadd.f32 %v590, %v2300
        %2306 = vmatprep.subr.bf16.mxu0 %v690
        %2307 = vmatpush1.bf16.msra.mxu0 %v689
        %2308 = vmatprep.subr.bf16.mxu0 %v702
        %2309 = vmatpush1.bf16.msra.mxu0 %v699
        %2310 = vmatprep.subr.bf16.mxu0 0
        %2311 = vmatpush1.bf16.msra.mxu0 0
        %2312 = vmatprep.subr.bf16.mxu0 0
        %2313 = vmatpush1.bf16.msra.mxu0 0
        %2314 = vmatprep.subr.bf16.mxu0 0
        %2315 = vmatpush1.bf16.msra.mxu0 0
        %2316 = vmatprep.subr.bf16.mxu0 0
        %2317 = vmatpush1.bf16.msra.mxu0 0
        %2318 = vmatprep.subr.bf16.mxu0 0
        %2319 = vmatpush1.bf16.msra.mxu0 0
        %2320 = vmatprep.subr.bf16.mxu0 0
        %2321 = vmatpush1.bf16.msra.mxu0 0
        %2322 = vmatprep.subr.bf16.mxu0 0
        %2323 = vmatpush1.bf16.msra.mxu0 0
        %2324 = vmatprep.subr.bf16.mxu0 0
        %2325 = vmatpush1.bf16.msra.mxu0 0
        %2326 = vmatprep.subr.bf16.mxu0 0
        %2327 = vmatpush1.bf16.msra.mxu0 0
        %2328 = vmatprep.subr.bf16.mxu0 0
        %2329 = vmatpush1.bf16.msra.mxu0 0
        %2330 = vmatprep.subr.bf16.mxu0 0
        %2331 = vmatpush1.bf16.msra.mxu0 0
        %2332 = vmatprep.subr.bf16.mxu0 0
        %2333 = vmatpush1.bf16.msra.mxu0 0
        %2334 = vmatprep.subr.bf16.mxu0 0
        %2335 = vmatpush1.bf16.msra.mxu0 0
        %2336 = vmatprep.subr.bf16.mxu0 0
        %2337 = vmatpush1.bf16.msra.mxu0 0
        %2338 = vmatprep.mubr.bf16.mxu0 0
        %2339 = vmatmul.mubr.bf16.gmra.mrb[0].mxu0 %v2129
        %v2340 = vpop.f32.mrb[0].mxu0
        %v2341 = vadd.f32 0.0, %v2340
        %v2342 = vpop.f32.mrb[0].mxu0
        %v2343 = vadd.f32 0.0, %v2342
        %v2344 = vpop.f32.mrb[0].mxu0
        %v2345 = vpop.f32.mrb[0].mxu0
        %2346 = vdwg.mxu0
        %v2347 = vadd.f32 %v2304, %v2341
        %v2348 = vadd.f32 %v2305, %v2343
        %s2349 = scalar_lea.vmem %s536, 40 [#allocation2]
        %v2350 = vld [vmem:[%s2349] sm:$0xf]
        %v2352 = vsel %vm616, %v2350, 0
        %2354 = vmatprep.subr.bf16.mxu0 %v767
        %2355 = vmatpush1.bf16.msra.mxu0 %v766
        %2356 = vmatprep.subr.bf16.mxu0 %v779
        %2357 = vmatpush1.bf16.msra.mxu0 %v776
        %2358 = vmatprep.subr.bf16.mxu0 0
        %2359 = vmatpush1.bf16.msra.mxu0 0
        %2360 = vmatprep.subr.bf16.mxu0 0
        %2361 = vmatpush1.bf16.msra.mxu0 0
        %2362 = vmatprep.subr.bf16.mxu0 0
        %2363 = vmatpush1.bf16.msra.mxu0 0
        %2364 = vmatprep.subr.bf16.mxu0 0
        %2365 = vmatpush1.bf16.msra.mxu0 0
        %2366 = vmatprep.subr.bf16.mxu0 0
        %2367 = vmatpush1.bf16.msra.mxu0 0
        %2368 = vmatprep.subr.bf16.mxu0 0
        %2369 = vmatpush1.bf16.msra.mxu0 0
        %2370 = vmatprep.subr.bf16.mxu0 0
        %2371 = vmatpush1.bf16.msra.mxu0 0
        %2372 = vmatprep.subr.bf16.mxu0 0
        %2373 = vmatpush1.bf16.msra.mxu0 0
        %2374 = vmatprep.subr.bf16.mxu0 0
        %2375 = vmatpush1.bf16.msra.mxu0 0
        %2376 = vmatprep.subr.bf16.mxu0 0
        %2377 = vmatpush1.bf16.msra.mxu0 0
        %2378 = vmatprep.subr.bf16.mxu0 0
        %2379 = vmatpush1.bf16.msra.mxu0 0
        %2380 = vmatprep.subr.bf16.mxu0 0
        %2381 = vmatpush1.bf16.msra.mxu0 0
        %2382 = vmatprep.subr.bf16.mxu0 0
        %2383 = vmatpush1.bf16.msra.mxu0 0
        %2384 = vmatprep.subr.bf16.mxu0 0
        %2385 = vmatpush1.bf16.msra.mxu0 0
        %2386 = vmatprep.mubr.bf16.mxu0 0
        %2387 = vmatmul.mubr.bf16.gmra.mrb[0].mxu0 %v2352
        %v2388 = vpop.f32.mrb[0].mxu0
        %v2389 = vadd.f32 0.0, %v2388
        %v2390 = vpop.f32.mrb[0].mxu0
        %v2391 = vadd.f32 0.0, %v2390
        %v2392 = vpop.f32.mrb[0].mxu0
        %v2393 = vpop.f32.mrb[0].mxu0
        %2394 = vdwg.mxu0
        %v2395 = vadd.f32 %v2347, %v2389
        %v2396 = vadd.f32 %v2348, %v2391
        %2397 = vmatprep.subr.bf16.mxu0 %v611
        %2398 = vmatpush1.bf16.msra.mxu0 %v610
        %2399 = vmatprep.subr.bf16.mxu0 %v625
        %2400 = vmatpush1.bf16.msra.mxu0 %v622
        %2401 = vmatprep.subr.bf16.mxu0 0
        %2402 = vmatpush1.bf16.msra.mxu0 0
        %2403 = vmatprep.subr.bf16.mxu0 0
        %2404 = vmatpush1.bf16.msra.mxu0 0
        %2405 = vmatprep.subr.bf16.mxu0 0
        %2406 = vmatpush1.bf16.msra.mxu0 0
        %2407 = vmatprep.subr.bf16.mxu0 0
        %2408 = vmatpush1.bf16.msra.mxu0 0
        %2409 = vmatprep.subr.bf16.mxu0 0
        %2410 = vmatpush1.bf16.msra.mxu0 0
        %2411 = vmatprep.subr.bf16.mxu0 0
        %2412 = vmatpush1.bf16.msra.mxu0 0
        %2413 = vmatprep.subr.bf16.mxu0 0
        %2414 = vmatpush1.bf16.msra.mxu0 0
        %2415 = vmatprep.subr.bf16.mxu0 0
        %2416 = vmatpush1.bf16.msra.mxu0 0
        %2417 = vmatprep.subr.bf16.mxu0 0
        %2418 = vmatpush1.bf16.msra.mxu0 0
        %2419 = vmatprep.subr.bf16.mxu0 0
        %2420 = vmatpush1.bf16.msra.mxu0 0
        %2421 = vmatprep.subr.bf16.mxu0 0
        %2422 = vmatpush1.bf16.msra.mxu0 0
        %2423 = vmatprep.subr.bf16.mxu0 0
        %2424 = vmatpush1.bf16.msra.mxu0 0
        %2425 = vmatprep.subr.bf16.mxu0 0
        %2426 = vmatpush1.bf16.msra.mxu0 0
        %2427 = vmatprep.subr.bf16.mxu0 0
        %2428 = vmatpush1.bf16.msra.mxu0 0
        %2429 = vmatprep.mubr.bf16.mxu0 0
        %2430 = vmatmul.mubr.bf16.gmra.mrb[0].mxu0 %v2129
        %v2431 = vpop.f32.mrb[0].mxu0
        %v2432 = vadd.f32 0.0, %v2431
        %v2433 = vpop.f32.mrb[0].mxu0
        %v2434 = vadd.f32 0.0, %v2433
        %v2435 = vpop.f32.mrb[0].mxu0
        %v2436 = vpop.f32.mrb[0].mxu0
        %2437 = vdwg.mxu0
        %v2438 = vadd.f32 %v586, %v2432
        %v2439 = vadd.f32 %v590, %v2434
        %2440 = vmatprep.subr.bf16.mxu0 %v690
        %2441 = vmatpush1.bf16.msra.mxu0 %v689
        %2442 = vmatprep.subr.bf16.mxu0 %v702
        %2443 = vmatpush1.bf16.msra.mxu0 %v699
        %2444 = vmatprep.subr.bf16.mxu0 0
        %2445 = vmatpush1.bf16.msra.mxu0 0
        %2446 = vmatprep.subr.bf16.mxu0 0
        %2447 = vmatpush1.bf16.msra.mxu0 0
        %2448 = vmatprep.subr.bf16.mxu0 0
        %2449 = vmatpush1.bf16.msra.mxu0 0
        %2450 = vmatprep.subr.bf16.mxu0 0
        %2451 = vmatpush1.bf16.msra.mxu0 0
        %2452 = vmatprep.subr.bf16.mxu0 0
        %2453 = vmatpush1.bf16.msra.mxu0 0
        %2454 = vmatprep.subr.bf16.mxu0 0
        %2455 = vmatpush1.bf16.msra.mxu0 0
        %2456 = vmatprep.subr.bf16.mxu0 0
        %2457 = vmatpush1.bf16.msra.mxu0 0
        %2458 = vmatprep.subr.bf16.mxu0 0
        %2459 = vmatpush1.bf16.msra.mxu0 0
        %2460 = vmatprep.subr.bf16.mxu0 0
        %2461 = vmatpush1.bf16.msra.mxu0 0
        %2462 = vmatprep.subr.bf16.mxu0 0
        %2463 = vmatpush1.bf16.msra.mxu0 0
        %2464 = vmatprep.subr.bf16.mxu0 0
        %2465 = vmatpush1.bf16.msra.mxu0 0
        %2466 = vmatprep.subr.bf16.mxu0 0
        %2467 = vmatpush1.bf16.msra.mxu0 0
        %2468 = vmatprep.subr.bf16.mxu0 0
        %2469 = vmatpush1.bf16.msra.mxu0 0
        %2470 = vmatprep.subr.bf16.mxu0 0
        %2471 = vmatpush1.bf16.msra.mxu0 0
        %2472 = vmatprep.mubr.bf16.mxu0 0
        %2473 = vmatmul.mubr.bf16.gmra.mrb[0].mxu0 %v2352
        %v2474 = vpop.f32.mrb[0].mxu0
        %v2475 = vadd.f32 0.0, %v2474
        %v2476 = vpop.f32.mrb[0].mxu0
        %v2477 = vadd.f32 0.0, %v2476
        %v2478 = vpop.f32.mrb[0].mxu0
        %v2479 = vpop.f32.mrb[0].mxu0
        %2480 = vdwg.mxu0
        %v2481 = vadd.f32 %v2438, %v2475
        %v2482 = vadd.f32 %v2439, %v2477
        %s2483 = scalar_lea.vmem %s536, 44 [#allocation2]
        %v2484 = vld [vmem:[%s2483] sm:$0xf]
        %v2486 = vsel %vm616, %v2484, 0
        %2488 = vmatprep.subr.bf16.mxu0 %v767
        %2489 = vmatpush1.bf16.msra.mxu0 %v766
        %2490 = vmatprep.subr.bf16.mxu0 %v779
        %2491 = vmatpush1.bf16.msra.mxu0 %v776
        %2492 = vmatprep.subr.bf16.mxu0 0
        %2493 = vmatpush1.bf16.msra.mxu0 0
        %2494 = vmatprep.subr.bf16.mxu0 0
        %2495 = vmatpush1.bf16.msra.mxu0 0
        %2496 = vmatprep.subr.bf16.mxu0 0
        %2497 = vmatpush1.bf16.msra.mxu0 0
        %2498 = vmatprep.subr.bf16.mxu0 0
        %2499 = vmatpush1.bf16.msra.mxu0 0
        %2500 = vmatprep.subr.bf16.mxu0 0
        %2501 = vmatpush1.bf16.msra.mxu0 0
        %2502 = vmatprep.subr.bf16.mxu0 0
        %2503 = vmatpush1.bf16.msra.mxu0 0
        %2504 = vmatprep.subr.bf16.mxu0 0
        %2505 = vmatpush1.bf16.msra.mxu0 0
        %2506 = vmatprep.subr.bf16.mxu0 0
        %2507 = vmatpush1.bf16.msra.mxu0 0
        %2508 = vmatprep.subr.bf16.mxu0 0
        %2509 = vmatpush1.bf16.msra.mxu0 0
        %2510 = vmatprep.subr.bf16.mxu0 0
        %2511 = vmatpush1.bf16.msra.mxu0 0
        %2512 = vmatprep.subr.bf16.mxu0 0
        %2513 = vmatpush1.bf16.msra.mxu0 0
        %2514 = vmatprep.subr.bf16.mxu0 0
        %2515 = vmatpush1.bf16.msra.mxu0 0
        %2516 = vmatprep.subr.bf16.mxu0 0
        %2517 = vmatpush1.bf16.msra.mxu0 0
        %2518 = vmatprep.subr.bf16.mxu0 0
        %2519 = vmatpush1.bf16.msra.mxu0 0
        %2520 = vmatprep.mubr.bf16.mxu0 0
        %2521 = vmatmul.mubr.bf16.gmra.mrb[0].mxu0 %v2486
        %v2522 = vpop.f32.mrb[0].mxu0
        %v2523 = vadd.f32 0.0, %v2522
        %v2524 = vpop.f32.mrb[0].mxu0
        %v2525 = vadd.f32 0.0, %v2524
        %v2526 = vpop.f32.mrb[0].mxu0
        %v2527 = vpop.f32.mrb[0].mxu0
        %2528 = vdwg.mxu0
        %v2529 = vadd.f32 %v2481, %v2523
        %v2530 = vadd.f32 %v2482, %v2525
        %v2531 = vmax.f32 %v2395, %v2529
        %v2532 = vmax.f32 %v2396, %v2530
        %v2533 = vpack.c.bf16 %v2531, %v2531
        %v2534 = vpack.c.bf16 %v2532, %v2532
        %v2536 = vsel %vm1034, %v2534, 0
        %2538 = vmatprep.subr.bf16.mxu0 0
        %2539 = vmatpush1.bf16.msra.mxu0 %v1016
        %2540 = vmatprep.subr.bf16.mxu0 0
        %2541 = vmatpush1.bf16.msra.mxu0 %v1017
        %2542 = vmatprep.subr.bf16.mxu0 0
        %2543 = vmatpush1.bf16.msra.mxu0 %v1018
        %2544 = vmatprep.subr.bf16.mxu0 0
        %2545 = vmatpush1.bf16.msra.mxu0 %v1019
        %2546 = vmatprep.subr.bf16.mxu0 0
        %2547 = vmatpush1.bf16.msra.mxu0 %v1020
        %2548 = vmatprep.subr.bf16.mxu0 0
        %2549 = vmatpush1.bf16.msra.mxu0 %v1021
        %2550 = vmatprep.subr.bf16.mxu0 0
        %2551 = vmatpush1.bf16.msra.mxu0 %v1022
        %2552 = vmatprep.subr.bf16.mxu0 0
        %2553 = vmatpush1.bf16.msra.mxu0 %v1023
        %2554 = vmatprep.subr.bf16.mxu0 0
        %2555 = vmatpush1.bf16.msra.mxu0 %v1024
        %2556 = vmatprep.subr.bf16.mxu0 0
        %2557 = vmatpush1.bf16.msra.mxu0 0
        %2558 = vmatprep.subr.bf16.mxu0 0
        %2559 = vmatpush1.bf16.msra.mxu0 0
        %2560 = vmatprep.subr.bf16.mxu0 0
        %2561 = vmatpush1.bf16.msra.mxu0 0
        %2562 = vmatprep.subr.bf16.mxu0 0
        %2563 = vmatpush1.bf16.msra.mxu0 0
        %2564 = vmatprep.subr.bf16.mxu0 0
        %2565 = vmatpush1.bf16.msra.mxu0 0
        %2566 = vmatprep.subr.bf16.mxu0 0
        %2567 = vmatpush1.bf16.msra.mxu0 0
        %2568 = vmatprep.subr.bf16.mxu0 0
        %2569 = vmatpush1.bf16.msra.mxu0 0
        %2570 = vmatprep.mubr.bf16.mxu0 %v2536
        %2571 = vmatmul.mubr.bf16.gmra.mrb[0].mxu0 %v2533
        %v2572 = vpop.f32.mrb[0].mxu0
        %v2573 = vadd.f32 0.0, %v2572
        %v2574 = vpop.f32.mrb[0].mxu0
        %v2575 = vpop.f32.mrb[0].mxu0
        %v2576 = vpop.f32.mrb[0].mxu0
        %2577 = vdwg.mxu0
        %2578 = vmatprep.subr.bf16.mxu0 0
        %2579 = vmatpush1.bf16.msra.mxu0 %v1132
        %2580 = vmatprep.subr.bf16.mxu0 0
        %2581 = vmatpush1.bf16.msra.mxu0 %v1133
        %2582 = vmatprep.subr.bf16.mxu0 0
        %2583 = vmatpush1.bf16.msra.mxu0 %v1134
        %2584 = vmatprep.subr.bf16.mxu0 0
        %2585 = vmatpush1.bf16.msra.mxu0 %v1135
        %2586 = vmatprep.subr.bf16.mxu0 0
        %2587 = vmatpush1.bf16.msra.mxu0 %v1136
        %2588 = vmatprep.subr.bf16.mxu0 0
        %2589 = vmatpush1.bf16.msra.mxu0 %v1137
        %2590 = vmatprep.subr.bf16.mxu0 0
        %2591 = vmatpush1.bf16.msra.mxu0 %v1138
        %2592 = vmatprep.subr.bf16.mxu0 0
        %2593 = vmatpush1.bf16.msra.mxu0 %v1139
        %2594 = vmatprep.subr.bf16.mxu0 0
        %2595 = vmatpush1.bf16.msra.mxu0 %v1140
        %2596 = vmatprep.subr.bf16.mxu0 0
        %2597 = vmatpush1.bf16.msra.mxu0 0
        %2598 = vmatprep.subr.bf16.mxu0 0
        %2599 = vmatpush1.bf16.msra.mxu0 0
        %2600 = vmatprep.subr.bf16.mxu0 0
        %2601 = vmatpush1.bf16.msra.mxu0 0
        %2602 = vmatprep.subr.bf16.mxu0 0
        %2603 = vmatpush1.bf16.msra.mxu0 0
        %2604 = vmatprep.subr.bf16.mxu0 0
        %2605 = vmatpush1.bf16.msra.mxu0 0
        %2606 = vmatprep.subr.bf16.mxu0 0
        %2607 = vmatpush1.bf16.msra.mxu0 0
        %2608 = vmatprep.subr.bf16.mxu0 0
        %2609 = vmatpush1.bf16.msra.mxu0 0
        %2610 = vmatprep.mubr.bf16.mxu0 %v2536
        %2611 = vmatmul.mubr.bf16.gmra.mrb[0].mxu0 %v2533
        %v2612 = vpop.f32.mrb[0].mxu0
        %v2613 = vadd.f32 0.0, %v2612
        %v2614 = vpop.f32.mrb[0].mxu0
        %v2615 = vpop.f32.mrb[0].mxu0
        %v2616 = vpop.f32.mrb[0].mxu0
        %2617 = vdwg.mxu0
        %v2618 = vmax.f32 %v2573, %v2613
        %v2619 = vpack.c.bf16 %v2618, %v2618
        %2620 = vmatprep.subr.bf16.mxu0 %v611
        %2621 = vmatpush1.bf16.msra.mxu0 %v610
        %2622 = vmatprep.subr.bf16.mxu0 %v625
        %2623 = vmatpush1.bf16.msra.mxu0 %v622
        %2624 = vmatprep.subr.bf16.mxu0 0
        %2625 = vmatpush1.bf16.msra.mxu0 0
        %2626 = vmatprep.subr.bf16.mxu0 0
        %2627 = vmatpush1.bf16.msra.mxu0 0
        %2628 = vmatprep.subr.bf16.mxu0 0
        %2629 = vmatpush1.bf16.msra.mxu0 0
        %2630 = vmatprep.subr.bf16.mxu0 0
        %2631 = vmatpush1.bf16.msra.mxu0 0
        %2632 = vmatprep.subr.bf16.mxu0 0
        %2633 = vmatpush1.bf16.msra.mxu0 0
        %2634 = vmatprep.subr.bf16.mxu0 0
        %2635 = vmatpush1.bf16.msra.mxu0 0
        %2636 = vmatprep.subr.bf16.mxu0 0
        %2637 = vmatpush1.bf16.msra.mxu0 0
        %2638 = vmatprep.subr.bf16.mxu0 0
        %2639 = vmatpush1.bf16.msra.mxu0 0
        %2640 = vmatprep.subr.bf16.mxu0 0
        %2641 = vmatpush1.bf16.msra.mxu0 0
        %2642 = vmatprep.subr.bf16.mxu0 0
        %2643 = vmatpush1.bf16.msra.mxu0 0
        %2644 = vmatprep.subr.bf16.mxu0 0
        %2645 = vmatpush1.bf16.msra.mxu0 0
        %2646 = vmatprep.subr.bf16.mxu0 0
        %2647 = vmatpush1.bf16.msra.mxu0 0
        %2648 = vmatprep.subr.bf16.mxu0 0
        %2649 = vmatpush1.bf16.msra.mxu0 0
        %2650 = vmatprep.subr.bf16.mxu0 0
        %2651 = vmatpush1.bf16.msra.mxu0 0
        %2652 = vmatprep.mubr.bf16.mxu0 0
        %2653 = vmatmul.mubr.bf16.gmra.mrb[0].mxu0 %v2352
        %v2654 = vpop.f32.mrb[0].mxu0
        %v2655 = vadd.f32 0.0, %v2654
        %v2656 = vpop.f32.mrb[0].mxu0
        %v2657 = vadd.f32 0.0, %v2656
        %v2658 = vpop.f32.mrb[0].mxu0
        %v2659 = vpop.f32.mrb[0].mxu0
        %2660 = vdwg.mxu0
        %v2661 = vadd.f32 %v586, %v2655
        %v2662 = vadd.f32 %v590, %v2657
        %2663 = vmatprep.subr.bf16.mxu0 %v690
        %2664 = vmatpush1.bf16.msra.mxu0 %v689
        %2665 = vmatprep.subr.bf16.mxu0 %v702
        %2666 = vmatpush1.bf16.msra.mxu0 %v699
        %2667 = vmatprep.subr.bf16.mxu0 0
        %2668 = vmatpush1.bf16.msra.mxu0 0
        %2669 = vmatprep.subr.bf16.mxu0 0
        %2670 = vmatpush1.bf16.msra.mxu0 0
        %2671 = vmatprep.subr.bf16.mxu0 0
        %2672 = vmatpush1.bf16.msra.mxu0 0
        %2673 = vmatprep.subr.bf16.mxu0 0
        %2674 = vmatpush1.bf16.msra.mxu0 0
        %2675 = vmatprep.subr.bf16.mxu0 0
        %2676 = vmatpush1.bf16.msra.mxu0 0
        %2677 = vmatprep.subr.bf16.mxu0 0
        %2678 = vmatpush1.bf16.msra.mxu0 0
        %2679 = vmatprep.subr.bf16.mxu0 0
        %2680 = vmatpush1.bf16.msra.mxu0 0
        %2681 = vmatprep.subr.bf16.mxu0 0
        %2682 = vmatpush1.bf16.msra.mxu0 0
        %2683 = vmatprep.subr.bf16.mxu0 0
        %2684 = vmatpush1.bf16.msra.mxu0 0
        %2685 = vmatprep.subr.bf16.mxu0 0
        %2686 = vmatpush1.bf16.msra.mxu0 0
        %2687 = vmatprep.subr.bf16.mxu0 0
        %2688 = vmatpush1.bf16.msra.mxu0 0
        %2689 = vmatprep.subr.bf16.mxu0 0
        %2690 = vmatpush1.bf16.msra.mxu0 0
        %2691 = vmatprep.subr.bf16.mxu0 0
        %2692 = vmatpush1.bf16.msra.mxu0 0
        %2693 = vmatprep.subr.bf16.mxu0 0
        %2694 = vmatpush1.bf16.msra.mxu0 0
        %2695 = vmatprep.mubr.bf16.mxu0 0
        %2696 = vmatmul.mubr.bf16.gmra.mrb[0].mxu0 %v2486
        %v2697 = vpop.f32.mrb[0].mxu0
        %v2698 = vadd.f32 0.0, %v2697
        %v2699 = vpop.f32.mrb[0].mxu0
        %v2700 = vadd.f32 0.0, %v2699
        %v2701 = vpop.f32.mrb[0].mxu0
        %v2702 = vpop.f32.mrb[0].mxu0
        %2703 = vdwg.mxu0
        %v2704 = vadd.f32 %v2661, %v2698
        %v2705 = vadd.f32 %v2662, %v2700
        %s2706 = scalar_lea.vmem %s536, 48 [#allocation2]
        %v2707 = vld [vmem:[%s2706] sm:$0xf]
        %v2709 = vsel %vm616, %v2707, 0
        %2711 = vmatprep.subr.bf16.mxu0 %v767
        %2712 = vmatpush1.bf16.msra.mxu0 %v766
        %2713 = vmatprep.subr.bf16.mxu0 %v779
        %2714 = vmatpush1.bf16.msra.mxu0 %v776
        %2715 = vmatprep.subr.bf16.mxu0 0
        %2716 = vmatpush1.bf16.msra.mxu0 0
        %2717 = vmatprep.subr.bf16.mxu0 0
        %2718 = vmatpush1.bf16.msra.mxu0 0
        %2719 = vmatprep.subr.bf16.mxu0 0
        %2720 = vmatpush1.bf16.msra.mxu0 0
        %2721 = vmatprep.subr.bf16.mxu0 0
        %2722 = vmatpush1.bf16.msra.mxu0 0
        %2723 = vmatprep.subr.bf16.mxu0 0
        %2724 = vmatpush1.bf16.msra.mxu0 0
        %2725 = vmatprep.subr.bf16.mxu0 0
        %2726 = vmatpush1.bf16.msra.mxu0 0
        %2727 = vmatprep.subr.bf16.mxu0 0
        %2728 = vmatpush1.bf16.msra.mxu0 0
        %2729 = vmatprep.subr.bf16.mxu0 0
        %2730 = vmatpush1.bf16.msra.mxu0 0
        %2731 = vmatprep.subr.bf16.mxu0 0
        %2732 = vmatpush1.bf16.msra.mxu0 0
        %2733 = vmatprep.subr.bf16.mxu0 0
        %2734 = vmatpush1.bf16.msra.mxu0 0
        %2735 = vmatprep.subr.bf16.mxu0 0
        %2736 = vmatpush1.bf16.msra.mxu0 0
        %2737 = vmatprep.subr.bf16.mxu0 0
        %2738 = vmatpush1.bf16.msra.mxu0 0
        %2739 = vmatprep.subr.bf16.mxu0 0
        %2740 = vmatpush1.bf16.msra.mxu0 0
        %2741 = vmatprep.subr.bf16.mxu0 0
        %2742 = vmatpush1.bf16.msra.mxu0 0
        %2743 = vmatprep.mubr.bf16.mxu0 0
        %2744 = vmatmul.mubr.bf16.gmra.mrb[0].mxu0 %v2709
        %v2745 = vpop.f32.mrb[0].mxu0
        %v2746 = vadd.f32 0.0, %v2745
        %v2747 = vpop.f32.mrb[0].mxu0
        %v2748 = vadd.f32 0.0, %v2747
        %v2749 = vpop.f32.mrb[0].mxu0
        %v2750 = vpop.f32.mrb[0].mxu0
        %2751 = vdwg.mxu0
        %v2752 = vadd.f32 %v2704, %v2746
        %v2753 = vadd.f32 %v2705, %v2748
        %2754 = vmatprep.subr.bf16.mxu0 %v611
        %2755 = vmatpush1.bf16.msra.mxu0 %v610
        %2756 = vmatprep.subr.bf16.mxu0 %v625
        %2757 = vmatpush1.bf16.msra.mxu0 %v622
        %2758 = vmatprep.subr.bf16.mxu0 0
        %2759 = vmatpush1.bf16.msra.mxu0 0
        %2760 = vmatprep.subr.bf16.mxu0 0
        %2761 = vmatpush1.bf16.msra.mxu0 0
        %2762 = vmatprep.subr.bf16.mxu0 0
        %2763 = vmatpush1.bf16.msra.mxu0 0
        %2764 = vmatprep.subr.bf16.mxu0 0
        %2765 = vmatpush1.bf16.msra.mxu0 0
        %2766 = vmatprep.subr.bf16.mxu0 0
        %2767 = vmatpush1.bf16.msra.mxu0 0
        %2768 = vmatprep.subr.bf16.mxu0 0
        %2769 = vmatpush1.bf16.msra.mxu0 0
        %2770 = vmatprep.subr.bf16.mxu0 0
        %2771 = vmatpush1.bf16.msra.mxu0 0
        %2772 = vmatprep.subr.bf16.mxu0 0
        %2773 = vmatpush1.bf16.msra.mxu0 0
        %2774 = vmatprep.subr.bf16.mxu0 0
        %2775 = vmatpush1.bf16.msra.mxu0 0
        %2776 = vmatprep.subr.bf16.mxu0 0
        %2777 = vmatpush1.bf16.msra.mxu0 0
        %2778 = vmatprep.subr.bf16.mxu0 0
        %2779 = vmatpush1.bf16.msra.mxu0 0
        %2780 = vmatprep.subr.bf16.mxu0 0
        %2781 = vmatpush1.bf16.msra.mxu0 0
        %2782 = vmatprep.subr.bf16.mxu0 0
        %2783 = vmatpush1.bf16.msra.mxu0 0
        %2784 = vmatprep.subr.bf16.mxu0 0
        %2785 = vmatpush1.bf16.msra.mxu0 0
        %2786 = vmatprep.mubr.bf16.mxu0 0
        %2787 = vmatmul.mubr.bf16.gmra.mrb[0].mxu0 %v2486
        %v2788 = vpop.f32.mrb[0].mxu0
        %v2789 = vadd.f32 0.0, %v2788
        %v2790 = vpop.f32.mrb[0].mxu0
        %v2791 = vadd.f32 0.0, %v2790
        %v2792 = vpop.f32.mrb[0].mxu0
        %v2793 = vpop.f32.mrb[0].mxu0
        %2794 = vdwg.mxu0
        %v2795 = vadd.f32 %v586, %v2789
        %v2796 = vadd.f32 %v590, %v2791
        %2797 = vmatprep.subr.bf16.mxu0 %v690
        %2798 = vmatpush1.bf16.msra.mxu0 %v689
        %2799 = vmatprep.subr.bf16.mxu0 %v702
        %2800 = vmatpush1.bf16.msra.mxu0 %v699
        %2801 = vmatprep.subr.bf16.mxu0 0
        %2802 = vmatpush1.bf16.msra.mxu0 0
        %2803 = vmatprep.subr.bf16.mxu0 0
        %2804 = vmatpush1.bf16.msra.mxu0 0
        %2805 = vmatprep.subr.bf16.mxu0 0
        %2806 = vmatpush1.bf16.msra.mxu0 0
        %2807 = vmatprep.subr.bf16.mxu0 0
        %2808 = vmatpush1.bf16.msra.mxu0 0
        %2809 = vmatprep.subr.bf16.mxu0 0
        %2810 = vmatpush1.bf16.msra.mxu0 0
        %2811 = vmatprep.subr.bf16.mxu0 0
        %2812 = vmatpush1.bf16.msra.mxu0 0
        %2813 = vmatprep.subr.bf16.mxu0 0
        %2814 = vmatpush1.bf16.msra.mxu0 0
        %2815 = vmatprep.subr.bf16.mxu0 0
        %2816 = vmatpush1.bf16.msra.mxu0 0
        %2817 = vmatprep.subr.bf16.mxu0 0
        %2818 = vmatpush1.bf16.msra.mxu0 0
        %2819 = vmatprep.subr.bf16.mxu0 0
        %2820 = vmatpush1.bf16.msra.mxu0 0
        %2821 = vmatprep.subr.bf16.mxu0 0
        %2822 = vmatpush1.bf16.msra.mxu0 0
        %2823 = vmatprep.subr.bf16.mxu0 0
        %2824 = vmatpush1.bf16.msra.mxu0 0
        %2825 = vmatprep.subr.bf16.mxu0 0
        %2826 = vmatpush1.bf16.msra.mxu0 0
        %2827 = vmatprep.subr.bf16.mxu0 0
        %2828 = vmatpush1.bf16.msra.mxu0 0
        %2829 = vmatprep.mubr.bf16.mxu0 0
        %2830 = vmatmul.mubr.bf16.gmra.mrb[0].mxu0 %v2709
        %v2831 = vpop.f32.mrb[0].mxu0
        %v2832 = vadd.f32 0.0, %v2831
        %v2833 = vpop.f32.mrb[0].mxu0
        %v2834 = vadd.f32 0.0, %v2833
        %v2835 = vpop.f32.mrb[0].mxu0
        %v2836 = vpop.f32.mrb[0].mxu0
        %2837 = vdwg.mxu0
        %v2838 = vadd.f32 %v2795, %v2832
        %v2839 = vadd.f32 %v2796, %v2834
        %s2840 = scalar_lea.vmem %s536, 52 [#allocation2]
        %v2841 = vld [vmem:[%s2840] sm:$0xf]
        %v2843 = vsel %vm616, %v2841, 0
        %2845 = vmatprep.subr.bf16.mxu0 %v767
        %2846 = vmatpush1.bf16.msra.mxu0 %v766
        %2847 = vmatprep.subr.bf16.mxu0 %v779
        %2848 = vmatpush1.bf16.msra.mxu0 %v776
        %2849 = vmatprep.subr.bf16.mxu0 0
        %2850 = vmatpush1.bf16.msra.mxu0 0
        %2851 = vmatprep.subr.bf16.mxu0 0
        %2852 = vmatpush1.bf16.msra.mxu0 0
        %2853 = vmatprep.subr.bf16.mxu0 0
        %2854 = vmatpush1.bf16.msra.mxu0 0
        %2855 = vmatprep.subr.bf16.mxu0 0
        %2856 = vmatpush1.bf16.msra.mxu0 0
        %2857 = vmatprep.subr.bf16.mxu0 0
        %2858 = vmatpush1.bf16.msra.mxu0 0
        %2859 = vmatprep.subr.bf16.mxu0 0
        %2860 = vmatpush1.bf16.msra.mxu0 0
        %2861 = vmatprep.subr.bf16.mxu0 0
        %2862 = vmatpush1.bf16.msra.mxu0 0
        %2863 = vmatprep.subr.bf16.mxu0 0
        %2864 = vmatpush1.bf16.msra.mxu0 0
        %2865 = vmatprep.subr.bf16.mxu0 0
        %2866 = vmatpush1.bf16.msra.mxu0 0
        %2867 = vmatprep.subr.bf16.mxu0 0
        %2868 = vmatpush1.bf16.msra.mxu0 0
        %2869 = vmatprep.subr.bf16.mxu0 0
        %2870 = vmatpush1.bf16.msra.mxu0 0
        %2871 = vmatprep.subr.bf16.mxu0 0
        %2872 = vmatpush1.bf16.msra.mxu0 0
        %2873 = vmatprep.subr.bf16.mxu0 0
        %2874 = vmatpush1.bf16.msra.mxu0 0
        %2875 = vmatprep.subr.bf16.mxu0 0
        %2876 = vmatpush1.bf16.msra.mxu0 0
        %2877 = vmatprep.mubr.bf16.mxu0 0
        %2878 = vmatmul.mubr.bf16.gmra.mrb[0].mxu0 %v2843
        %v2879 = vpop.f32.mrb[0].mxu0
        %v2880 = vadd.f32 0.0, %v2879
        %v2881 = vpop.f32.mrb[0].mxu0
        %v2882 = vadd.f32 0.0, %v2881
        %v2883 = vpop.f32.mrb[0].mxu0
        %v2884 = vpop.f32.mrb[0].mxu0
        %2885 = vdwg.mxu0
        %v2886 = vadd.f32 %v2838, %v2880
        %v2887 = vadd.f32 %v2839, %v2882
        %v2888 = vmax.f32 %v2752, %v2886
        %v2889 = vmax.f32 %v2753, %v2887
        %v2890 = vpack.c.bf16 %v2888, %v2888
        %v2891 = vpack.c.bf16 %v2889, %v2889
        %v2893 = vsel %vm1034, %v2891, 0
        %2895 = vmatprep.subr.bf16.mxu0 0
        %2896 = vmatpush1.bf16.msra.mxu0 %v1016
        %2897 = vmatprep.subr.bf16.mxu0 0
        %2898 = vmatpush1.bf16.msra.mxu0 %v1017
        %2899 = vmatprep.subr.bf16.mxu0 0
        %2900 = vmatpush1.bf16.msra.mxu0 %v1018
        %2901 = vmatprep.subr.bf16.mxu0 0
        %2902 = vmatpush1.bf16.msra.mxu0 %v1019
        %2903 = vmatprep.subr.bf16.mxu0 0
        %2904 = vmatpush1.bf16.msra.mxu0 %v1020
        %2905 = vmatprep.subr.bf16.mxu0 0
        %2906 = vmatpush1.bf16.msra.mxu0 %v1021
        %2907 = vmatprep.subr.bf16.mxu0 0
        %2908 = vmatpush1.bf16.msra.mxu0 %v1022
        %2909 = vmatprep.subr.bf16.mxu0 0
        %2910 = vmatpush1.bf16.msra.mxu0 %v1023
        %2911 = vmatprep.subr.bf16.mxu0 0
        %2912 = vmatpush1.bf16.msra.mxu0 %v1024
        %2913 = vmatprep.subr.bf16.mxu0 0
        %2914 = vmatpush1.bf16.msra.mxu0 0
        %2915 = vmatprep.subr.bf16.mxu0 0
        %2916 = vmatpush1.bf16.msra.mxu0 0
        %2917 = vmatprep.subr.bf16.mxu0 0
        %2918 = vmatpush1.bf16.msra.mxu0 0
        %2919 = vmatprep.subr.bf16.mxu0 0
        %2920 = vmatpush1.bf16.msra.mxu0 0
        %2921 = vmatprep.subr.bf16.mxu0 0
        %2922 = vmatpush1.bf16.msra.mxu0 0
        %2923 = vmatprep.subr.bf16.mxu0 0
        %2924 = vmatpush1.bf16.msra.mxu0 0
        %2925 = vmatprep.subr.bf16.mxu0 0
        %2926 = vmatpush1.bf16.msra.mxu0 0
        %2927 = vmatprep.mubr.bf16.mxu0 %v2893
        %2928 = vmatmul.mubr.bf16.gmra.mrb[0].mxu0 %v2890
        %v2929 = vpop.f32.mrb[0].mxu0
        %v2930 = vadd.f32 0.0, %v2929
        %v2931 = vpop.f32.mrb[0].mxu0
        %v2932 = vpop.f32.mrb[0].mxu0
        %v2933 = vpop.f32.mrb[0].mxu0
        %2934 = vdwg.mxu0
        %2935 = vmatprep.subr.bf16.mxu0 0
        %2936 = vmatpush1.bf16.msra.mxu0 %v1132
        %2937 = vmatprep.subr.bf16.mxu0 0
        %2938 = vmatpush1.bf16.msra.mxu0 %v1133
        %2939 = vmatprep.subr.bf16.mxu0 0
        %2940 = vmatpush1.bf16.msra.mxu0 %v1134
        %2941 = vmatprep.subr.bf16.mxu0 0
        %2942 = vmatpush1.bf16.msra.mxu0 %v1135
        %2943 = vmatprep.subr.bf16.mxu0 0
        %2944 = vmatpush1.bf16.msra.mxu0 %v1136
        %2945 = vmatprep.subr.bf16.mxu0 0
        %2946 = vmatpush1.bf16.msra.mxu0 %v1137
        %2947 = vmatprep.subr.bf16.mxu0 0
        %2948 = vmatpush1.bf16.msra.mxu0 %v1138
        %2949 = vmatprep.subr.bf16.mxu0 0
        %2950 = vmatpush1.bf16.msra.mxu0 %v1139
        %2951 = vmatprep.subr.bf16.mxu0 0
        %2952 = vmatpush1.bf16.msra.mxu0 %v1140
        %2953 = vmatprep.subr.bf16.mxu0 0
        %2954 = vmatpush1.bf16.msra.mxu0 0
        %2955 = vmatprep.subr.bf16.mxu0 0
        %2956 = vmatpush1.bf16.msra.mxu0 0
        %2957 = vmatprep.subr.bf16.mxu0 0
        %2958 = vmatpush1.bf16.msra.mxu0 0
        %2959 = vmatprep.subr.bf16.mxu0 0
        %2960 = vmatpush1.bf16.msra.mxu0 0
        %2961 = vmatprep.subr.bf16.mxu0 0
        %2962 = vmatpush1.bf16.msra.mxu0 0
        %2963 = vmatprep.subr.bf16.mxu0 0
        %2964 = vmatpush1.bf16.msra.mxu0 0
        %2965 = vmatprep.subr.bf16.mxu0 0
        %2966 = vmatpush1.bf16.msra.mxu0 0
        %2967 = vmatprep.mubr.bf16.mxu0 %v2893
        %2968 = vmatmul.mubr.bf16.gmra.mrb[0].mxu0 %v2890
        %v2969 = vpop.f32.mrb[0].mxu0
        %v2970 = vadd.f32 0.0, %v2969
        %v2971 = vpop.f32.mrb[0].mxu0
        %v2972 = vpop.f32.mrb[0].mxu0
        %v2973 = vpop.f32.mrb[0].mxu0
        %2974 = vdwg.mxu0
        %v2975 = vmax.f32 %v2930, %v2970
        %v2976 = vpack.c.bf16 %v2975, %v2975
        %2977 = vmatprep.subr.bf16.mxu0 %v611
        %2978 = vmatpush1.bf16.msra.mxu0 %v610
        %2979 = vmatprep.subr.bf16.mxu0 %v625
        %2980 = vmatpush1.bf16.msra.mxu0 %v622
        %2981 = vmatprep.subr.bf16.mxu0 0
        %2982 = vmatpush1.bf16.msra.mxu0 0
        %2983 = vmatprep.subr.bf16.mxu0 0
        %2984 = vmatpush1.bf16.msra.mxu0 0
        %2985 = vmatprep.subr.bf16.mxu0 0
        %2986 = vmatpush1.bf16.msra.mxu0 0
        %2987 = vmatprep.subr.bf16.mxu0 0
        %2988 = vmatpush1.bf16.msra.mxu0 0
        %2989 = vmatprep.subr.bf16.mxu0 0
        %2990 = vmatpush1.bf16.msra.mxu0 0
        %2991 = vmatprep.subr.bf16.mxu0 0
        %2992 = vmatpush1.bf16.msra.mxu0 0
        %2993 = vmatprep.subr.bf16.mxu0 0
        %2994 = vmatpush1.bf16.msra.mxu0 0
        %2995 = vmatprep.subr.bf16.mxu0 0
        %2996 = vmatpush1.bf16.msra.mxu0 0
        %2997 = vmatprep.subr.bf16.mxu0 0
        %2998 = vmatpush1.bf16.msra.mxu0 0
        %2999 = vmatprep.subr.bf16.mxu0 0
        %3000 = vmatpush1.bf16.msra.mxu0 0
        %3001 = vmatprep.subr.bf16.mxu0 0
        %3002 = vmatpush1.bf16.msra.mxu0 0
        %3003 = vmatprep.subr.bf16.mxu0 0
        %3004 = vmatpush1.bf16.msra.mxu0 0
        %3005 = vmatprep.subr.bf16.mxu0 0
        %3006 = vmatpush1.bf16.msra.mxu0 0
        %3007 = vmatprep.subr.bf16.mxu0 0
        %3008 = vmatpush1.bf16.msra.mxu0 0
        %3009 = vmatprep.mubr.bf16.mxu0 0
        %3010 = vmatmul.mubr.bf16.gmra.mrb[0].mxu0 %v2709
        %v3011 = vpop.f32.mrb[0].mxu0
        %v3012 = vadd.f32 0.0, %v3011
        %v3013 = vpop.f32.mrb[0].mxu0
        %v3014 = vadd.f32 0.0, %v3013
        %v3015 = vpop.f32.mrb[0].mxu0
        %v3016 = vpop.f32.mrb[0].mxu0
        %3017 = vdwg.mxu0
        %v3018 = vadd.f32 %v586, %v3012
        %v3019 = vadd.f32 %v590, %v3014
        %3020 = vmatprep.subr.bf16.mxu0 %v690
        %3021 = vmatpush1.bf16.msra.mxu0 %v689
        %3022 = vmatprep.subr.bf16.mxu0 %v702
        %3023 = vmatpush1.bf16.msra.mxu0 %v699
        %3024 = vmatprep.subr.bf16.mxu0 0
        %3025 = vmatpush1.bf16.msra.mxu0 0
        %3026 = vmatprep.subr.bf16.mxu0 0
        %3027 = vmatpush1.bf16.msra.mxu0 0
        %3028 = vmatprep.subr.bf16.mxu0 0
        %3029 = vmatpush1.bf16.msra.mxu0 0
        %3030 = vmatprep.subr.bf16.mxu0 0
        %3031 = vmatpush1.bf16.msra.mxu0 0
        %3032 = vmatprep.subr.bf16.mxu0 0
        %3033 = vmatpush1.bf16.msra.mxu0 0
        %3034 = vmatprep.subr.bf16.mxu0 0
        %3035 = vmatpush1.bf16.msra.mxu0 0
        %3036 = vmatprep.subr.bf16.mxu0 0
        %3037 = vmatpush1.bf16.msra.mxu0 0
        %3038 = vmatprep.subr.bf16.mxu0 0
        %3039 = vmatpush1.bf16.msra.mxu0 0
        %3040 = vmatprep.subr.bf16.mxu0 0
        %3041 = vmatpush1.bf16.msra.mxu0 0
        %3042 = vmatprep.subr.bf16.mxu0 0
        %3043 = vmatpush1.bf16.msra.mxu0 0
        %3044 = vmatprep.subr.bf16.mxu0 0
        %3045 = vmatpush1.bf16.msra.mxu0 0
        %3046 = vmatprep.subr.bf16.mxu0 0
        %3047 = vmatpush1.bf16.msra.mxu0 0
        %3048 = vmatprep.subr.bf16.mxu0 0
        %3049 = vmatpush1.bf16.msra.mxu0 0
        %3050 = vmatprep.subr.bf16.mxu0 0
        %3051 = vmatpush1.bf16.msra.mxu0 0
        %3052 = vmatprep.mubr.bf16.mxu0 0
        %3053 = vmatmul.mubr.bf16.gmra.mrb[0].mxu0 %v2843
        %v3054 = vpop.f32.mrb[0].mxu0
        %v3055 = vadd.f32 0.0, %v3054
        %v3056 = vpop.f32.mrb[0].mxu0
        %v3057 = vadd.f32 0.0, %v3056
        %v3058 = vpop.f32.mrb[0].mxu0
        %v3059 = vpop.f32.mrb[0].mxu0
        %3060 = vdwg.mxu0
        %v3061 = vadd.f32 %v3018, %v3055
        %v3062 = vadd.f32 %v3019, %v3057
        %s3063 = scalar_lea.vmem %s536, 56 [#allocation2]
        %v3064 = vld [vmem:[%s3063] sm:$0xf]
        %v3066 = vsel %vm616, %v3064, 0
        %3068 = vmatprep.subr.bf16.mxu0 %v767
        %3069 = vmatpush1.bf16.msra.mxu0 %v766
        %3070 = vmatprep.subr.bf16.mxu0 %v779
        %3071 = vmatpush1.bf16.msra.mxu0 %v776
        %3072 = vmatprep.subr.bf16.mxu0 0
        %3073 = vmatpush1.bf16.msra.mxu0 0
        %3074 = vmatprep.subr.bf16.mxu0 0
        %3075 = vmatpush1.bf16.msra.mxu0 0
        %3076 = vmatprep.subr.bf16.mxu0 0
        %3077 = vmatpush1.bf16.msra.mxu0 0
        %3078 = vmatprep.subr.bf16.mxu0 0
        %3079 = vmatpush1.bf16.msra.mxu0 0
        %3080 = vmatprep.subr.bf16.mxu0 0
        %3081 = vmatpush1.bf16.msra.mxu0 0
        %3082 = vmatprep.subr.bf16.mxu0 0
        %3083 = vmatpush1.bf16.msra.mxu0 0
        %3084 = vmatprep.subr.bf16.mxu0 0
        %3085 = vmatpush1.bf16.msra.mxu0 0
        %3086 = vmatprep.subr.bf16.mxu0 0
        %3087 = vmatpush1.bf16.msra.mxu0 0
        %3088 = vmatprep.subr.bf16.mxu0 0
        %3089 = vmatpush1.bf16.msra.mxu0 0
        %3090 = vmatprep.subr.bf16.mxu0 0
        %3091 = vmatpush1.bf16.msra.mxu0 0
        %3092 = vmatprep.subr.bf16.mxu0 0
        %3093 = vmatpush1.bf16.msra.mxu0 0
        %3094 = vmatprep.subr.bf16.mxu0 0
        %3095 = vmatpush1.bf16.msra.mxu0 0
        %3096 = vmatprep.subr.bf16.mxu0 0
        %3097 = vmatpush1.bf16.msra.mxu0 0
        %3098 = vmatprep.subr.bf16.mxu0 0
        %3099 = vmatpush1.bf16.msra.mxu0 0
        %3100 = vmatprep.mubr.bf16.mxu0 0
        %3101 = vmatmul.mubr.bf16.gmra.mrb[0].mxu0 %v3066
        %v3102 = vpop.f32.mrb[0].mxu0
        %v3103 = vadd.f32 0.0, %v3102
        %v3104 = vpop.f32.mrb[0].mxu0
        %v3105 = vadd.f32 0.0, %v3104
        %v3106 = vpop.f32.mrb[0].mxu0
        %v3107 = vpop.f32.mrb[0].mxu0
        %3108 = vdwg.mxu0
        %v3109 = vadd.f32 %v3061, %v3103
        %v3110 = vadd.f32 %v3062, %v3105
        %3111 = vmatprep.subr.bf16.mxu0 %v611
        %3112 = vmatpush1.bf16.msra.mxu0 %v610
        %3113 = vmatprep.subr.bf16.mxu0 %v625
        %3114 = vmatpush1.bf16.msra.mxu0 %v622
        %3115 = vmatprep.subr.bf16.mxu0 0
        %3116 = vmatpush1.bf16.msra.mxu0 0
        %3117 = vmatprep.subr.bf16.mxu0 0
        %3118 = vmatpush1.bf16.msra.mxu0 0
        %3119 = vmatprep.subr.bf16.mxu0 0
        %3120 = vmatpush1.bf16.msra.mxu0 0
        %3121 = vmatprep.subr.bf16.mxu0 0
        %3122 = vmatpush1.bf16.msra.mxu0 0
        %3123 = vmatprep.subr.bf16.mxu0 0
        %3124 = vmatpush1.bf16.msra.mxu0 0
        %3125 = vmatprep.subr.bf16.mxu0 0
        %3126 = vmatpush1.bf16.msra.mxu0 0
        %3127 = vmatprep.subr.bf16.mxu0 0
        %3128 = vmatpush1.bf16.msra.mxu0 0
        %3129 = vmatprep.subr.bf16.mxu0 0
        %3130 = vmatpush1.bf16.msra.mxu0 0
        %3131 = vmatprep.subr.bf16.mxu0 0
        %3132 = vmatpush1.bf16.msra.mxu0 0
        %3133 = vmatprep.subr.bf16.mxu0 0
        %3134 = vmatpush1.bf16.msra.mxu0 0
        %3135 = vmatprep.subr.bf16.mxu0 0
        %3136 = vmatpush1.bf16.msra.mxu0 0
        %3137 = vmatprep.subr.bf16.mxu0 0
        %3138 = vmatpush1.bf16.msra.mxu0 0
        %3139 = vmatprep.subr.bf16.mxu0 0
        %3140 = vmatpush1.bf16.msra.mxu0 0
        %3141 = vmatprep.subr.bf16.mxu0 0
        %3142 = vmatpush1.bf16.msra.mxu0 0
        %3143 = vmatprep.mubr.bf16.mxu0 0
        %3144 = vmatmul.mubr.bf16.gmra.mrb[0].mxu0 %v2843
        %v3145 = vpop.f32.mrb[0].mxu0
        %v3146 = vadd.f32 0.0, %v3145
        %v3147 = vpop.f32.mrb[0].mxu0
        %v3148 = vadd.f32 0.0, %v3147
        %v3149 = vpop.f32.mrb[0].mxu0
        %v3150 = vpop.f32.mrb[0].mxu0
        %3151 = vdwg.mxu0
        %v3152 = vadd.f32 %v586, %v3146
        %v3153 = vadd.f32 %v590, %v3148
        %3154 = vmatprep.subr.bf16.mxu0 %v690
        %3155 = vmatpush1.bf16.msra.mxu0 %v689
        %3156 = vmatprep.subr.bf16.mxu0 %v702
        %3157 = vmatpush1.bf16.msra.mxu0 %v699
        %3158 = vmatprep.subr.bf16.mxu0 0
        %3159 = vmatpush1.bf16.msra.mxu0 0
        %3160 = vmatprep.subr.bf16.mxu0 0
        %3161 = vmatpush1.bf16.msra.mxu0 0
        %3162 = vmatprep.subr.bf16.mxu0 0
        %3163 = vmatpush1.bf16.msra.mxu0 0
        %3164 = vmatprep.subr.bf16.mxu0 0
        %3165 = vmatpush1.bf16.msra.mxu0 0
        %3166 = vmatprep.subr.bf16.mxu0 0
        %3167 = vmatpush1.bf16.msra.mxu0 0
        %3168 = vmatprep.subr.bf16.mxu0 0
        %3169 = vmatpush1.bf16.msra.mxu0 0
        %3170 = vmatprep.subr.bf16.mxu0 0
        %3171 = vmatpush1.bf16.msra.mxu0 0
        %3172 = vmatprep.subr.bf16.mxu0 0
        %3173 = vmatpush1.bf16.msra.mxu0 0
        %3174 = vmatprep.subr.bf16.mxu0 0
        %3175 = vmatpush1.bf16.msra.mxu0 0
        %3176 = vmatprep.subr.bf16.mxu0 0
        %3177 = vmatpush1.bf16.msra.mxu0 0
        %3178 = vmatprep.subr.bf16.mxu0 0
        %3179 = vmatpush1.bf16.msra.mxu0 0
        %3180 = vmatprep.subr.bf16.mxu0 0
        %3181 = vmatpush1.bf16.msra.mxu0 0
        %3182 = vmatprep.subr.bf16.mxu0 0
        %3183 = vmatpush1.bf16.msra.mxu0 0
        %3184 = vmatprep.subr.bf16.mxu0 0
        %3185 = vmatpush1.bf16.msra.mxu0 0
        %3186 = vmatprep.mubr.bf16.mxu0 0
        %3187 = vmatmul.mubr.bf16.gmra.mrb[0].mxu0 %v3066
        %v3188 = vpop.f32.mrb[0].mxu0
        %v3189 = vadd.f32 0.0, %v3188
        %v3190 = vpop.f32.mrb[0].mxu0
        %v3191 = vadd.f32 0.0, %v3190
        %v3192 = vpop.f32.mrb[0].mxu0
        %v3193 = vpop.f32.mrb[0].mxu0
        %3194 = vdwg.mxu0
        %v3195 = vadd.f32 %v3152, %v3189
        %v3196 = vadd.f32 %v3153, %v3191
        %s3197 = scalar_lea.vmem %s536, 60 [#allocation2]
        %v3198 = vld [vmem:[%s3197] sm:$0xf]
        %v3200 = vsel %vm616, %v3198, 0
        %3202 = vmatprep.subr.bf16.mxu0 %v767
        %3203 = vmatpush1.bf16.msra.mxu0 %v766
        %3204 = vmatprep.subr.bf16.mxu0 %v779
        %3205 = vmatpush1.bf16.msra.mxu0 %v776
        %3206 = vmatprep.subr.bf16.mxu0 0
        %3207 = vmatpush1.bf16.msra.mxu0 0
        %3208 = vmatprep.subr.bf16.mxu0 0
        %3209 = vmatpush1.bf16.msra.mxu0 0
        %3210 = vmatprep.subr.bf16.mxu0 0
        %3211 = vmatpush1.bf16.msra.mxu0 0
        %3212 = vmatprep.subr.bf16.mxu0 0
        %3213 = vmatpush1.bf16.msra.mxu0 0
        %3214 = vmatprep.subr.bf16.mxu0 0
        %3215 = vmatpush1.bf16.msra.mxu0 0
        %3216 = vmatprep.subr.bf16.mxu0 0
        %3217 = vmatpush1.bf16.msra.mxu0 0
        %3218 = vmatprep.subr.bf16.mxu0 0
        %3219 = vmatpush1.bf16.msra.mxu0 0
        %3220 = vmatprep.subr.bf16.mxu0 0
        %3221 = vmatpush1.bf16.msra.mxu0 0
        %3222 = vmatprep.subr.bf16.mxu0 0
        %3223 = vmatpush1.bf16.msra.mxu0 0
        %3224 = vmatprep.subr.bf16.mxu0 0
        %3225 = vmatpush1.bf16.msra.mxu0 0
        %3226 = vmatprep.subr.bf16.mxu0 0
        %3227 = vmatpush1.bf16.msra.mxu0 0
        %3228 = vmatprep.subr.bf16.mxu0 0
        %3229 = vmatpush1.bf16.msra.mxu0 0
        %3230 = vmatprep.subr.bf16.mxu0 0
        %3231 = vmatpush1.bf16.msra.mxu0 0
        %3232 = vmatprep.subr.bf16.mxu0 0
        %3233 = vmatpush1.bf16.msra.mxu0 0
        %3234 = vmatprep.mubr.bf16.mxu0 0
        %3235 = vmatmul.mubr.bf16.gmra.mrb[0].mxu0 %v3200
        %v3236 = vpop.f32.mrb[0].mxu0
        %v3237 = vadd.f32 0.0, %v3236
        %v3238 = vpop.f32.mrb[0].mxu0
        %v3239 = vadd.f32 0.0, %v3238
        %v3240 = vpop.f32.mrb[0].mxu0
        %v3241 = vpop.f32.mrb[0].mxu0
        %3242 = vdwg.mxu0
        %v3243 = vadd.f32 %v3195, %v3237
        %v3244 = vadd.f32 %v3196, %v3239
        %v3245 = vmax.f32 %v3109, %v3243
        %v3246 = vmax.f32 %v3110, %v3244
        %v3247 = vpack.c.bf16 %v3245, %v3245
        %v3248 = vpack.c.bf16 %v3246, %v3246
        %v3250 = vsel %vm1034, %v3248, 0
        %3252 = vmatprep.subr.bf16.mxu0 0
        %3253 = vmatpush1.bf16.msra.mxu0 %v1016
        %3254 = vmatprep.subr.bf16.mxu0 0
        %3255 = vmatpush1.bf16.msra.mxu0 %v1017
        %3256 = vmatprep.subr.bf16.mxu0 0
        %3257 = vmatpush1.bf16.msra.mxu0 %v1018
        %3258 = vmatprep.subr.bf16.mxu0 0
        %3259 = vmatpush1.bf16.msra.mxu0 %v1019
        %3260 = vmatprep.subr.bf16.mxu0 0
        %3261 = vmatpush1.bf16.msra.mxu0 %v1020
        %3262 = vmatprep.subr.bf16.mxu0 0
        %3263 = vmatpush1.bf16.msra.mxu0 %v1021
        %3264 = vmatprep.subr.bf16.mxu0 0
        %3265 = vmatpush1.bf16.msra.mxu0 %v1022
        %3266 = vmatprep.subr.bf16.mxu0 0
        %3267 = vmatpush1.bf16.msra.mxu0 %v1023
        %3268 = vmatprep.subr.bf16.mxu0 0
        %3269 = vmatpush1.bf16.msra.mxu0 %v1024
        %3270 = vmatprep.subr.bf16.mxu0 0
        %3271 = vmatpush1.bf16.msra.mxu0 0
        %3272 = vmatprep.subr.bf16.mxu0 0
        %3273 = vmatpush1.bf16.msra.mxu0 0
        %3274 = vmatprep.subr.bf16.mxu0 0
        %3275 = vmatpush1.bf16.msra.mxu0 0
        %3276 = vmatprep.subr.bf16.mxu0 0
        %3277 = vmatpush1.bf16.msra.mxu0 0
        %3278 = vmatprep.subr.bf16.mxu0 0
        %3279 = vmatpush1.bf16.msra.mxu0 0
        %3280 = vmatprep.subr.bf16.mxu0 0
        %3281 = vmatpush1.bf16.msra.mxu0 0
        %3282 = vmatprep.subr.bf16.mxu0 0
        %3283 = vmatpush1.bf16.msra.mxu0 0
        %3284 = vmatprep.mubr.bf16.mxu0 %v3250
        %3285 = vmatmul.mubr.bf16.gmra.mrb[0].mxu0 %v3247
        %v3286 = vpop.f32.mrb[0].mxu0
        %v3287 = vadd.f32 0.0, %v3286
        %v3288 = vpop.f32.mrb[0].mxu0
        %v3289 = vpop.f32.mrb[0].mxu0
        %v3290 = vpop.f32.mrb[0].mxu0
        %3291 = vdwg.mxu0
        %3292 = vmatprep.subr.bf16.mxu0 0
        %3293 = vmatpush1.bf16.msra.mxu0 %v1132
        %3294 = vmatprep.subr.bf16.mxu0 0
        %3295 = vmatpush1.bf16.msra.mxu0 %v1133
        %3296 = vmatprep.subr.bf16.mxu0 0
        %3297 = vmatpush1.bf16.msra.mxu0 %v1134
        %3298 = vmatprep.subr.bf16.mxu0 0
        %3299 = vmatpush1.bf16.msra.mxu0 %v1135
        %3300 = vmatprep.subr.bf16.mxu0 0
        %3301 = vmatpush1.bf16.msra.mxu0 %v1136
        %3302 = vmatprep.subr.bf16.mxu0 0
        %3303 = vmatpush1.bf16.msra.mxu0 %v1137
        %3304 = vmatprep.subr.bf16.mxu0 0
        %3305 = vmatpush1.bf16.msra.mxu0 %v1138
        %3306 = vmatprep.subr.bf16.mxu0 0
        %3307 = vmatpush1.bf16.msra.mxu0 %v1139
        %3308 = vmatprep.subr.bf16.mxu0 0
        %3309 = vmatpush1.bf16.msra.mxu0 %v1140
        %3310 = vmatprep.subr.bf16.mxu0 0
        %3311 = vmatpush1.bf16.msra.mxu0 0
        %3312 = vmatprep.subr.bf16.mxu0 0
        %3313 = vmatpush1.bf16.msra.mxu0 0
        %3314 = vmatprep.subr.bf16.mxu0 0
        %3315 = vmatpush1.bf16.msra.mxu0 0
        %3316 = vmatprep.subr.bf16.mxu0 0
        %3317 = vmatpush1.bf16.msra.mxu0 0
        %3318 = vmatprep.subr.bf16.mxu0 0
        %3319 = vmatpush1.bf16.msra.mxu0 0
        %3320 = vmatprep.subr.bf16.mxu0 0
        %3321 = vmatpush1.bf16.msra.mxu0 0
        %3322 = vmatprep.subr.bf16.mxu0 0
        %3323 = vmatpush1.bf16.msra.mxu0 0
        %3324 = vmatprep.mubr.bf16.mxu0 %v3250
        %3325 = vmatmul.mubr.bf16.gmra.mrb[0].mxu0 %v3247
        %v3326 = vpop.f32.mrb[0].mxu0
        %v3327 = vadd.f32 0.0, %v3326
        %v3328 = vpop.f32.mrb[0].mxu0
        %v3329 = vpop.f32.mrb[0].mxu0
        %v3330 = vpop.f32.mrb[0].mxu0
        %3331 = vdwg.mxu0
        %v3332 = vmax.f32 %v3287, %v3327
        %v3333 = vpack.c.bf16 %v3332, %v3332
        %3334 = vmatprep.subr.bf16.mxu0 %v611
        %3335 = vmatpush1.bf16.msra.mxu0 %v610
        %3336 = vmatprep.subr.bf16.mxu0 %v625
        %3337 = vmatpush1.bf16.msra.mxu0 %v622
        %3338 = vmatprep.subr.bf16.mxu0 0
        %3339 = vmatpush1.bf16.msra.mxu0 0
        %3340 = vmatprep.subr.bf16.mxu0 0
        %3341 = vmatpush1.bf16.msra.mxu0 0
        %3342 = vmatprep.subr.bf16.mxu0 0
        %3343 = vmatpush1.bf16.msra.mxu0 0
        %3344 = vmatprep.subr.bf16.mxu0 0
        %3345 = vmatpush1.bf16.msra.mxu0 0
        %3346 = vmatprep.subr.bf16.mxu0 0
        %3347 = vmatpush1.bf16.msra.mxu0 0
        %3348 = vmatprep.subr.bf16.mxu0 0
        %3349 = vmatpush1.bf16.msra.mxu0 0
        %3350 = vmatprep.subr.bf16.mxu0 0
        %3351 = vmatpush1.bf16.msra.mxu0 0
        %3352 = vmatprep.subr.bf16.mxu0 0
        %3353 = vmatpush1.bf16.msra.mxu0 0
        %3354 = vmatprep.subr.bf16.mxu0 0
        %3355 = vmatpush1.bf16.msra.mxu0 0
        %3356 = vmatprep.subr.bf16.mxu0 0
        %3357 = vmatpush1.bf16.msra.mxu0 0
        %3358 = vmatprep.subr.bf16.mxu0 0
        %3359 = vmatpush1.bf16.msra.mxu0 0
        %3360 = vmatprep.subr.bf16.mxu0 0
        %3361 = vmatpush1.bf16.msra.mxu0 0
        %3362 = vmatprep.subr.bf16.mxu0 0
        %3363 = vmatpush1.bf16.msra.mxu0 0
        %3364 = vmatprep.subr.bf16.mxu0 0
        %3365 = vmatpush1.bf16.msra.mxu0 0
        %3366 = vmatprep.mubr.bf16.mxu0 0
        %3367 = vmatmul.mubr.bf16.gmra.mrb[0].mxu0 %v3066
        %v3368 = vpop.f32.mrb[0].mxu0
        %v3369 = vadd.f32 0.0, %v3368
        %v3370 = vpop.f32.mrb[0].mxu0
        %v3371 = vadd.f32 0.0, %v3370
        %v3372 = vpop.f32.mrb[0].mxu0
        %v3373 = vpop.f32.mrb[0].mxu0
        %3374 = vdwg.mxu0
        %v3375 = vadd.f32 %v586, %v3369
        %v3376 = vadd.f32 %v590, %v3371
        %3377 = vmatprep.subr.bf16.mxu0 %v690
        %3378 = vmatpush1.bf16.msra.mxu0 %v689
        %3379 = vmatprep.subr.bf16.mxu0 %v702
        %3380 = vmatpush1.bf16.msra.mxu0 %v699
        %3381 = vmatprep.subr.bf16.mxu0 0
        %3382 = vmatpush1.bf16.msra.mxu0 0
        %3383 = vmatprep.subr.bf16.mxu0 0
        %3384 = vmatpush1.bf16.msra.mxu0 0
        %3385 = vmatprep.subr.bf16.mxu0 0
        %3386 = vmatpush1.bf16.msra.mxu0 0
        %3387 = vmatprep.subr.bf16.mxu0 0
        %3388 = vmatpush1.bf16.msra.mxu0 0
        %3389 = vmatprep.subr.bf16.mxu0 0
        %3390 = vmatpush1.bf16.msra.mxu0 0
        %3391 = vmatprep.subr.bf16.mxu0 0
        %3392 = vmatpush1.bf16.msra.mxu0 0
        %3393 = vmatprep.subr.bf16.mxu0 0
        %3394 = vmatpush1.bf16.msra.mxu0 0
        %3395 = vmatprep.subr.bf16.mxu0 0
        %3396 = vmatpush1.bf16.msra.mxu0 0
        %3397 = vmatprep.subr.bf16.mxu0 0
        %3398 = vmatpush1.bf16.msra.mxu0 0
        %3399 = vmatprep.subr.bf16.mxu0 0
        %3400 = vmatpush1.bf16.msra.mxu0 0
        %3401 = vmatprep.subr.bf16.mxu0 0
        %3402 = vmatpush1.bf16.msra.mxu0 0
        %3403 = vmatprep.subr.bf16.mxu0 0
        %3404 = vmatpush1.bf16.msra.mxu0 0
        %3405 = vmatprep.subr.bf16.mxu0 0
        %3406 = vmatpush1.bf16.msra.mxu0 0
        %3407 = vmatprep.subr.bf16.mxu0 0
        %3408 = vmatpush1.bf16.msra.mxu0 0
        %3409 = vmatprep.mubr.bf16.mxu0 0
        %3410 = vmatmul.mubr.bf16.gmra.mrb[0].mxu0 %v3200
        %v3411 = vpop.f32.mrb[0].mxu0
        %v3412 = vadd.f32 0.0, %v3411
        %v3413 = vpop.f32.mrb[0].mxu0
        %v3414 = vadd.f32 0.0, %v3413
        %v3415 = vpop.f32.mrb[0].mxu0
        %v3416 = vpop.f32.mrb[0].mxu0
        %3417 = vdwg.mxu0
        %v3418 = vadd.f32 %v3375, %v3412
        %v3419 = vadd.f32 %v3376, %v3414
        %s3420 = scalar_lea.vmem %s536, 64 [#allocation2]
        %v3421 = vld [vmem:[%s3420] sm:$0xf]
        %v3423 = vsel %vm616, %v3421, 0
        %3425 = vmatprep.subr.bf16.mxu0 %v767
        %3426 = vmatpush1.bf16.msra.mxu0 %v766
        %3427 = vmatprep.subr.bf16.mxu0 %v779
        %3428 = vmatpush1.bf16.msra.mxu0 %v776
        %3429 = vmatprep.subr.bf16.mxu0 0
        %3430 = vmatpush1.bf16.msra.mxu0 0
        %3431 = vmatprep.subr.bf16.mxu0 0
        %3432 = vmatpush1.bf16.msra.mxu0 0
        %3433 = vmatprep.subr.bf16.mxu0 0
        %3434 = vmatpush1.bf16.msra.mxu0 0
        %3435 = vmatprep.subr.bf16.mxu0 0
        %3436 = vmatpush1.bf16.msra.mxu0 0
        %3437 = vmatprep.subr.bf16.mxu0 0
        %3438 = vmatpush1.bf16.msra.mxu0 0
        %3439 = vmatprep.subr.bf16.mxu0 0
        %3440 = vmatpush1.bf16.msra.mxu0 0
        %3441 = vmatprep.subr.bf16.mxu0 0
        %3442 = vmatpush1.bf16.msra.mxu0 0
        %3443 = vmatprep.subr.bf16.mxu0 0
        %3444 = vmatpush1.bf16.msra.mxu0 0
        %3445 = vmatprep.subr.bf16.mxu0 0
        %3446 = vmatpush1.bf16.msra.mxu0 0
        %3447 = vmatprep.subr.bf16.mxu0 0
        %3448 = vmatpush1.bf16.msra.mxu0 0
        %3449 = vmatprep.subr.bf16.mxu0 0
        %3450 = vmatpush1.bf16.msra.mxu0 0
        %3451 = vmatprep.subr.bf16.mxu0 0
        %3452 = vmatpush1.bf16.msra.mxu0 0
        %3453 = vmatprep.subr.bf16.mxu0 0
        %3454 = vmatpush1.bf16.msra.mxu0 0
        %3455 = vmatprep.subr.bf16.mxu0 0
        %3456 = vmatpush1.bf16.msra.mxu0 0
        %3457 = vmatprep.mubr.bf16.mxu0 0
        %3458 = vmatmul.mubr.bf16.gmra.mrb[0].mxu0 %v3423
        %v3459 = vpop.f32.mrb[0].mxu0
        %v3460 = vadd.f32 0.0, %v3459
        %v3461 = vpop.f32.mrb[0].mxu0
        %v3462 = vadd.f32 0.0, %v3461
        %v3463 = vpop.f32.mrb[0].mxu0
        %v3464 = vpop.f32.mrb[0].mxu0
        %3465 = vdwg.mxu0
        %v3466 = vadd.f32 %v3418, %v3460
        %v3467 = vadd.f32 %v3419, %v3462
        %3468 = vmatprep.subr.bf16.mxu0 %v611
        %3469 = vmatpush1.bf16.msra.mxu0 %v610
        %3470 = vmatprep.subr.bf16.mxu0 %v625
        %3471 = vmatpush1.bf16.msra.mxu0 %v622
        %3472 = vmatprep.subr.bf16.mxu0 0
        %3473 = vmatpush1.bf16.msra.mxu0 0
        %3474 = vmatprep.subr.bf16.mxu0 0
        %3475 = vmatpush1.bf16.msra.mxu0 0
        %3476 = vmatprep.subr.bf16.mxu0 0
        %3477 = vmatpush1.bf16.msra.mxu0 0
        %3478 = vmatprep.subr.bf16.mxu0 0
        %3479 = vmatpush1.bf16.msra.mxu0 0
        %3480 = vmatprep.subr.bf16.mxu0 0
        %3481 = vmatpush1.bf16.msra.mxu0 0
        %3482 = vmatprep.subr.bf16.mxu0 0
        %3483 = vmatpush1.bf16.msra.mxu0 0
        %3484 = vmatprep.subr.bf16.mxu0 0
        %3485 = vmatpush1.bf16.msra.mxu0 0
        %3486 = vmatprep.subr.bf16.mxu0 0
        %3487 = vmatpush1.bf16.msra.mxu0 0
        %3488 = vmatprep.subr.bf16.mxu0 0
        %3489 = vmatpush1.bf16.msra.mxu0 0
        %3490 = vmatprep.subr.bf16.mxu0 0
        %3491 = vmatpush1.bf16.msra.mxu0 0
        %3492 = vmatprep.subr.bf16.mxu0 0
        %3493 = vmatpush1.bf16.msra.mxu0 0
        %3494 = vmatprep.subr.bf16.mxu0 0
        %3495 = vmatpush1.bf16.msra.mxu0 0
        %3496 = vmatprep.subr.bf16.mxu0 0
        %3497 = vmatpush1.bf16.msra.mxu0 0
        %3498 = vmatprep.subr.bf16.mxu0 0
        %3499 = vmatpush1.bf16.msra.mxu0 0
        %3500 = vmatprep.mubr.bf16.mxu0 0
        %3501 = vmatmul.mubr.bf16.gmra.mrb[0].mxu0 %v3200
        %v3502 = vpop.f32.mrb[0].mxu0
        %v3503 = vadd.f32 0.0, %v3502
        %v3504 = vpop.f32.mrb[0].mxu0
        %v3505 = vadd.f32 0.0, %v3504
        %v3506 = vpop.f32.mrb[0].mxu0
        %v3507 = vpop.f32.mrb[0].mxu0
        %3508 = vdwg.mxu0
        %v3509 = vadd.f32 %v586, %v3503
        %v3510 = vadd.f32 %v590, %v3505
        %3511 = vmatprep.subr.bf16.mxu0 %v690
        %3512 = vmatpush1.bf16.msra.mxu0 %v689
        %3513 = vmatprep.subr.bf16.mxu0 %v702
        %3514 = vmatpush1.bf16.msra.mxu0 %v699
        %3515 = vmatprep.subr.bf16.mxu0 0
        %3516 = vmatpush1.bf16.msra.mxu0 0
        %3517 = vmatprep.subr.bf16.mxu0 0
        %3518 = vmatpush1.bf16.msra.mxu0 0
        %3519 = vmatprep.subr.bf16.mxu0 0
        %3520 = vmatpush1.bf16.msra.mxu0 0
        %3521 = vmatprep.subr.bf16.mxu0 0
        %3522 = vmatpush1.bf16.msra.mxu0 0
        %3523 = vmatprep.subr.bf16.mxu0 0
        %3524 = vmatpush1.bf16.msra.mxu0 0
        %3525 = vmatprep.subr.bf16.mxu0 0
        %3526 = vmatpush1.bf16.msra.mxu0 0
        %3527 = vmatprep.subr.bf16.mxu0 0
        %3528 = vmatpush1.bf16.msra.mxu0 0
        %3529 = vmatprep.subr.bf16.mxu0 0
        %3530 = vmatpush1.bf16.msra.mxu0 0
        %3531 = vmatprep.subr.bf16.mxu0 0
        %3532 = vmatpush1.bf16.msra.mxu0 0
        %3533 = vmatprep.subr.bf16.mxu0 0
        %3534 = vmatpush1.bf16.msra.mxu0 0
        %3535 = vmatprep.subr.bf16.mxu0 0
        %3536 = vmatpush1.bf16.msra.mxu0 0
        %3537 = vmatprep.subr.bf16.mxu0 0
        %3538 = vmatpush1.bf16.msra.mxu0 0
        %3539 = vmatprep.subr.bf16.mxu0 0
        %3540 = vmatpush1.bf16.msra.mxu0 0
        %3541 = vmatprep.subr.bf16.mxu0 0
        %3542 = vmatpush1.bf16.msra.mxu0 0
        %3543 = vmatprep.mubr.bf16.mxu0 0
        %3544 = vmatmul.mubr.bf16.gmra.mrb[0].mxu0 %v3423
        %v3545 = vpop.f32.mrb[0].mxu0
        %v3546 = vadd.f32 0.0, %v3545
        %v3547 = vpop.f32.mrb[0].mxu0
        %v3548 = vadd.f32 0.0, %v3547
        %v3549 = vpop.f32.mrb[0].mxu0
        %v3550 = vpop.f32.mrb[0].mxu0
        %3551 = vdwg.mxu0
        %v3552 = vadd.f32 %v3509, %v3546
        %v3553 = vadd.f32 %v3510, %v3548
        %s3554 = scalar_lea.vmem %s536, 68 [#allocation2]
        %v3555 = vld [vmem:[%s3554] sm:$0xf]
        %v3557 = vsel %vm616, %v3555, 0
        %3559 = vmatprep.subr.bf16.mxu0 %v767
        %3560 = vmatpush1.bf16.msra.mxu0 %v766
        %3561 = vmatprep.subr.bf16.mxu0 %v779
        %3562 = vmatpush1.bf16.msra.mxu0 %v776
        %3563 = vmatprep.subr.bf16.mxu0 0
        %3564 = vmatpush1.bf16.msra.mxu0 0
        %3565 = vmatprep.subr.bf16.mxu0 0
        %3566 = vmatpush1.bf16.msra.mxu0 0
        %3567 = vmatprep.subr.bf16.mxu0 0
        %3568 = vmatpush1.bf16.msra.mxu0 0
        %3569 = vmatprep.subr.bf16.mxu0 0
        %3570 = vmatpush1.bf16.msra.mxu0 0
        %3571 = vmatprep.subr.bf16.mxu0 0
        %3572 = vmatpush1.bf16.msra.mxu0 0
        %3573 = vmatprep.subr.bf16.mxu0 0
        %3574 = vmatpush1.bf16.msra.mxu0 0
        %3575 = vmatprep.subr.bf16.mxu0 0
        %3576 = vmatpush1.bf16.msra.mxu0 0
        %3577 = vmatprep.subr.bf16.mxu0 0
        %3578 = vmatpush1.bf16.msra.mxu0 0
        %3579 = vmatprep.subr.bf16.mxu0 0
        %3580 = vmatpush1.bf16.msra.mxu0 0
        %3581 = vmatprep.subr.bf16.mxu0 0
        %3582 = vmatpush1.bf16.msra.mxu0 0
        %3583 = vmatprep.subr.bf16.mxu0 0
        %3584 = vmatpush1.bf16.msra.mxu0 0
        %3585 = vmatprep.subr.bf16.mxu0 0
        %3586 = vmatpush1.bf16.msra.mxu0 0
        %3587 = vmatprep.subr.bf16.mxu0 0
        %3588 = vmatpush1.bf16.msra.mxu0 0
        %3589 = vmatprep.subr.bf16.mxu0 0
        %3590 = vmatpush1.bf16.msra.mxu0 0
        %3591 = vmatprep.mubr.bf16.mxu0 0
        %3592 = vmatmul.mubr.bf16.gmra.mrb[0].mxu0 %v3557
        %v3593 = vpop.f32.mrb[0].mxu0
        %v3594 = vadd.f32 0.0, %v3593
        %v3595 = vpop.f32.mrb[0].mxu0
        %v3596 = vadd.f32 0.0, %v3595
        %v3597 = vpop.f32.mrb[0].mxu0
        %v3598 = vpop.f32.mrb[0].mxu0
        %3599 = vdwg.mxu0
        %v3600 = vadd.f32 %v3552, %v3594
        %v3601 = vadd.f32 %v3553, %v3596
        %v3602 = vmax.f32 %v3466, %v3600
        %v3603 = vmax.f32 %v3467, %v3601
        %v3604 = vpack.c.bf16 %v3602, %v3602
        %v3605 = vpack.c.bf16 %v3603, %v3603
        %v3607 = vsel %vm1034, %v3605, 0
        %3609 = vmatprep.subr.bf16.mxu0 0
        %3610 = vmatpush1.bf16.msra.mxu0 %v1016
        %3611 = vmatprep.subr.bf16.mxu0 0
        %3612 = vmatpush1.bf16.msra.mxu0 %v1017
        %3613 = vmatprep.subr.bf16.mxu0 0
        %3614 = vmatpush1.bf16.msra.mxu0 %v1018
        %3615 = vmatprep.subr.bf16.mxu0 0
        %3616 = vmatpush1.bf16.msra.mxu0 %v1019
        %3617 = vmatprep.subr.bf16.mxu0 0
        %3618 = vmatpush1.bf16.msra.mxu0 %v1020
        %3619 = vmatprep.subr.bf16.mxu0 0
        %3620 = vmatpush1.bf16.msra.mxu0 %v1021
        %3621 = vmatprep.subr.bf16.mxu0 0
        %3622 = vmatpush1.bf16.msra.mxu0 %v1022
        %3623 = vmatprep.subr.bf16.mxu0 0
        %3624 = vmatpush1.bf16.msra.mxu0 %v1023
        %3625 = vmatprep.subr.bf16.mxu0 0
        %3626 = vmatpush1.bf16.msra.mxu0 %v1024
        %3627 = vmatprep.subr.bf16.mxu0 0
        %3628 = vmatpush1.bf16.msra.mxu0 0
        %3629 = vmatprep.subr.bf16.mxu0 0
        %3630 = vmatpush1.bf16.msra.mxu0 0
        %3631 = vmatprep.subr.bf16.mxu0 0
        %3632 = vmatpush1.bf16.msra.mxu0 0
        %3633 = vmatprep.subr.bf16.mxu0 0
        %3634 = vmatpush1.bf16.msra.mxu0 0
        %3635 = vmatprep.subr.bf16.mxu0 0
        %3636 = vmatpush1.bf16.msra.mxu0 0
        %3637 = vmatprep.subr.bf16.mxu0 0
        %3638 = vmatpush1.bf16.msra.mxu0 0
        %3639 = vmatprep.subr.bf16.mxu0 0
        %3640 = vmatpush1.bf16.msra.mxu0 0
        %3641 = vmatprep.mubr.bf16.mxu0 %v3607
        %3642 = vmatmul.mubr.bf16.gmra.mrb[0].mxu0 %v3604
        %v3643 = vpop.f32.mrb[0].mxu0
        %v3644 = vadd.f32 0.0, %v3643
        %v3645 = vpop.f32.mrb[0].mxu0
        %v3646 = vpop.f32.mrb[0].mxu0
        %v3647 = vpop.f32.mrb[0].mxu0
        %3648 = vdwg.mxu0
        %3649 = vmatprep.subr.bf16.mxu0 0
        %3650 = vmatpush1.bf16.msra.mxu0 %v1132
        %3651 = vmatprep.subr.bf16.mxu0 0
        %3652 = vmatpush1.bf16.msra.mxu0 %v1133
        %3653 = vmatprep.subr.bf16.mxu0 0
        %3654 = vmatpush1.bf16.msra.mxu0 %v1134
        %3655 = vmatprep.subr.bf16.mxu0 0
        %3656 = vmatpush1.bf16.msra.mxu0 %v1135
        %3657 = vmatprep.subr.bf16.mxu0 0
        %3658 = vmatpush1.bf16.msra.mxu0 %v1136
        %3659 = vmatprep.subr.bf16.mxu0 0
        %3660 = vmatpush1.bf16.msra.mxu0 %v1137
        %3661 = vmatprep.subr.bf16.mxu0 0
        %3662 = vmatpush1.bf16.msra.mxu0 %v1138
        %3663 = vmatprep.subr.bf16.mxu0 0
        %3664 = vmatpush1.bf16.msra.mxu0 %v1139
        %3665 = vmatprep.subr.bf16.mxu0 0
        %3666 = vmatpush1.bf16.msra.mxu0 %v1140
        %3667 = vmatprep.subr.bf16.mxu0 0
        %3668 = vmatpush1.bf16.msra.mxu0 0
        %3669 = vmatprep.subr.bf16.mxu0 0
        %3670 = vmatpush1.bf16.msra.mxu0 0
        %3671 = vmatprep.subr.bf16.mxu0 0
        %3672 = vmatpush1.bf16.msra.mxu0 0
        %3673 = vmatprep.subr.bf16.mxu0 0
        %3674 = vmatpush1.bf16.msra.mxu0 0
        %3675 = vmatprep.subr.bf16.mxu0 0
        %3676 = vmatpush1.bf16.msra.mxu0 0
        %3677 = vmatprep.subr.bf16.mxu0 0
        %3678 = vmatpush1.bf16.msra.mxu0 0
        %3679 = vmatprep.subr.bf16.mxu0 0
        %3680 = vmatpush1.bf16.msra.mxu0 0
        %3681 = vmatprep.mubr.bf16.mxu0 %v3607
        %3682 = vmatmul.mubr.bf16.gmra.mrb[0].mxu0 %v3604
        %v3683 = vpop.f32.mrb[0].mxu0
        %v3684 = vadd.f32 0.0, %v3683
        %v3685 = vpop.f32.mrb[0].mxu0
        %v3686 = vpop.f32.mrb[0].mxu0
        %v3687 = vpop.f32.mrb[0].mxu0
        %3688 = vdwg.mxu0
        %v3689 = vmax.f32 %v3644, %v3684
        %v3690 = vpack.c.bf16 %v3689, %v3689
        %3691 = vmatprep.subr.bf16.mxu0 %v611
        %3692 = vmatpush1.bf16.msra.mxu0 %v610
        %3693 = vmatprep.subr.bf16.mxu0 %v625
        %3694 = vmatpush1.bf16.msra.mxu0 %v622
        %3695 = vmatprep.subr.bf16.mxu0 0
        %3696 = vmatpush1.bf16.msra.mxu0 0
        %3697 = vmatprep.subr.bf16.mxu0 0
        %3698 = vmatpush1.bf16.msra.mxu0 0
        %3699 = vmatprep.subr.bf16.mxu0 0
        %3700 = vmatpush1.bf16.msra.mxu0 0
        %3701 = vmatprep.subr.bf16.mxu0 0
        %3702 = vmatpush1.bf16.msra.mxu0 0
        %3703 = vmatprep.subr.bf16.mxu0 0
        %3704 = vmatpush1.bf16.msra.mxu0 0
        %3705 = vmatprep.subr.bf16.mxu0 0
        %3706 = vmatpush1.bf16.msra.mxu0 0
        %3707 = vmatprep.subr.bf16.mxu0 0
        %3708 = vmatpush1.bf16.msra.mxu0 0
        %3709 = vmatprep.subr.bf16.mxu0 0
        %3710 = vmatpush1.bf16.msra.mxu0 0
        %3711 = vmatprep.subr.bf16.mxu0 0
        %3712 = vmatpush1.bf16.msra.mxu0 0
        %3713 = vmatprep.subr.bf16.mxu0 0
        %3714 = vmatpush1.bf16.msra.mxu0 0
        %3715 = vmatprep.subr.bf16.mxu0 0
        %3716 = vmatpush1.bf16.msra.mxu0 0
        %3717 = vmatprep.subr.bf16.mxu0 0
        %3718 = vmatpush1.bf16.msra.mxu0 0
        %3719 = vmatprep.subr.bf16.mxu0 0
        %3720 = vmatpush1.bf16.msra.mxu0 0
        %3721 = vmatprep.subr.bf16.mxu0 0
        %3722 = vmatpush1.bf16.msra.mxu0 0
        %3723 = vmatprep.mubr.bf16.mxu0 0
        %3724 = vmatmul.mubr.bf16.gmra.mrb[0].mxu0 %v3423
        %v3725 = vpop.f32.mrb[0].mxu0
        %v3726 = vadd.f32 0.0, %v3725
        %v3727 = vpop.f32.mrb[0].mxu0
        %v3728 = vadd.f32 0.0, %v3727
        %v3729 = vpop.f32.mrb[0].mxu0
        %v3730 = vpop.f32.mrb[0].mxu0
        %3731 = vdwg.mxu0
        %v3732 = vadd.f32 %v586, %v3726
        %v3733 = vadd.f32 %v590, %v3728
        %3734 = vmatprep.subr.bf16.mxu0 %v690
        %3735 = vmatpush1.bf16.msra.mxu0 %v689
        %3736 = vmatprep.subr.bf16.mxu0 %v702
        %3737 = vmatpush1.bf16.msra.mxu0 %v699
        %3738 = vmatprep.subr.bf16.mxu0 0
        %3739 = vmatpush1.bf16.msra.mxu0 0
        %3740 = vmatprep.subr.bf16.mxu0 0
        %3741 = vmatpush1.bf16.msra.mxu0 0
        %3742 = vmatprep.subr.bf16.mxu0 0
        %3743 = vmatpush1.bf16.msra.mxu0 0
        %3744 = vmatprep.subr.bf16.mxu0 0
        %3745 = vmatpush1.bf16.msra.mxu0 0
        %3746 = vmatprep.subr.bf16.mxu0 0
        %3747 = vmatpush1.bf16.msra.mxu0 0
        %3748 = vmatprep.subr.bf16.mxu0 0
        %3749 = vmatpush1.bf16.msra.mxu0 0
        %3750 = vmatprep.subr.bf16.mxu0 0
        %3751 = vmatpush1.bf16.msra.mxu0 0
        %3752 = vmatprep.subr.bf16.mxu0 0
        %3753 = vmatpush1.bf16.msra.mxu0 0
        %3754 = vmatprep.subr.bf16.mxu0 0
        %3755 = vmatpush1.bf16.msra.mxu0 0
        %3756 = vmatprep.subr.bf16.mxu0 0
        %3757 = vmatpush1.bf16.msra.mxu0 0
        %3758 = vmatprep.subr.bf16.mxu0 0
        %3759 = vmatpush1.bf16.msra.mxu0 0
        %3760 = vmatprep.subr.bf16.mxu0 0
        %3761 = vmatpush1.bf16.msra.mxu0 0
        %3762 = vmatprep.subr.bf16.mxu0 0
        %3763 = vmatpush1.bf16.msra.mxu0 0
        %3764 = vmatprep.subr.bf16.mxu0 0
        %3765 = vmatpush1.bf16.msra.mxu0 0
        %3766 = vmatprep.mubr.bf16.mxu0 0
        %3767 = vmatmul.mubr.bf16.gmra.mrb[0].mxu0 %v3557
        %v3768 = vpop.f32.mrb[0].mxu0
        %v3769 = vadd.f32 0.0, %v3768
        %v3770 = vpop.f32.mrb[0].mxu0
        %v3771 = vadd.f32 0.0, %v3770
        %v3772 = vpop.f32.mrb[0].mxu0
        %v3773 = vpop.f32.mrb[0].mxu0
        %3774 = vdwg.mxu0
        %v3775 = vadd.f32 %v3732, %v3769
        %v3776 = vadd.f32 %v3733, %v3771
        %s3777 = scalar_lea.vmem %s536, 72 [#allocation2]
        %v3778 = vld [vmem:[%s3777] sm:$0xf]
        %v3780 = vsel %vm616, %v3778, 0
        %3782 = vmatprep.subr.bf16.mxu0 %v767
        %3783 = vmatpush1.bf16.msra.mxu0 %v766
        %3784 = vmatprep.subr.bf16.mxu0 %v779
        %3785 = vmatpush1.bf16.msra.mxu0 %v776
        %3786 = vmatprep.subr.bf16.mxu0 0
        %3787 = vmatpush1.bf16.msra.mxu0 0
        %3788 = vmatprep.subr.bf16.mxu0 0
        %3789 = vmatpush1.bf16.msra.mxu0 0
        %3790 = vmatprep.subr.bf16.mxu0 0
        %3791 = vmatpush1.bf16.msra.mxu0 0
        %3792 = vmatprep.subr.bf16.mxu0 0
        %3793 = vmatpush1.bf16.msra.mxu0 0
        %3794 = vmatprep.subr.bf16.mxu0 0
        %3795 = vmatpush1.bf16.msra.mxu0 0
        %3796 = vmatprep.subr.bf16.mxu0 0
        %3797 = vmatpush1.bf16.msra.mxu0 0
        %3798 = vmatprep.subr.bf16.mxu0 0
        %3799 = vmatpush1.bf16.msra.mxu0 0
        %3800 = vmatprep.subr.bf16.mxu0 0
        %3801 = vmatpush1.bf16.msra.mxu0 0
        %3802 = vmatprep.subr.bf16.mxu0 0
        %3803 = vmatpush1.bf16.msra.mxu0 0
        %3804 = vmatprep.subr.bf16.mxu0 0
        %3805 = vmatpush1.bf16.msra.mxu0 0
        %3806 = vmatprep.subr.bf16.mxu0 0
        %3807 = vmatpush1.bf16.msra.mxu0 0
        %3808 = vmatprep.subr.bf16.mxu0 0
        %3809 = vmatpush1.bf16.msra.mxu0 0
        %3810 = vmatprep.subr.bf16.mxu0 0
        %3811 = vmatpush1.bf16.msra.mxu0 0
        %3812 = vmatprep.subr.bf16.mxu0 0
        %3813 = vmatpush1.bf16.msra.mxu0 0
        %3814 = vmatprep.mubr.bf16.mxu0 0
        %3815 = vmatmul.mubr.bf16.gmra.mrb[0].mxu0 %v3780
        %v3816 = vpop.f32.mrb[0].mxu0
        %v3817 = vadd.f32 0.0, %v3816
        %v3818 = vpop.f32.mrb[0].mxu0
        %v3819 = vadd.f32 0.0, %v3818
        %v3820 = vpop.f32.mrb[0].mxu0
        %v3821 = vpop.f32.mrb[0].mxu0
        %3822 = vdwg.mxu0
        %v3823 = vadd.f32 %v3775, %v3817
        %v3824 = vadd.f32 %v3776, %v3819
        %3825 = vmatprep.subr.bf16.mxu0 %v611
        %3826 = vmatpush1.bf16.msra.mxu0 %v610
        %3827 = vmatprep.subr.bf16.mxu0 %v625
        %3828 = vmatpush1.bf16.msra.mxu0 %v622
        %3829 = vmatprep.subr.bf16.mxu0 0
        %3830 = vmatpush1.bf16.msra.mxu0 0
        %3831 = vmatprep.subr.bf16.mxu0 0
        %3832 = vmatpush1.bf16.msra.mxu0 0
        %3833 = vmatprep.subr.bf16.mxu0 0
        %3834 = vmatpush1.bf16.msra.mxu0 0
        %3835 = vmatprep.subr.bf16.mxu0 0
        %3836 = vmatpush1.bf16.msra.mxu0 0
        %3837 = vmatprep.subr.bf16.mxu0 0
        %3838 = vmatpush1.bf16.msra.mxu0 0
        %3839 = vmatprep.subr.bf16.mxu0 0
        %3840 = vmatpush1.bf16.msra.mxu0 0
        %3841 = vmatprep.subr.bf16.mxu0 0
        %3842 = vmatpush1.bf16.msra.mxu0 0
        %3843 = vmatprep.subr.bf16.mxu0 0
        %3844 = vmatpush1.bf16.msra.mxu0 0
        %3845 = vmatprep.subr.bf16.mxu0 0
        %3846 = vmatpush1.bf16.msra.mxu0 0
        %3847 = vmatprep.subr.bf16.mxu0 0
        %3848 = vmatpush1.bf16.msra.mxu0 0
        %3849 = vmatprep.subr.bf16.mxu0 0
        %3850 = vmatpush1.bf16.msra.mxu0 0
        %3851 = vmatprep.subr.bf16.mxu0 0
        %3852 = vmatpush1.bf16.msra.mxu0 0
        %3853 = vmatprep.subr.bf16.mxu0 0
        %3854 = vmatpush1.bf16.msra.mxu0 0
        %3855 = vmatprep.subr.bf16.mxu0 0
        %3856 = vmatpush1.bf16.msra.mxu0 0
        %3857 = vmatprep.mubr.bf16.mxu0 0
        %3858 = vmatmul.mubr.bf16.gmra.mrb[0].mxu0 %v3557
        %v3859 = vpop.f32.mrb[0].mxu0
        %v3860 = vadd.f32 0.0, %v3859
        %v3861 = vpop.f32.mrb[0].mxu0
        %v3862 = vadd.f32 0.0, %v3861
        %v3863 = vpop.f32.mrb[0].mxu0
        %v3864 = vpop.f32.mrb[0].mxu0
        %3865 = vdwg.mxu0
        %v3866 = vadd.f32 %v586, %v3860
        %v3867 = vadd.f32 %v590, %v3862
        %3868 = vmatprep.subr.bf16.mxu0 %v690
        %3869 = vmatpush1.bf16.msra.mxu0 %v689
        %3870 = vmatprep.subr.bf16.mxu0 %v702
        %3871 = vmatpush1.bf16.msra.mxu0 %v699
        %3872 = vmatprep.subr.bf16.mxu0 0
        %3873 = vmatpush1.bf16.msra.mxu0 0
        %3874 = vmatprep.subr.bf16.mxu0 0
        %3875 = vmatpush1.bf16.msra.mxu0 0
        %3876 = vmatprep.subr.bf16.mxu0 0
        %3877 = vmatpush1.bf16.msra.mxu0 0
        %3878 = vmatprep.subr.bf16.mxu0 0
        %3879 = vmatpush1.bf16.msra.mxu0 0
        %3880 = vmatprep.subr.bf16.mxu0 0
        %3881 = vmatpush1.bf16.msra.mxu0 0
        %3882 = vmatprep.subr.bf16.mxu0 0
        %3883 = vmatpush1.bf16.msra.mxu0 0
        %3884 = vmatprep.subr.bf16.mxu0 0
        %3885 = vmatpush1.bf16.msra.mxu0 0
        %3886 = vmatprep.subr.bf16.mxu0 0
        %3887 = vmatpush1.bf16.msra.mxu0 0
        %3888 = vmatprep.subr.bf16.mxu0 0
        %3889 = vmatpush1.bf16.msra.mxu0 0
        %3890 = vmatprep.subr.bf16.mxu0 0
        %3891 = vmatpush1.bf16.msra.mxu0 0
        %3892 = vmatprep.subr.bf16.mxu0 0
        %3893 = vmatpush1.bf16.msra.mxu0 0
        %3894 = vmatprep.subr.bf16.mxu0 0
        %3895 = vmatpush1.bf16.msra.mxu0 0
        %3896 = vmatprep.subr.bf16.mxu0 0
        %3897 = vmatpush1.bf16.msra.mxu0 0
        %3898 = vmatprep.subr.bf16.mxu0 0
        %3899 = vmatpush1.bf16.msra.mxu0 0
        %3900 = vmatprep.mubr.bf16.mxu0 0
        %3901 = vmatmul.mubr.bf16.gmra.mrb[0].mxu0 %v3780
        %v3902 = vpop.f32.mrb[0].mxu0
        %v3903 = vadd.f32 0.0, %v3902
        %v3904 = vpop.f32.mrb[0].mxu0
        %v3905 = vadd.f32 0.0, %v3904
        %v3906 = vpop.f32.mrb[0].mxu0
        %v3907 = vpop.f32.mrb[0].mxu0
        %3908 = vdwg.mxu0
        %v3909 = vadd.f32 %v3866, %v3903
        %v3910 = vadd.f32 %v3867, %v3905
        %s3911 = scalar_lea.vmem %s536, 76 [#allocation2]
        %v3912 = vld [vmem:[%s3911] sm:$0xf]
        %v3914 = vsel %vm616, %v3912, 0
        %3916 = vmatprep.subr.bf16.mxu0 %v767
        %3917 = vmatpush1.bf16.msra.mxu0 %v766
        %3918 = vmatprep.subr.bf16.mxu0 %v779
        %3919 = vmatpush1.bf16.msra.mxu0 %v776
        %3920 = vmatprep.subr.bf16.mxu0 0
        %3921 = vmatpush1.bf16.msra.mxu0 0
        %3922 = vmatprep.subr.bf16.mxu0 0
        %3923 = vmatpush1.bf16.msra.mxu0 0
        %3924 = vmatprep.subr.bf16.mxu0 0
        %3925 = vmatpush1.bf16.msra.mxu0 0
        %3926 = vmatprep.subr.bf16.mxu0 0
        %3927 = vmatpush1.bf16.msra.mxu0 0
        %3928 = vmatprep.subr.bf16.mxu0 0
        %3929 = vmatpush1.bf16.msra.mxu0 0
        %3930 = vmatprep.subr.bf16.mxu0 0
        %3931 = vmatpush1.bf16.msra.mxu0 0
        %3932 = vmatprep.subr.bf16.mxu0 0
        %3933 = vmatpush1.bf16.msra.mxu0 0
        %3934 = vmatprep.subr.bf16.mxu0 0
        %3935 = vmatpush1.bf16.msra.mxu0 0
        %3936 = vmatprep.subr.bf16.mxu0 0
        %3937 = vmatpush1.bf16.msra.mxu0 0
        %3938 = vmatprep.subr.bf16.mxu0 0
        %3939 = vmatpush1.bf16.msra.mxu0 0
        %3940 = vmatprep.subr.bf16.mxu0 0
        %3941 = vmatpush1.bf16.msra.mxu0 0
        %3942 = vmatprep.subr.bf16.mxu0 0
        %3943 = vmatpush1.bf16.msra.mxu0 0
        %3944 = vmatprep.subr.bf16.mxu0 0
        %3945 = vmatpush1.bf16.msra.mxu0 0
        %3946 = vmatprep.subr.bf16.mxu0 0
        %3947 = vmatpush1.bf16.msra.mxu0 0
        %3948 = vmatprep.mubr.bf16.mxu0 0
        %3949 = vmatmul.mubr.bf16.gmra.mrb[0].mxu0 %v3914
        %v3950 = vpop.f32.mrb[0].mxu0
        %v3951 = vadd.f32 0.0, %v3950
        %v3952 = vpop.f32.mrb[0].mxu0
        %v3953 = vadd.f32 0.0, %v3952
        %v3954 = vpop.f32.mrb[0].mxu0
        %v3955 = vpop.f32.mrb[0].mxu0
        %3956 = vdwg.mxu0
        %v3957 = vadd.f32 %v3909, %v3951
        %v3958 = vadd.f32 %v3910, %v3953
        %v3959 = vmax.f32 %v3823, %v3957
        %v3960 = vmax.f32 %v3824, %v3958
        %v3961 = vpack.c.bf16 %v3959, %v3959
        %v3962 = vpack.c.bf16 %v3960, %v3960
        %v3964 = vsel %vm1034, %v3962, 0
        %3966 = vmatprep.subr.bf16.mxu0 0
        %3967 = vmatpush1.bf16.msra.mxu0 %v1016
        %3968 = vmatprep.subr.bf16.mxu0 0
        %3969 = vmatpush1.bf16.msra.mxu0 %v1017
        %3970 = vmatprep.subr.bf16.mxu0 0
        %3971 = vmatpush1.bf16.msra.mxu0 %v1018
        %3972 = vmatprep.subr.bf16.mxu0 0
        %3973 = vmatpush1.bf16.msra.mxu0 %v1019
        %3974 = vmatprep.subr.bf16.mxu0 0
        %3975 = vmatpush1.bf16.msra.mxu0 %v1020
        %3976 = vmatprep.subr.bf16.mxu0 0
        %3977 = vmatpush1.bf16.msra.mxu0 %v1021
        %3978 = vmatprep.subr.bf16.mxu0 0
        %3979 = vmatpush1.bf16.msra.mxu0 %v1022
        %3980 = vmatprep.subr.bf16.mxu0 0
        %3981 = vmatpush1.bf16.msra.mxu0 %v1023
        %3982 = vmatprep.subr.bf16.mxu0 0
        %3983 = vmatpush1.bf16.msra.mxu0 %v1024
        %3984 = vmatprep.subr.bf16.mxu0 0
        %3985 = vmatpush1.bf16.msra.mxu0 0
        %3986 = vmatprep.subr.bf16.mxu0 0
        %3987 = vmatpush1.bf16.msra.mxu0 0
        %3988 = vmatprep.subr.bf16.mxu0 0
        %3989 = vmatpush1.bf16.msra.mxu0 0
        %3990 = vmatprep.subr.bf16.mxu0 0
        %3991 = vmatpush1.bf16.msra.mxu0 0
        %3992 = vmatprep.subr.bf16.mxu0 0
        %3993 = vmatpush1.bf16.msra.mxu0 0
        %3994 = vmatprep.subr.bf16.mxu0 0
        %3995 = vmatpush1.bf16.msra.mxu0 0
        %3996 = vmatprep.subr.bf16.mxu0 0
        %3997 = vmatpush1.bf16.msra.mxu0 0
        %3998 = vmatprep.mubr.bf16.mxu0 %v3964
        %3999 = vmatmul.mubr.bf16.gmra.mrb[0].mxu0 %v3961
        %v4000 = vpop.f32.mrb[0].mxu0
        %v4001 = vadd.f32 0.0, %v4000
        %v4002 = vpop.f32.mrb[0].mxu0
        %v4003 = vpop.f32.mrb[0].mxu0
        %v4004 = vpop.f32.mrb[0].mxu0
        %4005 = vdwg.mxu0
        %4006 = vmatprep.subr.bf16.mxu0 0
        %4007 = vmatpush1.bf16.msra.mxu0 %v1132
        %4008 = vmatprep.subr.bf16.mxu0 0
        %4009 = vmatpush1.bf16.msra.mxu0 %v1133
        %4010 = vmatprep.subr.bf16.mxu0 0
        %4011 = vmatpush1.bf16.msra.mxu0 %v1134
        %4012 = vmatprep.subr.bf16.mxu0 0
        %4013 = vmatpush1.bf16.msra.mxu0 %v1135
        %4014 = vmatprep.subr.bf16.mxu0 0
        %4015 = vmatpush1.bf16.msra.mxu0 %v1136
        %4016 = vmatprep.subr.bf16.mxu0 0
        %4017 = vmatpush1.bf16.msra.mxu0 %v1137
        %4018 = vmatprep.subr.bf16.mxu0 0
        %4019 = vmatpush1.bf16.msra.mxu0 %v1138
        %4020 = vmatprep.subr.bf16.mxu0 0
        %4021 = vmatpush1.bf16.msra.mxu0 %v1139
        %4022 = vmatprep.subr.bf16.mxu0 0
        %4023 = vmatpush1.bf16.msra.mxu0 %v1140
        %4024 = vmatprep.subr.bf16.mxu0 0
        %4025 = vmatpush1.bf16.msra.mxu0 0
        %4026 = vmatprep.subr.bf16.mxu0 0
        %4027 = vmatpush1.bf16.msra.mxu0 0
        %4028 = vmatprep.subr.bf16.mxu0 0
        %4029 = vmatpush1.bf16.msra.mxu0 0
        %4030 = vmatprep.subr.bf16.mxu0 0
        %4031 = vmatpush1.bf16.msra.mxu0 0
        %4032 = vmatprep.subr.bf16.mxu0 0
        %4033 = vmatpush1.bf16.msra.mxu0 0
        %4034 = vmatprep.subr.bf16.mxu0 0
        %4035 = vmatpush1.bf16.msra.mxu0 0
        %4036 = vmatprep.subr.bf16.mxu0 0
        %4037 = vmatpush1.bf16.msra.mxu0 0
        %4038 = vmatprep.mubr.bf16.mxu0 %v3964
        %4039 = vmatmul.mubr.bf16.gmra.mrb[0].mxu0 %v3961
        %v4040 = vpop.f32.mrb[0].mxu0
        %v4041 = vadd.f32 0.0, %v4040
        %v4042 = vpop.f32.mrb[0].mxu0
        %v4043 = vpop.f32.mrb[0].mxu0
        %v4044 = vpop.f32.mrb[0].mxu0
        %4045 = vdwg.mxu0
        %v4046 = vmax.f32 %v4001, %v4041
        %v4047 = vpack.c.bf16 %v4046, %v4046
        %4048 = vmatprep.subr.bf16.mxu0 %v611
        %4049 = vmatpush1.bf16.msra.mxu0 %v610
        %4050 = vmatprep.subr.bf16.mxu0 %v625
        %4051 = vmatpush1.bf16.msra.mxu0 %v622
        %4052 = vmatprep.subr.bf16.mxu0 0
        %4053 = vmatpush1.bf16.msra.mxu0 0
        %4054 = vmatprep.subr.bf16.mxu0 0
        %4055 = vmatpush1.bf16.msra.mxu0 0
        %4056 = vmatprep.subr.bf16.mxu0 0
        %4057 = vmatpush1.bf16.msra.mxu0 0
        %4058 = vmatprep.subr.bf16.mxu0 0
        %4059 = vmatpush1.bf16.msra.mxu0 0
        %4060 = vmatprep.subr.bf16.mxu0 0
        %4061 = vmatpush1.bf16.msra.mxu0 0
        %4062 = vmatprep.subr.bf16.mxu0 0
        %4063 = vmatpush1.bf16.msra.mxu0 0
        %4064 = vmatprep.subr.bf16.mxu0 0
        %4065 = vmatpush1.bf16.msra.mxu0 0
        %4066 = vmatprep.subr.bf16.mxu0 0
        %4067 = vmatpush1.bf16.msra.mxu0 0
        %4068 = vmatprep.subr.bf16.mxu0 0
        %4069 = vmatpush1.bf16.msra.mxu0 0
        %4070 = vmatprep.subr.bf16.mxu0 0
        %4071 = vmatpush1.bf16.msra.mxu0 0
        %4072 = vmatprep.subr.bf16.mxu0 0
        %4073 = vmatpush1.bf16.msra.mxu0 0
        %4074 = vmatprep.subr.bf16.mxu0 0
        %4075 = vmatpush1.bf16.msra.mxu0 0
        %4076 = vmatprep.subr.bf16.mxu0 0
        %4077 = vmatpush1.bf16.msra.mxu0 0
        %4078 = vmatprep.subr.bf16.mxu0 0
        %4079 = vmatpush1.bf16.msra.mxu0 0
        %4080 = vmatprep.mubr.bf16.mxu0 0
        %4081 = vmatmul.mubr.bf16.gmra.mrb[0].mxu0 %v3780
        %v4082 = vpop.f32.mrb[0].mxu0
        %v4083 = vadd.f32 0.0, %v4082
        %v4084 = vpop.f32.mrb[0].mxu0
        %v4085 = vadd.f32 0.0, %v4084
        %v4086 = vpop.f32.mrb[0].mxu0
        %v4087 = vpop.f32.mrb[0].mxu0
        %4088 = vdwg.mxu0
        %v4089 = vadd.f32 %v586, %v4083
        %v4090 = vadd.f32 %v590, %v4085
        %4091 = vmatprep.subr.bf16.mxu0 %v690
        %4092 = vmatpush1.bf16.msra.mxu0 %v689
        %4093 = vmatprep.subr.bf16.mxu0 %v702
        %4094 = vmatpush1.bf16.msra.mxu0 %v699
        %4095 = vmatprep.subr.bf16.mxu0 0
        %4096 = vmatpush1.bf16.msra.mxu0 0
        %4097 = vmatprep.subr.bf16.mxu0 0
        %4098 = vmatpush1.bf16.msra.mxu0 0
        %4099 = vmatprep.subr.bf16.mxu0 0
        %4100 = vmatpush1.bf16.msra.mxu0 0
        %4101 = vmatprep.subr.bf16.mxu0 0
        %4102 = vmatpush1.bf16.msra.mxu0 0
        %4103 = vmatprep.subr.bf16.mxu0 0
        %4104 = vmatpush1.bf16.msra.mxu0 0
        %4105 = vmatprep.subr.bf16.mxu0 0
        %4106 = vmatpush1.bf16.msra.mxu0 0
        %4107 = vmatprep.subr.bf16.mxu0 0
        %4108 = vmatpush1.bf16.msra.mxu0 0
        %4109 = vmatprep.subr.bf16.mxu0 0
        %4110 = vmatpush1.bf16.msra.mxu0 0
        %4111 = vmatprep.subr.bf16.mxu0 0
        %4112 = vmatpush1.bf16.msra.mxu0 0
        %4113 = vmatprep.subr.bf16.mxu0 0
        %4114 = vmatpush1.bf16.msra.mxu0 0
        %4115 = vmatprep.subr.bf16.mxu0 0
        %4116 = vmatpush1.bf16.msra.mxu0 0
        %4117 = vmatprep.subr.bf16.mxu0 0
        %4118 = vmatpush1.bf16.msra.mxu0 0
        %4119 = vmatprep.subr.bf16.mxu0 0
        %4120 = vmatpush1.bf16.msra.mxu0 0
        %4121 = vmatprep.subr.bf16.mxu0 0
        %4122 = vmatpush1.bf16.msra.mxu0 0
        %4123 = vmatprep.mubr.bf16.mxu0 0
        %4124 = vmatmul.mubr.bf16.gmra.mrb[0].mxu0 %v3914
        %v4125 = vpop.f32.mrb[0].mxu0
        %v4126 = vadd.f32 0.0, %v4125
        %v4127 = vpop.f32.mrb[0].mxu0
        %v4128 = vadd.f32 0.0, %v4127
        %v4129 = vpop.f32.mrb[0].mxu0
        %v4130 = vpop.f32.mrb[0].mxu0
        %4131 = vdwg.mxu0
        %v4132 = vadd.f32 %v4089, %v4126
        %v4133 = vadd.f32 %v4090, %v4128
        %s4134 = scalar_lea.vmem %s536, 80 [#allocation2]
        %v4135 = vld [vmem:[%s4134] sm:$0xf]
        %v4137 = vsel %vm616, %v4135, 0
        %4139 = vmatprep.subr.bf16.mxu0 %v767
        %4140 = vmatpush1.bf16.msra.mxu0 %v766
        %4141 = vmatprep.subr.bf16.mxu0 %v779
        %4142 = vmatpush1.bf16.msra.mxu0 %v776
        %4143 = vmatprep.subr.bf16.mxu0 0
        %4144 = vmatpush1.bf16.msra.mxu0 0
        %4145 = vmatprep.subr.bf16.mxu0 0
        %4146 = vmatpush1.bf16.msra.mxu0 0
        %4147 = vmatprep.subr.bf16.mxu0 0
        %4148 = vmatpush1.bf16.msra.mxu0 0
        %4149 = vmatprep.subr.bf16.mxu0 0
        %4150 = vmatpush1.bf16.msra.mxu0 0
        %4151 = vmatprep.subr.bf16.mxu0 0
        %4152 = vmatpush1.bf16.msra.mxu0 0
        %4153 = vmatprep.subr.bf16.mxu0 0
        %4154 = vmatpush1.bf16.msra.mxu0 0
        %4155 = vmatprep.subr.bf16.mxu0 0
        %4156 = vmatpush1.bf16.msra.mxu0 0
        %4157 = vmatprep.subr.bf16.mxu0 0
        %4158 = vmatpush1.bf16.msra.mxu0 0
        %4159 = vmatprep.subr.bf16.mxu0 0
        %4160 = vmatpush1.bf16.msra.mxu0 0
        %4161 = vmatprep.subr.bf16.mxu0 0
        %4162 = vmatpush1.bf16.msra.mxu0 0
        %4163 = vmatprep.subr.bf16.mxu0 0
        %4164 = vmatpush1.bf16.msra.mxu0 0
        %4165 = vmatprep.subr.bf16.mxu0 0
        %4166 = vmatpush1.bf16.msra.mxu0 0
        %4167 = vmatprep.subr.bf16.mxu0 0
        %4168 = vmatpush1.bf16.msra.mxu0 0
        %4169 = vmatprep.subr.bf16.mxu0 0
        %4170 = vmatpush1.bf16.msra.mxu0 0
        %4171 = vmatprep.mubr.bf16.mxu0 0
        %4172 = vmatmul.mubr.bf16.gmra.mrb[0].mxu0 %v4137
        %v4173 = vpop.f32.mrb[0].mxu0
        %v4174 = vadd.f32 0.0, %v4173
        %v4175 = vpop.f32.mrb[0].mxu0
        %v4176 = vadd.f32 0.0, %v4175
        %v4177 = vpop.f32.mrb[0].mxu0
        %v4178 = vpop.f32.mrb[0].mxu0
        %4179 = vdwg.mxu0
        %v4180 = vadd.f32 %v4132, %v4174
        %v4181 = vadd.f32 %v4133, %v4176
        %4182 = vmatprep.subr.bf16.mxu0 %v611
        %4183 = vmatpush1.bf16.msra.mxu0 %v610
        %4184 = vmatprep.subr.bf16.mxu0 %v625
        %4185 = vmatpush1.bf16.msra.mxu0 %v622
        %4186 = vmatprep.subr.bf16.mxu0 0
        %4187 = vmatpush1.bf16.msra.mxu0 0
        %4188 = vmatprep.subr.bf16.mxu0 0
        %4189 = vmatpush1.bf16.msra.mxu0 0
        %4190 = vmatprep.subr.bf16.mxu0 0
        %4191 = vmatpush1.bf16.msra.mxu0 0
        %4192 = vmatprep.subr.bf16.mxu0 0
        %4193 = vmatpush1.bf16.msra.mxu0 0
        %4194 = vmatprep.subr.bf16.mxu0 0
        %4195 = vmatpush1.bf16.msra.mxu0 0
        %4196 = vmatprep.subr.bf16.mxu0 0
        %4197 = vmatpush1.bf16.msra.mxu0 0
        %4198 = vmatprep.subr.bf16.mxu0 0
        %4199 = vmatpush1.bf16.msra.mxu0 0
        %4200 = vmatprep.subr.bf16.mxu0 0
        %4201 = vmatpush1.bf16.msra.mxu0 0
        %4202 = vmatprep.subr.bf16.mxu0 0
        %4203 = vmatpush1.bf16.msra.mxu0 0
        %4204 = vmatprep.subr.bf16.mxu0 0
        %4205 = vmatpush1.bf16.msra.mxu0 0
        %4206 = vmatprep.subr.bf16.mxu0 0
        %4207 = vmatpush1.bf16.msra.mxu0 0
        %4208 = vmatprep.subr.bf16.mxu0 0
        %4209 = vmatpush1.bf16.msra.mxu0 0
        %4210 = vmatprep.subr.bf16.mxu0 0
        %4211 = vmatpush1.bf16.msra.mxu0 0
        %4212 = vmatprep.subr.bf16.mxu0 0
        %4213 = vmatpush1.bf16.msra.mxu0 0
        %4214 = vmatprep.mubr.bf16.mxu0 0
        %4215 = vmatmul.mubr.bf16.gmra.mrb[0].mxu0 %v3914
        %v4216 = vpop.f32.mrb[0].mxu0
        %v4217 = vadd.f32 0.0, %v4216
        %v4218 = vpop.f32.mrb[0].mxu0
        %v4219 = vadd.f32 0.0, %v4218
        %v4220 = vpop.f32.mrb[0].mxu0
        %v4221 = vpop.f32.mrb[0].mxu0
        %4222 = vdwg.mxu0
        %v4223 = vadd.f32 %v586, %v4217
        %v4224 = vadd.f32 %v590, %v4219
        %4225 = vmatprep.subr.bf16.mxu0 %v690
        %4226 = vmatpush1.bf16.msra.mxu0 %v689
        %4227 = vmatprep.subr.bf16.mxu0 %v702
        %4228 = vmatpush1.bf16.msra.mxu0 %v699
        %4229 = vmatprep.subr.bf16.mxu0 0
        %4230 = vmatpush1.bf16.msra.mxu0 0
        %4231 = vmatprep.subr.bf16.mxu0 0
        %4232 = vmatpush1.bf16.msra.mxu0 0
        %4233 = vmatprep.subr.bf16.mxu0 0
        %4234 = vmatpush1.bf16.msra.mxu0 0
        %4235 = vmatprep.subr.bf16.mxu0 0
        %4236 = vmatpush1.bf16.msra.mxu0 0
        %4237 = vmatprep.subr.bf16.mxu0 0
        %4238 = vmatpush1.bf16.msra.mxu0 0
        %4239 = vmatprep.subr.bf16.mxu0 0
        %4240 = vmatpush1.bf16.msra.mxu0 0
        %4241 = vmatprep.subr.bf16.mxu0 0
        %4242 = vmatpush1.bf16.msra.mxu0 0
        %4243 = vmatprep.subr.bf16.mxu0 0
        %4244 = vmatpush1.bf16.msra.mxu0 0
        %4245 = vmatprep.subr.bf16.mxu0 0
        %4246 = vmatpush1.bf16.msra.mxu0 0
        %4247 = vmatprep.subr.bf16.mxu0 0
        %4248 = vmatpush1.bf16.msra.mxu0 0
        %4249 = vmatprep.subr.bf16.mxu0 0
        %4250 = vmatpush1.bf16.msra.mxu0 0
        %4251 = vmatprep.subr.bf16.mxu0 0
        %4252 = vmatpush1.bf16.msra.mxu0 0
        %4253 = vmatprep.subr.bf16.mxu0 0
        %4254 = vmatpush1.bf16.msra.mxu0 0
        %4255 = vmatprep.subr.bf16.mxu0 0
        %4256 = vmatpush1.bf16.msra.mxu0 0
        %4257 = vmatprep.mubr.bf16.mxu0 0
        %4258 = vmatmul.mubr.bf16.gmra.mrb[0].mxu0 %v4137
        %v4259 = vpop.f32.mrb[0].mxu0
        %v4260 = vadd.f32 0.0, %v4259
        %v4261 = vpop.f32.mrb[0].mxu0
        %v4262 = vadd.f32 0.0, %v4261
        %v4263 = vpop.f32.mrb[0].mxu0
        %v4264 = vpop.f32.mrb[0].mxu0
        %4265 = vdwg.mxu0
        %v4266 = vadd.f32 %v4223, %v4260
        %v4267 = vadd.f32 %v4224, %v4262
        %s4268 = scalar_lea.vmem %s536, 84 [#allocation2]
        %v4269 = vld [vmem:[%s4268] sm:$0xf]
        %v4271 = vsel %vm616, %v4269, 0
        %4273 = vmatprep.subr.bf16.mxu0 %v767
        %4274 = vmatpush1.bf16.msra.mxu0 %v766
        %4275 = vmatprep.subr.bf16.mxu0 %v779
        %4276 = vmatpush1.bf16.msra.mxu0 %v776
        %4277 = vmatprep.subr.bf16.mxu0 0
        %4278 = vmatpush1.bf16.msra.mxu0 0
        %4279 = vmatprep.subr.bf16.mxu0 0
        %4280 = vmatpush1.bf16.msra.mxu0 0
        %4281 = vmatprep.subr.bf16.mxu0 0
        %4282 = vmatpush1.bf16.msra.mxu0 0
        %4283 = vmatprep.subr.bf16.mxu0 0
        %4284 = vmatpush1.bf16.msra.mxu0 0
        %4285 = vmatprep.subr.bf16.mxu0 0
        %4286 = vmatpush1.bf16.msra.mxu0 0
        %4287 = vmatprep.subr.bf16.mxu0 0
        %4288 = vmatpush1.bf16.msra.mxu0 0
        %4289 = vmatprep.subr.bf16.mxu0 0
        %4290 = vmatpush1.bf16.msra.mxu0 0
        %4291 = vmatprep.subr.bf16.mxu0 0
        %4292 = vmatpush1.bf16.msra.mxu0 0
        %4293 = vmatprep.subr.bf16.mxu0 0
        %4294 = vmatpush1.bf16.msra.mxu0 0
        %4295 = vmatprep.subr.bf16.mxu0 0
        %4296 = vmatpush1.bf16.msra.mxu0 0
        %4297 = vmatprep.subr.bf16.mxu0 0
        %4298 = vmatpush1.bf16.msra.mxu0 0
        %4299 = vmatprep.subr.bf16.mxu0 0
        %4300 = vmatpush1.bf16.msra.mxu0 0
        %4301 = vmatprep.subr.bf16.mxu0 0
        %4302 = vmatpush1.bf16.msra.mxu0 0
        %4303 = vmatprep.subr.bf16.mxu0 0
        %4304 = vmatpush1.bf16.msra.mxu0 0
        %4305 = vmatprep.mubr.bf16.mxu0 0
        %4306 = vmatmul.mubr.bf16.gmra.mrb[0].mxu0 %v4271
        %v4307 = vpop.f32.mrb[0].mxu0
        %v4308 = vadd.f32 0.0, %v4307
        %v4309 = vpop.f32.mrb[0].mxu0
        %v4310 = vadd.f32 0.0, %v4309
        %v4311 = vpop.f32.mrb[0].mxu0
        %v4312 = vpop.f32.mrb[0].mxu0
        %4313 = vdwg.mxu0
        %v4314 = vadd.f32 %v4266, %v4308
        %v4315 = vadd.f32 %v4267, %v4310
        %v4316 = vmax.f32 %v4180, %v4314
        %v4317 = vmax.f32 %v4181, %v4315
        %v4318 = vpack.c.bf16 %v4316, %v4316
        %v4319 = vpack.c.bf16 %v4317, %v4317
        %v4321 = vsel %vm1034, %v4319, 0
        %4323 = vmatprep.subr.bf16.mxu0 0
        %4324 = vmatpush1.bf16.msra.mxu0 %v1016
        %4325 = vmatprep.subr.bf16.mxu0 0
        %4326 = vmatpush1.bf16.msra.mxu0 %v1017
        %4327 = vmatprep.subr.bf16.mxu0 0
        %4328 = vmatpush1.bf16.msra.mxu0 %v1018
        %4329 = vmatprep.subr.bf16.mxu0 0
        %4330 = vmatpush1.bf16.msra.mxu0 %v1019
        %4331 = vmatprep.subr.bf16.mxu0 0
        %4332 = vmatpush1.bf16.msra.mxu0 %v1020
        %4333 = vmatprep.subr.bf16.mxu0 0
        %4334 = vmatpush1.bf16.msra.mxu0 %v1021
        %4335 = vmatprep.subr.bf16.mxu0 0
        %4336 = vmatpush1.bf16.msra.mxu0 %v1022
        %4337 = vmatprep.subr.bf16.mxu0 0
        %4338 = vmatpush1.bf16.msra.mxu0 %v1023
        %4339 = vmatprep.subr.bf16.mxu0 0
        %4340 = vmatpush1.bf16.msra.mxu0 %v1024
        %4341 = vmatprep.subr.bf16.mxu0 0
        %4342 = vmatpush1.bf16.msra.mxu0 0
        %4343 = vmatprep.subr.bf16.mxu0 0
        %4344 = vmatpush1.bf16.msra.mxu0 0
        %4345 = vmatprep.subr.bf16.mxu0 0
        %4346 = vmatpush1.bf16.msra.mxu0 0
        %4347 = vmatprep.subr.bf16.mxu0 0
        %4348 = vmatpush1.bf16.msra.mxu0 0
        %4349 = vmatprep.subr.bf16.mxu0 0
        %4350 = vmatpush1.bf16.msra.mxu0 0
        %4351 = vmatprep.subr.bf16.mxu0 0
        %4352 = vmatpush1.bf16.msra.mxu0 0
        %4353 = vmatprep.subr.bf16.mxu0 0
        %4354 = vmatpush1.bf16.msra.mxu0 0
        %4355 = vmatprep.mubr.bf16.mxu0 %v4321
        %4356 = vmatmul.mubr.bf16.gmra.mrb[0].mxu0 %v4318
        %v4357 = vpop.f32.mrb[0].mxu0
        %v4358 = vadd.f32 0.0, %v4357
        %v4359 = vpop.f32.mrb[0].mxu0
        %v4360 = vpop.f32.mrb[0].mxu0
        %v4361 = vpop.f32.mrb[0].mxu0
        %4362 = vdwg.mxu0
        %4363 = vmatprep.subr.bf16.mxu0 0
        %4364 = vmatpush1.bf16.msra.mxu0 %v1132
        %4365 = vmatprep.subr.bf16.mxu0 0
        %4366 = vmatpush1.bf16.msra.mxu0 %v1133
        %4367 = vmatprep.subr.bf16.mxu0 0
        %4368 = vmatpush1.bf16.msra.mxu0 %v1134
        %4369 = vmatprep.subr.bf16.mxu0 0
        %4370 = vmatpush1.bf16.msra.mxu0 %v1135
        %4371 = vmatprep.subr.bf16.mxu0 0
        %4372 = vmatpush1.bf16.msra.mxu0 %v1136
        %4373 = vmatprep.subr.bf16.mxu0 0
        %4374 = vmatpush1.bf16.msra.mxu0 %v1137
        %4375 = vmatprep.subr.bf16.mxu0 0
        %4376 = vmatpush1.bf16.msra.mxu0 %v1138
        %4377 = vmatprep.subr.bf16.mxu0 0
        %4378 = vmatpush1.bf16.msra.mxu0 %v1139
        %4379 = vmatprep.subr.bf16.mxu0 0
        %4380 = vmatpush1.bf16.msra.mxu0 %v1140
        %4381 = vmatprep.subr.bf16.mxu0 0
        %4382 = vmatpush1.bf16.msra.mxu0 0
        %4383 = vmatprep.subr.bf16.mxu0 0
        %4384 = vmatpush1.bf16.msra.mxu0 0
        %4385 = vmatprep.subr.bf16.mxu0 0
        %4386 = vmatpush1.bf16.msra.mxu0 0
        %4387 = vmatprep.subr.bf16.mxu0 0
        %4388 = vmatpush1.bf16.msra.mxu0 0
        %4389 = vmatprep.subr.bf16.mxu0 0
        %4390 = vmatpush1.bf16.msra.mxu0 0
        %4391 = vmatprep.subr.bf16.mxu0 0
        %4392 = vmatpush1.bf16.msra.mxu0 0
        %4393 = vmatprep.subr.bf16.mxu0 0
        %4394 = vmatpush1.bf16.msra.mxu0 0
        %4395 = vmatprep.mubr.bf16.mxu0 %v4321
        %4396 = vmatmul.mubr.bf16.gmra.mrb[0].mxu0 %v4318
        %v4397 = vpop.f32.mrb[0].mxu0
        %v4398 = vadd.f32 0.0, %v4397
        %v4399 = vpop.f32.mrb[0].mxu0
        %v4400 = vpop.f32.mrb[0].mxu0
        %v4401 = vpop.f32.mrb[0].mxu0
        %4402 = vdwg.mxu0
        %v4403 = vmax.f32 %v4358, %v4398
        %v4404 = vpack.c.bf16 %v4403, %v4403
        %4405 = vmatprep.subr.bf16.mxu0 %v611
        %4406 = vmatpush1.bf16.msra.mxu0 %v610
        %4407 = vmatprep.subr.bf16.mxu0 %v625
        %4408 = vmatpush1.bf16.msra.mxu0 %v622
        %4409 = vmatprep.subr.bf16.mxu0 0
        %4410 = vmatpush1.bf16.msra.mxu0 0
        %4411 = vmatprep.subr.bf16.mxu0 0
        %4412 = vmatpush1.bf16.msra.mxu0 0
        %4413 = vmatprep.subr.bf16.mxu0 0
        %4414 = vmatpush1.bf16.msra.mxu0 0
        %4415 = vmatprep.subr.bf16.mxu0 0
        %4416 = vmatpush1.bf16.msra.mxu0 0
        %4417 = vmatprep.subr.bf16.mxu0 0
        %4418 = vmatpush1.bf16.msra.mxu0 0
        %4419 = vmatprep.subr.bf16.mxu0 0
        %4420 = vmatpush1.bf16.msra.mxu0 0
        %4421 = vmatprep.subr.bf16.mxu0 0
        %4422 = vmatpush1.bf16.msra.mxu0 0
        %4423 = vmatprep.subr.bf16.mxu0 0
        %4424 = vmatpush1.bf16.msra.mxu0 0
        %4425 = vmatprep.subr.bf16.mxu0 0
        %4426 = vmatpush1.bf16.msra.mxu0 0
        %4427 = vmatprep.subr.bf16.mxu0 0
        %4428 = vmatpush1.bf16.msra.mxu0 0
        %4429 = vmatprep.subr.bf16.mxu0 0
        %4430 = vmatpush1.bf16.msra.mxu0 0
        %4431 = vmatprep.subr.bf16.mxu0 0
        %4432 = vmatpush1.bf16.msra.mxu0 0
        %4433 = vmatprep.subr.bf16.mxu0 0
        %4434 = vmatpush1.bf16.msra.mxu0 0
        %4435 = vmatprep.subr.bf16.mxu0 0
        %4436 = vmatpush1.bf16.msra.mxu0 0
        %4437 = vmatprep.mubr.bf16.mxu0 0
        %4438 = vmatmul.mubr.bf16.gmra.mrb[0].mxu0 %v4137
        %v4439 = vpop.f32.mrb[0].mxu0
        %v4440 = vadd.f32 0.0, %v4439
        %v4441 = vpop.f32.mrb[0].mxu0
        %v4442 = vadd.f32 0.0, %v4441
        %v4443 = vpop.f32.mrb[0].mxu0
        %v4444 = vpop.f32.mrb[0].mxu0
        %4445 = vdwg.mxu0
        %v4446 = vadd.f32 %v586, %v4440
        %v4447 = vadd.f32 %v590, %v4442
        %4448 = vmatprep.subr.bf16.mxu0 %v690
        %4449 = vmatpush1.bf16.msra.mxu0 %v689
        %4450 = vmatprep.subr.bf16.mxu0 %v702
        %4451 = vmatpush1.bf16.msra.mxu0 %v699
        %4452 = vmatprep.subr.bf16.mxu0 0
        %4453 = vmatpush1.bf16.msra.mxu0 0
        %4454 = vmatprep.subr.bf16.mxu0 0
        %4455 = vmatpush1.bf16.msra.mxu0 0
        %4456 = vmatprep.subr.bf16.mxu0 0
        %4457 = vmatpush1.bf16.msra.mxu0 0
        %4458 = vmatprep.subr.bf16.mxu0 0
        %4459 = vmatpush1.bf16.msra.mxu0 0
        %4460 = vmatprep.subr.bf16.mxu0 0
        %4461 = vmatpush1.bf16.msra.mxu0 0
        %4462 = vmatprep.subr.bf16.mxu0 0
        %4463 = vmatpush1.bf16.msra.mxu0 0
        %4464 = vmatprep.subr.bf16.mxu0 0
        %4465 = vmatpush1.bf16.msra.mxu0 0
        %4466 = vmatprep.subr.bf16.mxu0 0
        %4467 = vmatpush1.bf16.msra.mxu0 0
        %4468 = vmatprep.subr.bf16.mxu0 0
        %4469 = vmatpush1.bf16.msra.mxu0 0
        %4470 = vmatprep.subr.bf16.mxu0 0
        %4471 = vmatpush1.bf16.msra.mxu0 0
        %4472 = vmatprep.subr.bf16.mxu0 0
        %4473 = vmatpush1.bf16.msra.mxu0 0
        %4474 = vmatprep.subr.bf16.mxu0 0
        %4475 = vmatpush1.bf16.msra.mxu0 0
        %4476 = vmatprep.subr.bf16.mxu0 0
        %4477 = vmatpush1.bf16.msra.mxu0 0
        %4478 = vmatprep.subr.bf16.mxu0 0
        %4479 = vmatpush1.bf16.msra.mxu0 0
        %4480 = vmatprep.mubr.bf16.mxu0 0
        %4481 = vmatmul.mubr.bf16.gmra.mrb[0].mxu0 %v4271
        %v4482 = vpop.f32.mrb[0].mxu0
        %v4483 = vadd.f32 0.0, %v4482
        %v4484 = vpop.f32.mrb[0].mxu0
        %v4485 = vadd.f32 0.0, %v4484
        %v4486 = vpop.f32.mrb[0].mxu0
        %v4487 = vpop.f32.mrb[0].mxu0
        %4488 = vdwg.mxu0
        %v4489 = vadd.f32 %v4446, %v4483
        %v4490 = vadd.f32 %v4447, %v4485
        %s4491 = scalar_lea.vmem %s536, 88 [#allocation2]
        %v4492 = vld [vmem:[%s4491] sm:$0xf]
        %v4494 = vsel %vm616, %v4492, 0
        %4496 = vmatprep.subr.bf16.mxu0 %v767
        %4497 = vmatpush1.bf16.msra.mxu0 %v766
        %4498 = vmatprep.subr.bf16.mxu0 %v779
        %4499 = vmatpush1.bf16.msra.mxu0 %v776
        %4500 = vmatprep.subr.bf16.mxu0 0
        %4501 = vmatpush1.bf16.msra.mxu0 0
        %4502 = vmatprep.subr.bf16.mxu0 0
        %4503 = vmatpush1.bf16.msra.mxu0 0
        %4504 = vmatprep.subr.bf16.mxu0 0
        %4505 = vmatpush1.bf16.msra.mxu0 0
        %4506 = vmatprep.subr.bf16.mxu0 0
        %4507 = vmatpush1.bf16.msra.mxu0 0
        %4508 = vmatprep.subr.bf16.mxu0 0
        %4509 = vmatpush1.bf16.msra.mxu0 0
        %4510 = vmatprep.subr.bf16.mxu0 0
        %4511 = vmatpush1.bf16.msra.mxu0 0
        %4512 = vmatprep.subr.bf16.mxu0 0
        %4513 = vmatpush1.bf16.msra.mxu0 0
        %4514 = vmatprep.subr.bf16.mxu0 0
        %4515 = vmatpush1.bf16.msra.mxu0 0
        %4516 = vmatprep.subr.bf16.mxu0 0
        %4517 = vmatpush1.bf16.msra.mxu0 0
        %4518 = vmatprep.subr.bf16.mxu0 0
        %4519 = vmatpush1.bf16.msra.mxu0 0
        %4520 = vmatprep.subr.bf16.mxu0 0
        %4521 = vmatpush1.bf16.msra.mxu0 0
        %4522 = vmatprep.subr.bf16.mxu0 0
        %4523 = vmatpush1.bf16.msra.mxu0 0
        %4524 = vmatprep.subr.bf16.mxu0 0
        %4525 = vmatpush1.bf16.msra.mxu0 0
        %4526 = vmatprep.subr.bf16.mxu0 0
        %4527 = vmatpush1.bf16.msra.mxu0 0
        %4528 = vmatprep.mubr.bf16.mxu0 0
        %4529 = vmatmul.mubr.bf16.gmra.mrb[0].mxu0 %v4494
        %v4530 = vpop.f32.mrb[0].mxu0
        %v4531 = vadd.f32 0.0, %v4530
        %v4532 = vpop.f32.mrb[0].mxu0
        %v4533 = vadd.f32 0.0, %v4532
        %v4534 = vpop.f32.mrb[0].mxu0
        %v4535 = vpop.f32.mrb[0].mxu0
        %4536 = vdwg.mxu0
        %v4537 = vadd.f32 %v4489, %v4531
        %v4538 = vadd.f32 %v4490, %v4533
        %4539 = vmatprep.subr.bf16.mxu0 %v611
        %4540 = vmatpush1.bf16.msra.mxu0 %v610
        %4541 = vmatprep.subr.bf16.mxu0 %v625
        %4542 = vmatpush1.bf16.msra.mxu0 %v622
        %4543 = vmatprep.subr.bf16.mxu0 0
        %4544 = vmatpush1.bf16.msra.mxu0 0
        %4545 = vmatprep.subr.bf16.mxu0 0
        %4546 = vmatpush1.bf16.msra.mxu0 0
        %4547 = vmatprep.subr.bf16.mxu0 0
        %4548 = vmatpush1.bf16.msra.mxu0 0
        %4549 = vmatprep.subr.bf16.mxu0 0
        %4550 = vmatpush1.bf16.msra.mxu0 0
        %4551 = vmatprep.subr.bf16.mxu0 0
        %4552 = vmatpush1.bf16.msra.mxu0 0
        %4553 = vmatprep.subr.bf16.mxu0 0
        %4554 = vmatpush1.bf16.msra.mxu0 0
        %4555 = vmatprep.subr.bf16.mxu0 0
        %4556 = vmatpush1.bf16.msra.mxu0 0
        %4557 = vmatprep.subr.bf16.mxu0 0
        %4558 = vmatpush1.bf16.msra.mxu0 0
        %4559 = vmatprep.subr.bf16.mxu0 0
        %4560 = vmatpush1.bf16.msra.mxu0 0
        %4561 = vmatprep.subr.bf16.mxu0 0
        %4562 = vmatpush1.bf16.msra.mxu0 0
        %4563 = vmatprep.subr.bf16.mxu0 0
        %4564 = vmatpush1.bf16.msra.mxu0 0
        %4565 = vmatprep.subr.bf16.mxu0 0
        %4566 = vmatpush1.bf16.msra.mxu0 0
        %4567 = vmatprep.subr.bf16.mxu0 0
        %4568 = vmatpush1.bf16.msra.mxu0 0
        %4569 = vmatprep.subr.bf16.mxu0 0
        %4570 = vmatpush1.bf16.msra.mxu0 0
        %4571 = vmatprep.mubr.bf16.mxu0 0
        %4572 = vmatmul.mubr.bf16.gmra.mrb[0].mxu0 %v4271
        %v4573 = vpop.f32.mrb[0].mxu0
        %v4574 = vadd.f32 0.0, %v4573
        %v4575 = vpop.f32.mrb[0].mxu0
        %v4576 = vadd.f32 0.0, %v4575
        %v4577 = vpop.f32.mrb[0].mxu0
        %v4578 = vpop.f32.mrb[0].mxu0
        %4579 = vdwg.mxu0
        %v4580 = vadd.f32 %v586, %v4574
        %v4581 = vadd.f32 %v590, %v4576
        %4582 = vmatprep.subr.bf16.mxu0 %v690
        %4583 = vmatpush1.bf16.msra.mxu0 %v689
        %4584 = vmatprep.subr.bf16.mxu0 %v702
        %4585 = vmatpush1.bf16.msra.mxu0 %v699
        %4586 = vmatprep.subr.bf16.mxu0 0
        %4587 = vmatpush1.bf16.msra.mxu0 0
        %4588 = vmatprep.subr.bf16.mxu0 0
        %4589 = vmatpush1.bf16.msra.mxu0 0
        %4590 = vmatprep.subr.bf16.mxu0 0
        %4591 = vmatpush1.bf16.msra.mxu0 0
        %4592 = vmatprep.subr.bf16.mxu0 0
        %4593 = vmatpush1.bf16.msra.mxu0 0
        %4594 = vmatprep.subr.bf16.mxu0 0
        %4595 = vmatpush1.bf16.msra.mxu0 0
        %4596 = vmatprep.subr.bf16.mxu0 0
        %4597 = vmatpush1.bf16.msra.mxu0 0
        %4598 = vmatprep.subr.bf16.mxu0 0
        %4599 = vmatpush1.bf16.msra.mxu0 0
        %4600 = vmatprep.subr.bf16.mxu0 0
        %4601 = vmatpush1.bf16.msra.mxu0 0
        %4602 = vmatprep.subr.bf16.mxu0 0
        %4603 = vmatpush1.bf16.msra.mxu0 0
        %4604 = vmatprep.subr.bf16.mxu0 0
        %4605 = vmatpush1.bf16.msra.mxu0 0
        %4606 = vmatprep.subr.bf16.mxu0 0
        %4607 = vmatpush1.bf16.msra.mxu0 0
        %4608 = vmatprep.subr.bf16.mxu0 0
        %4609 = vmatpush1.bf16.msra.mxu0 0
        %4610 = vmatprep.subr.bf16.mxu0 0
        %4611 = vmatpush1.bf16.msra.mxu0 0
        %4612 = vmatprep.subr.bf16.mxu0 0
        %4613 = vmatpush1.bf16.msra.mxu0 0
        %4614 = vmatprep.mubr.bf16.mxu0 0
        %4615 = vmatmul.mubr.bf16.gmra.mrb[0].mxu0 %v4494
        %v4616 = vpop.f32.mrb[0].mxu0
        %v4617 = vadd.f32 0.0, %v4616
        %v4618 = vpop.f32.mrb[0].mxu0
        %v4619 = vadd.f32 0.0, %v4618
        %v4620 = vpop.f32.mrb[0].mxu0
        %v4621 = vpop.f32.mrb[0].mxu0
        %4622 = vdwg.mxu0
        %v4623 = vadd.f32 %v4580, %v4617
        %v4624 = vadd.f32 %v4581, %v4619
        %s4625 = scalar_lea.vmem %s536, 92 [#allocation2]
        %v4626 = vld [vmem:[%s4625] sm:$0xf]
        %v4628 = vsel %vm616, %v4626, 0
        %4630 = vmatprep.subr.bf16.mxu0 %v767
        %4631 = vmatpush1.bf16.msra.mxu0 %v766
        %4632 = vmatprep.subr.bf16.mxu0 %v779
        %4633 = vmatpush1.bf16.msra.mxu0 %v776
        %4634 = vmatprep.subr.bf16.mxu0 0
        %4635 = vmatpush1.bf16.msra.mxu0 0
        %4636 = vmatprep.subr.bf16.mxu0 0
        %4637 = vmatpush1.bf16.msra.mxu0 0
        %4638 = vmatprep.subr.bf16.mxu0 0
        %4639 = vmatpush1.bf16.msra.mxu0 0
        %4640 = vmatprep.subr.bf16.mxu0 0
        %4641 = vmatpush1.bf16.msra.mxu0 0
        %4642 = vmatprep.subr.bf16.mxu0 0
        %4643 = vmatpush1.bf16.msra.mxu0 0
        %4644 = vmatprep.subr.bf16.mxu0 0
        %4645 = vmatpush1.bf16.msra.mxu0 0
        %4646 = vmatprep.subr.bf16.mxu0 0
        %4647 = vmatpush1.bf16.msra.mxu0 0
        %4648 = vmatprep.subr.bf16.mxu0 0
        %4649 = vmatpush1.bf16.msra.mxu0 0
        %4650 = vmatprep.subr.bf16.mxu0 0
        %4651 = vmatpush1.bf16.msra.mxu0 0
        %4652 = vmatprep.subr.bf16.mxu0 0
        %4653 = vmatpush1.bf16.msra.mxu0 0
        %4654 = vmatprep.subr.bf16.mxu0 0
        %4655 = vmatpush1.bf16.msra.mxu0 0
        %4656 = vmatprep.subr.bf16.mxu0 0
        %4657 = vmatpush1.bf16.msra.mxu0 0
        %4658 = vmatprep.subr.bf16.mxu0 0
        %4659 = vmatpush1.bf16.msra.mxu0 0
        %4660 = vmatprep.subr.bf16.mxu0 0
        %4661 = vmatpush1.bf16.msra.mxu0 0
        %4662 = vmatprep.mubr.bf16.mxu0 0
        %4663 = vmatmul.mubr.bf16.gmra.mrb[0].mxu0 %v4628
        %v4664 = vpop.f32.mrb[0].mxu0
        %v4665 = vadd.f32 0.0, %v4664
        %v4666 = vpop.f32.mrb[0].mxu0
        %v4667 = vadd.f32 0.0, %v4666
        %v4668 = vpop.f32.mrb[0].mxu0
        %v4669 = vpop.f32.mrb[0].mxu0
        %4670 = vdwg.mxu0
        %v4671 = vadd.f32 %v4623, %v4665
        %v4672 = vadd.f32 %v4624, %v4667
        %v4673 = vmax.f32 %v4537, %v4671
        %v4674 = vmax.f32 %v4538, %v4672
        %v4675 = vpack.c.bf16 %v4673, %v4673
        %v4676 = vpack.c.bf16 %v4674, %v4674
        %v4678 = vsel %vm1034, %v4676, 0
        %4680 = vmatprep.subr.bf16.mxu0 0
        %4681 = vmatpush1.bf16.msra.mxu0 %v1016
        %4682 = vmatprep.subr.bf16.mxu0 0
        %4683 = vmatpush1.bf16.msra.mxu0 %v1017
        %4684 = vmatprep.subr.bf16.mxu0 0
        %4685 = vmatpush1.bf16.msra.mxu0 %v1018
        %4686 = vmatprep.subr.bf16.mxu0 0
        %4687 = vmatpush1.bf16.msra.mxu0 %v1019
        %4688 = vmatprep.subr.bf16.mxu0 0
        %4689 = vmatpush1.bf16.msra.mxu0 %v1020
        %4690 = vmatprep.subr.bf16.mxu0 0
        %4691 = vmatpush1.bf16.msra.mxu0 %v1021
        %4692 = vmatprep.subr.bf16.mxu0 0
        %4693 = vmatpush1.bf16.msra.mxu0 %v1022
        %4694 = vmatprep.subr.bf16.mxu0 0
        %4695 = vmatpush1.bf16.msra.mxu0 %v1023
        %4696 = vmatprep.subr.bf16.mxu0 0
        %4697 = vmatpush1.bf16.msra.mxu0 %v1024
        %4698 = vmatprep.subr.bf16.mxu0 0
        %4699 = vmatpush1.bf16.msra.mxu0 0
        %4700 = vmatprep.subr.bf16.mxu0 0
        %4701 = vmatpush1.bf16.msra.mxu0 0
        %4702 = vmatprep.subr.bf16.mxu0 0
        %4703 = vmatpush1.bf16.msra.mxu0 0
        %4704 = vmatprep.subr.bf16.mxu0 0
        %4705 = vmatpush1.bf16.msra.mxu0 0
        %4706 = vmatprep.subr.bf16.mxu0 0
        %4707 = vmatpush1.bf16.msra.mxu0 0
        %4708 = vmatprep.subr.bf16.mxu0 0
        %4709 = vmatpush1.bf16.msra.mxu0 0
        %4710 = vmatprep.subr.bf16.mxu0 0
        %4711 = vmatpush1.bf16.msra.mxu0 0
        %4712 = vmatprep.mubr.bf16.mxu0 %v4678
        %4713 = vmatmul.mubr.bf16.gmra.mrb[0].mxu0 %v4675
        %v4714 = vpop.f32.mrb[0].mxu0
        %v4715 = vadd.f32 0.0, %v4714
        %v4716 = vpop.f32.mrb[0].mxu0
        %v4717 = vpop.f32.mrb[0].mxu0
        %v4718 = vpop.f32.mrb[0].mxu0
        %4719 = vdwg.mxu0
        %4720 = vmatprep.subr.bf16.mxu0 0
        %4721 = vmatpush1.bf16.msra.mxu0 %v1132
        %4722 = vmatprep.subr.bf16.mxu0 0
        %4723 = vmatpush1.bf16.msra.mxu0 %v1133
        %4724 = vmatprep.subr.bf16.mxu0 0
        %4725 = vmatpush1.bf16.msra.mxu0 %v1134
        %4726 = vmatprep.subr.bf16.mxu0 0
        %4727 = vmatpush1.bf16.msra.mxu0 %v1135
        %4728 = vmatprep.subr.bf16.mxu0 0
        %4729 = vmatpush1.bf16.msra.mxu0 %v1136
        %4730 = vmatprep.subr.bf16.mxu0 0
        %4731 = vmatpush1.bf16.msra.mxu0 %v1137
        %4732 = vmatprep.subr.bf16.mxu0 0
        %4733 = vmatpush1.bf16.msra.mxu0 %v1138
        %4734 = vmatprep.subr.bf16.mxu0 0
        %4735 = vmatpush1.bf16.msra.mxu0 %v1139
        %4736 = vmatprep.subr.bf16.mxu0 0
        %4737 = vmatpush1.bf16.msra.mxu0 %v1140
        %4738 = vmatprep.subr.bf16.mxu0 0
        %4739 = vmatpush1.bf16.msra.mxu0 0
        %4740 = vmatprep.subr.bf16.mxu0 0
        %4741 = vmatpush1.bf16.msra.mxu0 0
        %4742 = vmatprep.subr.bf16.mxu0 0
        %4743 = vmatpush1.bf16.msra.mxu0 0
        %4744 = vmatprep.subr.bf16.mxu0 0
        %4745 = vmatpush1.bf16.msra.mxu0 0
        %4746 = vmatprep.subr.bf16.mxu0 0
        %4747 = vmatpush1.bf16.msra.mxu0 0
        %4748 = vmatprep.subr.bf16.mxu0 0
        %4749 = vmatpush1.bf16.msra.mxu0 0
        %4750 = vmatprep.subr.bf16.mxu0 0
        %4751 = vmatpush1.bf16.msra.mxu0 0
        %4752 = vmatprep.mubr.bf16.mxu0 %v4678
        %4753 = vmatmul.mubr.bf16.gmra.mrb[0].mxu0 %v4675
        %v4754 = vpop.f32.mrb[0].mxu0
        %v4755 = vadd.f32 0.0, %v4754
        %v4756 = vpop.f32.mrb[0].mxu0
        %v4757 = vpop.f32.mrb[0].mxu0
        %v4758 = vpop.f32.mrb[0].mxu0
        %4759 = vdwg.mxu0
        %v4760 = vmax.f32 %v4715, %v4755
        %v4761 = vpack.c.bf16 %v4760, %v4760
        %4762 = vmatprep.subr.bf16.mxu0 %v611
        %4763 = vmatpush1.bf16.msra.mxu0 %v610
        %4764 = vmatprep.subr.bf16.mxu0 %v625
        %4765 = vmatpush1.bf16.msra.mxu0 %v622
        %4766 = vmatprep.subr.bf16.mxu0 0
        %4767 = vmatpush1.bf16.msra.mxu0 0
        %4768 = vmatprep.subr.bf16.mxu0 0
        %4769 = vmatpush1.bf16.msra.mxu0 0
        %4770 = vmatprep.subr.bf16.mxu0 0
        %4771 = vmatpush1.bf16.msra.mxu0 0
        %4772 = vmatprep.subr.bf16.mxu0 0
        %4773 = vmatpush1.bf16.msra.mxu0 0
        %4774 = vmatprep.subr.bf16.mxu0 0
        %4775 = vmatpush1.bf16.msra.mxu0 0
        %4776 = vmatprep.subr.bf16.mxu0 0
        %4777 = vmatpush1.bf16.msra.mxu0 0
        %4778 = vmatprep.subr.bf16.mxu0 0
        %4779 = vmatpush1.bf16.msra.mxu0 0
        %4780 = vmatprep.subr.bf16.mxu0 0
        %4781 = vmatpush1.bf16.msra.mxu0 0
        %4782 = vmatprep.subr.bf16.mxu0 0
        %4783 = vmatpush1.bf16.msra.mxu0 0
        %4784 = vmatprep.subr.bf16.mxu0 0
        %4785 = vmatpush1.bf16.msra.mxu0 0
        %4786 = vmatprep.subr.bf16.mxu0 0
        %4787 = vmatpush1.bf16.msra.mxu0 0
        %4788 = vmatprep.subr.bf16.mxu0 0
        %4789 = vmatpush1.bf16.msra.mxu0 0
        %4790 = vmatprep.subr.bf16.mxu0 0
        %4791 = vmatpush1.bf16.msra.mxu0 0
        %4792 = vmatprep.subr.bf16.mxu0 0
        %4793 = vmatpush1.bf16.msra.mxu0 0
        %4794 = vmatprep.mubr.bf16.mxu0 0
        %4795 = vmatmul.mubr.bf16.gmra.mrb[0].mxu0 %v4494
        %v4796 = vpop.f32.mrb[0].mxu0
        %v4797 = vadd.f32 0.0, %v4796
        %v4798 = vpop.f32.mrb[0].mxu0
        %v4799 = vadd.f32 0.0, %v4798
        %v4800 = vpop.f32.mrb[0].mxu0
        %v4801 = vpop.f32.mrb[0].mxu0
        %4802 = vdwg.mxu0
        %v4803 = vadd.f32 %v586, %v4797
        %v4804 = vadd.f32 %v590, %v4799
        %4805 = vmatprep.subr.bf16.mxu0 %v690
        %4806 = vmatpush1.bf16.msra.mxu0 %v689
        %4807 = vmatprep.subr.bf16.mxu0 %v702
        %4808 = vmatpush1.bf16.msra.mxu0 %v699
        %4809 = vmatprep.subr.bf16.mxu0 0
        %4810 = vmatpush1.bf16.msra.mxu0 0
        %4811 = vmatprep.subr.bf16.mxu0 0
        %4812 = vmatpush1.bf16.msra.mxu0 0
        %4813 = vmatprep.subr.bf16.mxu0 0
        %4814 = vmatpush1.bf16.msra.mxu0 0
        %4815 = vmatprep.subr.bf16.mxu0 0
        %4816 = vmatpush1.bf16.msra.mxu0 0
        %4817 = vmatprep.subr.bf16.mxu0 0
        %4818 = vmatpush1.bf16.msra.mxu0 0
        %4819 = vmatprep.subr.bf16.mxu0 0
        %4820 = vmatpush1.bf16.msra.mxu0 0
        %4821 = vmatprep.subr.bf16.mxu0 0
        %4822 = vmatpush1.bf16.msra.mxu0 0
        %4823 = vmatprep.subr.bf16.mxu0 0
        %4824 = vmatpush1.bf16.msra.mxu0 0
        %4825 = vmatprep.subr.bf16.mxu0 0
        %4826 = vmatpush1.bf16.msra.mxu0 0
        %4827 = vmatprep.subr.bf16.mxu0 0
        %4828 = vmatpush1.bf16.msra.mxu0 0
        %4829 = vmatprep.subr.bf16.mxu0 0
        %4830 = vmatpush1.bf16.msra.mxu0 0
        %4831 = vmatprep.subr.bf16.mxu0 0
        %4832 = vmatpush1.bf16.msra.mxu0 0
        %4833 = vmatprep.subr.bf16.mxu0 0
        %4834 = vmatpush1.bf16.msra.mxu0 0
        %4835 = vmatprep.subr.bf16.mxu0 0
        %4836 = vmatpush1.bf16.msra.mxu0 0
        %4837 = vmatprep.mubr.bf16.mxu0 0
        %4838 = vmatmul.mubr.bf16.gmra.mrb[0].mxu0 %v4628
        %v4839 = vpop.f32.mrb[0].mxu0
        %v4840 = vadd.f32 0.0, %v4839
        %v4841 = vpop.f32.mrb[0].mxu0
        %v4842 = vadd.f32 0.0, %v4841
        %v4843 = vpop.f32.mrb[0].mxu0
        %v4844 = vpop.f32.mrb[0].mxu0
        %4845 = vdwg.mxu0
        %v4846 = vadd.f32 %v4803, %v4840
        %v4847 = vadd.f32 %v4804, %v4842
        %s4848 = scalar_lea.vmem %s536, 96 [#allocation2]
        %v4849 = vld [vmem:[%s4848] sm:$0xf]
        %v4851 = vsel %vm616, %v4849, 0
        %4853 = vmatprep.subr.bf16.mxu0 %v767
        %4854 = vmatpush1.bf16.msra.mxu0 %v766
        %4855 = vmatprep.subr.bf16.mxu0 %v779
        %4856 = vmatpush1.bf16.msra.mxu0 %v776
        %4857 = vmatprep.subr.bf16.mxu0 0
        %4858 = vmatpush1.bf16.msra.mxu0 0
        %4859 = vmatprep.subr.bf16.mxu0 0
        %4860 = vmatpush1.bf16.msra.mxu0 0
        %4861 = vmatprep.subr.bf16.mxu0 0
        %4862 = vmatpush1.bf16.msra.mxu0 0
        %4863 = vmatprep.subr.bf16.mxu0 0
        %4864 = vmatpush1.bf16.msra.mxu0 0
        %4865 = vmatprep.subr.bf16.mxu0 0
        %4866 = vmatpush1.bf16.msra.mxu0 0
        %4867 = vmatprep.subr.bf16.mxu0 0
        %4868 = vmatpush1.bf16.msra.mxu0 0
        %4869 = vmatprep.subr.bf16.mxu0 0
        %4870 = vmatpush1.bf16.msra.mxu0 0
        %4871 = vmatprep.subr.bf16.mxu0 0
        %4872 = vmatpush1.bf16.msra.mxu0 0
        %4873 = vmatprep.subr.bf16.mxu0 0
        %4874 = vmatpush1.bf16.msra.mxu0 0
        %4875 = vmatprep.subr.bf16.mxu0 0
        %4876 = vmatpush1.bf16.msra.mxu0 0
        %4877 = vmatprep.subr.bf16.mxu0 0
        %4878 = vmatpush1.bf16.msra.mxu0 0
        %4879 = vmatprep.subr.bf16.mxu0 0
        %4880 = vmatpush1.bf16.msra.mxu0 0
        %4881 = vmatprep.subr.bf16.mxu0 0
        %4882 = vmatpush1.bf16.msra.mxu0 0
        %4883 = vmatprep.subr.bf16.mxu0 0
        %4884 = vmatpush1.bf16.msra.mxu0 0
        %4885 = vmatprep.mubr.bf16.mxu0 0
        %4886 = vmatmul.mubr.bf16.gmra.mrb[0].mxu0 %v4851
        %v4887 = vpop.f32.mrb[0].mxu0
        %v4888 = vadd.f32 0.0, %v4887
        %v4889 = vpop.f32.mrb[0].mxu0
        %v4890 = vadd.f32 0.0, %v4889
        %v4891 = vpop.f32.mrb[0].mxu0
        %v4892 = vpop.f32.mrb[0].mxu0
        %4893 = vdwg.mxu0
        %v4894 = vadd.f32 %v4846, %v4888
        %v4895 = vadd.f32 %v4847, %v4890
        %4896 = vmatprep.subr.bf16.mxu0 %v611
        %4897 = vmatpush1.bf16.msra.mxu0 %v610
        %4898 = vmatprep.subr.bf16.mxu0 %v625
        %4899 = vmatpush1.bf16.msra.mxu0 %v622
        %4900 = vmatprep.subr.bf16.mxu0 0
        %4901 = vmatpush1.bf16.msra.mxu0 0
        %4902 = vmatprep.subr.bf16.mxu0 0
        %4903 = vmatpush1.bf16.msra.mxu0 0
        %4904 = vmatprep.subr.bf16.mxu0 0
        %4905 = vmatpush1.bf16.msra.mxu0 0
        %4906 = vmatprep.subr.bf16.mxu0 0
        %4907 = vmatpush1.bf16.msra.mxu0 0
        %4908 = vmatprep.subr.bf16.mxu0 0
        %4909 = vmatpush1.bf16.msra.mxu0 0
        %4910 = vmatprep.subr.bf16.mxu0 0
        %4911 = vmatpush1.bf16.msra.mxu0 0
        %4912 = vmatprep.subr.bf16.mxu0 0
        %4913 = vmatpush1.bf16.msra.mxu0 0
        %4914 = vmatprep.subr.bf16.mxu0 0
        %4915 = vmatpush1.bf16.msra.mxu0 0
        %4916 = vmatprep.subr.bf16.mxu0 0
        %4917 = vmatpush1.bf16.msra.mxu0 0
        %4918 = vmatprep.subr.bf16.mxu0 0
        %4919 = vmatpush1.bf16.msra.mxu0 0
        %4920 = vmatprep.subr.bf16.mxu0 0
        %4921 = vmatpush1.bf16.msra.mxu0 0
        %4922 = vmatprep.subr.bf16.mxu0 0
        %4923 = vmatpush1.bf16.msra.mxu0 0
        %4924 = vmatprep.subr.bf16.mxu0 0
        %4925 = vmatpush1.bf16.msra.mxu0 0
        %4926 = vmatprep.subr.bf16.mxu0 0
        %4927 = vmatpush1.bf16.msra.mxu0 0
        %4928 = vmatprep.mubr.bf16.mxu0 0
        %4929 = vmatmul.mubr.bf16.gmra.mrb[0].mxu0 %v4628
        %v4930 = vpop.f32.mrb[0].mxu0
        %v4931 = vadd.f32 0.0, %v4930
        %v4932 = vpop.f32.mrb[0].mxu0
        %v4933 = vadd.f32 0.0, %v4932
        %v4934 = vpop.f32.mrb[0].mxu0
        %v4935 = vpop.f32.mrb[0].mxu0
        %4936 = vdwg.mxu0
        %v4937 = vadd.f32 %v586, %v4931
        %v4938 = vadd.f32 %v590, %v4933
        %4939 = vmatprep.subr.bf16.mxu0 %v690
        %4940 = vmatpush1.bf16.msra.mxu0 %v689
        %4941 = vmatprep.subr.bf16.mxu0 %v702
        %4942 = vmatpush1.bf16.msra.mxu0 %v699
        %4943 = vmatprep.subr.bf16.mxu0 0
        %4944 = vmatpush1.bf16.msra.mxu0 0
        %4945 = vmatprep.subr.bf16.mxu0 0
        %4946 = vmatpush1.bf16.msra.mxu0 0
        %4947 = vmatprep.subr.bf16.mxu0 0
        %4948 = vmatpush1.bf16.msra.mxu0 0
        %4949 = vmatprep.subr.bf16.mxu0 0
        %4950 = vmatpush1.bf16.msra.mxu0 0
        %4951 = vmatprep.subr.bf16.mxu0 0
        %4952 = vmatpush1.bf16.msra.mxu0 0
        %4953 = vmatprep.subr.bf16.mxu0 0
        %4954 = vmatpush1.bf16.msra.mxu0 0
        %4955 = vmatprep.subr.bf16.mxu0 0
        %4956 = vmatpush1.bf16.msra.mxu0 0
        %4957 = vmatprep.subr.bf16.mxu0 0
        %4958 = vmatpush1.bf16.msra.mxu0 0
        %4959 = vmatprep.subr.bf16.mxu0 0
        %4960 = vmatpush1.bf16.msra.mxu0 0
        %4961 = vmatprep.subr.bf16.mxu0 0
        %4962 = vmatpush1.bf16.msra.mxu0 0
        %4963 = vmatprep.subr.bf16.mxu0 0
        %4964 = vmatpush1.bf16.msra.mxu0 0
        %4965 = vmatprep.subr.bf16.mxu0 0
        %4966 = vmatpush1.bf16.msra.mxu0 0
        %4967 = vmatprep.subr.bf16.mxu0 0
        %4968 = vmatpush1.bf16.msra.mxu0 0
        %4969 = vmatprep.subr.bf16.mxu0 0
        %4970 = vmatpush1.bf16.msra.mxu0 0
        %4971 = vmatprep.mubr.bf16.mxu0 0
        %4972 = vmatmul.mubr.bf16.gmra.mrb[0].mxu0 %v4851
        %v4973 = vpop.f32.mrb[0].mxu0
        %v4974 = vadd.f32 0.0, %v4973
        %v4975 = vpop.f32.mrb[0].mxu0
        %v4976 = vadd.f32 0.0, %v4975
        %v4977 = vpop.f32.mrb[0].mxu0
        %v4978 = vpop.f32.mrb[0].mxu0
        %4979 = vdwg.mxu0
        %v4980 = vadd.f32 %v4937, %v4974
        %v4981 = vadd.f32 %v4938, %v4976
        %s4982 = scalar_lea.vmem %s536, 100 [#allocation2]
        %v4983 = vld [vmem:[%s4982] sm:$0xf]
        %v4985 = vsel %vm616, %v4983, 0
        %4987 = vmatprep.subr.bf16.mxu0 %v767
        %4988 = vmatpush1.bf16.msra.mxu0 %v766
        %4989 = vmatprep.subr.bf16.mxu0 %v779
        %4990 = vmatpush1.bf16.msra.mxu0 %v776
        %4991 = vmatprep.subr.bf16.mxu0 0
        %4992 = vmatpush1.bf16.msra.mxu0 0
        %4993 = vmatprep.subr.bf16.mxu0 0
        %4994 = vmatpush1.bf16.msra.mxu0 0
        %4995 = vmatprep.subr.bf16.mxu0 0
        %4996 = vmatpush1.bf16.msra.mxu0 0
        %4997 = vmatprep.subr.bf16.mxu0 0
        %4998 = vmatpush1.bf16.msra.mxu0 0
        %4999 = vmatprep.subr.bf16.mxu0 0
        %5000 = vmatpush1.bf16.msra.mxu0 0
        %5001 = vmatprep.subr.bf16.mxu0 0
        %5002 = vmatpush1.bf16.msra.mxu0 0
        %5003 = vmatprep.subr.bf16.mxu0 0
        %5004 = vmatpush1.bf16.msra.mxu0 0
        %5005 = vmatprep.subr.bf16.mxu0 0
        %5006 = vmatpush1.bf16.msra.mxu0 0
        %5007 = vmatprep.subr.bf16.mxu0 0
        %5008 = vmatpush1.bf16.msra.mxu0 0
        %5009 = vmatprep.subr.bf16.mxu0 0
        %5010 = vmatpush1.bf16.msra.mxu0 0
        %5011 = vmatprep.subr.bf16.mxu0 0
        %5012 = vmatpush1.bf16.msra.mxu0 0
        %5013 = vmatprep.subr.bf16.mxu0 0
        %5014 = vmatpush1.bf16.msra.mxu0 0
        %5015 = vmatprep.subr.bf16.mxu0 0
        %5016 = vmatpush1.bf16.msra.mxu0 0
        %5017 = vmatprep.subr.bf16.mxu0 0
        %5018 = vmatpush1.bf16.msra.mxu0 0
        %5019 = vmatprep.mubr.bf16.mxu0 0
        %5020 = vmatmul.mubr.bf16.gmra.mrb[0].mxu0 %v4985
        %v5021 = vpop.f32.mrb[0].mxu0
        %v5022 = vadd.f32 0.0, %v5021
        %v5023 = vpop.f32.mrb[0].mxu0
        %v5024 = vadd.f32 0.0, %v5023
        %v5025 = vpop.f32.mrb[0].mxu0
        %v5026 = vpop.f32.mrb[0].mxu0
        %5027 = vdwg.mxu0
        %v5028 = vadd.f32 %v4980, %v5022
        %v5029 = vadd.f32 %v4981, %v5024
        %v5030 = vmax.f32 %v4894, %v5028
        %v5031 = vmax.f32 %v4895, %v5029
        %v5032 = vpack.c.bf16 %v5030, %v5030
        %v5033 = vpack.c.bf16 %v5031, %v5031
        %v5035 = vsel %vm1034, %v5033, 0
        %5037 = vmatprep.subr.bf16.mxu0 0
        %5038 = vmatpush1.bf16.msra.mxu0 %v1016
        %5039 = vmatprep.subr.bf16.mxu0 0
        %5040 = vmatpush1.bf16.msra.mxu0 %v1017
        %5041 = vmatprep.subr.bf16.mxu0 0
        %5042 = vmatpush1.bf16.msra.mxu0 %v1018
        %5043 = vmatprep.subr.bf16.mxu0 0
        %5044 = vmatpush1.bf16.msra.mxu0 %v1019
        %5045 = vmatprep.subr.bf16.mxu0 0
        %5046 = vmatpush1.bf16.msra.mxu0 %v1020
        %5047 = vmatprep.subr.bf16.mxu0 0
        %5048 = vmatpush1.bf16.msra.mxu0 %v1021
        %5049 = vmatprep.subr.bf16.mxu0 0
        %5050 = vmatpush1.bf16.msra.mxu0 %v1022
        %5051 = vmatprep.subr.bf16.mxu0 0
        %5052 = vmatpush1.bf16.msra.mxu0 %v1023
        %5053 = vmatprep.subr.bf16.mxu0 0
        %5054 = vmatpush1.bf16.msra.mxu0 %v1024
        %5055 = vmatprep.subr.bf16.mxu0 0
        %5056 = vmatpush1.bf16.msra.mxu0 0
        %5057 = vmatprep.subr.bf16.mxu0 0
        %5058 = vmatpush1.bf16.msra.mxu0 0
        %5059 = vmatprep.subr.bf16.mxu0 0
        %5060 = vmatpush1.bf16.msra.mxu0 0
        %5061 = vmatprep.subr.bf16.mxu0 0
        %5062 = vmatpush1.bf16.msra.mxu0 0
        %5063 = vmatprep.subr.bf16.mxu0 0
        %5064 = vmatpush1.bf16.msra.mxu0 0
        %5065 = vmatprep.subr.bf16.mxu0 0
        %5066 = vmatpush1.bf16.msra.mxu0 0
        %5067 = vmatprep.subr.bf16.mxu0 0
        %5068 = vmatpush1.bf16.msra.mxu0 0
        %5069 = vmatprep.mubr.bf16.mxu0 %v5035
        %5070 = vmatmul.mubr.bf16.gmra.mrb[0].mxu0 %v5032
        %v5071 = vpop.f32.mrb[0].mxu0
        %v5072 = vadd.f32 0.0, %v5071
        %v5073 = vpop.f32.mrb[0].mxu0
        %v5074 = vpop.f32.mrb[0].mxu0
        %v5075 = vpop.f32.mrb[0].mxu0
        %5076 = vdwg.mxu0
        %5077 = vmatprep.subr.bf16.mxu0 0
        %5078 = vmatpush1.bf16.msra.mxu0 %v1132
        %5079 = vmatprep.subr.bf16.mxu0 0
        %5080 = vmatpush1.bf16.msra.mxu0 %v1133
        %5081 = vmatprep.subr.bf16.mxu0 0
        %5082 = vmatpush1.bf16.msra.mxu0 %v1134
        %5083 = vmatprep.subr.bf16.mxu0 0
        %5084 = vmatpush1.bf16.msra.mxu0 %v1135
        %5085 = vmatprep.subr.bf16.mxu0 0
        %5086 = vmatpush1.bf16.msra.mxu0 %v1136
        %5087 = vmatprep.subr.bf16.mxu0 0
        %5088 = vmatpush1.bf16.msra.mxu0 %v1137
        %5089 = vmatprep.subr.bf16.mxu0 0
        %5090 = vmatpush1.bf16.msra.mxu0 %v1138
        %5091 = vmatprep.subr.bf16.mxu0 0
        %5092 = vmatpush1.bf16.msra.mxu0 %v1139
        %5093 = vmatprep.subr.bf16.mxu0 0
        %5094 = vmatpush1.bf16.msra.mxu0 %v1140
        %5095 = vmatprep.subr.bf16.mxu0 0
        %5096 = vmatpush1.bf16.msra.mxu0 0
        %5097 = vmatprep.subr.bf16.mxu0 0
        %5098 = vmatpush1.bf16.msra.mxu0 0
        %5099 = vmatprep.subr.bf16.mxu0 0
        %5100 = vmatpush1.bf16.msra.mxu0 0
        %5101 = vmatprep.subr.bf16.mxu0 0
        %5102 = vmatpush1.bf16.msra.mxu0 0
        %5103 = vmatprep.subr.bf16.mxu0 0
        %5104 = vmatpush1.bf16.msra.mxu0 0
        %5105 = vmatprep.subr.bf16.mxu0 0
        %5106 = vmatpush1.bf16.msra.mxu0 0
        %5107 = vmatprep.subr.bf16.mxu0 0
        %5108 = vmatpush1.bf16.msra.mxu0 0
        %5109 = vmatprep.mubr.bf16.mxu0 %v5035
        %5110 = vmatmul.mubr.bf16.gmra.mrb[0].mxu0 %v5032
        %v5111 = vpop.f32.mrb[0].mxu0
        %v5112 = vadd.f32 0.0, %v5111
        %v5113 = vpop.f32.mrb[0].mxu0
        %v5114 = vpop.f32.mrb[0].mxu0
        %v5115 = vpop.f32.mrb[0].mxu0
        %5116 = vdwg.mxu0
        %v5117 = vmax.f32 %v5072, %v5112
        %v5118 = vpack.c.bf16 %v5117, %v5117
        %v5119 = vld [vmem:[%s6] sm:$0x3]
        %v5121 = vlaneseq
        %v5122 = vshrl.u32 %v5121, 7
        %v5123 = vsub.s32 0, %v5122
        %v5124 = vrot.slane %v5119, %v5123
        %v5125 = vlaneseq
        %v5126 = vshrl.u32 %v5125, 7
        %v5127 = vsub.s32 1, %v5126
        %v5128 = vrot.slane %v5119, %v5127
        %v5131 = vld [vmem:[%s5] sm:$0xff]
        %v5132 = vld [vmem:[%s5 + $0x8] sm:$0xff]
        %v5133 = vld [vmem:[%s5 + $0x10] sm:$0xff]
        %v5134 = vld [vmem:[%s5 + $0x18] sm:$0xff]
        %v5135 = vld [vmem:[%s5 + $0x20] sm:$0xff]
        %v5136 = vld [vmem:[%s5 + $0x28] sm:$0xff]
        %v5137 = vld [vmem:[%s5 + $0x30] sm:$0xff]
        %v5138 = vld [vmem:[%s5 + $0x38] sm:$0xff]
        %v5139 = vld [vmem:[%s5 + $0x40] sm:$0xff]
        %v5149 = vunpack.c.l.b16 %v5131
        %v5150 = vunpack.c.h.b16 %v5131
        %v5151 = vunpack.c.l.b16 %v5132
        %v5152 = vunpack.c.h.b16 %v5132
        %v5153 = vunpack.c.l.b16 %v5133
        %v5154 = vunpack.c.h.b16 %v5133
        %v5155 = vunpack.c.l.b16 %v5134
        %v5156 = vunpack.c.h.b16 %v5134
        %v5157 = vunpack.c.l.b16 %v5135
        %v5158 = vunpack.c.h.b16 %v5135
        %v5159 = vunpack.c.l.b16 %v5136
        %v5160 = vunpack.c.h.b16 %v5136
        %v5161 = vunpack.c.l.b16 %v5137
        %v5162 = vunpack.c.h.b16 %v5137
        %v5163 = vunpack.c.l.b16 %v5138
        %v5164 = vunpack.c.h.b16 %v5138
        %v5165 = vunpack.c.l.b16 %v5139
        %v5166 = vunpack.c.h.b16 %v5139
        %v5167 = vpack.c.b16 %v5151, %v5149
        %v5168 = vpack.c.b16 %v5152, %v5150
        %v5169 = vpack.c.b16 %v5155, %v5153
        %v5170 = vpack.c.b16 %v5156, %v5154
        %v5171 = vpack.c.b16 %v5159, %v5157
        %v5172 = vpack.c.b16 %v5160, %v5158
        %v5173 = vpack.c.b16 %v5163, %v5161
        %v5174 = vpack.c.b16 %v5164, %v5162
        %v5175 = vpack.c.b16 %v5165, %v5165
        %v5176 = vpack.c.b16 %v5166, %v5166
        %vm5185 = vcmask 588800
        %v5187 = vsel %vm5185, %v1191, 0
        %vm5189 = vcmask 1043456
        %v5191 = vsel %vm5189, %v5175, 0
        %v5194 = vsel %vm5189, %v5176, 0
        %5196 = vmatprep.subr.bf16.mxu0 %v5168
        %5197 = vmatpush1.bf16.msra.mxu0 %v5167
        %5198 = vmatprep.subr.bf16.mxu0 %v5170
        %5199 = vmatpush1.bf16.msra.mxu0 %v5169
        %5200 = vmatprep.subr.bf16.mxu0 %v5172
        %5201 = vmatpush1.bf16.msra.mxu0 %v5171
        %5202 = vmatprep.subr.bf16.mxu0 %v5174
        %5203 = vmatpush1.bf16.msra.mxu0 %v5173
        %5204 = vmatprep.subr.bf16.mxu0 %v5194
        %5205 = vmatpush1.bf16.msra.mxu0 %v5191
        %5206 = vmatprep.subr.bf16.mxu0 0
        %5207 = vmatpush1.bf16.msra.mxu0 0
        %5208 = vmatprep.subr.bf16.mxu0 0
        %5209 = vmatpush1.bf16.msra.mxu0 0
        %5210 = vmatprep.subr.bf16.mxu0 0
        %5211 = vmatpush1.bf16.msra.mxu0 0
        %5212 = vmatprep.subr.bf16.mxu0 0
        %5213 = vmatpush1.bf16.msra.mxu0 0
        %5214 = vmatprep.subr.bf16.mxu0 0
        %5215 = vmatpush1.bf16.msra.mxu0 0
        %5216 = vmatprep.subr.bf16.mxu0 0
        %5217 = vmatpush1.bf16.msra.mxu0 0
        %5218 = vmatprep.subr.bf16.mxu0 0
        %5219 = vmatpush1.bf16.msra.mxu0 0
        %5220 = vmatprep.subr.bf16.mxu0 0
        %5221 = vmatpush1.bf16.msra.mxu0 0
        %5222 = vmatprep.subr.bf16.mxu0 0
        %5223 = vmatpush1.bf16.msra.mxu0 0
        %5224 = vmatprep.subr.bf16.mxu0 0
        %5225 = vmatpush1.bf16.msra.mxu0 0
        %5226 = vmatprep.subr.bf16.mxu0 0
        %5227 = vmatpush1.bf16.msra.mxu0 0
        %5228 = vmatprep.mubr.bf16.mxu0 0
        %5229 = vmatmul.mubr.bf16.gmra.mrb[0].mxu0 %v5187
        %v5230 = vpop.f32.mrb[0].mxu0
        %v5231 = vadd.f32 0.0, %v5230
        %v5232 = vpop.f32.mrb[0].mxu0
        %v5233 = vadd.f32 0.0, %v5232
        %v5234 = vpop.f32.mrb[0].mxu0
        %v5235 = vpop.f32.mrb[0].mxu0
        %5236 = vdwg.mxu0
        %v5237 = vadd.f32 %v5124, %v5231
        %v5238 = vadd.f32 %v5128, %v5233
        %s5239 = scalar_lea.vmem %s5, 72
        %v5240 = vld [vmem:[%s5239] sm:$0xff]
        %v5241 = vld [vmem:[%s5239 + $0x8] sm:$0xff]
        %v5242 = vld [vmem:[%s5239 + $0x10] sm:$0xff]
        %v5243 = vld [vmem:[%s5239 + $0x18] sm:$0xff]
        %v5244 = vld [vmem:[%s5239 + $0x20] sm:$0xff]
        %v5245 = vld [vmem:[%s5239 + $0x28] sm:$0xff]
        %v5246 = vld [vmem:[%s5239 + $0x30] sm:$0xff]
        %v5247 = vld [vmem:[%s5239 + $0x38] sm:$0xff]
        %v5248 = vld [vmem:[%s5239 + $0x40] sm:$0xff]
        %v5258 = vunpack.c.l.b16 %v5240
        %v5259 = vunpack.c.h.b16 %v5240
        %v5260 = vunpack.c.l.b16 %v5241
        %v5261 = vunpack.c.h.b16 %v5241
        %v5262 = vunpack.c.l.b16 %v5242
        %v5263 = vunpack.c.h.b16 %v5242
        %v5264 = vunpack.c.l.b16 %v5243
        %v5265 = vunpack.c.h.b16 %v5243
        %v5266 = vunpack.c.l.b16 %v5244
        %v5267 = vunpack.c.h.b16 %v5244
        %v5268 = vunpack.c.l.b16 %v5245
        %v5269 = vunpack.c.h.b16 %v5245
        %v5270 = vunpack.c.l.b16 %v5246
        %v5271 = vunpack.c.h.b16 %v5246
        %v5272 = vunpack.c.l.b16 %v5247
        %v5273 = vunpack.c.h.b16 %v5247
        %v5274 = vunpack.c.l.b16 %v5248
        %v5275 = vunpack.c.h.b16 %v5248
        %v5276 = vpack.c.b16 %v5260, %v5258
        %v5277 = vpack.c.b16 %v5261, %v5259
        %v5278 = vpack.c.b16 %v5264, %v5262
        %v5279 = vpack.c.b16 %v5265, %v5263
        %v5280 = vpack.c.b16 %v5268, %v5266
        %v5281 = vpack.c.b16 %v5269, %v5267
        %v5282 = vpack.c.b16 %v5272, %v5270
        %v5283 = vpack.c.b16 %v5273, %v5271
        %v5284 = vpack.c.b16 %v5274, %v5274
        %v5285 = vpack.c.b16 %v5275, %v5275
        %v5295 = vsel %vm5185, %v1548, 0
        %v5298 = vsel %vm5189, %v5284, 0
        %v5301 = vsel %vm5189, %v5285, 0
        %5303 = vmatprep.subr.bf16.mxu0 %v5277
        %5304 = vmatpush1.bf16.msra.mxu0 %v5276
        %5305 = vmatprep.subr.bf16.mxu0 %v5279
        %5306 = vmatpush1.bf16.msra.mxu0 %v5278
        %5307 = vmatprep.subr.bf16.mxu0 %v5281
        %5308 = vmatpush1.bf16.msra.mxu0 %v5280
        %5309 = vmatprep.subr.bf16.mxu0 %v5283
        %5310 = vmatpush1.bf16.msra.mxu0 %v5282
        %5311 = vmatprep.subr.bf16.mxu0 %v5301
        %5312 = vmatpush1.bf16.msra.mxu0 %v5298
        %5313 = vmatprep.subr.bf16.mxu0 0
        %5314 = vmatpush1.bf16.msra.mxu0 0
        %5315 = vmatprep.subr.bf16.mxu0 0
        %5316 = vmatpush1.bf16.msra.mxu0 0
        %5317 = vmatprep.subr.bf16.mxu0 0
        %5318 = vmatpush1.bf16.msra.mxu0 0
        %5319 = vmatprep.subr.bf16.mxu0 0
        %5320 = vmatpush1.bf16.msra.mxu0 0
        %5321 = vmatprep.subr.bf16.mxu0 0
        %5322 = vmatpush1.bf16.msra.mxu0 0
        %5323 = vmatprep.subr.bf16.mxu0 0
        %5324 = vmatpush1.bf16.msra.mxu0 0
        %5325 = vmatprep.subr.bf16.mxu0 0
        %5326 = vmatpush1.bf16.msra.mxu0 0
        %5327 = vmatprep.subr.bf16.mxu0 0
        %5328 = vmatpush1.bf16.msra.mxu0 0
        %5329 = vmatprep.subr.bf16.mxu0 0
        %5330 = vmatpush1.bf16.msra.mxu0 0
        %5331 = vmatprep.subr.bf16.mxu0 0
        %5332 = vmatpush1.bf16.msra.mxu0 0
        %5333 = vmatprep.subr.bf16.mxu0 0
        %5334 = vmatpush1.bf16.msra.mxu0 0
        %5335 = vmatprep.mubr.bf16.mxu0 0
        %5336 = vmatmul.mubr.bf16.gmra.mrb[0].mxu0 %v5295
        %v5337 = vpop.f32.mrb[0].mxu0
        %v5338 = vadd.f32 0.0, %v5337
        %v5339 = vpop.f32.mrb[0].mxu0
        %v5340 = vadd.f32 0.0, %v5339
        %v5341 = vpop.f32.mrb[0].mxu0
        %v5342 = vpop.f32.mrb[0].mxu0
        %5343 = vdwg.mxu0
        %v5344 = vadd.f32 %v5237, %v5338
        %v5345 = vadd.f32 %v5238, %v5340
        %s5346 = scalar_lea.vmem %s5, 144
        %v5347 = vld [vmem:[%s5346] sm:$0xff]
        %v5348 = vld [vmem:[%s5346 + $0x8] sm:$0xff]
        %v5349 = vld [vmem:[%s5346 + $0x10] sm:$0xff]
        %v5350 = vld [vmem:[%s5346 + $0x18] sm:$0xff]
        %v5351 = vld [vmem:[%s5346 + $0x20] sm:$0xff]
        %v5352 = vld [vmem:[%s5346 + $0x28] sm:$0xff]
        %v5353 = vld [vmem:[%s5346 + $0x30] sm:$0xff]
        %v5354 = vld [vmem:[%s5346 + $0x38] sm:$0xff]
        %v5355 = vld [vmem:[%s5346 + $0x40] sm:$0xff]
        %v5365 = vunpack.c.l.b16 %v5347
        %v5366 = vunpack.c.h.b16 %v5347
        %v5367 = vunpack.c.l.b16 %v5348
        %v5368 = vunpack.c.h.b16 %v5348
        %v5369 = vunpack.c.l.b16 %v5349
        %v5370 = vunpack.c.h.b16 %v5349
        %v5371 = vunpack.c.l.b16 %v5350
        %v5372 = vunpack.c.h.b16 %v5350
        %v5373 = vunpack.c.l.b16 %v5351
        %v5374 = vunpack.c.h.b16 %v5351
        %v5375 = vunpack.c.l.b16 %v5352
        %v5376 = vunpack.c.h.b16 %v5352
        %v5377 = vunpack.c.l.b16 %v5353
        %v5378 = vunpack.c.h.b16 %v5353
        %v5379 = vunpack.c.l.b16 %v5354
        %v5380 = vunpack.c.h.b16 %v5354
        %v5381 = vunpack.c.l.b16 %v5355
        %v5382 = vunpack.c.h.b16 %v5355
        %v5383 = vpack.c.b16 %v5367, %v5365
        %v5384 = vpack.c.b16 %v5368, %v5366
        %v5385 = vpack.c.b16 %v5371, %v5369
        %v5386 = vpack.c.b16 %v5372, %v5370
        %v5387 = vpack.c.b16 %v5375, %v5373
        %v5388 = vpack.c.b16 %v5376, %v5374
        %v5389 = vpack.c.b16 %v5379, %v5377
        %v5390 = vpack.c.b16 %v5380, %v5378
        %v5391 = vpack.c.b16 %v5381, %v5381
        %v5392 = vpack.c.b16 %v5382, %v5382
        %v5402 = vsel %vm5185, %v1905, 0
        %v5405 = vsel %vm5189, %v5391, 0
        %v5408 = vsel %vm5189, %v5392, 0
        %5410 = vmatprep.subr.bf16.mxu0 %v5384
        %5411 = vmatpush1.bf16.msra.mxu0 %v5383
        %5412 = vmatprep.subr.bf16.mxu0 %v5386
        %5413 = vmatpush1.bf16.msra.mxu0 %v5385
        %5414 = vmatprep.subr.bf16.mxu0 %v5388
        %5415 = vmatpush1.bf16.msra.mxu0 %v5387
        %5416 = vmatprep.subr.bf16.mxu0 %v5390
        %5417 = vmatpush1.bf16.msra.mxu0 %v5389
        %5418 = vmatprep.subr.bf16.mxu0 %v5408
        %5419 = vmatpush1.bf16.msra.mxu0 %v5405
        %5420 = vmatprep.subr.bf16.mxu0 0
        %5421 = vmatpush1.bf16.msra.mxu0 0
        %5422 = vmatprep.subr.bf16.mxu0 0
        %5423 = vmatpush1.bf16.msra.mxu0 0
        %5424 = vmatprep.subr.bf16.mxu0 0
        %5425 = vmatpush1.bf16.msra.mxu0 0
        %5426 = vmatprep.subr.bf16.mxu0 0
        %5427 = vmatpush1.bf16.msra.mxu0 0
        %5428 = vmatprep.subr.bf16.mxu0 0
        %5429 = vmatpush1.bf16.msra.mxu0 0
        %5430 = vmatprep.subr.bf16.mxu0 0
        %5431 = vmatpush1.bf16.msra.mxu0 0
        %5432 = vmatprep.subr.bf16.mxu0 0
        %5433 = vmatpush1.bf16.msra.mxu0 0
        %5434 = vmatprep.subr.bf16.mxu0 0
        %5435 = vmatpush1.bf16.msra.mxu0 0
        %5436 = vmatprep.subr.bf16.mxu0 0
        %5437 = vmatpush1.bf16.msra.mxu0 0
        %5438 = vmatprep.subr.bf16.mxu0 0
        %5439 = vmatpush1.bf16.msra.mxu0 0
        %5440 = vmatprep.subr.bf16.mxu0 0
        %5441 = vmatpush1.bf16.msra.mxu0 0
        %5442 = vmatprep.mubr.bf16.mxu0 0
        %5443 = vmatmul.mubr.bf16.gmra.mrb[0].mxu0 %v5402
        %v5444 = vpop.f32.mrb[0].mxu0
        %v5445 = vadd.f32 0.0, %v5444
        %v5446 = vpop.f32.mrb[0].mxu0
        %v5447 = vadd.f32 0.0, %v5446
        %v5448 = vpop.f32.mrb[0].mxu0
        %v5449 = vpop.f32.mrb[0].mxu0
        %5450 = vdwg.mxu0
        %v5451 = vadd.f32 %v5344, %v5445
        %v5452 = vadd.f32 %v5345, %v5447
        %5453 = vmatprep.subr.bf16.mxu0 %v5168
        %5454 = vmatpush1.bf16.msra.mxu0 %v5167
        %5455 = vmatprep.subr.bf16.mxu0 %v5170
        %5456 = vmatpush1.bf16.msra.mxu0 %v5169
        %5457 = vmatprep.subr.bf16.mxu0 %v5172
        %5458 = vmatpush1.bf16.msra.mxu0 %v5171
        %5459 = vmatprep.subr.bf16.mxu0 %v5174
        %5460 = vmatpush1.bf16.msra.mxu0 %v5173
        %5461 = vmatprep.subr.bf16.mxu0 %v5194
        %5462 = vmatpush1.bf16.msra.mxu0 %v5191
        %5463 = vmatprep.subr.bf16.mxu0 0
        %5464 = vmatpush1.bf16.msra.mxu0 0
        %5465 = vmatprep.subr.bf16.mxu0 0
        %5466 = vmatpush1.bf16.msra.mxu0 0
        %5467 = vmatprep.subr.bf16.mxu0 0
        %5468 = vmatpush1.bf16.msra.mxu0 0
        %5469 = vmatprep.subr.bf16.mxu0 0
        %5470 = vmatpush1.bf16.msra.mxu0 0
        %5471 = vmatprep.subr.bf16.mxu0 0
        %5472 = vmatpush1.bf16.msra.mxu0 0
        %5473 = vmatprep.subr.bf16.mxu0 0
        %5474 = vmatpush1.bf16.msra.mxu0 0
        %5475 = vmatprep.subr.bf16.mxu0 0
        %5476 = vmatpush1.bf16.msra.mxu0 0
        %5477 = vmatprep.subr.bf16.mxu0 0
        %5478 = vmatpush1.bf16.msra.mxu0 0
        %5479 = vmatprep.subr.bf16.mxu0 0
        %5480 = vmatpush1.bf16.msra.mxu0 0
        %5481 = vmatprep.subr.bf16.mxu0 0
        %5482 = vmatpush1.bf16.msra.mxu0 0
        %5483 = vmatprep.subr.bf16.mxu0 0
        %5484 = vmatpush1.bf16.msra.mxu0 0
        %5485 = vmatprep.mubr.bf16.mxu0 0
        %5486 = vmatmul.mubr.bf16.gmra.mrb[0].mxu0 %v5295
        %v5487 = vpop.f32.mrb[0].mxu0
        %v5488 = vadd.f32 0.0, %v5487
        %v5489 = vpop.f32.mrb[0].mxu0
        %v5490 = vadd.f32 0.0, %v5489
        %v5491 = vpop.f32.mrb[0].mxu0
        %v5492 = vpop.f32.mrb[0].mxu0
        %5493 = vdwg.mxu0
        %v5494 = vadd.f32 %v5124, %v5488
        %v5495 = vadd.f32 %v5128, %v5490
        %5496 = vmatprep.subr.bf16.mxu0 %v5277
        %5497 = vmatpush1.bf16.msra.mxu0 %v5276
        %5498 = vmatprep.subr.bf16.mxu0 %v5279
        %5499 = vmatpush1.bf16.msra.mxu0 %v5278
        %5500 = vmatprep.subr.bf16.mxu0 %v5281
        %5501 = vmatpush1.bf16.msra.mxu0 %v5280
        %5502 = vmatprep.subr.bf16.mxu0 %v5283
        %5503 = vmatpush1.bf16.msra.mxu0 %v5282
        %5504 = vmatprep.subr.bf16.mxu0 %v5301
        %5505 = vmatpush1.bf16.msra.mxu0 %v5298
        %5506 = vmatprep.subr.bf16.mxu0 0
        %5507 = vmatpush1.bf16.msra.mxu0 0
        %5508 = vmatprep.subr.bf16.mxu0 0
        %5509 = vmatpush1.bf16.msra.mxu0 0
        %5510 = vmatprep.subr.bf16.mxu0 0
        %5511 = vmatpush1.bf16.msra.mxu0 0
        %5512 = vmatprep.subr.bf16.mxu0 0
        %5513 = vmatpush1.bf16.msra.mxu0 0
        %5514 = vmatprep.subr.bf16.mxu0 0
        %5515 = vmatpush1.bf16.msra.mxu0 0
        %5516 = vmatprep.subr.bf16.mxu0 0
        %5517 = vmatpush1.bf16.msra.mxu0 0
        %5518 = vmatprep.subr.bf16.mxu0 0
        %5519 = vmatpush1.bf16.msra.mxu0 0
        %5520 = vmatprep.subr.bf16.mxu0 0
        %5521 = vmatpush1.bf16.msra.mxu0 0
        %5522 = vmatprep.subr.bf16.mxu0 0
        %5523 = vmatpush1.bf16.msra.mxu0 0
        %5524 = vmatprep.subr.bf16.mxu0 0
        %5525 = vmatpush1.bf16.msra.mxu0 0
        %5526 = vmatprep.subr.bf16.mxu0 0
        %5527 = vmatpush1.bf16.msra.mxu0 0
        %5528 = vmatprep.mubr.bf16.mxu0 0
        %5529 = vmatmul.mubr.bf16.gmra.mrb[0].mxu0 %v5402
        %v5530 = vpop.f32.mrb[0].mxu0
        %v5531 = vadd.f32 0.0, %v5530
        %v5532 = vpop.f32.mrb[0].mxu0
        %v5533 = vadd.f32 0.0, %v5532
        %v5534 = vpop.f32.mrb[0].mxu0
        %v5535 = vpop.f32.mrb[0].mxu0
        %5536 = vdwg.mxu0
        %v5537 = vadd.f32 %v5494, %v5531
        %v5538 = vadd.f32 %v5495, %v5533
        %v5540 = vsel %vm5185, %v2262, 0
        %5542 = vmatprep.subr.bf16.mxu0 %v5384
        %5543 = vmatpush1.bf16.msra.mxu0 %v5383
        %5544 = vmatprep.subr.bf16.mxu0 %v5386
        %5545 = vmatpush1.bf16.msra.mxu0 %v5385
        %5546 = vmatprep.subr.bf16.mxu0 %v5388
        %5547 = vmatpush1.bf16.msra.mxu0 %v5387
        %5548 = vmatprep.subr.bf16.mxu0 %v5390
        %5549 = vmatpush1.bf16.msra.mxu0 %v5389
        %5550 = vmatprep.subr.bf16.mxu0 %v5408
        %5551 = vmatpush1.bf16.msra.mxu0 %v5405
        %5552 = vmatprep.subr.bf16.mxu0 0
        %5553 = vmatpush1.bf16.msra.mxu0 0
        %5554 = vmatprep.subr.bf16.mxu0 0
        %5555 = vmatpush1.bf16.msra.mxu0 0
        %5556 = vmatprep.subr.bf16.mxu0 0
        %5557 = vmatpush1.bf16.msra.mxu0 0
        %5558 = vmatprep.subr.bf16.mxu0 0
        %5559 = vmatpush1.bf16.msra.mxu0 0
        %5560 = vmatprep.subr.bf16.mxu0 0
        %5561 = vmatpush1.bf16.msra.mxu0 0
        %5562 = vmatprep.subr.bf16.mxu0 0
        %5563 = vmatpush1.bf16.msra.mxu0 0
        %5564 = vmatprep.subr.bf16.mxu0 0
        %5565 = vmatpush1.bf16.msra.mxu0 0
        %5566 = vmatprep.subr.bf16.mxu0 0
        %5567 = vmatpush1.bf16.msra.mxu0 0
        %5568 = vmatprep.subr.bf16.mxu0 0
        %5569 = vmatpush1.bf16.msra.mxu0 0
        %5570 = vmatprep.subr.bf16.mxu0 0
        %5571 = vmatpush1.bf16.msra.mxu0 0
        %5572 = vmatprep.subr.bf16.mxu0 0
        %5573 = vmatpush1.bf16.msra.mxu0 0
        %5574 = vmatprep.mubr.bf16.mxu0 0
        %5575 = vmatmul.mubr.bf16.gmra.mrb[0].mxu0 %v5540
        %v5576 = vpop.f32.mrb[0].mxu0
        %v5577 = vadd.f32 0.0, %v5576
        %v5578 = vpop.f32.mrb[0].mxu0
        %v5579 = vadd.f32 0.0, %v5578
        %v5580 = vpop.f32.mrb[0].mxu0
        %v5581 = vpop.f32.mrb[0].mxu0
        %5582 = vdwg.mxu0
        %v5583 = vadd.f32 %v5537, %v5577
        %v5584 = vadd.f32 %v5538, %v5579
        %v5585 = vmax.f32 %v5451, %v5583
        %v5586 = vmax.f32 %v5452, %v5584
        %v5587 = vpack.c.bf16 %v5585, %v5585
        %v5588 = vpack.c.bf16 %v5586, %v5586
        %v5589 = vld [vmem:[%s7] sm:$0xf]
        %v5590 = vld [vmem:[%s7 + $0x4] sm:$0xf]
        %v5591 = vld [vmem:[%s7 + $0x8] sm:$0xf]
        %v5592 = vld [vmem:[%s7 + $0xc] sm:$0xf]
        %v5593 = vld [vmem:[%s7 + $0x10] sm:$0xf]
        %v5594 = vld [vmem:[%s7 + $0x14] sm:$0xf]
        %v5595 = vld [vmem:[%s7 + $0x18] sm:$0xf]
        %v5596 = vld [vmem:[%s7 + $0x1c] sm:$0xf]
        %v5597 = vld [vmem:[%s7 + $0x20] sm:$0xf]
        %v5598 = vld [vmem:[%s7 + $0x24] sm:$0xf]
        %v5599 = vld [vmem:[%s7 + $0x28] sm:$0xf]
        %v5600 = vld [vmem:[%s7 + $0x2c] sm:$0xf]
        %v5601 = vld [vmem:[%s7 + $0x30] sm:$0xf]
        %v5602 = vld [vmem:[%s7 + $0x34] sm:$0xf]
        %v5603 = vld [vmem:[%s7 + $0x38] sm:$0xf]
        %v5604 = vld [vmem:[%s7 + $0x3c] sm:$0xf]
        %v5605 = vld [vmem:[%s7 + $0x40] sm:$0xf]
        %v5606 = vld [vmem:[%s7 + $0x44] sm:$0xf]
        %v5607 = vld [vmem:[%s7 + $0x48] sm:$0xf]
        %v5608 = vld [vmem:[%s7 + $0x4c] sm:$0xf]
        %v5629 = vunpack.c.l.b16 %v5589
        %v5630 = vunpack.c.l.b16 %v5590
        %v5631 = vunpack.c.l.b16 %v5591
        %v5632 = vunpack.c.l.b16 %v5592
        %v5633 = vunpack.c.l.b16 %v5593
        %v5634 = vunpack.c.l.b16 %v5594
        %v5635 = vunpack.c.l.b16 %v5595
        %v5636 = vunpack.c.l.b16 %v5596
        %v5637 = vunpack.c.l.b16 %v5597
        %v5638 = vunpack.c.l.b16 %v5598
        %v5639 = vunpack.c.l.b16 %v5599
        %v5640 = vunpack.c.l.b16 %v5600
        %v5641 = vunpack.c.l.b16 %v5601
        %v5642 = vunpack.c.l.b16 %v5602
        %v5643 = vunpack.c.l.b16 %v5603
        %v5644 = vunpack.c.l.b16 %v5604
        %v5645 = vunpack.c.l.b16 %v5605
        %v5646 = vunpack.c.l.b16 %v5606
        %v5647 = vunpack.c.l.b16 %v5607
        %v5648 = vunpack.c.l.b16 %v5608
        %v5649 = vpack.c.b16 %v5630, %v5629
        %v5650 = vpack.c.b16 %v5632, %v5631
        %v5651 = vpack.c.b16 %v5634, %v5633
        %v5652 = vpack.c.b16 %v5636, %v5635
        %v5653 = vpack.c.b16 %v5638, %v5637
        %v5654 = vpack.c.b16 %v5640, %v5639
        %v5655 = vpack.c.b16 %v5642, %v5641
        %v5656 = vpack.c.b16 %v5644, %v5643
        %v5657 = vpack.c.b16 %v5646, %v5645
        %v5658 = vpack.c.b16 %v5648, %v5647
        %vm5669 = vcmask 261120
        %v5671 = vsel %vm5669, %v5588, 0
        %5673 = vmatprep.subr.bf16.mxu0 0
        %5674 = vmatpush1.bf16.msra.mxu0 %v5649
        %5675 = vmatprep.subr.bf16.mxu0 0
        %5676 = vmatpush1.bf16.msra.mxu0 %v5650
        %5677 = vmatprep.subr.bf16.mxu0 0
        %5678 = vmatpush1.bf16.msra.mxu0 %v5651
        %5679 = vmatprep.subr.bf16.mxu0 0
        %5680 = vmatpush1.bf16.msra.mxu0 %v5652
        %5681 = vmatprep.subr.bf16.mxu0 0
        %5682 = vmatpush1.bf16.msra.mxu0 %v5653
        %5683 = vmatprep.subr.bf16.mxu0 0
        %5684 = vmatpush1.bf16.msra.mxu0 %v5654
        %5685 = vmatprep.subr.bf16.mxu0 0
        %5686 = vmatpush1.bf16.msra.mxu0 %v5655
        %5687 = vmatprep.subr.bf16.mxu0 0
        %5688 = vmatpush1.bf16.msra.mxu0 %v5656
        %5689 = vmatprep.subr.bf16.mxu0 0
        %5690 = vmatpush1.bf16.msra.mxu0 %v5657
        %5691 = vmatprep.subr.bf16.mxu0 0
        %5692 = vmatpush1.bf16.msra.mxu0 %v5658
        %5693 = vmatprep.subr.bf16.mxu0 0
        %5694 = vmatpush1.bf16.msra.mxu0 0
        %5695 = vmatprep.subr.bf16.mxu0 0
        %5696 = vmatpush1.bf16.msra.mxu0 0
        %5697 = vmatprep.subr.bf16.mxu0 0
        %5698 = vmatpush1.bf16.msra.mxu0 0
        %5699 = vmatprep.subr.bf16.mxu0 0
        %5700 = vmatpush1.bf16.msra.mxu0 0
        %5701 = vmatprep.subr.bf16.mxu0 0
        %5702 = vmatpush1.bf16.msra.mxu0 0
        %5703 = vmatprep.subr.bf16.mxu0 0
        %5704 = vmatpush1.bf16.msra.mxu0 0
        %5705 = vmatprep.mubr.bf16.mxu0 %v5671
        %5706 = vmatmul.mubr.bf16.gmra.mrb[0].mxu0 %v5587
        %v5707 = vpop.f32.mrb[0].mxu0
        %v5708 = vadd.f32 0.0, %v5707
        %v5709 = vpop.f32.mrb[0].mxu0
        %v5710 = vpop.f32.mrb[0].mxu0
        %v5711 = vpop.f32.mrb[0].mxu0
        %5712 = vdwg.mxu0
        %v5713 = vld [vmem:[%s8] sm:$0xf]
        %v5714 = vld [vmem:[%s8 + $0x4] sm:$0xf]
        %v5715 = vld [vmem:[%s8 + $0x8] sm:$0xf]
        %v5716 = vld [vmem:[%s8 + $0xc] sm:$0xf]
        %v5717 = vld [vmem:[%s8 + $0x10] sm:$0xf]
        %v5718 = vld [vmem:[%s8 + $0x14] sm:$0xf]
        %v5719 = vld [vmem:[%s8 + $0x18] sm:$0xf]
        %v5720 = vld [vmem:[%s8 + $0x1c] sm:$0xf]
        %v5721 = vld [vmem:[%s8 + $0x20] sm:$0xf]
        %v5722 = vld [vmem:[%s8 + $0x24] sm:$0xf]
        %v5723 = vld [vmem:[%s8 + $0x28] sm:$0xf]
        %v5724 = vld [vmem:[%s8 + $0x2c] sm:$0xf]
        %v5725 = vld [vmem:[%s8 + $0x30] sm:$0xf]
        %v5726 = vld [vmem:[%s8 + $0x34] sm:$0xf]
        %v5727 = vld [vmem:[%s8 + $0x38] sm:$0xf]
        %v5728 = vld [vmem:[%s8 + $0x3c] sm:$0xf]
        %v5729 = vld [vmem:[%s8 + $0x40] sm:$0xf]
        %v5730 = vld [vmem:[%s8 + $0x44] sm:$0xf]
        %v5731 = vld [vmem:[%s8 + $0x48] sm:$0xf]
        %v5732 = vld [vmem:[%s8 + $0x4c] sm:$0xf]
        %v5753 = vunpack.c.l.b16 %v5713
        %v5754 = vunpack.c.l.b16 %v5714
        %v5755 = vunpack.c.l.b16 %v5715
        %v5756 = vunpack.c.l.b16 %v5716
        %v5757 = vunpack.c.l.b16 %v5717
        %v5758 = vunpack.c.l.b16 %v5718
        %v5759 = vunpack.c.l.b16 %v5719
        %v5760 = vunpack.c.l.b16 %v5720
        %v5761 = vunpack.c.l.b16 %v5721
        %v5762 = vunpack.c.l.b16 %v5722
        %v5763 = vunpack.c.l.b16 %v5723
        %v5764 = vunpack.c.l.b16 %v5724
        %v5765 = vunpack.c.l.b16 %v5725
        %v5766 = vunpack.c.l.b16 %v5726
        %v5767 = vunpack.c.l.b16 %v5727
        %v5768 = vunpack.c.l.b16 %v5728
        %v5769 = vunpack.c.l.b16 %v5729
        %v5770 = vunpack.c.l.b16 %v5730
        %v5771 = vunpack.c.l.b16 %v5731
        %v5772 = vunpack.c.l.b16 %v5732
        %v5773 = vpack.c.b16 %v5754, %v5753
        %v5774 = vpack.c.b16 %v5756, %v5755
        %v5775 = vpack.c.b16 %v5758, %v5757
        %v5776 = vpack.c.b16 %v5760, %v5759
        %v5777 = vpack.c.b16 %v5762, %v5761
        %v5778 = vpack.c.b16 %v5764, %v5763
        %v5779 = vpack.c.b16 %v5766, %v5765
        %v5780 = vpack.c.b16 %v5768, %v5767
        %v5781 = vpack.c.b16 %v5770, %v5769
        %v5782 = vpack.c.b16 %v5772, %v5771
        %5793 = vmatprep.subr.bf16.mxu0 0
        %5794 = vmatpush1.bf16.msra.mxu0 %v5773
        %5795 = vmatprep.subr.bf16.mxu0 0
        %5796 = vmatpush1.bf16.msra.mxu0 %v5774
        %5797 = vmatprep.subr.bf16.mxu0 0
        %5798 = vmatpush1.bf16.msra.mxu0 %v5775
        %5799 = vmatprep.subr.bf16.mxu0 0
        %5800 = vmatpush1.bf16.msra.mxu0 %v5776
        %5801 = vmatprep.subr.bf16.mxu0 0
        %5802 = vmatpush1.bf16.msra.mxu0 %v5777
        %5803 = vmatprep.subr.bf16.mxu0 0
        %5804 = vmatpush1.bf16.msra.mxu0 %v5778
        %5805 = vmatprep.subr.bf16.mxu0 0
        %5806 = vmatpush1.bf16.msra.mxu0 %v5779
        %5807 = vmatprep.subr.bf16.mxu0 0
        %5808 = vmatpush1.bf16.msra.mxu0 %v5780
        %5809 = vmatprep.subr.bf16.mxu0 0
        %5810 = vmatpush1.bf16.msra.mxu0 %v5781
        %5811 = vmatprep.subr.bf16.mxu0 0
        %5812 = vmatpush1.bf16.msra.mxu0 %v5782
        %5813 = vmatprep.subr.bf16.mxu0 0
        %5814 = vmatpush1.bf16.msra.mxu0 0
        %5815 = vmatprep.subr.bf16.mxu0 0
        %5816 = vmatpush1.bf16.msra.mxu0 0
        %5817 = vmatprep.subr.bf16.mxu0 0
        %5818 = vmatpush1.bf16.msra.mxu0 0
        %5819 = vmatprep.subr.bf16.mxu0 0
        %5820 = vmatpush1.bf16.msra.mxu0 0
        %5821 = vmatprep.subr.bf16.mxu0 0
        %5822 = vmatpush1.bf16.msra.mxu0 0
        %5823 = vmatprep.subr.bf16.mxu0 0
        %5824 = vmatpush1.bf16.msra.mxu0 0
        %5825 = vmatprep.mubr.bf16.mxu0 %v5671
        %5826 = vmatmul.mubr.bf16.gmra.mrb[0].mxu0 %v5587
        %v5827 = vpop.f32.mrb[0].mxu0
        %v5828 = vadd.f32 0.0, %v5827
        %v5829 = vpop.f32.mrb[0].mxu0
        %v5830 = vpop.f32.mrb[0].mxu0
        %v5831 = vpop.f32.mrb[0].mxu0
        %5832 = vdwg.mxu0
        %v5833 = vmax.f32 %v5708, %v5828
        %v5834 = vpack.c.bf16 %v5833, %v5833
        %5835 = vmatprep.subr.bf16.mxu0 %v5168
        %5836 = vmatpush1.bf16.msra.mxu0 %v5167
        %5837 = vmatprep.subr.bf16.mxu0 %v5170
        %5838 = vmatpush1.bf16.msra.mxu0 %v5169
        %5839 = vmatprep.subr.bf16.mxu0 %v5172
        %5840 = vmatpush1.bf16.msra.mxu0 %v5171
        %5841 = vmatprep.subr.bf16.mxu0 %v5174
        %5842 = vmatpush1.bf16.msra.mxu0 %v5173
        %5843 = vmatprep.subr.bf16.mxu0 %v5194
        %5844 = vmatpush1.bf16.msra.mxu0 %v5191
        %5845 = vmatprep.subr.bf16.mxu0 0
        %5846 = vmatpush1.bf16.msra.mxu0 0
        %5847 = vmatprep.subr.bf16.mxu0 0
        %5848 = vmatpush1.bf16.msra.mxu0 0
        %5849 = vmatprep.subr.bf16.mxu0 0
        %5850 = vmatpush1.bf16.msra.mxu0 0
        %5851 = vmatprep.subr.bf16.mxu0 0
        %5852 = vmatpush1.bf16.msra.mxu0 0
        %5853 = vmatprep.subr.bf16.mxu0 0
        %5854 = vmatpush1.bf16.msra.mxu0 0
        %5855 = vmatprep.subr.bf16.mxu0 0
        %5856 = vmatpush1.bf16.msra.mxu0 0
        %5857 = vmatprep.subr.bf16.mxu0 0
        %5858 = vmatpush1.bf16.msra.mxu0 0
        %5859 = vmatprep.subr.bf16.mxu0 0
        %5860 = vmatpush1.bf16.msra.mxu0 0
        %5861 = vmatprep.subr.bf16.mxu0 0
        %5862 = vmatpush1.bf16.msra.mxu0 0
        %5863 = vmatprep.subr.bf16.mxu0 0
        %5864 = vmatpush1.bf16.msra.mxu0 0
        %5865 = vmatprep.subr.bf16.mxu0 0
        %5866 = vmatpush1.bf16.msra.mxu0 0
        %5867 = vmatprep.mubr.bf16.mxu0 0
        %5868 = vmatmul.mubr.bf16.gmra.mrb[0].mxu0 %v5402
        %v5869 = vpop.f32.mrb[0].mxu0
        %v5870 = vadd.f32 0.0, %v5869
        %v5871 = vpop.f32.mrb[0].mxu0
        %v5872 = vadd.f32 0.0, %v5871
        %v5873 = vpop.f32.mrb[0].mxu0
        %v5874 = vpop.f32.mrb[0].mxu0
        %5875 = vdwg.mxu0
        %v5876 = vadd.f32 %v5124, %v5870
        %v5877 = vadd.f32 %v5128, %v5872
        %5878 = vmatprep.subr.bf16.mxu0 %v5277
        %5879 = vmatpush1.bf16.msra.mxu0 %v5276
        %5880 = vmatprep.subr.bf16.mxu0 %v5279
        %5881 = vmatpush1.bf16.msra.mxu0 %v5278
        %5882 = vmatprep.subr.bf16.mxu0 %v5281
        %5883 = vmatpush1.bf16.msra.mxu0 %v5280
        %5884 = vmatprep.subr.bf16.mxu0 %v5283
        %5885 = vmatpush1.bf16.msra.mxu0 %v5282
        %5886 = vmatprep.subr.bf16.mxu0 %v5301
        %5887 = vmatpush1.bf16.msra.mxu0 %v5298
        %5888 = vmatprep.subr.bf16.mxu0 0
        %5889 = vmatpush1.bf16.msra.mxu0 0
        %5890 = vmatprep.subr.bf16.mxu0 0
        %5891 = vmatpush1.bf16.msra.mxu0 0
        %5892 = vmatprep.subr.bf16.mxu0 0
        %5893 = vmatpush1.bf16.msra.mxu0 0
        %5894 = vmatprep.subr.bf16.mxu0 0
        %5895 = vmatpush1.bf16.msra.mxu0 0
        %5896 = vmatprep.subr.bf16.mxu0 0
        %5897 = vmatpush1.bf16.msra.mxu0 0
        %5898 = vmatprep.subr.bf16.mxu0 0
        %5899 = vmatpush1.bf16.msra.mxu0 0
        %5900 = vmatprep.subr.bf16.mxu0 0
        %5901 = vmatpush1.bf16.msra.mxu0 0
        %5902 = vmatprep.subr.bf16.mxu0 0
        %5903 = vmatpush1.bf16.msra.mxu0 0
        %5904 = vmatprep.subr.bf16.mxu0 0
        %5905 = vmatpush1.bf16.msra.mxu0 0
        %5906 = vmatprep.subr.bf16.mxu0 0
        %5907 = vmatpush1.bf16.msra.mxu0 0
        %5908 = vmatprep.subr.bf16.mxu0 0
        %5909 = vmatpush1.bf16.msra.mxu0 0
        %5910 = vmatprep.mubr.bf16.mxu0 0
        %5911 = vmatmul.mubr.bf16.gmra.mrb[0].mxu0 %v5540
        %v5912 = vpop.f32.mrb[0].mxu0
        %v5913 = vadd.f32 0.0, %v5912
        %v5914 = vpop.f32.mrb[0].mxu0
        %v5915 = vadd.f32 0.0, %v5914
        %v5916 = vpop.f32.mrb[0].mxu0
        %v5917 = vpop.f32.mrb[0].mxu0
        %5918 = vdwg.mxu0
        %v5919 = vadd.f32 %v5876, %v5913
        %v5920 = vadd.f32 %v5877, %v5915
        %v5922 = vsel %vm5185, %v2619, 0
        %5924 = vmatprep.subr.bf16.mxu0 %v5384
        %5925 = vmatpush1.bf16.msra.mxu0 %v5383
        %5926 = vmatprep.subr.bf16.mxu0 %v5386
        %5927 = vmatpush1.bf16.msra.mxu0 %v5385
        %5928 = vmatprep.subr.bf16.mxu0 %v5388
        %5929 = vmatpush1.bf16.msra.mxu0 %v5387
        %5930 = vmatprep.subr.bf16.mxu0 %v5390
        %5931 = vmatpush1.bf16.msra.mxu0 %v5389
        %5932 = vmatprep.subr.bf16.mxu0 %v5408
        %5933 = vmatpush1.bf16.msra.mxu0 %v5405
        %5934 = vmatprep.subr.bf16.mxu0 0
        %5935 = vmatpush1.bf16.msra.mxu0 0
        %5936 = vmatprep.subr.bf16.mxu0 0
        %5937 = vmatpush1.bf16.msra.mxu0 0
        %5938 = vmatprep.subr.bf16.mxu0 0
        %5939 = vmatpush1.bf16.msra.mxu0 0
        %5940 = vmatprep.subr.bf16.mxu0 0
        %5941 = vmatpush1.bf16.msra.mxu0 0
        %5942 = vmatprep.subr.bf16.mxu0 0
        %5943 = vmatpush1.bf16.msra.mxu0 0
        %5944 = vmatprep.subr.bf16.mxu0 0
        %5945 = vmatpush1.bf16.msra.mxu0 0
        %5946 = vmatprep.subr.bf16.mxu0 0
        %5947 = vmatpush1.bf16.msra.mxu0 0
        %5948 = vmatprep.subr.bf16.mxu0 0
        %5949 = vmatpush1.bf16.msra.mxu0 0
        %5950 = vmatprep.subr.bf16.mxu0 0
        %5951 = vmatpush1.bf16.msra.mxu0 0
        %5952 = vmatprep.subr.bf16.mxu0 0
        %5953 = vmatpush1.bf16.msra.mxu0 0
        %5954 = vmatprep.subr.bf16.mxu0 0
        %5955 = vmatpush1.bf16.msra.mxu0 0
        %5956 = vmatprep.mubr.bf16.mxu0 0
        %5957 = vmatmul.mubr.bf16.gmra.mrb[0].mxu0 %v5922
        %v5958 = vpop.f32.mrb[0].mxu0
        %v5959 = vadd.f32 0.0, %v5958
        %v5960 = vpop.f32.mrb[0].mxu0
        %v5961 = vadd.f32 0.0, %v5960
        %v5962 = vpop.f32.mrb[0].mxu0
        %v5963 = vpop.f32.mrb[0].mxu0
        %5964 = vdwg.mxu0
        %v5965 = vadd.f32 %v5919, %v5959
        %v5966 = vadd.f32 %v5920, %v5961
        %5967 = vmatprep.subr.bf16.mxu0 %v5168
        %5968 = vmatpush1.bf16.msra.mxu0 %v5167
        %5969 = vmatprep.subr.bf16.mxu0 %v5170
        %5970 = vmatpush1.bf16.msra.mxu0 %v5169
        %5971 = vmatprep.subr.bf16.mxu0 %v5172
        %5972 = vmatpush1.bf16.msra.mxu0 %v5171
        %5973 = vmatprep.subr.bf16.mxu0 %v5174
        %5974 = vmatpush1.bf16.msra.mxu0 %v5173
        %5975 = vmatprep.subr.bf16.mxu0 %v5194
        %5976 = vmatpush1.bf16.msra.mxu0 %v5191
        %5977 = vmatprep.subr.bf16.mxu0 0
        %5978 = vmatpush1.bf16.msra.mxu0 0
        %5979 = vmatprep.subr.bf16.mxu0 0
        %5980 = vmatpush1.bf16.msra.mxu0 0
        %5981 = vmatprep.subr.bf16.mxu0 0
        %5982 = vmatpush1.bf16.msra.mxu0 0
        %5983 = vmatprep.subr.bf16.mxu0 0
        %5984 = vmatpush1.bf16.msra.mxu0 0
        %5985 = vmatprep.subr.bf16.mxu0 0
        %5986 = vmatpush1.bf16.msra.mxu0 0
        %5987 = vmatprep.subr.bf16.mxu0 0
        %5988 = vmatpush1.bf16.msra.mxu0 0
        %5989 = vmatprep.subr.bf16.mxu0 0
        %5990 = vmatpush1.bf16.msra.mxu0 0
        %5991 = vmatprep.subr.bf16.mxu0 0
        %5992 = vmatpush1.bf16.msra.mxu0 0
        %5993 = vmatprep.subr.bf16.mxu0 0
        %5994 = vmatpush1.bf16.msra.mxu0 0
        %5995 = vmatprep.subr.bf16.mxu0 0
        %5996 = vmatpush1.bf16.msra.mxu0 0
        %5997 = vmatprep.subr.bf16.mxu0 0
        %5998 = vmatpush1.bf16.msra.mxu0 0
        %5999 = vmatprep.mubr.bf16.mxu0 0
        %6000 = vmatmul.mubr.bf16.gmra.mrb[0].mxu0 %v5540
        %v6001 = vpop.f32.mrb[0].mxu0
        %v6002 = vadd.f32 0.0, %v6001
        %v6003 = vpop.f32.mrb[0].mxu0
        %v6004 = vadd.f32 0.0, %v6003
        %v6005 = vpop.f32.mrb[0].mxu0
        %v6006 = vpop.f32.mrb[0].mxu0
        %6007 = vdwg.mxu0
        %v6008 = vadd.f32 %v5124, %v6002
        %v6009 = vadd.f32 %v5128, %v6004
        %6010 = vmatprep.subr.bf16.mxu0 %v5277
        %6011 = vmatpush1.bf16.msra.mxu0 %v5276
        %6012 = vmatprep.subr.bf16.mxu0 %v5279
        %6013 = vmatpush1.bf16.msra.mxu0 %v5278
        %6014 = vmatprep.subr.bf16.mxu0 %v5281
        %6015 = vmatpush1.bf16.msra.mxu0 %v5280
        %6016 = vmatprep.subr.bf16.mxu0 %v5283
        %6017 = vmatpush1.bf16.msra.mxu0 %v5282
        %6018 = vmatprep.subr.bf16.mxu0 %v5301
        %6019 = vmatpush1.bf16.msra.mxu0 %v5298
        %6020 = vmatprep.subr.bf16.mxu0 0
        %6021 = vmatpush1.bf16.msra.mxu0 0
        %6022 = vmatprep.subr.bf16.mxu0 0
        %6023 = vmatpush1.bf16.msra.mxu0 0
        %6024 = vmatprep.subr.bf16.mxu0 0
        %6025 = vmatpush1.bf16.msra.mxu0 0
        %6026 = vmatprep.subr.bf16.mxu0 0
        %6027 = vmatpush1.bf16.msra.mxu0 0
        %6028 = vmatprep.subr.bf16.mxu0 0
        %6029 = vmatpush1.bf16.msra.mxu0 0
        %6030 = vmatprep.subr.bf16.mxu0 0
        %6031 = vmatpush1.bf16.msra.mxu0 0
        %6032 = vmatprep.subr.bf16.mxu0 0
        %6033 = vmatpush1.bf16.msra.mxu0 0
        %6034 = vmatprep.subr.bf16.mxu0 0
        %6035 = vmatpush1.bf16.msra.mxu0 0
        %6036 = vmatprep.subr.bf16.mxu0 0
        %6037 = vmatpush1.bf16.msra.mxu0 0
        %6038 = vmatprep.subr.bf16.mxu0 0
        %6039 = vmatpush1.bf16.msra.mxu0 0
        %6040 = vmatprep.subr.bf16.mxu0 0
        %6041 = vmatpush1.bf16.msra.mxu0 0
        %6042 = vmatprep.mubr.bf16.mxu0 0
        %6043 = vmatmul.mubr.bf16.gmra.mrb[0].mxu0 %v5922
        %v6044 = vpop.f32.mrb[0].mxu0
        %v6045 = vadd.f32 0.0, %v6044
        %v6046 = vpop.f32.mrb[0].mxu0
        %v6047 = vadd.f32 0.0, %v6046
        %v6048 = vpop.f32.mrb[0].mxu0
        %v6049 = vpop.f32.mrb[0].mxu0
        %6050 = vdwg.mxu0
        %v6051 = vadd.f32 %v6008, %v6045
        %v6052 = vadd.f32 %v6009, %v6047
        %v6054 = vsel %vm5185, %v2976, 0
        %6056 = vmatprep.subr.bf16.mxu0 %v5384
        %6057 = vmatpush1.bf16.msra.mxu0 %v5383
        %6058 = vmatprep.subr.bf16.mxu0 %v5386
        %6059 = vmatpush1.bf16.msra.mxu0 %v5385
        %6060 = vmatprep.subr.bf16.mxu0 %v5388
        %6061 = vmatpush1.bf16.msra.mxu0 %v5387
        %6062 = vmatprep.subr.bf16.mxu0 %v5390
        %6063 = vmatpush1.bf16.msra.mxu0 %v5389
        %6064 = vmatprep.subr.bf16.mxu0 %v5408
        %6065 = vmatpush1.bf16.msra.mxu0 %v5405
        %6066 = vmatprep.subr.bf16.mxu0 0
        %6067 = vmatpush1.bf16.msra.mxu0 0
        %6068 = vmatprep.subr.bf16.mxu0 0
        %6069 = vmatpush1.bf16.msra.mxu0 0
        %6070 = vmatprep.subr.bf16.mxu0 0
        %6071 = vmatpush1.bf16.msra.mxu0 0
        %6072 = vmatprep.subr.bf16.mxu0 0
        %6073 = vmatpush1.bf16.msra.mxu0 0
        %6074 = vmatprep.subr.bf16.mxu0 0
        %6075 = vmatpush1.bf16.msra.mxu0 0
        %6076 = vmatprep.subr.bf16.mxu0 0
        %6077 = vmatpush1.bf16.msra.mxu0 0
        %6078 = vmatprep.subr.bf16.mxu0 0
        %6079 = vmatpush1.bf16.msra.mxu0 0
        %6080 = vmatprep.subr.bf16.mxu0 0
        %6081 = vmatpush1.bf16.msra.mxu0 0
        %6082 = vmatprep.subr.bf16.mxu0 0
        %6083 = vmatpush1.bf16.msra.mxu0 0
        %6084 = vmatprep.subr.bf16.mxu0 0
        %6085 = vmatpush1.bf16.msra.mxu0 0
        %6086 = vmatprep.subr.bf16.mxu0 0
        %6087 = vmatpush1.bf16.msra.mxu0 0
        %6088 = vmatprep.mubr.bf16.mxu0 0
        %6089 = vmatmul.mubr.bf16.gmra.mrb[0].mxu0 %v6054
        %v6090 = vpop.f32.mrb[0].mxu0
        %v6091 = vadd.f32 0.0, %v6090
        %v6092 = vpop.f32.mrb[0].mxu0
        %v6093 = vadd.f32 0.0, %v6092
        %v6094 = vpop.f32.mrb[0].mxu0
        %v6095 = vpop.f32.mrb[0].mxu0
        %6096 = vdwg.mxu0
        %v6097 = vadd.f32 %v6051, %v6091
        %v6098 = vadd.f32 %v6052, %v6093
        %v6099 = vmax.f32 %v5965, %v6097
        %v6100 = vmax.f32 %v5966, %v6098
        %v6101 = vpack.c.bf16 %v6099, %v6099
        %v6102 = vpack.c.bf16 %v6100, %v6100
        %v6104 = vsel %vm5669, %v6102, 0
        %6106 = vmatprep.subr.bf16.mxu0 0
        %6107 = vmatpush1.bf16.msra.mxu0 %v5649
        %6108 = vmatprep.subr.bf16.mxu0 0
        %6109 = vmatpush1.bf16.msra.mxu0 %v5650
        %6110 = vmatprep.subr.bf16.mxu0 0
        %6111 = vmatpush1.bf16.msra.mxu0 %v5651
        %6112 = vmatprep.subr.bf16.mxu0 0
        %6113 = vmatpush1.bf16.msra.mxu0 %v5652
        %6114 = vmatprep.subr.bf16.mxu0 0
        %6115 = vmatpush1.bf16.msra.mxu0 %v5653
        %6116 = vmatprep.subr.bf16.mxu0 0
        %6117 = vmatpush1.bf16.msra.mxu0 %v5654
        %6118 = vmatprep.subr.bf16.mxu0 0
        %6119 = vmatpush1.bf16.msra.mxu0 %v5655
        %6120 = vmatprep.subr.bf16.mxu0 0
        %6121 = vmatpush1.bf16.msra.mxu0 %v5656
        %6122 = vmatprep.subr.bf16.mxu0 0
        %6123 = vmatpush1.bf16.msra.mxu0 %v5657
        %6124 = vmatprep.subr.bf16.mxu0 0
        %6125 = vmatpush1.bf16.msra.mxu0 %v5658
        %6126 = vmatprep.subr.bf16.mxu0 0
        %6127 = vmatpush1.bf16.msra.mxu0 0
        %6128 = vmatprep.subr.bf16.mxu0 0
        %6129 = vmatpush1.bf16.msra.mxu0 0
        %6130 = vmatprep.subr.bf16.mxu0 0
        %6131 = vmatpush1.bf16.msra.mxu0 0
        %6132 = vmatprep.subr.bf16.mxu0 0
        %6133 = vmatpush1.bf16.msra.mxu0 0
        %6134 = vmatprep.subr.bf16.mxu0 0
        %6135 = vmatpush1.bf16.msra.mxu0 0
        %6136 = vmatprep.subr.bf16.mxu0 0
        %6137 = vmatpush1.bf16.msra.mxu0 0
        %6138 = vmatprep.mubr.bf16.mxu0 %v6104
        %6139 = vmatmul.mubr.bf16.gmra.mrb[0].mxu0 %v6101
        %v6140 = vpop.f32.mrb[0].mxu0
        %v6141 = vadd.f32 0.0, %v6140
        %v6142 = vpop.f32.mrb[0].mxu0
        %v6143 = vpop.f32.mrb[0].mxu0
        %v6144 = vpop.f32.mrb[0].mxu0
        %6145 = vdwg.mxu0
        %6146 = vmatprep.subr.bf16.mxu0 0
        %6147 = vmatpush1.bf16.msra.mxu0 %v5773
        %6148 = vmatprep.subr.bf16.mxu0 0
        %6149 = vmatpush1.bf16.msra.mxu0 %v5774
        %6150 = vmatprep.subr.bf16.mxu0 0
        %6151 = vmatpush1.bf16.msra.mxu0 %v5775
        %6152 = vmatprep.subr.bf16.mxu0 0
        %6153 = vmatpush1.bf16.msra.mxu0 %v5776
        %6154 = vmatprep.subr.bf16.mxu0 0
        %6155 = vmatpush1.bf16.msra.mxu0 %v5777
        %6156 = vmatprep.subr.bf16.mxu0 0
        %6157 = vmatpush1.bf16.msra.mxu0 %v5778
        %6158 = vmatprep.subr.bf16.mxu0 0
        %6159 = vmatpush1.bf16.msra.mxu0 %v5779
        %6160 = vmatprep.subr.bf16.mxu0 0
        %6161 = vmatpush1.bf16.msra.mxu0 %v5780
        %6162 = vmatprep.subr.bf16.mxu0 0
        %6163 = vmatpush1.bf16.msra.mxu0 %v5781
        %6164 = vmatprep.subr.bf16.mxu0 0
        %6165 = vmatpush1.bf16.msra.mxu0 %v5782
        %6166 = vmatprep.subr.bf16.mxu0 0
        %6167 = vmatpush1.bf16.msra.mxu0 0
        %6168 = vmatprep.subr.bf16.mxu0 0
        %6169 = vmatpush1.bf16.msra.mxu0 0
        %6170 = vmatprep.subr.bf16.mxu0 0
        %6171 = vmatpush1.bf16.msra.mxu0 0
        %6172 = vmatprep.subr.bf16.mxu0 0
        %6173 = vmatpush1.bf16.msra.mxu0 0
        %6174 = vmatprep.subr.bf16.mxu0 0
        %6175 = vmatpush1.bf16.msra.mxu0 0
        %6176 = vmatprep.subr.bf16.mxu0 0
        %6177 = vmatpush1.bf16.msra.mxu0 0
        %6178 = vmatprep.mubr.bf16.mxu0 %v6104
        %6179 = vmatmul.mubr.bf16.gmra.mrb[0].mxu0 %v6101
        %v6180 = vpop.f32.mrb[0].mxu0
        %v6181 = vadd.f32 0.0, %v6180
        %v6182 = vpop.f32.mrb[0].mxu0
        %v6183 = vpop.f32.mrb[0].mxu0
        %v6184 = vpop.f32.mrb[0].mxu0
        %6185 = vdwg.mxu0
        %v6186 = vmax.f32 %v6141, %v6181
        %v6187 = vpack.c.bf16 %v6186, %v6186
        %6188 = vmatprep.subr.bf16.mxu0 %v5168
        %6189 = vmatpush1.bf16.msra.mxu0 %v5167
        %6190 = vmatprep.subr.bf16.mxu0 %v5170
        %6191 = vmatpush1.bf16.msra.mxu0 %v5169
        %6192 = vmatprep.subr.bf16.mxu0 %v5172
        %6193 = vmatpush1.bf16.msra.mxu0 %v5171
        %6194 = vmatprep.subr.bf16.mxu0 %v5174
        %6195 = vmatpush1.bf16.msra.mxu0 %v5173
        %6196 = vmatprep.subr.bf16.mxu0 %v5194
        %6197 = vmatpush1.bf16.msra.mxu0 %v5191
        %6198 = vmatprep.subr.bf16.mxu0 0
        %6199 = vmatpush1.bf16.msra.mxu0 0
        %6200 = vmatprep.subr.bf16.mxu0 0
        %6201 = vmatpush1.bf16.msra.mxu0 0
        %6202 = vmatprep.subr.bf16.mxu0 0
        %6203 = vmatpush1.bf16.msra.mxu0 0
        %6204 = vmatprep.subr.bf16.mxu0 0
        %6205 = vmatpush1.bf16.msra.mxu0 0
        %6206 = vmatprep.subr.bf16.mxu0 0
        %6207 = vmatpush1.bf16.msra.mxu0 0
        %6208 = vmatprep.subr.bf16.mxu0 0
        %6209 = vmatpush1.bf16.msra.mxu0 0
        %6210 = vmatprep.subr.bf16.mxu0 0
        %6211 = vmatpush1.bf16.msra.mxu0 0
        %6212 = vmatprep.subr.bf16.mxu0 0
        %6213 = vmatpush1.bf16.msra.mxu0 0
        %6214 = vmatprep.subr.bf16.mxu0 0
        %6215 = vmatpush1.bf16.msra.mxu0 0
        %6216 = vmatprep.subr.bf16.mxu0 0
        %6217 = vmatpush1.bf16.msra.mxu0 0
        %6218 = vmatprep.subr.bf16.mxu0 0
        %6219 = vmatpush1.bf16.msra.mxu0 0
        %6220 = vmatprep.mubr.bf16.mxu0 0
        %6221 = vmatmul.mubr.bf16.gmra.mrb[0].mxu0 %v5922
        %v6222 = vpop.f32.mrb[0].mxu0
        %v6223 = vadd.f32 0.0, %v6222
        %v6224 = vpop.f32.mrb[0].mxu0
        %v6225 = vadd.f32 0.0, %v6224
        %v6226 = vpop.f32.mrb[0].mxu0
        %v6227 = vpop.f32.mrb[0].mxu0
        %6228 = vdwg.mxu0
        %v6229 = vadd.f32 %v5124, %v6223
        %v6230 = vadd.f32 %v5128, %v6225
        %6231 = vmatprep.subr.bf16.mxu0 %v5277
        %6232 = vmatpush1.bf16.msra.mxu0 %v5276
        %6233 = vmatprep.subr.bf16.mxu0 %v5279
        %6234 = vmatpush1.bf16.msra.mxu0 %v5278
        %6235 = vmatprep.subr.bf16.mxu0 %v5281
        %6236 = vmatpush1.bf16.msra.mxu0 %v5280
        %6237 = vmatprep.subr.bf16.mxu0 %v5283
        %6238 = vmatpush1.bf16.msra.mxu0 %v5282
        %6239 = vmatprep.subr.bf16.mxu0 %v5301
        %6240 = vmatpush1.bf16.msra.mxu0 %v5298
        %6241 = vmatprep.subr.bf16.mxu0 0
        %6242 = vmatpush1.bf16.msra.mxu0 0
        %6243 = vmatprep.subr.bf16.mxu0 0
        %6244 = vmatpush1.bf16.msra.mxu0 0
        %6245 = vmatprep.subr.bf16.mxu0 0
        %6246 = vmatpush1.bf16.msra.mxu0 0
        %6247 = vmatprep.subr.bf16.mxu0 0
        %6248 = vmatpush1.bf16.msra.mxu0 0
        %6249 = vmatprep.subr.bf16.mxu0 0
        %6250 = vmatpush1.bf16.msra.mxu0 0
        %6251 = vmatprep.subr.bf16.mxu0 0
        %6252 = vmatpush1.bf16.msra.mxu0 0
        %6253 = vmatprep.subr.bf16.mxu0 0
        %6254 = vmatpush1.bf16.msra.mxu0 0
        %6255 = vmatprep.subr.bf16.mxu0 0
        %6256 = vmatpush1.bf16.msra.mxu0 0
        %6257 = vmatprep.subr.bf16.mxu0 0
        %6258 = vmatpush1.bf16.msra.mxu0 0
        %6259 = vmatprep.subr.bf16.mxu0 0
        %6260 = vmatpush1.bf16.msra.mxu0 0
        %6261 = vmatprep.subr.bf16.mxu0 0
        %6262 = vmatpush1.bf16.msra.mxu0 0
        %6263 = vmatprep.mubr.bf16.mxu0 0
        %6264 = vmatmul.mubr.bf16.gmra.mrb[0].mxu0 %v6054
        %v6265 = vpop.f32.mrb[0].mxu0
        %v6266 = vadd.f32 0.0, %v6265
        %v6267 = vpop.f32.mrb[0].mxu0
        %v6268 = vadd.f32 0.0, %v6267
        %v6269 = vpop.f32.mrb[0].mxu0
        %v6270 = vpop.f32.mrb[0].mxu0
        %6271 = vdwg.mxu0
        %v6272 = vadd.f32 %v6229, %v6266
        %v6273 = vadd.f32 %v6230, %v6268
        %v6275 = vsel %vm5185, %v3333, 0
        %6277 = vmatprep.subr.bf16.mxu0 %v5384
        %6278 = vmatpush1.bf16.msra.mxu0 %v5383
        %6279 = vmatprep.subr.bf16.mxu0 %v5386
        %6280 = vmatpush1.bf16.msra.mxu0 %v5385
        %6281 = vmatprep.subr.bf16.mxu0 %v5388
        %6282 = vmatpush1.bf16.msra.mxu0 %v5387
        %6283 = vmatprep.subr.bf16.mxu0 %v5390
        %6284 = vmatpush1.bf16.msra.mxu0 %v5389
        %6285 = vmatprep.subr.bf16.mxu0 %v5408
        %6286 = vmatpush1.bf16.msra.mxu0 %v5405
        %6287 = vmatprep.subr.bf16.mxu0 0
        %6288 = vmatpush1.bf16.msra.mxu0 0
        %6289 = vmatprep.subr.bf16.mxu0 0
        %6290 = vmatpush1.bf16.msra.mxu0 0
        %6291 = vmatprep.subr.bf16.mxu0 0
        %6292 = vmatpush1.bf16.msra.mxu0 0
        %6293 = vmatprep.subr.bf16.mxu0 0
        %6294 = vmatpush1.bf16.msra.mxu0 0
        %6295 = vmatprep.subr.bf16.mxu0 0
        %6296 = vmatpush1.bf16.msra.mxu0 0
        %6297 = vmatprep.subr.bf16.mxu0 0
        %6298 = vmatpush1.bf16.msra.mxu0 0
        %6299 = vmatprep.subr.bf16.mxu0 0
        %6300 = vmatpush1.bf16.msra.mxu0 0
        %6301 = vmatprep.subr.bf16.mxu0 0
        %6302 = vmatpush1.bf16.msra.mxu0 0
        %6303 = vmatprep.subr.bf16.mxu0 0
        %6304 = vmatpush1.bf16.msra.mxu0 0
        %6305 = vmatprep.subr.bf16.mxu0 0
        %6306 = vmatpush1.bf16.msra.mxu0 0
        %6307 = vmatprep.subr.bf16.mxu0 0
        %6308 = vmatpush1.bf16.msra.mxu0 0
        %6309 = vmatprep.mubr.bf16.mxu0 0
        %6310 = vmatmul.mubr.bf16.gmra.mrb[0].mxu0 %v6275
        %v6311 = vpop.f32.mrb[0].mxu0
        %v6312 = vadd.f32 0.0, %v6311
        %v6313 = vpop.f32.mrb[0].mxu0
        %v6314 = vadd.f32 0.0, %v6313
        %v6315 = vpop.f32.mrb[0].mxu0
        %v6316 = vpop.f32.mrb[0].mxu0
        %6317 = vdwg.mxu0
        %v6318 = vadd.f32 %v6272, %v6312
        %v6319 = vadd.f32 %v6273, %v6314
        %6320 = vmatprep.subr.bf16.mxu0 %v5168
        %6321 = vmatpush1.bf16.msra.mxu0 %v5167
        %6322 = vmatprep.subr.bf16.mxu0 %v5170
        %6323 = vmatpush1.bf16.msra.mxu0 %v5169
        %6324 = vmatprep.subr.bf16.mxu0 %v5172
        %6325 = vmatpush1.bf16.msra.mxu0 %v5171
        %6326 = vmatprep.subr.bf16.mxu0 %v5174
        %6327 = vmatpush1.bf16.msra.mxu0 %v5173
        %6328 = vmatprep.subr.bf16.mxu0 %v5194
        %6329 = vmatpush1.bf16.msra.mxu0 %v5191
        %6330 = vmatprep.subr.bf16.mxu0 0
        %6331 = vmatpush1.bf16.msra.mxu0 0
        %6332 = vmatprep.subr.bf16.mxu0 0
        %6333 = vmatpush1.bf16.msra.mxu0 0
        %6334 = vmatprep.subr.bf16.mxu0 0
        %6335 = vmatpush1.bf16.msra.mxu0 0
        %6336 = vmatprep.subr.bf16.mxu0 0
        %6337 = vmatpush1.bf16.msra.mxu0 0
        %6338 = vmatprep.subr.bf16.mxu0 0
        %6339 = vmatpush1.bf16.msra.mxu0 0
        %6340 = vmatprep.subr.bf16.mxu0 0
        %6341 = vmatpush1.bf16.msra.mxu0 0
        %6342 = vmatprep.subr.bf16.mxu0 0
        %6343 = vmatpush1.bf16.msra.mxu0 0
        %6344 = vmatprep.subr.bf16.mxu0 0
        %6345 = vmatpush1.bf16.msra.mxu0 0
        %6346 = vmatprep.subr.bf16.mxu0 0
        %6347 = vmatpush1.bf16.msra.mxu0 0
        %6348 = vmatprep.subr.bf16.mxu0 0
        %6349 = vmatpush1.bf16.msra.mxu0 0
        %6350 = vmatprep.subr.bf16.mxu0 0
        %6351 = vmatpush1.bf16.msra.mxu0 0
        %6352 = vmatprep.mubr.bf16.mxu0 0
        %6353 = vmatmul.mubr.bf16.gmra.mrb[0].mxu0 %v6054
        %v6354 = vpop.f32.mrb[0].mxu0
        %v6355 = vadd.f32 0.0, %v6354
        %v6356 = vpop.f32.mrb[0].mxu0
        %v6357 = vadd.f32 0.0, %v6356
        %v6358 = vpop.f32.mrb[0].mxu0
        %v6359 = vpop.f32.mrb[0].mxu0
        %6360 = vdwg.mxu0
        %v6361 = vadd.f32 %v5124, %v6355
        %v6362 = vadd.f32 %v5128, %v6357
        %6363 = vmatprep.subr.bf16.mxu0 %v5277
        %6364 = vmatpush1.bf16.msra.mxu0 %v5276
        %6365 = vmatprep.subr.bf16.mxu0 %v5279
        %6366 = vmatpush1.bf16.msra.mxu0 %v5278
        %6367 = vmatprep.subr.bf16.mxu0 %v5281
        %6368 = vmatpush1.bf16.msra.mxu0 %v5280
        %6369 = vmatprep.subr.bf16.mxu0 %v5283
        %6370 = vmatpush1.bf16.msra.mxu0 %v5282
        %6371 = vmatprep.subr.bf16.mxu0 %v5301
        %6372 = vmatpush1.bf16.msra.mxu0 %v5298
        %6373 = vmatprep.subr.bf16.mxu0 0
        %6374 = vmatpush1.bf16.msra.mxu0 0
        %6375 = vmatprep.subr.bf16.mxu0 0
        %6376 = vmatpush1.bf16.msra.mxu0 0
        %6377 = vmatprep.subr.bf16.mxu0 0
        %6378 = vmatpush1.bf16.msra.mxu0 0
        %6379 = vmatprep.subr.bf16.mxu0 0
        %6380 = vmatpush1.bf16.msra.mxu0 0
        %6381 = vmatprep.subr.bf16.mxu0 0
        %6382 = vmatpush1.bf16.msra.mxu0 0
        %6383 = vmatprep.subr.bf16.mxu0 0
        %6384 = vmatpush1.bf16.msra.mxu0 0
        %6385 = vmatprep.subr.bf16.mxu0 0
        %6386 = vmatpush1.bf16.msra.mxu0 0
        %6387 = vmatprep.subr.bf16.mxu0 0
        %6388 = vmatpush1.bf16.msra.mxu0 0
        %6389 = vmatprep.subr.bf16.mxu0 0
        %6390 = vmatpush1.bf16.msra.mxu0 0
        %6391 = vmatprep.subr.bf16.mxu0 0
        %6392 = vmatpush1.bf16.msra.mxu0 0
        %6393 = vmatprep.subr.bf16.mxu0 0
        %6394 = vmatpush1.bf16.msra.mxu0 0
        %6395 = vmatprep.mubr.bf16.mxu0 0
        %6396 = vmatmul.mubr.bf16.gmra.mrb[0].mxu0 %v6275
        %v6397 = vpop.f32.mrb[0].mxu0
        %v6398 = vadd.f32 0.0, %v6397
        %v6399 = vpop.f32.mrb[0].mxu0
        %v6400 = vadd.f32 0.0, %v6399
        %v6401 = vpop.f32.mrb[0].mxu0
        %v6402 = vpop.f32.mrb[0].mxu0
        %6403 = vdwg.mxu0
        %v6404 = vadd.f32 %v6361, %v6398
        %v6405 = vadd.f32 %v6362, %v6400
        %v6407 = vsel %vm5185, %v3690, 0
        %6409 = vmatprep.subr.bf16.mxu0 %v5384
        %6410 = vmatpush1.bf16.msra.mxu0 %v5383
        %6411 = vmatprep.subr.bf16.mxu0 %v5386
        %6412 = vmatpush1.bf16.msra.mxu0 %v5385
        %6413 = vmatprep.subr.bf16.mxu0 %v5388
        %6414 = vmatpush1.bf16.msra.mxu0 %v5387
        %6415 = vmatprep.subr.bf16.mxu0 %v5390
        %6416 = vmatpush1.bf16.msra.mxu0 %v5389
        %6417 = vmatprep.subr.bf16.mxu0 %v5408
        %6418 = vmatpush1.bf16.msra.mxu0 %v5405
        %6419 = vmatprep.subr.bf16.mxu0 0
        %6420 = vmatpush1.bf16.msra.mxu0 0
        %6421 = vmatprep.subr.bf16.mxu0 0
        %6422 = vmatpush1.bf16.msra.mxu0 0
        %6423 = vmatprep.subr.bf16.mxu0 0
        %6424 = vmatpush1.bf16.msra.mxu0 0
        %6425 = vmatprep.subr.bf16.mxu0 0
        %6426 = vmatpush1.bf16.msra.mxu0 0
        %6427 = vmatprep.subr.bf16.mxu0 0
        %6428 = vmatpush1.bf16.msra.mxu0 0
        %6429 = vmatprep.subr.bf16.mxu0 0
        %6430 = vmatpush1.bf16.msra.mxu0 0
        %6431 = vmatprep.subr.bf16.mxu0 0
        %6432 = vmatpush1.bf16.msra.mxu0 0
        %6433 = vmatprep.subr.bf16.mxu0 0
        %6434 = vmatpush1.bf16.msra.mxu0 0
        %6435 = vmatprep.subr.bf16.mxu0 0
        %6436 = vmatpush1.bf16.msra.mxu0 0
        %6437 = vmatprep.subr.bf16.mxu0 0
        %6438 = vmatpush1.bf16.msra.mxu0 0
        %6439 = vmatprep.subr.bf16.mxu0 0
        %6440 = vmatpush1.bf16.msra.mxu0 0
        %6441 = vmatprep.mubr.bf16.mxu0 0
        %6442 = vmatmul.mubr.bf16.gmra.mrb[0].mxu0 %v6407
        %v6443 = vpop.f32.mrb[0].mxu0
        %v6444 = vadd.f32 0.0, %v6443
        %v6445 = vpop.f32.mrb[0].mxu0
        %v6446 = vadd.f32 0.0, %v6445
        %v6447 = vpop.f32.mrb[0].mxu0
        %v6448 = vpop.f32.mrb[0].mxu0
        %6449 = vdwg.mxu0
        %v6450 = vadd.f32 %v6404, %v6444
        %v6451 = vadd.f32 %v6405, %v6446
        %v6452 = vmax.f32 %v6318, %v6450
        %v6453 = vmax.f32 %v6319, %v6451
        %v6454 = vpack.c.bf16 %v6452, %v6452
        %v6455 = vpack.c.bf16 %v6453, %v6453
        %v6457 = vsel %vm5669, %v6455, 0
        %6459 = vmatprep.subr.bf16.mxu0 0
        %6460 = vmatpush1.bf16.msra.mxu0 %v5649
        %6461 = vmatprep.subr.bf16.mxu0 0
        %6462 = vmatpush1.bf16.msra.mxu0 %v5650
        %6463 = vmatprep.subr.bf16.mxu0 0
        %6464 = vmatpush1.bf16.msra.mxu0 %v5651
        %6465 = vmatprep.subr.bf16.mxu0 0
        %6466 = vmatpush1.bf16.msra.mxu0 %v5652
        %6467 = vmatprep.subr.bf16.mxu0 0
        %6468 = vmatpush1.bf16.msra.mxu0 %v5653
        %6469 = vmatprep.subr.bf16.mxu0 0
        %6470 = vmatpush1.bf16.msra.mxu0 %v5654
        %6471 = vmatprep.subr.bf16.mxu0 0
        %6472 = vmatpush1.bf16.msra.mxu0 %v5655
        %6473 = vmatprep.subr.bf16.mxu0 0
        %6474 = vmatpush1.bf16.msra.mxu0 %v5656
        %6475 = vmatprep.subr.bf16.mxu0 0
        %6476 = vmatpush1.bf16.msra.mxu0 %v5657
        %6477 = vmatprep.subr.bf16.mxu0 0
        %6478 = vmatpush1.bf16.msra.mxu0 %v5658
        %6479 = vmatprep.subr.bf16.mxu0 0
        %6480 = vmatpush1.bf16.msra.mxu0 0
        %6481 = vmatprep.subr.bf16.mxu0 0
        %6482 = vmatpush1.bf16.msra.mxu0 0
        %6483 = vmatprep.subr.bf16.mxu0 0
        %6484 = vmatpush1.bf16.msra.mxu0 0
        %6485 = vmatprep.subr.bf16.mxu0 0
        %6486 = vmatpush1.bf16.msra.mxu0 0
        %6487 = vmatprep.subr.bf16.mxu0 0
        %6488 = vmatpush1.bf16.msra.mxu0 0
        %6489 = vmatprep.subr.bf16.mxu0 0
        %6490 = vmatpush1.bf16.msra.mxu0 0
        %6491 = vmatprep.mubr.bf16.mxu0 %v6457
        %6492 = vmatmul.mubr.bf16.gmra.mrb[0].mxu0 %v6454
        %v6493 = vpop.f32.mrb[0].mxu0
        %v6494 = vadd.f32 0.0, %v6493
        %v6495 = vpop.f32.mrb[0].mxu0
        %v6496 = vpop.f32.mrb[0].mxu0
        %v6497 = vpop.f32.mrb[0].mxu0
        %6498 = vdwg.mxu0
        %6499 = vmatprep.subr.bf16.mxu0 0
        %6500 = vmatpush1.bf16.msra.mxu0 %v5773
        %6501 = vmatprep.subr.bf16.mxu0 0
        %6502 = vmatpush1.bf16.msra.mxu0 %v5774
        %6503 = vmatprep.subr.bf16.mxu0 0
        %6504 = vmatpush1.bf16.msra.mxu0 %v5775
        %6505 = vmatprep.subr.bf16.mxu0 0
        %6506 = vmatpush1.bf16.msra.mxu0 %v5776
        %6507 = vmatprep.subr.bf16.mxu0 0
        %6508 = vmatpush1.bf16.msra.mxu0 %v5777
        %6509 = vmatprep.subr.bf16.mxu0 0
        %6510 = vmatpush1.bf16.msra.mxu0 %v5778
        %6511 = vmatprep.subr.bf16.mxu0 0
        %6512 = vmatpush1.bf16.msra.mxu0 %v5779
        %6513 = vmatprep.subr.bf16.mxu0 0
        %6514 = vmatpush1.bf16.msra.mxu0 %v5780
        %6515 = vmatprep.subr.bf16.mxu0 0
        %6516 = vmatpush1.bf16.msra.mxu0 %v5781
        %6517 = vmatprep.subr.bf16.mxu0 0
        %6518 = vmatpush1.bf16.msra.mxu0 %v5782
        %6519 = vmatprep.subr.bf16.mxu0 0
        %6520 = vmatpush1.bf16.msra.mxu0 0
        %6521 = vmatprep.subr.bf16.mxu0 0
        %6522 = vmatpush1.bf16.msra.mxu0 0
        %6523 = vmatprep.subr.bf16.mxu0 0
        %6524 = vmatpush1.bf16.msra.mxu0 0
        %6525 = vmatprep.subr.bf16.mxu0 0
        %6526 = vmatpush1.bf16.msra.mxu0 0
        %6527 = vmatprep.subr.bf16.mxu0 0
        %6528 = vmatpush1.bf16.msra.mxu0 0
        %6529 = vmatprep.subr.bf16.mxu0 0
        %6530 = vmatpush1.bf16.msra.mxu0 0
        %6531 = vmatprep.mubr.bf16.mxu0 %v6457
        %6532 = vmatmul.mubr.bf16.gmra.mrb[0].mxu0 %v6454
        %v6533 = vpop.f32.mrb[0].mxu0
        %v6534 = vadd.f32 0.0, %v6533
        %v6535 = vpop.f32.mrb[0].mxu0
        %v6536 = vpop.f32.mrb[0].mxu0
        %v6537 = vpop.f32.mrb[0].mxu0
        %6538 = vdwg.mxu0
        %v6539 = vmax.f32 %v6494, %v6534
        %v6540 = vpack.c.bf16 %v6539, %v6539
        %6541 = vmatprep.subr.bf16.mxu0 %v5168
        %6542 = vmatpush1.bf16.msra.mxu0 %v5167
        %6543 = vmatprep.subr.bf16.mxu0 %v5170
        %6544 = vmatpush1.bf16.msra.mxu0 %v5169
        %6545 = vmatprep.subr.bf16.mxu0 %v5172
        %6546 = vmatpush1.bf16.msra.mxu0 %v5171
        %6547 = vmatprep.subr.bf16.mxu0 %v5174
        %6548 = vmatpush1.bf16.msra.mxu0 %v5173
        %6549 = vmatprep.subr.bf16.mxu0 %v5194
        %6550 = vmatpush1.bf16.msra.mxu0 %v5191
        %6551 = vmatprep.subr.bf16.mxu0 0
        %6552 = vmatpush1.bf16.msra.mxu0 0
        %6553 = vmatprep.subr.bf16.mxu0 0
        %6554 = vmatpush1.bf16.msra.mxu0 0
        %6555 = vmatprep.subr.bf16.mxu0 0
        %6556 = vmatpush1.bf16.msra.mxu0 0
        %6557 = vmatprep.subr.bf16.mxu0 0
        %6558 = vmatpush1.bf16.msra.mxu0 0
        %6559 = vmatprep.subr.bf16.mxu0 0
        %6560 = vmatpush1.bf16.msra.mxu0 0
        %6561 = vmatprep.subr.bf16.mxu0 0
        %6562 = vmatpush1.bf16.msra.mxu0 0
        %6563 = vmatprep.subr.bf16.mxu0 0
        %6564 = vmatpush1.bf16.msra.mxu0 0
        %6565 = vmatprep.subr.bf16.mxu0 0
        %6566 = vmatpush1.bf16.msra.mxu0 0
        %6567 = vmatprep.subr.bf16.mxu0 0
        %6568 = vmatpush1.bf16.msra.mxu0 0
        %6569 = vmatprep.subr.bf16.mxu0 0
        %6570 = vmatpush1.bf16.msra.mxu0 0
        %6571 = vmatprep.subr.bf16.mxu0 0
        %6572 = vmatpush1.bf16.msra.mxu0 0
        %6573 = vmatprep.mubr.bf16.mxu0 0
        %6574 = vmatmul.mubr.bf16.gmra.mrb[0].mxu0 %v6275
        %v6575 = vpop.f32.mrb[0].mxu0
        %v6576 = vadd.f32 0.0, %v6575
        %v6577 = vpop.f32.mrb[0].mxu0
        %v6578 = vadd.f32 0.0, %v6577
        %v6579 = vpop.f32.mrb[0].mxu0
        %v6580 = vpop.f32.mrb[0].mxu0
        %6581 = vdwg.mxu0
        %v6582 = vadd.f32 %v5124, %v6576
        %v6583 = vadd.f32 %v5128, %v6578
        %6584 = vmatprep.subr.bf16.mxu0 %v5277
        %6585 = vmatpush1.bf16.msra.mxu0 %v5276
        %6586 = vmatprep.subr.bf16.mxu0 %v5279
        %6587 = vmatpush1.bf16.msra.mxu0 %v5278
        %6588 = vmatprep.subr.bf16.mxu0 %v5281
        %6589 = vmatpush1.bf16.msra.mxu0 %v5280
        %6590 = vmatprep.subr.bf16.mxu0 %v5283
        %6591 = vmatpush1.bf16.msra.mxu0 %v5282
        %6592 = vmatprep.subr.bf16.mxu0 %v5301
        %6593 = vmatpush1.bf16.msra.mxu0 %v5298
        %6594 = vmatprep.subr.bf16.mxu0 0
        %6595 = vmatpush1.bf16.msra.mxu0 0
        %6596 = vmatprep.subr.bf16.mxu0 0
        %6597 = vmatpush1.bf16.msra.mxu0 0
        %6598 = vmatprep.subr.bf16.mxu0 0
        %6599 = vmatpush1.bf16.msra.mxu0 0
        %6600 = vmatprep.subr.bf16.mxu0 0
        %6601 = vmatpush1.bf16.msra.mxu0 0
        %6602 = vmatprep.subr.bf16.mxu0 0
        %6603 = vmatpush1.bf16.msra.mxu0 0
        %6604 = vmatprep.subr.bf16.mxu0 0
        %6605 = vmatpush1.bf16.msra.mxu0 0
        %6606 = vmatprep.subr.bf16.mxu0 0
        %6607 = vmatpush1.bf16.msra.mxu0 0
        %6608 = vmatprep.subr.bf16.mxu0 0
        %6609 = vmatpush1.bf16.msra.mxu0 0
        %6610 = vmatprep.subr.bf16.mxu0 0
        %6611 = vmatpush1.bf16.msra.mxu0 0
        %6612 = vmatprep.subr.bf16.mxu0 0
        %6613 = vmatpush1.bf16.msra.mxu0 0
        %6614 = vmatprep.subr.bf16.mxu0 0
        %6615 = vmatpush1.bf16.msra.mxu0 0
        %6616 = vmatprep.mubr.bf16.mxu0 0
        %6617 = vmatmul.mubr.bf16.gmra.mrb[0].mxu0 %v6407
        %v6618 = vpop.f32.mrb[0].mxu0
        %v6619 = vadd.f32 0.0, %v6618
        %v6620 = vpop.f32.mrb[0].mxu0
        %v6621 = vadd.f32 0.0, %v6620
        %v6622 = vpop.f32.mrb[0].mxu0
        %v6623 = vpop.f32.mrb[0].mxu0
        %6624 = vdwg.mxu0
        %v6625 = vadd.f32 %v6582, %v6619
        %v6626 = vadd.f32 %v6583, %v6621
        %v6628 = vsel %vm5185, %v4047, 0
        %6630 = vmatprep.subr.bf16.mxu0 %v5384
        %6631 = vmatpush1.bf16.msra.mxu0 %v5383
        %6632 = vmatprep.subr.bf16.mxu0 %v5386
        %6633 = vmatpush1.bf16.msra.mxu0 %v5385
        %6634 = vmatprep.subr.bf16.mxu0 %v5388
        %6635 = vmatpush1.bf16.msra.mxu0 %v5387
        %6636 = vmatprep.subr.bf16.mxu0 %v5390
        %6637 = vmatpush1.bf16.msra.mxu0 %v5389
        %6638 = vmatprep.subr.bf16.mxu0 %v5408
        %6639 = vmatpush1.bf16.msra.mxu0 %v5405
        %6640 = vmatprep.subr.bf16.mxu0 0
        %6641 = vmatpush1.bf16.msra.mxu0 0
        %6642 = vmatprep.subr.bf16.mxu0 0
        %6643 = vmatpush1.bf16.msra.mxu0 0
        %6644 = vmatprep.subr.bf16.mxu0 0
        %6645 = vmatpush1.bf16.msra.mxu0 0
        %6646 = vmatprep.subr.bf16.mxu0 0
        %6647 = vmatpush1.bf16.msra.mxu0 0
        %6648 = vmatprep.subr.bf16.mxu0 0
        %6649 = vmatpush1.bf16.msra.mxu0 0
        %6650 = vmatprep.subr.bf16.mxu0 0
        %6651 = vmatpush1.bf16.msra.mxu0 0
        %6652 = vmatprep.subr.bf16.mxu0 0
        %6653 = vmatpush1.bf16.msra.mxu0 0
        %6654 = vmatprep.subr.bf16.mxu0 0
        %6655 = vmatpush1.bf16.msra.mxu0 0
        %6656 = vmatprep.subr.bf16.mxu0 0
        %6657 = vmatpush1.bf16.msra.mxu0 0
        %6658 = vmatprep.subr.bf16.mxu0 0
        %6659 = vmatpush1.bf16.msra.mxu0 0
        %6660 = vmatprep.subr.bf16.mxu0 0
        %6661 = vmatpush1.bf16.msra.mxu0 0
        %6662 = vmatprep.mubr.bf16.mxu0 0
        %6663 = vmatmul.mubr.bf16.gmra.mrb[0].mxu0 %v6628
        %v6664 = vpop.f32.mrb[0].mxu0
        %v6665 = vadd.f32 0.0, %v6664
        %v6666 = vpop.f32.mrb[0].mxu0
        %v6667 = vadd.f32 0.0, %v6666
        %v6668 = vpop.f32.mrb[0].mxu0
        %v6669 = vpop.f32.mrb[0].mxu0
        %6670 = vdwg.mxu0
        %v6671 = vadd.f32 %v6625, %v6665
        %v6672 = vadd.f32 %v6626, %v6667
        %6673 = vmatprep.subr.bf16.mxu0 %v5168
        %6674 = vmatpush1.bf16.msra.mxu0 %v5167
        %6675 = vmatprep.subr.bf16.mxu0 %v5170
        %6676 = vmatpush1.bf16.msra.mxu0 %v5169
        %6677 = vmatprep.subr.bf16.mxu0 %v5172
        %6678 = vmatpush1.bf16.msra.mxu0 %v5171
        %6679 = vmatprep.subr.bf16.mxu0 %v5174
        %6680 = vmatpush1.bf16.msra.mxu0 %v5173
        %6681 = vmatprep.subr.bf16.mxu0 %v5194
        %6682 = vmatpush1.bf16.msra.mxu0 %v5191
        %6683 = vmatprep.subr.bf16.mxu0 0
        %6684 = vmatpush1.bf16.msra.mxu0 0
        %6685 = vmatprep.subr.bf16.mxu0 0
        %6686 = vmatpush1.bf16.msra.mxu0 0
        %6687 = vmatprep.subr.bf16.mxu0 0
        %6688 = vmatpush1.bf16.msra.mxu0 0
        %6689 = vmatprep.subr.bf16.mxu0 0
        %6690 = vmatpush1.bf16.msra.mxu0 0
        %6691 = vmatprep.subr.bf16.mxu0 0
        %6692 = vmatpush1.bf16.msra.mxu0 0
        %6693 = vmatprep.subr.bf16.mxu0 0
        %6694 = vmatpush1.bf16.msra.mxu0 0
        %6695 = vmatprep.subr.bf16.mxu0 0
        %6696 = vmatpush1.bf16.msra.mxu0 0
        %6697 = vmatprep.subr.bf16.mxu0 0
        %6698 = vmatpush1.bf16.msra.mxu0 0
        %6699 = vmatprep.subr.bf16.mxu0 0
        %6700 = vmatpush1.bf16.msra.mxu0 0
        %6701 = vmatprep.subr.bf16.mxu0 0
        %6702 = vmatpush1.bf16.msra.mxu0 0
        %6703 = vmatprep.subr.bf16.mxu0 0
        %6704 = vmatpush1.bf16.msra.mxu0 0
        %6705 = vmatprep.mubr.bf16.mxu0 0
        %6706 = vmatmul.mubr.bf16.gmra.mrb[0].mxu0 %v6407
        %v6707 = vpop.f32.mrb[0].mxu0
        %v6708 = vadd.f32 0.0, %v6707
        %v6709 = vpop.f32.mrb[0].mxu0
        %v6710 = vadd.f32 0.0, %v6709
        %v6711 = vpop.f32.mrb[0].mxu0
        %v6712 = vpop.f32.mrb[0].mxu0
        %6713 = vdwg.mxu0
        %v6714 = vadd.f32 %v5124, %v6708
        %v6715 = vadd.f32 %v5128, %v6710
        %6716 = vmatprep.subr.bf16.mxu0 %v5277
        %6717 = vmatpush1.bf16.msra.mxu0 %v5276
        %6718 = vmatprep.subr.bf16.mxu0 %v5279
        %6719 = vmatpush1.bf16.msra.mxu0 %v5278
        %6720 = vmatprep.subr.bf16.mxu0 %v5281
        %6721 = vmatpush1.bf16.msra.mxu0 %v5280
        %6722 = vmatprep.subr.bf16.mxu0 %v5283
        %6723 = vmatpush1.bf16.msra.mxu0 %v5282
        %6724 = vmatprep.subr.bf16.mxu0 %v5301
        %6725 = vmatpush1.bf16.msra.mxu0 %v5298
        %6726 = vmatprep.subr.bf16.mxu0 0
        %6727 = vmatpush1.bf16.msra.mxu0 0
        %6728 = vmatprep.subr.bf16.mxu0 0
        %6729 = vmatpush1.bf16.msra.mxu0 0
        %6730 = vmatprep.subr.bf16.mxu0 0
        %6731 = vmatpush1.bf16.msra.mxu0 0
        %6732 = vmatprep.subr.bf16.mxu0 0
        %6733 = vmatpush1.bf16.msra.mxu0 0
        %6734 = vmatprep.subr.bf16.mxu0 0
        %6735 = vmatpush1.bf16.msra.mxu0 0
        %6736 = vmatprep.subr.bf16.mxu0 0
        %6737 = vmatpush1.bf16.msra.mxu0 0
        %6738 = vmatprep.subr.bf16.mxu0 0
        %6739 = vmatpush1.bf16.msra.mxu0 0
        %6740 = vmatprep.subr.bf16.mxu0 0
        %6741 = vmatpush1.bf16.msra.mxu0 0
        %6742 = vmatprep.subr.bf16.mxu0 0
        %6743 = vmatpush1.bf16.msra.mxu0 0
        %6744 = vmatprep.subr.bf16.mxu0 0
        %6745 = vmatpush1.bf16.msra.mxu0 0
        %6746 = vmatprep.subr.bf16.mxu0 0
        %6747 = vmatpush1.bf16.msra.mxu0 0
        %6748 = vmatprep.mubr.bf16.mxu0 0
        %6749 = vmatmul.mubr.bf16.gmra.mrb[0].mxu0 %v6628
        %v6750 = vpop.f32.mrb[0].mxu0
        %v6751 = vadd.f32 0.0, %v6750
        %v6752 = vpop.f32.mrb[0].mxu0
        %v6753 = vadd.f32 0.0, %v6752
        %v6754 = vpop.f32.mrb[0].mxu0
        %v6755 = vpop.f32.mrb[0].mxu0
        %6756 = vdwg.mxu0
        %v6757 = vadd.f32 %v6714, %v6751
        %v6758 = vadd.f32 %v6715, %v6753
        %v6760 = vsel %vm5185, %v4404, 0
        %6762 = vmatprep.subr.bf16.mxu0 %v5384
        %6763 = vmatpush1.bf16.msra.mxu0 %v5383
        %6764 = vmatprep.subr.bf16.mxu0 %v5386
        %6765 = vmatpush1.bf16.msra.mxu0 %v5385
        %6766 = vmatprep.subr.bf16.mxu0 %v5388
        %6767 = vmatpush1.bf16.msra.mxu0 %v5387
        %6768 = vmatprep.subr.bf16.mxu0 %v5390
        %6769 = vmatpush1.bf16.msra.mxu0 %v5389
        %6770 = vmatprep.subr.bf16.mxu0 %v5408
        %6771 = vmatpush1.bf16.msra.mxu0 %v5405
        %6772 = vmatprep.subr.bf16.mxu0 0
        %6773 = vmatpush1.bf16.msra.mxu0 0
        %6774 = vmatprep.subr.bf16.mxu0 0
        %6775 = vmatpush1.bf16.msra.mxu0 0
        %6776 = vmatprep.subr.bf16.mxu0 0
        %6777 = vmatpush1.bf16.msra.mxu0 0
        %6778 = vmatprep.subr.bf16.mxu0 0
        %6779 = vmatpush1.bf16.msra.mxu0 0
        %6780 = vmatprep.subr.bf16.mxu0 0
        %6781 = vmatpush1.bf16.msra.mxu0 0
        %6782 = vmatprep.subr.bf16.mxu0 0
        %6783 = vmatpush1.bf16.msra.mxu0 0
        %6784 = vmatprep.subr.bf16.mxu0 0
        %6785 = vmatpush1.bf16.msra.mxu0 0
        %6786 = vmatprep.subr.bf16.mxu0 0
        %6787 = vmatpush1.bf16.msra.mxu0 0
        %6788 = vmatprep.subr.bf16.mxu0 0
        %6789 = vmatpush1.bf16.msra.mxu0 0
        %6790 = vmatprep.subr.bf16.mxu0 0
        %6791 = vmatpush1.bf16.msra.mxu0 0
        %6792 = vmatprep.subr.bf16.mxu0 0
        %6793 = vmatpush1.bf16.msra.mxu0 0
        %6794 = vmatprep.mubr.bf16.mxu0 0
        %6795 = vmatmul.mubr.bf16.gmra.mrb[0].mxu0 %v6760
        %v6796 = vpop.f32.mrb[0].mxu0
        %v6797 = vadd.f32 0.0, %v6796
        %v6798 = vpop.f32.mrb[0].mxu0
        %v6799 = vadd.f32 0.0, %v6798
        %v6800 = vpop.f32.mrb[0].mxu0
        %v6801 = vpop.f32.mrb[0].mxu0
        %6802 = vdwg.mxu0
        %v6803 = vadd.f32 %v6757, %v6797
        %v6804 = vadd.f32 %v6758, %v6799
        %v6805 = vmax.f32 %v6671, %v6803
        %v6806 = vmax.f32 %v6672, %v6804
        %v6807 = vpack.c.bf16 %v6805, %v6805
        %v6808 = vpack.c.bf16 %v6806, %v6806
        %v6810 = vsel %vm5669, %v6808, 0
        %6812 = vmatprep.subr.bf16.mxu0 0
        %6813 = vmatpush1.bf16.msra.mxu0 %v5649
        %6814 = vmatprep.subr.bf16.mxu0 0
        %6815 = vmatpush1.bf16.msra.mxu0 %v5650
        %6816 = vmatprep.subr.bf16.mxu0 0
        %6817 = vmatpush1.bf16.msra.mxu0 %v5651
        %6818 = vmatprep.subr.bf16.mxu0 0
        %6819 = vmatpush1.bf16.msra.mxu0 %v5652
        %6820 = vmatprep.subr.bf16.mxu0 0
        %6821 = vmatpush1.bf16.msra.mxu0 %v5653
        %6822 = vmatprep.subr.bf16.mxu0 0
        %6823 = vmatpush1.bf16.msra.mxu0 %v5654
        %6824 = vmatprep.subr.bf16.mxu0 0
        %6825 = vmatpush1.bf16.msra.mxu0 %v5655
        %6826 = vmatprep.subr.bf16.mxu0 0
        %6827 = vmatpush1.bf16.msra.mxu0 %v5656
        %6828 = vmatprep.subr.bf16.mxu0 0
        %6829 = vmatpush1.bf16.msra.mxu0 %v5657
        %6830 = vmatprep.subr.bf16.mxu0 0
        %6831 = vmatpush1.bf16.msra.mxu0 %v5658
        %6832 = vmatprep.subr.bf16.mxu0 0
        %6833 = vmatpush1.bf16.msra.mxu0 0
        %6834 = vmatprep.subr.bf16.mxu0 0
        %6835 = vmatpush1.bf16.msra.mxu0 0
        %6836 = vmatprep.subr.bf16.mxu0 0
        %6837 = vmatpush1.bf16.msra.mxu0 0
        %6838 = vmatprep.subr.bf16.mxu0 0
        %6839 = vmatpush1.bf16.msra.mxu0 0
        %6840 = vmatprep.subr.bf16.mxu0 0
        %6841 = vmatpush1.bf16.msra.mxu0 0
        %6842 = vmatprep.subr.bf16.mxu0 0
        %6843 = vmatpush1.bf16.msra.mxu0 0
        %6844 = vmatprep.mubr.bf16.mxu0 %v6810
        %6845 = vmatmul.mubr.bf16.gmra.mrb[0].mxu0 %v6807
        %v6846 = vpop.f32.mrb[0].mxu0
        %v6847 = vadd.f32 0.0, %v6846
        %v6848 = vpop.f32.mrb[0].mxu0
        %v6849 = vpop.f32.mrb[0].mxu0
        %v6850 = vpop.f32.mrb[0].mxu0
        %6851 = vdwg.mxu0
        %6852 = vmatprep.subr.bf16.mxu0 0
        %6853 = vmatpush1.bf16.msra.mxu0 %v5773
        %6854 = vmatprep.subr.bf16.mxu0 0
        %6855 = vmatpush1.bf16.msra.mxu0 %v5774
        %6856 = vmatprep.subr.bf16.mxu0 0
        %6857 = vmatpush1.bf16.msra.mxu0 %v5775
        %6858 = vmatprep.subr.bf16.mxu0 0
        %6859 = vmatpush1.bf16.msra.mxu0 %v5776
        %6860 = vmatprep.subr.bf16.mxu0 0
        %6861 = vmatpush1.bf16.msra.mxu0 %v5777
        %6862 = vmatprep.subr.bf16.mxu0 0
        %6863 = vmatpush1.bf16.msra.mxu0 %v5778
        %6864 = vmatprep.subr.bf16.mxu0 0
        %6865 = vmatpush1.bf16.msra.mxu0 %v5779
        %6866 = vmatprep.subr.bf16.mxu0 0
        %6867 = vmatpush1.bf16.msra.mxu0 %v5780
        %6868 = vmatprep.subr.bf16.mxu0 0
        %6869 = vmatpush1.bf16.msra.mxu0 %v5781
        %6870 = vmatprep.subr.bf16.mxu0 0
        %6871 = vmatpush1.bf16.msra.mxu0 %v5782
        %6872 = vmatprep.subr.bf16.mxu0 0
        %6873 = vmatpush1.bf16.msra.mxu0 0
        %6874 = vmatprep.subr.bf16.mxu0 0
        %6875 = vmatpush1.bf16.msra.mxu0 0
        %6876 = vmatprep.subr.bf16.mxu0 0
        %6877 = vmatpush1.bf16.msra.mxu0 0
        %6878 = vmatprep.subr.bf16.mxu0 0
        %6879 = vmatpush1.bf16.msra.mxu0 0
        %6880 = vmatprep.subr.bf16.mxu0 0
        %6881 = vmatpush1.bf16.msra.mxu0 0
        %6882 = vmatprep.subr.bf16.mxu0 0
        %6883 = vmatpush1.bf16.msra.mxu0 0
        %6884 = vmatprep.mubr.bf16.mxu0 %v6810
        %6885 = vmatmul.mubr.bf16.gmra.mrb[0].mxu0 %v6807
        %v6886 = vpop.f32.mrb[0].mxu0
        %v6887 = vadd.f32 0.0, %v6886
        %v6888 = vpop.f32.mrb[0].mxu0
        %v6889 = vpop.f32.mrb[0].mxu0
        %v6890 = vpop.f32.mrb[0].mxu0
        %6891 = vdwg.mxu0
        %v6892 = vmax.f32 %v6847, %v6887
        %v6893 = vpack.c.bf16 %v6892, %v6892
        %6894 = vmatprep.subr.bf16.mxu0 %v5168
        %6895 = vmatpush1.bf16.msra.mxu0 %v5167
        %6896 = vmatprep.subr.bf16.mxu0 %v5170
        %6897 = vmatpush1.bf16.msra.mxu0 %v5169
        %6898 = vmatprep.subr.bf16.mxu0 %v5172
        %6899 = vmatpush1.bf16.msra.mxu0 %v5171
        %6900 = vmatprep.subr.bf16.mxu0 %v5174
        %6901 = vmatpush1.bf16.msra.mxu0 %v5173
        %6902 = vmatprep.subr.bf16.mxu0 %v5194
        %6903 = vmatpush1.bf16.msra.mxu0 %v5191
        %6904 = vmatprep.subr.bf16.mxu0 0
        %6905 = vmatpush1.bf16.msra.mxu0 0
        %6906 = vmatprep.subr.bf16.mxu0 0
        %6907 = vmatpush1.bf16.msra.mxu0 0
        %6908 = vmatprep.subr.bf16.mxu0 0
        %6909 = vmatpush1.bf16.msra.mxu0 0
        %6910 = vmatprep.subr.bf16.mxu0 0
        %6911 = vmatpush1.bf16.msra.mxu0 0
        %6912 = vmatprep.subr.bf16.mxu0 0
        %6913 = vmatpush1.bf16.msra.mxu0 0
        %6914 = vmatprep.subr.bf16.mxu0 0
        %6915 = vmatpush1.bf16.msra.mxu0 0
        %6916 = vmatprep.subr.bf16.mxu0 0
        %6917 = vmatpush1.bf16.msra.mxu0 0
        %6918 = vmatprep.subr.bf16.mxu0 0
        %6919 = vmatpush1.bf16.msra.mxu0 0
        %6920 = vmatprep.subr.bf16.mxu0 0
        %6921 = vmatpush1.bf16.msra.mxu0 0
        %6922 = vmatprep.subr.bf16.mxu0 0
        %6923 = vmatpush1.bf16.msra.mxu0 0
        %6924 = vmatprep.subr.bf16.mxu0 0
        %6925 = vmatpush1.bf16.msra.mxu0 0
        %6926 = vmatprep.mubr.bf16.mxu0 0
        %6927 = vmatmul.mubr.bf16.gmra.mrb[0].mxu0 %v6628
        %v6928 = vpop.f32.mrb[0].mxu0
        %v6929 = vadd.f32 0.0, %v6928
        %v6930 = vpop.f32.mrb[0].mxu0
        %v6931 = vadd.f32 0.0, %v6930
        %v6932 = vpop.f32.mrb[0].mxu0
        %v6933 = vpop.f32.mrb[0].mxu0
        %6934 = vdwg.mxu0
        %v6935 = vadd.f32 %v5124, %v6929
        %v6936 = vadd.f32 %v5128, %v6931
        %6937 = vmatprep.subr.bf16.mxu0 %v5277
        %6938 = vmatpush1.bf16.msra.mxu0 %v5276
        %6939 = vmatprep.subr.bf16.mxu0 %v5279
        %6940 = vmatpush1.bf16.msra.mxu0 %v5278
        %6941 = vmatprep.subr.bf16.mxu0 %v5281
        %6942 = vmatpush1.bf16.msra.mxu0 %v5280
        %6943 = vmatprep.subr.bf16.mxu0 %v5283
        %6944 = vmatpush1.bf16.msra.mxu0 %v5282
        %6945 = vmatprep.subr.bf16.mxu0 %v5301
        %6946 = vmatpush1.bf16.msra.mxu0 %v5298
        %6947 = vmatprep.subr.bf16.mxu0 0
        %6948 = vmatpush1.bf16.msra.mxu0 0
        %6949 = vmatprep.subr.bf16.mxu0 0
        %6950 = vmatpush1.bf16.msra.mxu0 0
        %6951 = vmatprep.subr.bf16.mxu0 0
        %6952 = vmatpush1.bf16.msra.mxu0 0
        %6953 = vmatprep.subr.bf16.mxu0 0
        %6954 = vmatpush1.bf16.msra.mxu0 0
        %6955 = vmatprep.subr.bf16.mxu0 0
        %6956 = vmatpush1.bf16.msra.mxu0 0
        %6957 = vmatprep.subr.bf16.mxu0 0
        %6958 = vmatpush1.bf16.msra.mxu0 0
        %6959 = vmatprep.subr.bf16.mxu0 0
        %6960 = vmatpush1.bf16.msra.mxu0 0
        %6961 = vmatprep.subr.bf16.mxu0 0
        %6962 = vmatpush1.bf16.msra.mxu0 0
        %6963 = vmatprep.subr.bf16.mxu0 0
        %6964 = vmatpush1.bf16.msra.mxu0 0
        %6965 = vmatprep.subr.bf16.mxu0 0
        %6966 = vmatpush1.bf16.msra.mxu0 0
        %6967 = vmatprep.subr.bf16.mxu0 0
        %6968 = vmatpush1.bf16.msra.mxu0 0
        %6969 = vmatprep.mubr.bf16.mxu0 0
        %6970 = vmatmul.mubr.bf16.gmra.mrb[0].mxu0 %v6760
        %v6971 = vpop.f32.mrb[0].mxu0
        %v6972 = vadd.f32 0.0, %v6971
        %v6973 = vpop.f32.mrb[0].mxu0
        %v6974 = vadd.f32 0.0, %v6973
        %v6975 = vpop.f32.mrb[0].mxu0
        %v6976 = vpop.f32.mrb[0].mxu0
        %6977 = vdwg.mxu0
        %v6978 = vadd.f32 %v6935, %v6972
        %v6979 = vadd.f32 %v6936, %v6974
        %v6981 = vsel %vm5185, %v4761, 0
        %6983 = vmatprep.subr.bf16.mxu0 %v5384
        %6984 = vmatpush1.bf16.msra.mxu0 %v5383
        %6985 = vmatprep.subr.bf16.mxu0 %v5386
        %6986 = vmatpush1.bf16.msra.mxu0 %v5385
        %6987 = vmatprep.subr.bf16.mxu0 %v5388
        %6988 = vmatpush1.bf16.msra.mxu0 %v5387
        %6989 = vmatprep.subr.bf16.mxu0 %v5390
        %6990 = vmatpush1.bf16.msra.mxu0 %v5389
        %6991 = vmatprep.subr.bf16.mxu0 %v5408
        %6992 = vmatpush1.bf16.msra.mxu0 %v5405
        %6993 = vmatprep.subr.bf16.mxu0 0
        %6994 = vmatpush1.bf16.msra.mxu0 0
        %6995 = vmatprep.subr.bf16.mxu0 0
        %6996 = vmatpush1.bf16.msra.mxu0 0
        %6997 = vmatprep.subr.bf16.mxu0 0
        %6998 = vmatpush1.bf16.msra.mxu0 0
        %6999 = vmatprep.subr.bf16.mxu0 0
        %7000 = vmatpush1.bf16.msra.mxu0 0
        %7001 = vmatprep.subr.bf16.mxu0 0
        %7002 = vmatpush1.bf16.msra.mxu0 0
        %7003 = vmatprep.subr.bf16.mxu0 0
        %7004 = vmatpush1.bf16.msra.mxu0 0
        %7005 = vmatprep.subr.bf16.mxu0 0
        %7006 = vmatpush1.bf16.msra.mxu0 0
        %7007 = vmatprep.subr.bf16.mxu0 0
        %7008 = vmatpush1.bf16.msra.mxu0 0
        %7009 = vmatprep.subr.bf16.mxu0 0
        %7010 = vmatpush1.bf16.msra.mxu0 0
        %7011 = vmatprep.subr.bf16.mxu0 0
        %7012 = vmatpush1.bf16.msra.mxu0 0
        %7013 = vmatprep.subr.bf16.mxu0 0
        %7014 = vmatpush1.bf16.msra.mxu0 0
        %7015 = vmatprep.mubr.bf16.mxu0 0
        %7016 = vmatmul.mubr.bf16.gmra.mrb[0].mxu0 %v6981
        %v7017 = vpop.f32.mrb[0].mxu0
        %v7018 = vadd.f32 0.0, %v7017
        %v7019 = vpop.f32.mrb[0].mxu0
        %v7020 = vadd.f32 0.0, %v7019
        %v7021 = vpop.f32.mrb[0].mxu0
        %v7022 = vpop.f32.mrb[0].mxu0
        %7023 = vdwg.mxu0
        %v7024 = vadd.f32 %v6978, %v7018
        %v7025 = vadd.f32 %v6979, %v7020
        %7026 = vmatprep.subr.bf16.mxu0 %v5168
        %7027 = vmatpush1.bf16.msra.mxu0 %v5167
        %7028 = vmatprep.subr.bf16.mxu0 %v5170
        %7029 = vmatpush1.bf16.msra.mxu0 %v5169
        %7030 = vmatprep.subr.bf16.mxu0 %v5172
        %7031 = vmatpush1.bf16.msra.mxu0 %v5171
        %7032 = vmatprep.subr.bf16.mxu0 %v5174
        %7033 = vmatpush1.bf16.msra.mxu0 %v5173
        %7034 = vmatprep.subr.bf16.mxu0 %v5194
        %7035 = vmatpush1.bf16.msra.mxu0 %v5191
        %7036 = vmatprep.subr.bf16.mxu0 0
        %7037 = vmatpush1.bf16.msra.mxu0 0
        %7038 = vmatprep.subr.bf16.mxu0 0
        %7039 = vmatpush1.bf16.msra.mxu0 0
        %7040 = vmatprep.subr.bf16.mxu0 0
        %7041 = vmatpush1.bf16.msra.mxu0 0
        %7042 = vmatprep.subr.bf16.mxu0 0
        %7043 = vmatpush1.bf16.msra.mxu0 0
        %7044 = vmatprep.subr.bf16.mxu0 0
        %7045 = vmatpush1.bf16.msra.mxu0 0
        %7046 = vmatprep.subr.bf16.mxu0 0
        %7047 = vmatpush1.bf16.msra.mxu0 0
        %7048 = vmatprep.subr.bf16.mxu0 0
        %7049 = vmatpush1.bf16.msra.mxu0 0
        %7050 = vmatprep.subr.bf16.mxu0 0
        %7051 = vmatpush1.bf16.msra.mxu0 0
        %7052 = vmatprep.subr.bf16.mxu0 0
        %7053 = vmatpush1.bf16.msra.mxu0 0
        %7054 = vmatprep.subr.bf16.mxu0 0
        %7055 = vmatpush1.bf16.msra.mxu0 0
        %7056 = vmatprep.subr.bf16.mxu0 0
        %7057 = vmatpush1.bf16.msra.mxu0 0
        %7058 = vmatprep.mubr.bf16.mxu0 0
        %7059 = vmatmul.mubr.bf16.gmra.mrb[0].mxu0 %v6760
        %v7060 = vpop.f32.mrb[0].mxu0
        %v7061 = vadd.f32 0.0, %v7060
        %v7062 = vpop.f32.mrb[0].mxu0
        %v7063 = vadd.f32 0.0, %v7062
        %v7064 = vpop.f32.mrb[0].mxu0
        %v7065 = vpop.f32.mrb[0].mxu0
        %7066 = vdwg.mxu0
        %v7067 = vadd.f32 %v5124, %v7061
        %v7068 = vadd.f32 %v5128, %v7063
        %7069 = vmatprep.subr.bf16.mxu0 %v5277
        %7070 = vmatpush1.bf16.msra.mxu0 %v5276
        %7071 = vmatprep.subr.bf16.mxu0 %v5279
        %7072 = vmatpush1.bf16.msra.mxu0 %v5278
        %7073 = vmatprep.subr.bf16.mxu0 %v5281
        %7074 = vmatpush1.bf16.msra.mxu0 %v5280
        %7075 = vmatprep.subr.bf16.mxu0 %v5283
        %7076 = vmatpush1.bf16.msra.mxu0 %v5282
        %7077 = vmatprep.subr.bf16.mxu0 %v5301
        %7078 = vmatpush1.bf16.msra.mxu0 %v5298
        %7079 = vmatprep.subr.bf16.mxu0 0
        %7080 = vmatpush1.bf16.msra.mxu0 0
        %7081 = vmatprep.subr.bf16.mxu0 0
        %7082 = vmatpush1.bf16.msra.mxu0 0
        %7083 = vmatprep.subr.bf16.mxu0 0
        %7084 = vmatpush1.bf16.msra.mxu0 0
        %7085 = vmatprep.subr.bf16.mxu0 0
        %7086 = vmatpush1.bf16.msra.mxu0 0
        %7087 = vmatprep.subr.bf16.mxu0 0
        %7088 = vmatpush1.bf16.msra.mxu0 0
        %7089 = vmatprep.subr.bf16.mxu0 0
        %7090 = vmatpush1.bf16.msra.mxu0 0
        %7091 = vmatprep.subr.bf16.mxu0 0
        %7092 = vmatpush1.bf16.msra.mxu0 0
        %7093 = vmatprep.subr.bf16.mxu0 0
        %7094 = vmatpush1.bf16.msra.mxu0 0
        %7095 = vmatprep.subr.bf16.mxu0 0
        %7096 = vmatpush1.bf16.msra.mxu0 0
        %7097 = vmatprep.subr.bf16.mxu0 0
        %7098 = vmatpush1.bf16.msra.mxu0 0
        %7099 = vmatprep.subr.bf16.mxu0 0
        %7100 = vmatpush1.bf16.msra.mxu0 0
        %7101 = vmatprep.mubr.bf16.mxu0 0
        %7102 = vmatmul.mubr.bf16.gmra.mrb[0].mxu0 %v6981
        %v7103 = vpop.f32.mrb[0].mxu0
        %v7104 = vadd.f32 0.0, %v7103
        %v7105 = vpop.f32.mrb[0].mxu0
        %v7106 = vadd.f32 0.0, %v7105
        %v7107 = vpop.f32.mrb[0].mxu0
        %v7108 = vpop.f32.mrb[0].mxu0
        %7109 = vdwg.mxu0
        %v7110 = vadd.f32 %v7067, %v7104
        %v7111 = vadd.f32 %v7068, %v7106
        %v7113 = vsel %vm5185, %v5118, 0
        %7115 = vmatprep.subr.bf16.mxu0 %v5384
        %7116 = vmatpush1.bf16.msra.mxu0 %v5383
        %7117 = vmatprep.subr.bf16.mxu0 %v5386
        %7118 = vmatpush1.bf16.msra.mxu0 %v5385
        %7119 = vmatprep.subr.bf16.mxu0 %v5388
        %7120 = vmatpush1.bf16.msra.mxu0 %v5387
        %7121 = vmatprep.subr.bf16.mxu0 %v5390
        %7122 = vmatpush1.bf16.msra.mxu0 %v5389
        %7123 = vmatprep.subr.bf16.mxu0 %v5408
        %7124 = vmatpush1.bf16.msra.mxu0 %v5405
        %7125 = vmatprep.subr.bf16.mxu0 0
        %7126 = vmatpush1.bf16.msra.mxu0 0
        %7127 = vmatprep.subr.bf16.mxu0 0
        %7128 = vmatpush1.bf16.msra.mxu0 0
        %7129 = vmatprep.subr.bf16.mxu0 0
        %7130 = vmatpush1.bf16.msra.mxu0 0
        %7131 = vmatprep.subr.bf16.mxu0 0
        %7132 = vmatpush1.bf16.msra.mxu0 0
        %7133 = vmatprep.subr.bf16.mxu0 0
        %7134 = vmatpush1.bf16.msra.mxu0 0
        %7135 = vmatprep.subr.bf16.mxu0 0
        %7136 = vmatpush1.bf16.msra.mxu0 0
        %7137 = vmatprep.subr.bf16.mxu0 0
        %7138 = vmatpush1.bf16.msra.mxu0 0
        %7139 = vmatprep.subr.bf16.mxu0 0
        %7140 = vmatpush1.bf16.msra.mxu0 0
        %7141 = vmatprep.subr.bf16.mxu0 0
        %7142 = vmatpush1.bf16.msra.mxu0 0
        %7143 = vmatprep.subr.bf16.mxu0 0
        %7144 = vmatpush1.bf16.msra.mxu0 0
        %7145 = vmatprep.subr.bf16.mxu0 0
        %7146 = vmatpush1.bf16.msra.mxu0 0
        %7147 = vmatprep.mubr.bf16.mxu0 0
        %7148 = vmatmul.mubr.bf16.gmra.mrb[0].mxu0 %v7113
        %v7149 = vpop.f32.mrb[0].mxu0
        %v7150 = vadd.f32 0.0, %v7149
        %v7151 = vpop.f32.mrb[0].mxu0
        %v7152 = vadd.f32 0.0, %v7151
        %v7153 = vpop.f32.mrb[0].mxu0
        %v7154 = vpop.f32.mrb[0].mxu0
        %7155 = vdwg.mxu0
        %v7156 = vadd.f32 %v7110, %v7150
        %v7157 = vadd.f32 %v7111, %v7152
        %v7158 = vmax.f32 %v7024, %v7156
        %v7159 = vmax.f32 %v7025, %v7157
        %v7160 = vpack.c.bf16 %v7158, %v7158
        %v7161 = vpack.c.bf16 %v7159, %v7159
        %v7163 = vsel %vm5669, %v7161, 0
        %7165 = vmatprep.subr.bf16.mxu0 0
        %7166 = vmatpush1.bf16.msra.mxu0 %v5649
        %7167 = vmatprep.subr.bf16.mxu0 0
        %7168 = vmatpush1.bf16.msra.mxu0 %v5650
        %7169 = vmatprep.subr.bf16.mxu0 0
        %7170 = vmatpush1.bf16.msra.mxu0 %v5651
        %7171 = vmatprep.subr.bf16.mxu0 0
        %7172 = vmatpush1.bf16.msra.mxu0 %v5652
        %7173 = vmatprep.subr.bf16.mxu0 0
        %7174 = vmatpush1.bf16.msra.mxu0 %v5653
        %7175 = vmatprep.subr.bf16.mxu0 0
        %7176 = vmatpush1.bf16.msra.mxu0 %v5654
        %7177 = vmatprep.subr.bf16.mxu0 0
        %7178 = vmatpush1.bf16.msra.mxu0 %v5655
        %7179 = vmatprep.subr.bf16.mxu0 0
        %7180 = vmatpush1.bf16.msra.mxu0 %v5656
        %7181 = vmatprep.subr.bf16.mxu0 0
        %7182 = vmatpush1.bf16.msra.mxu0 %v5657
        %7183 = vmatprep.subr.bf16.mxu0 0
        %7184 = vmatpush1.bf16.msra.mxu0 %v5658
        %7185 = vmatprep.subr.bf16.mxu0 0
        %7186 = vmatpush1.bf16.msra.mxu0 0
        %7187 = vmatprep.subr.bf16.mxu0 0
        %7188 = vmatpush1.bf16.msra.mxu0 0
        %7189 = vmatprep.subr.bf16.mxu0 0
        %7190 = vmatpush1.bf16.msra.mxu0 0
        %7191 = vmatprep.subr.bf16.mxu0 0
        %7192 = vmatpush1.bf16.msra.mxu0 0
        %7193 = vmatprep.subr.bf16.mxu0 0
        %7194 = vmatpush1.bf16.msra.mxu0 0
        %7195 = vmatprep.subr.bf16.mxu0 0
        %7196 = vmatpush1.bf16.msra.mxu0 0
        %7197 = vmatprep.mubr.bf16.mxu0 %v7163
        %7198 = vmatmul.mubr.bf16.gmra.mrb[0].mxu0 %v7160
        %v7199 = vpop.f32.mrb[0].mxu0
        %v7200 = vadd.f32 0.0, %v7199
        %v7201 = vpop.f32.mrb[0].mxu0
        %v7202 = vpop.f32.mrb[0].mxu0
        %v7203 = vpop.f32.mrb[0].mxu0
        %7204 = vdwg.mxu0
        %7205 = vmatprep.subr.bf16.mxu0 0
        %7206 = vmatpush1.bf16.msra.mxu0 %v5773
        %7207 = vmatprep.subr.bf16.mxu0 0
        %7208 = vmatpush1.bf16.msra.mxu0 %v5774
        %7209 = vmatprep.subr.bf16.mxu0 0
        %7210 = vmatpush1.bf16.msra.mxu0 %v5775
        %7211 = vmatprep.subr.bf16.mxu0 0
        %7212 = vmatpush1.bf16.msra.mxu0 %v5776
        %7213 = vmatprep.subr.bf16.mxu0 0
        %7214 = vmatpush1.bf16.msra.mxu0 %v5777
        %7215 = vmatprep.subr.bf16.mxu0 0
        %7216 = vmatpush1.bf16.msra.mxu0 %v5778
        %7217 = vmatprep.subr.bf16.mxu0 0
        %7218 = vmatpush1.bf16.msra.mxu0 %v5779
        %7219 = vmatprep.subr.bf16.mxu0 0
        %7220 = vmatpush1.bf16.msra.mxu0 %v5780
        %7221 = vmatprep.subr.bf16.mxu0 0
        %7222 = vmatpush1.bf16.msra.mxu0 %v5781
        %7223 = vmatprep.subr.bf16.mxu0 0
        %7224 = vmatpush1.bf16.msra.mxu0 %v5782
        %7225 = vmatprep.subr.bf16.mxu0 0
        %7226 = vmatpush1.bf16.msra.mxu0 0
        %7227 = vmatprep.subr.bf16.mxu0 0
        %7228 = vmatpush1.bf16.msra.mxu0 0
        %7229 = vmatprep.subr.bf16.mxu0 0
        %7230 = vmatpush1.bf16.msra.mxu0 0
        %7231 = vmatprep.subr.bf16.mxu0 0
        %7232 = vmatpush1.bf16.msra.mxu0 0
        %7233 = vmatprep.subr.bf16.mxu0 0
        %7234 = vmatpush1.bf16.msra.mxu0 0
        %7235 = vmatprep.subr.bf16.mxu0 0
        %7236 = vmatpush1.bf16.msra.mxu0 0
        %7237 = vmatprep.mubr.bf16.mxu0 %v7163
        %7238 = vmatmul.mubr.bf16.gmra.mrb[0].mxu0 %v7160
        %v7239 = vpop.f32.mrb[0].mxu0
        %v7240 = vadd.f32 0.0, %v7239
        %v7241 = vpop.f32.mrb[0].mxu0
        %v7242 = vpop.f32.mrb[0].mxu0
        %v7243 = vpop.f32.mrb[0].mxu0
        %7244 = vdwg.mxu0
        %v7245 = vmax.f32 %v7200, %v7240
        %v7246 = vpack.c.bf16 %v7245, %v7245
        %v7247 = vld [vmem:[%s10] sm:$0x1]
        %v7249 = vlaneseq
        %v7250 = vshrl.u32 %v7249, 7
        %v7251 = vsub.s32 0, %v7250
        %v7252 = vrot.slane %v7247, %v7251
        %v7254 = vld [vmem:[%s9] sm:$0xf]
        %v7255 = vld [vmem:[%s9 + $0x4] sm:$0xf]
        %v7256 = vld [vmem:[%s9 + $0x8] sm:$0xf]
        %v7257 = vld [vmem:[%s9 + $0xc] sm:$0xf]
        %v7258 = vld [vmem:[%s9 + $0x10] sm:$0xf]
        %v7259 = vld [vmem:[%s9 + $0x14] sm:$0xf]
        %v7260 = vld [vmem:[%s9 + $0x18] sm:$0xf]
        %v7261 = vld [vmem:[%s9 + $0x1c] sm:$0xf]
        %v7262 = vld [vmem:[%s9 + $0x20] sm:$0xf]
        %v7263 = vld [vmem:[%s9 + $0x24] sm:$0xf]
        %v7274 = vunpack.c.l.b16 %v7254
        %v7275 = vunpack.c.l.b16 %v7255
        %v7276 = vunpack.c.l.b16 %v7256
        %v7277 = vunpack.c.l.b16 %v7257
        %v7278 = vunpack.c.l.b16 %v7258
        %v7279 = vunpack.c.l.b16 %v7259
        %v7280 = vunpack.c.l.b16 %v7260
        %v7281 = vunpack.c.l.b16 %v7261
        %v7282 = vunpack.c.l.b16 %v7262
        %v7283 = vunpack.c.l.b16 %v7263
        %v7284 = vpack.c.b16 %v7275, %v7274
        %v7285 = vpack.c.b16 %v7277, %v7276
        %v7286 = vpack.c.b16 %v7279, %v7278
        %v7287 = vpack.c.b16 %v7281, %v7280
        %v7288 = vpack.c.b16 %v7283, %v7282
        %vm7294 = vcmask 654336
        %v7296 = vsel %vm7294, %v5834, 0
        %7298 = vmatprep.subr.bf16.mxu0 0
        %7299 = vmatpush1.bf16.msra.mxu0 %v7284
        %7300 = vmatprep.subr.bf16.mxu0 0
        %7301 = vmatpush1.bf16.msra.mxu0 %v7285
        %7302 = vmatprep.subr.bf16.mxu0 0
        %7303 = vmatpush1.bf16.msra.mxu0 %v7286
        %7304 = vmatprep.subr.bf16.mxu0 0
        %7305 = vmatpush1.bf16.msra.mxu0 %v7287
        %7306 = vmatprep.subr.bf16.mxu0 0
        %7307 = vmatpush1.bf16.msra.mxu0 %v7288
        %7308 = vmatprep.subr.bf16.mxu0 0
        %7309 = vmatpush1.bf16.msra.mxu0 0
        %7310 = vmatprep.subr.bf16.mxu0 0
        %7311 = vmatpush1.bf16.msra.mxu0 0
        %7312 = vmatprep.subr.bf16.mxu0 0
        %7313 = vmatpush1.bf16.msra.mxu0 0
        %7314 = vmatprep.subr.bf16.mxu0 0
        %7315 = vmatpush1.bf16.msra.mxu0 0
        %7316 = vmatprep.subr.bf16.mxu0 0
        %7317 = vmatpush1.bf16.msra.mxu0 0
        %7318 = vmatprep.subr.bf16.mxu0 0
        %7319 = vmatpush1.bf16.msra.mxu0 0
        %7320 = vmatprep.subr.bf16.mxu0 0
        %7321 = vmatpush1.bf16.msra.mxu0 0
        %7322 = vmatprep.subr.bf16.mxu0 0
        %7323 = vmatpush1.bf16.msra.mxu0 0
        %7324 = vmatprep.subr.bf16.mxu0 0
        %7325 = vmatpush1.bf16.msra.mxu0 0
        %7326 = vmatprep.subr.bf16.mxu0 0
        %7327 = vmatpush1.bf16.msra.mxu0 0
        %7328 = vmatprep.subr.bf16.mxu0 0
        %7329 = vmatpush1.bf16.msra.mxu0 0
        %7330 = vmatprep.mubr.bf16.mxu0 0
        %7331 = vmatmul.mubr.bf16.gmra.mrb[0].mxu0 %v7296
        %v7332 = vpop.f32.mrb[0].mxu0
        %v7333 = vadd.f32 0.0, %v7332
        %v7334 = vpop.f32.mrb[0].mxu0
        %v7335 = vpop.f32.mrb[0].mxu0
        %v7336 = vpop.f32.mrb[0].mxu0
        %7337 = vdwg.mxu0
        %v7338 = vadd.f32 %v7252, %v7333
        %s7339 = scalar_lea.vmem %s9, 40
        %v7340 = vld [vmem:[%s7339] sm:$0xf]
        %v7341 = vld [vmem:[%s7339 + $0x4] sm:$0xf]
        %v7342 = vld [vmem:[%s7339 + $0x8] sm:$0xf]
        %v7343 = vld [vmem:[%s7339 + $0xc] sm:$0xf]
        %v7344 = vld [vmem:[%s7339 + $0x10] sm:$0xf]
        %v7345 = vld [vmem:[%s7339 + $0x14] sm:$0xf]
        %v7346 = vld [vmem:[%s7339 + $0x18] sm:$0xf]
        %v7347 = vld [vmem:[%s7339 + $0x1c] sm:$0xf]
        %v7348 = vld [vmem:[%s7339 + $0x20] sm:$0xf]
        %v7349 = vld [vmem:[%s7339 + $0x24] sm:$0xf]
        %v7360 = vunpack.c.l.b16 %v7340
        %v7361 = vunpack.c.l.b16 %v7341
        %v7362 = vunpack.c.l.b16 %v7342
        %v7363 = vunpack.c.l.b16 %v7343
        %v7364 = vunpack.c.l.b16 %v7344
        %v7365 = vunpack.c.l.b16 %v7345
        %v7366 = vunpack.c.l.b16 %v7346
        %v7367 = vunpack.c.l.b16 %v7347
        %v7368 = vunpack.c.l.b16 %v7348
        %v7369 = vunpack.c.l.b16 %v7349
        %v7370 = vpack.c.b16 %v7361, %v7360
        %v7371 = vpack.c.b16 %v7363, %v7362
        %v7372 = vpack.c.b16 %v7365, %v7364
        %v7373 = vpack.c.b16 %v7367, %v7366
        %v7374 = vpack.c.b16 %v7369, %v7368
        %v7381 = vsel %vm7294, %v6187, 0
        %7383 = vmatprep.subr.bf16.mxu0 0
        %7384 = vmatpush1.bf16.msra.mxu0 %v7370
        %7385 = vmatprep.subr.bf16.mxu0 0
        %7386 = vmatpush1.bf16.msra.mxu0 %v7371
        %7387 = vmatprep.subr.bf16.mxu0 0
        %7388 = vmatpush1.bf16.msra.mxu0 %v7372
        %7389 = vmatprep.subr.bf16.mxu0 0
        %7390 = vmatpush1.bf16.msra.mxu0 %v7373
        %7391 = vmatprep.subr.bf16.mxu0 0
        %7392 = vmatpush1.bf16.msra.mxu0 %v7374
        %7393 = vmatprep.subr.bf16.mxu0 0
        %7394 = vmatpush1.bf16.msra.mxu0 0
        %7395 = vmatprep.subr.bf16.mxu0 0
        %7396 = vmatpush1.bf16.msra.mxu0 0
        %7397 = vmatprep.subr.bf16.mxu0 0
        %7398 = vmatpush1.bf16.msra.mxu0 0
        %7399 = vmatprep.subr.bf16.mxu0 0
        %7400 = vmatpush1.bf16.msra.mxu0 0
        %7401 = vmatprep.subr.bf16.mxu0 0
        %7402 = vmatpush1.bf16.msra.mxu0 0
        %7403 = vmatprep.subr.bf16.mxu0 0
        %7404 = vmatpush1.bf16.msra.mxu0 0
        %7405 = vmatprep.subr.bf16.mxu0 0
        %7406 = vmatpush1.bf16.msra.mxu0 0
        %7407 = vmatprep.subr.bf16.mxu0 0
        %7408 = vmatpush1.bf16.msra.mxu0 0
        %7409 = vmatprep.subr.bf16.mxu0 0
        %7410 = vmatpush1.bf16.msra.mxu0 0
        %7411 = vmatprep.subr.bf16.mxu0 0
        %7412 = vmatpush1.bf16.msra.mxu0 0
        %7413 = vmatprep.subr.bf16.mxu0 0
        %7414 = vmatpush1.bf16.msra.mxu0 0
        %7415 = vmatprep.mubr.bf16.mxu0 0
        %7416 = vmatmul.mubr.bf16.gmra.mrb[0].mxu0 %v7381
        %v7417 = vpop.f32.mrb[0].mxu0
        %v7418 = vadd.f32 0.0, %v7417
        %v7419 = vpop.f32.mrb[0].mxu0
        %v7420 = vpop.f32.mrb[0].mxu0
        %v7421 = vpop.f32.mrb[0].mxu0
        %7422 = vdwg.mxu0
        %v7423 = vadd.f32 %v7338, %v7418
        %s7424 = scalar_lea.vmem %s9, 80
        %v7425 = vld [vmem:[%s7424] sm:$0xf]
        %v7426 = vld [vmem:[%s7424 + $0x4] sm:$0xf]
        %v7427 = vld [vmem:[%s7424 + $0x8] sm:$0xf]
        %v7428 = vld [vmem:[%s7424 + $0xc] sm:$0xf]
        %v7429 = vld [vmem:[%s7424 + $0x10] sm:$0xf]
        %v7430 = vld [vmem:[%s7424 + $0x14] sm:$0xf]
        %v7431 = vld [vmem:[%s7424 + $0x18] sm:$0xf]
        %v7432 = vld [vmem:[%s7424 + $0x1c] sm:$0xf]
        %v7433 = vld [vmem:[%s7424 + $0x20] sm:$0xf]
        %v7434 = vld [vmem:[%s7424 + $0x24] sm:$0xf]
        %v7445 = vunpack.c.l.b16 %v7425
        %v7446 = vunpack.c.l.b16 %v7426
        %v7447 = vunpack.c.l.b16 %v7427
        %v7448 = vunpack.c.l.b16 %v7428
        %v7449 = vunpack.c.l.b16 %v7429
        %v7450 = vunpack.c.l.b16 %v7430
        %v7451 = vunpack.c.l.b16 %v7431
        %v7452 = vunpack.c.l.b16 %v7432
        %v7453 = vunpack.c.l.b16 %v7433
        %v7454 = vunpack.c.l.b16 %v7434
        %v7455 = vpack.c.b16 %v7446, %v7445
        %v7456 = vpack.c.b16 %v7448, %v7447
        %v7457 = vpack.c.b16 %v7450, %v7449
        %v7458 = vpack.c.b16 %v7452, %v7451
        %v7459 = vpack.c.b16 %v7454, %v7453
        %v7466 = vsel %vm7294, %v6540, 0
        %7468 = vmatprep.subr.bf16.mxu0 0
        %7469 = vmatpush1.bf16.msra.mxu0 %v7455
        %7470 = vmatprep.subr.bf16.mxu0 0
        %7471 = vmatpush1.bf16.msra.mxu0 %v7456
        %7472 = vmatprep.subr.bf16.mxu0 0
        %7473 = vmatpush1.bf16.msra.mxu0 %v7457
        %7474 = vmatprep.subr.bf16.mxu0 0
        %7475 = vmatpush1.bf16.msra.mxu0 %v7458
        %7476 = vmatprep.subr.bf16.mxu0 0
        %7477 = vmatpush1.bf16.msra.mxu0 %v7459
        %7478 = vmatprep.subr.bf16.mxu0 0
        %7479 = vmatpush1.bf16.msra.mxu0 0
        %7480 = vmatprep.subr.bf16.mxu0 0
        %7481 = vmatpush1.bf16.msra.mxu0 0
        %7482 = vmatprep.subr.bf16.mxu0 0
        %7483 = vmatpush1.bf16.msra.mxu0 0
        %7484 = vmatprep.subr.bf16.mxu0 0
        %7485 = vmatpush1.bf16.msra.mxu0 0
        %7486 = vmatprep.subr.bf16.mxu0 0
        %7487 = vmatpush1.bf16.msra.mxu0 0
        %7488 = vmatprep.subr.bf16.mxu0 0
        %7489 = vmatpush1.bf16.msra.mxu0 0
        %7490 = vmatprep.subr.bf16.mxu0 0
        %7491 = vmatpush1.bf16.msra.mxu0 0
        %7492 = vmatprep.subr.bf16.mxu0 0
        %7493 = vmatpush1.bf16.msra.mxu0 0
        %7494 = vmatprep.subr.bf16.mxu0 0
        %7495 = vmatpush1.bf16.msra.mxu0 0
        %7496 = vmatprep.subr.bf16.mxu0 0
        %7497 = vmatpush1.bf16.msra.mxu0 0
        %7498 = vmatprep.subr.bf16.mxu0 0
        %7499 = vmatpush1.bf16.msra.mxu0 0
        %7500 = vmatprep.mubr.bf16.mxu0 0
        %7501 = vmatmul.mubr.bf16.gmra.mrb[0].mxu0 %v7466
        %v7502 = vpop.f32.mrb[0].mxu0
        %v7503 = vadd.f32 0.0, %v7502
        %v7504 = vpop.f32.mrb[0].mxu0
        %v7505 = vpop.f32.mrb[0].mxu0
        %v7506 = vpop.f32.mrb[0].mxu0
        %7507 = vdwg.mxu0
        %v7508 = vadd.f32 %v7423, %v7503
        %s7509 = scalar_lea.vmem %s9, 120
        %v7510 = vld [vmem:[%s7509] sm:$0xf]
        %v7511 = vld [vmem:[%s7509 + $0x4] sm:$0xf]
        %v7512 = vld [vmem:[%s7509 + $0x8] sm:$0xf]
        %v7513 = vld [vmem:[%s7509 + $0xc] sm:$0xf]
        %v7514 = vld [vmem:[%s7509 + $0x10] sm:$0xf]
        %v7515 = vld [vmem:[%s7509 + $0x14] sm:$0xf]
        %v7516 = vld [vmem:[%s7509 + $0x18] sm:$0xf]
        %v7517 = vld [vmem:[%s7509 + $0x1c] sm:$0xf]
        %v7518 = vld [vmem:[%s7509 + $0x20] sm:$0xf]
        %v7519 = vld [vmem:[%s7509 + $0x24] sm:$0xf]
        %v7530 = vunpack.c.l.b16 %v7510
        %v7531 = vunpack.c.l.b16 %v7511
        %v7532 = vunpack.c.l.b16 %v7512
        %v7533 = vunpack.c.l.b16 %v7513
        %v7534 = vunpack.c.l.b16 %v7514
        %v7535 = vunpack.c.l.b16 %v7515
        %v7536 = vunpack.c.l.b16 %v7516
        %v7537 = vunpack.c.l.b16 %v7517
        %v7538 = vunpack.c.l.b16 %v7518
        %v7539 = vunpack.c.l.b16 %v7519
        %v7540 = vpack.c.b16 %v7531, %v7530
        %v7541 = vpack.c.b16 %v7533, %v7532
        %v7542 = vpack.c.b16 %v7535, %v7534
        %v7543 = vpack.c.b16 %v7537, %v7536
        %v7544 = vpack.c.b16 %v7539, %v7538
        %v7551 = vsel %vm7294, %v6893, 0
        %7553 = vmatprep.subr.bf16.mxu0 0
        %7554 = vmatpush1.bf16.msra.mxu0 %v7540
        %7555 = vmatprep.subr.bf16.mxu0 0
        %7556 = vmatpush1.bf16.msra.mxu0 %v7541
        %7557 = vmatprep.subr.bf16.mxu0 0
        %7558 = vmatpush1.bf16.msra.mxu0 %v7542
        %7559 = vmatprep.subr.bf16.mxu0 0
        %7560 = vmatpush1.bf16.msra.mxu0 %v7543
        %7561 = vmatprep.subr.bf16.mxu0 0
        %7562 = vmatpush1.bf16.msra.mxu0 %v7544
        %7563 = vmatprep.subr.bf16.mxu0 0
        %7564 = vmatpush1.bf16.msra.mxu0 0
        %7565 = vmatprep.subr.bf16.mxu0 0
        %7566 = vmatpush1.bf16.msra.mxu0 0
        %7567 = vmatprep.subr.bf16.mxu0 0
        %7568 = vmatpush1.bf16.msra.mxu0 0
        %7569 = vmatprep.subr.bf16.mxu0 0
        %7570 = vmatpush1.bf16.msra.mxu0 0
        %7571 = vmatprep.subr.bf16.mxu0 0
        %7572 = vmatpush1.bf16.msra.mxu0 0
        %7573 = vmatprep.subr.bf16.mxu0 0
        %7574 = vmatpush1.bf16.msra.mxu0 0
        %7575 = vmatprep.subr.bf16.mxu0 0
        %7576 = vmatpush1.bf16.msra.mxu0 0
        %7577 = vmatprep.subr.bf16.mxu0 0
        %7578 = vmatpush1.bf16.msra.mxu0 0
        %7579 = vmatprep.subr.bf16.mxu0 0
        %7580 = vmatpush1.bf16.msra.mxu0 0
        %7581 = vmatprep.subr.bf16.mxu0 0
        %7582 = vmatpush1.bf16.msra.mxu0 0
        %7583 = vmatprep.subr.bf16.mxu0 0
        %7584 = vmatpush1.bf16.msra.mxu0 0
        %7585 = vmatprep.mubr.bf16.mxu0 0
        %7586 = vmatmul.mubr.bf16.gmra.mrb[0].mxu0 %v7551
        %v7587 = vpop.f32.mrb[0].mxu0
        %v7588 = vadd.f32 0.0, %v7587
        %v7589 = vpop.f32.mrb[0].mxu0
        %v7590 = vpop.f32.mrb[0].mxu0
        %v7591 = vpop.f32.mrb[0].mxu0
        %7592 = vdwg.mxu0
        %v7593 = vadd.f32 %v7508, %v7588
        %s7594 = scalar_lea.vmem %s9, 160
        %v7595 = vld [vmem:[%s7594] sm:$0xf]
        %v7596 = vld [vmem:[%s7594 + $0x4] sm:$0xf]
        %v7597 = vld [vmem:[%s7594 + $0x8] sm:$0xf]
        %v7598 = vld [vmem:[%s7594 + $0xc] sm:$0xf]
        %v7599 = vld [vmem:[%s7594 + $0x10] sm:$0xf]
        %v7600 = vld [vmem:[%s7594 + $0x14] sm:$0xf]
        %v7601 = vld [vmem:[%s7594 + $0x18] sm:$0xf]
        %v7602 = vld [vmem:[%s7594 + $0x1c] sm:$0xf]
        %v7603 = vld [vmem:[%s7594 + $0x20] sm:$0xf]
        %v7604 = vld [vmem:[%s7594 + $0x24] sm:$0xf]
        %v7615 = vunpack.c.l.b16 %v7595
        %v7616 = vunpack.c.l.b16 %v7596
        %v7617 = vunpack.c.l.b16 %v7597
        %v7618 = vunpack.c.l.b16 %v7598
        %v7619 = vunpack.c.l.b16 %v7599
        %v7620 = vunpack.c.l.b16 %v7600
        %v7621 = vunpack.c.l.b16 %v7601
        %v7622 = vunpack.c.l.b16 %v7602
        %v7623 = vunpack.c.l.b16 %v7603
        %v7624 = vunpack.c.l.b16 %v7604
        %v7625 = vpack.c.b16 %v7616, %v7615
        %v7626 = vpack.c.b16 %v7618, %v7617
        %v7627 = vpack.c.b16 %v7620, %v7619
        %v7628 = vpack.c.b16 %v7622, %v7621
        %v7629 = vpack.c.b16 %v7624, %v7623
        %v7636 = vsel %vm7294, %v7246, 0
        %7638 = vmatprep.subr.bf16.mxu0 0
        %7639 = vmatpush1.bf16.msra.mxu0 %v7625
        %7640 = vmatprep.subr.bf16.mxu0 0
        %7641 = vmatpush1.bf16.msra.mxu0 %v7626
        %7642 = vmatprep.subr.bf16.mxu0 0
        %7643 = vmatpush1.bf16.msra.mxu0 %v7627
        %7644 = vmatprep.subr.bf16.mxu0 0
        %7645 = vmatpush1.bf16.msra.mxu0 %v7628
        %7646 = vmatprep.subr.bf16.mxu0 0
        %7647 = vmatpush1.bf16.msra.mxu0 %v7629
        %7648 = vmatprep.subr.bf16.mxu0 0
        %7649 = vmatpush1.bf16.msra.mxu0 0
        %7650 = vmatprep.subr.bf16.mxu0 0
        %7651 = vmatpush1.bf16.msra.mxu0 0
        %7652 = vmatprep.subr.bf16.mxu0 0
        %7653 = vmatpush1.bf16.msra.mxu0 0
        %7654 = vmatprep.subr.bf16.mxu0 0
        %7655 = vmatpush1.bf16.msra.mxu0 0
        %7656 = vmatprep.subr.bf16.mxu0 0
        %7657 = vmatpush1.bf16.msra.mxu0 0
        %7658 = vmatprep.subr.bf16.mxu0 0
        %7659 = vmatpush1.bf16.msra.mxu0 0
        %7660 = vmatprep.subr.bf16.mxu0 0
        %7661 = vmatpush1.bf16.msra.mxu0 0
        %7662 = vmatprep.subr.bf16.mxu0 0
        %7663 = vmatpush1.bf16.msra.mxu0 0
        %7664 = vmatprep.subr.bf16.mxu0 0
        %7665 = vmatpush1.bf16.msra.mxu0 0
        %7666 = vmatprep.subr.bf16.mxu0 0
        %7667 = vmatpush1.bf16.msra.mxu0 0
        %7668 = vmatprep.subr.bf16.mxu0 0
        %7669 = vmatpush1.bf16.msra.mxu0 0
        %7670 = vmatprep.mubr.bf16.mxu0 0
        %7671 = vmatmul.mubr.bf16.gmra.mrb[0].mxu0 %v7636
        %v7672 = vpop.f32.mrb[0].mxu0
        %v7673 = vadd.f32 0.0, %v7672
        %v7674 = vpop.f32.mrb[0].mxu0
        %v7675 = vpop.f32.mrb[0].mxu0
        %v7676 = vpop.f32.mrb[0].mxu0
        %7677 = vdwg.mxu0
        %v7678 = vadd.f32 %v7593, %v7673
        %v7679 = vmax.f32 %v7678, 0.0
        %v7680 = vpack.c.bf16 %v7679, %v7679
        %v7681 = vld [vmem:[%s11] sm:$0xf]
        %v7682 = vld [vmem:[%s11 + $0x4] sm:$0xf]
        %v7683 = vld [vmem:[%s11 + $0x8] sm:$0xf]
        %v7684 = vld [vmem:[%s11 + $0xc] sm:$0xf]
        %v7685 = vld [vmem:[%s11 + $0x10] sm:$0xf]
        %v7686 = vld [vmem:[%s11 + $0x14] sm:$0xf]
        %v7687 = vld [vmem:[%s11 + $0x18] sm:$0xf]
        %v7688 = vld [vmem:[%s11 + $0x1c] sm:$0xf]
        %v7689 = vld [vmem:[%s11 + $0x20] sm:$0xf]
        %v7690 = vld [vmem:[%s11 + $0x24] sm:$0xf]
        %v7691 = vld [vmem:[%s11 + $0x28] sm:$0xf]
        %v7692 = vld [vmem:[%s11 + $0x2c] sm:$0xf]
        %v7693 = vld [vmem:[%s11 + $0x30] sm:$0xf]
        %v7694 = vld [vmem:[%s11 + $0x34] sm:$0xf]
        %v7695 = vld [vmem:[%s11 + $0x38] sm:$0xf]
        %v7696 = vld [vmem:[%s12] sm:$0x1]
        %v7698 = vlaneseq
        %v7699 = vshrl.u32 %v7698, 7
        %v7700 = vsub.s32 0, %v7699
        %v7701 = vrot.slane %v7696, %v7700
        %v7718 = vunpack.c.l.b16 %v7681
        %v7719 = vunpack.c.l.b16 %v7682
        %v7720 = vunpack.c.l.b16 %v7683
        %v7721 = vunpack.c.l.b16 %v7684
        %v7722 = vunpack.c.l.b16 %v7685
        %v7723 = vunpack.c.l.b16 %v7686
        %v7724 = vunpack.c.l.b16 %v7687
        %v7725 = vunpack.c.l.b16 %v7688
        %v7726 = vunpack.c.l.b16 %v7689
        %v7727 = vunpack.c.l.b16 %v7690
        %v7728 = vunpack.c.l.b16 %v7691
        %v7729 = vunpack.c.l.b16 %v7692
        %v7730 = vunpack.c.l.b16 %v7693
        %v7731 = vunpack.c.l.b16 %v7694
        %v7732 = vunpack.c.l.b16 %v7695
        %v7733 = vpack.c.b16 %v7719, %v7718
        %v7734 = vpack.c.b16 %v7721, %v7720
        %v7735 = vpack.c.b16 %v7723, %v7722
        %v7736 = vpack.c.b16 %v7725, %v7724
        %v7737 = vpack.c.b16 %v7727, %v7726
        %v7738 = vpack.c.b16 %v7729, %v7728
        %v7739 = vpack.c.b16 %v7731, %v7730
        %v7740 = vpack.c.b16 %v7732, %v7732
        %vm7748 = vcmask 982016
        %v7750 = vsel %vm7748, %v7680, 0
        %v7753 = vsel %vm5189, %v7740, 0
        %7755 = vmatprep.subr.bf16.mxu0 0
        %7756 = vmatpush1.bf16.msra.mxu0 %v7733
        %7757 = vmatprep.subr.bf16.mxu0 0
        %7758 = vmatpush1.bf16.msra.mxu0 %v7734
        %7759 = vmatprep.subr.bf16.mxu0 0
        %7760 = vmatpush1.bf16.msra.mxu0 %v7735
        %7761 = vmatprep.subr.bf16.mxu0 0
        %7762 = vmatpush1.bf16.msra.mxu0 %v7736
        %7763 = vmatprep.subr.bf16.mxu0 0
        %7764 = vmatpush1.bf16.msra.mxu0 %v7737
        %7765 = vmatprep.subr.bf16.mxu0 0
        %7766 = vmatpush1.bf16.msra.mxu0 %v7738
        %7767 = vmatprep.subr.bf16.mxu0 0
        %7768 = vmatpush1.bf16.msra.mxu0 %v7739
        %7769 = vmatprep.subr.bf16.mxu0 0
        %7770 = vmatpush1.bf16.msra.mxu0 %v7753
        %7771 = vmatprep.subr.bf16.mxu0 0
        %7772 = vmatpush1.bf16.msra.mxu0 0
        %7773 = vmatprep.subr.bf16.mxu0 0
        %7774 = vmatpush1.bf16.msra.mxu0 0
        %7775 = vmatprep.subr.bf16.mxu0 0
        %7776 = vmatpush1.bf16.msra.mxu0 0
        %7777 = vmatprep.subr.bf16.mxu0 0
        %7778 = vmatpush1.bf16.msra.mxu0 0
        %7779 = vmatprep.subr.bf16.mxu0 0
        %7780 = vmatpush1.bf16.msra.mxu0 0
        %7781 = vmatprep.subr.bf16.mxu0 0
        %7782 = vmatpush1.bf16.msra.mxu0 0
        %7783 = vmatprep.subr.bf16.mxu0 0
        %7784 = vmatpush1.bf16.msra.mxu0 0
        %7785 = vmatprep.subr.bf16.mxu0 0
        %7786 = vmatpush1.bf16.msra.mxu0 0
        %7787 = vmatprep.mubr.bf16.mxu0 0
        %7788 = vmatmul.mubr.bf16.gmra.mrb[0].mxu0 %v7750
        %v7789 = vpop.f32.mrb[0].mxu0
        %v7790 = vadd.f32 %v7701, %v7789
        %v7791 = vpop.f32.mrb[0].mxu0
        %v7792 = vpop.f32.mrb[0].mxu0
        %v7793 = vpop.f32.mrb[0].mxu0
        %7794 = vdwg.mxu0
        %7795 = vst [vmem:[%s579] sm:$0xff] %v7790
        %p7796 = scmp.lt.s32.totalorder %s24, 1
        %s7797 = scalar_select %p7796, %s24, 1
        %s7798 = smul.addr %s7797, 8
        %s7799 = scalar_lea.vmem %s13, %s7798
        // Predicated region
        $region114: #{convolution_forward.1} parent=108 // pred_check
          %p7800 = pneg %p320
        $region115: #{convolution_forward.1} parent=108 // pred_check_branch
          %7802 = sbr.rel (%p7800) target = $region117
        $region116: #{convolution_forward.1} parent=108 // pred_region
          _
        $region117: #{convolution_forward.1} parent=108 // pred_fallthru
          _
      $region109: #{convolution_forward.1} parent=5 // pred_fallthru
        _
      %p7803 = scmp.le.s32.totalorder 2, %s19
      // Predicated region
      $region118: #{convolution_forward.1} parent=5 // pred_check
        %p7804 = pneg %p7803
      $region119: #{convolution_forward.1} parent=5 // pred_check_branch
        %7806 = sbr.rel (%p7804) target = $region121
      $region120: #{convolution_forward.1} parent=5 // pred_region
        %s7807 = ssub.s32 %s19, 2
        // Predicated region
        $region122: #{convolution_forward.1} parent=120 // pred_check
          %p7808 = pneg %p326
        $region123: #{convolution_forward.1} parent=120 // pred_check_branch
          %7810 = sbr.rel (%p7808) target = $region125
        $region124: #{convolution_forward.1} parent=120 // pred_region
          %p7811 = scmp.lt.s32.totalorder %s25, 1
          %s7812 = scalar_select %p7811, %s25, 1
          %s7813 = smul.addr %s7812, 8
          %s7814 = scalar_lea.vmem %s13, %s7813
        $region125: #{convolution_forward.1} parent=120 // pred_fallthru
          _
      $region121: #{convolution_forward.1} parent=5 // pred_fallthru
        _
    $region6: #{convolution_forward.1} parent=1 // loop_footer
      %s23 = sadd.s32 1, %s19
    $region7: #{convolution_forward.1} parent=1 // loop_footer_branch
      %18 = sbr.rel target = $region3
    $region8: #{convolution_forward.1} parent=1 // loop_exit
      _

</llo_original>
